<compile_context>
chip_gen: v6e
topology: v6e:2x2x1
jax: 0.10.0
libtpu: 0.0.40
codegen_flags: <defaults>
</compile_context>

<pallas_src>
import functools

import numpy as np
import jax
import jax.numpy as jnp
from jax.experimental import pallas as pl
from jax.experimental.pallas import tpu as pltpu


# ---------------------------------------------------------------------------
# helpers
# ---------------------------------------------------------------------------

def _round_up(n, m):
    return ((n + m - 1) // m) * m


def _vmem_capacity():
    try:
        return int(pltpu.get_tpu_info().vmem_capacity_bytes)
    except Exception:
        return 64 << 20                       # v7x-safe fallback


def _vmem_limit(need_bytes, cap):
    return int(min(max(need_bytes + (8 << 20), 32 << 20), (cap * 3) // 4))


def _pick_cols(total, bytes_per_col, budget):
    """Largest multiple of 128 dividing `total` whose block fits the budget."""
    best, t = 128, 128
    while t <= total:
        if total % t == 0 and t * bytes_per_col <= budget:
            best = t
        t += 128
    return best


class Geom:
    """Guarded, zero-padded, flattened activation layout.

    A (C, H, W) plane is stored as (C, L): index  G0 + r*Wp + c  (r in [0,Hp),
    c in [0,Wp)) holds the zero-padded plane value at (r, c); everything else
    is zero.  Real pixel (y, x) lives at G0 + (y+1)*Wp + (x+1).  The layout is
    its own 3x3-conv input: tap (dy, dx) of output position q reads input
    position q + (dy-1)*Wp + (dx-1), and with G0 >= Wp+1 every access stays in
    bounds.  L and the computed width Nc are multiples of 128 (lane-dense).
    """

    def __init__(self, H, W, guard=128):
        assert W + 3 <= guard, "W > 125 needs a larger (multiple-of-128) guard"
        self.H, self.W = H, W
        self.Hp, self.Wp = H + 2, W + 2
        self.G0 = guard
        self.core = self.Hp * self.Wp
        self.L = 2 * guard + _round_up(self.core, 128)
        self.Nc = self.L - 2 * guard

    def pack(self, x):                        # (B, C, H, W) -> (B, C, L)
        B, C = x.shape[0], x.shape[1]
        xp = jnp.pad(x, ((0, 0), (0, 0), (1, 1), (1, 1)))
        xf = xp.reshape(B, C, self.core)
        return jnp.pad(xf, ((0, 0), (0, 0),
                            (self.G0, self.L - self.G0 - self.core)))

    def unpack(self, xf):                     # (B, C, L) -> (B, C, H, W)
        B, C = xf.shape[0], xf.shape[1]
        core = xf[:, :, self.G0:self.G0 + self.core]
        core = core.reshape(B, C, self.Hp, self.Wp)
        return core[:, :, 1:1 + self.H, 1:1 + self.W]

    def valid_mask(self):                     # (1, Nc) float32
        j = np.arange(self.Nc)
        r, c = j // self.Wp, j % self.Wp
        m = (r >= 1) & (r <= self.H) & (c >= 1) & (c <= self.W)
        return jnp.asarray(m.astype(np.float32))[None, :]


def _fold_bn(w, bn, eps):
    """Fold inference BatchNorm into conv weights; return (Cout,9Cin) + bias."""
    gamma, beta, mean, var = bn
    scale = gamma / jnp.sqrt(var + eps)
    w_fold = w * scale[:, None, None, None]                  # (Cout,Cin,3,3)
    b_fold = beta - mean * scale
    cout, cin = w.shape[0], w.shape[1]
    wmat = jnp.transpose(w_fold, (0, 2, 3, 1)).reshape(cout, 9 * cin)
    return wmat, b_fold.reshape(cout, 1)


# ---------------------------------------------------------------------------
# fused 3x3 conv + BN (+ReLU) : whole guarded plane per batch, single matmul
# ---------------------------------------------------------------------------

def _conv_taps(x_ref, w_ref, b_ref, mask_ref, *, Wp, G0, Nc, relu, mxu_dtype):
    base = G0 - Wp - 1
    cols = []
    for dy in range(3):
        for dx in range(3):
            off = base + dy * Wp + dx
            cols.append(x_ref[0, :, off:off + Nc])           # lane-shifted view
    patches = jnp.concatenate(cols, axis=0).astype(mxu_dtype)  # (9*Cin, Nc)
    acc = jnp.dot(w_ref[...].astype(mxu_dtype), patches,
                  preferred_element_type=jnp.float32)          # (Cout, Nc)
    acc = acc + b_ref[...]
    if relu:
        acc = jnp.maximum(acc, 0.0)
    return acc * mask_ref[...]                                 # zero pads/guards


def _guarded(vals, G0, dtype):
    z = jnp.zeros((vals.shape[0], G0), dtype)
    return jnp.concatenate([z, vals.astype(dtype), z], axis=1)


def _conv1_kernel(x_ref, w_ref, b_ref, mask_ref, o_ref, *, Wp, G0, Nc, mxu_dtype):
    vals = _conv_taps(x_ref, w_ref, b_ref, mask_ref, Wp=Wp, G0=G0, Nc=Nc,
                      relu=True, mxu_dtype=mxu_dtype)
    o_ref[0] = _guarded(vals, G0, o_ref.dtype)


def _conv2_ca_kernel(x_ref, w_ref, b_ref, mask_ref, w1_ref, w2_ref,
                     h2_ref, ca_ref, pooled_ref,
                     *, Wp, G0, Nc, inv_hw, inv_c, mxu_dtype):
    vals = _conv_taps(x_ref, w_ref, b_ref, mask_ref, Wp=Wp, G0=G0, Nc=Nc,
                      relu=False, mxu_dtype=mxu_dtype)        # (C, Nc)

    # -- channel attention: whole plane is resident, reduction is free filler --
    mask = mask_ref[...]                                      # (1, Nc)
    ch_sum = jnp.sum(vals, axis=1, keepdims=True)             # (C, 1)
    ch_max = jnp.max(jnp.where(mask > 0.0, vals, -jnp.inf),
                     axis=1, keepdims=True)                   # (C, 1)
    avgmax = jnp.concatenate([ch_sum * inv_hw, ch_max], axis=1)   # (C, 2)
    h = jnp.maximum(jnp.dot(w1_ref[...], avgmax,
                            preferred_element_type=jnp.float32), 0.0)  # (hid,2)
    o2 = jnp.dot(w2_ref[...], h, preferred_element_type=jnp.float32)   # (C, 2)
    ca = jax.nn.sigmoid(o2[:, 0:1] + o2[:, 1:2])              # (C, 1)
    ca_ref[0] = ca

    # -- channel-wise mean/max pooling of y = ca*h2 (no y HBM round trip) --
    y = vals * ca                                             # (C, Nc)
    p_avg = jnp.sum(y, axis=0, keepdims=True) * inv_c         # (1, Nc)
    p_max = jnp.max(y, axis=0, keepdims=True)                 # (1, Nc)
    pooled = jnp.concatenate([p_avg, p_max], axis=0)          # single store
    pooled_ref[0] = _guarded(pooled, G0, pooled_ref.dtype)

    h2_ref[0] = _guarded(vals, G0, h2_ref.dtype)


# TODO(synk): for planes too large to keep a full (C, L) batch-plane resident
# in VMEM, add a halo-tiled spatial grid axis (manual DMA with overlap).

def conv1_bn_relu(xf, w, bn, geom, *, eps=1e-5, mxu_dtype=jnp.float32):
    B, Cin, L = xf.shape
    Cout = w.shape[0]
    wmat, bias = _fold_bn(w, bn, eps)
    mask = geom.valid_mask()
    cap = _vmem_capacity()
    need = (2 * (Cin + Cout) * L + 10 * Cin * geom.Nc + Cout * 9 * Cin) * 4
    return pl.pallas_call(
        functools.partial(_conv1_kernel, Wp=geom.Wp, G0=geom.G0, Nc=geom.Nc,
                          mxu_dtype=mxu_dtype),
        out_shape=jax.ShapeDtypeStruct((B, Cout, L), jnp.float32),
        grid_spec=pltpu.PrefetchScalarGridSpec(
            num_scalar_prefetch=0,
            grid=(B,),
            in_specs=[
                pl.BlockSpec((1, Cin, L), lambda b: (b, 0, 0)),
                pl.BlockSpec((Cout, 9 * Cin), lambda b: (0, 0)),
                pl.BlockSpec((Cout, 1), lambda b: (0, 0)),
                pl.BlockSpec((1, geom.Nc), lambda b: (0, 0)),
            ],
            out_specs=pl.BlockSpec((1, Cout, L), lambda b: (b, 0, 0)),
        ),
        compiler_params=pltpu.CompilerParams(
            dimension_semantics=("parallel",),
            vmem_limit_bytes=_vmem_limit(need, cap),
        ),
        cost_estimate=pl.CostEstimate(
            flops=2 * B * Cout * 9 * Cin * geom.Nc,
            transcendentals=0,
            bytes_accessed=(B * (Cin + Cout) * L + Cout * 9 * Cin) * 4,
        ),
    )(xf, wmat, bias, mask)


def conv2_bn_ca(h1, w, bn, fc1_w, fc2_w, geom, *, eps=1e-5,
                mxu_dtype=jnp.float32):
    B, Cin, L = h1.shape
    Cout = w.shape[0]
    wmat, bias = _fold_bn(w, bn, eps)
    mask = geom.valid_mask()
    inv_hw = 1.0 / float(geom.H * geom.W)
    inv_c = 1.0 / float(Cout)
    cap = _vmem_capacity()
    need = (2 * (Cin + Cout + 2) * L + 10 * Cin * geom.Nc + Cout * 9 * Cin) * 4
    return pl.pallas_call(
        functools.partial(_conv2_ca_kernel, Wp=geom.Wp, G0=geom.G0, Nc=geom.Nc,
                          inv_hw=inv_hw, inv_c=inv_c, mxu_dtype=mxu_dtype),
        out_shape=(
            jax.ShapeDtypeStruct((B, Cout, L), jnp.float32),   # h2
            jax.ShapeDtypeStruct((B, Cout, 1), jnp.float32),   # ca
            jax.ShapeDtypeStruct((B, 2, L), jnp.float32),      # pooled avg/max
        ),
        grid_spec=pltpu.PrefetchScalarGridSpec(
            num_scalar_prefetch=0,
            grid=(B,),
            in_specs=[
                pl.BlockSpec((1, Cin, L), lambda b: (b, 0, 0)),
                pl.BlockSpec((Cout, 9 * Cin), lambda b: (0, 0)),
                pl.BlockSpec((Cout, 1), lambda b: (0, 0)),
                pl.BlockSpec((1, geom.Nc), lambda b: (0, 0)),
                pl.BlockSpec(fc1_w.shape, lambda b: (0, 0)),   # (hid, C)
                pl.BlockSpec(fc2_w.shape, lambda b: (0, 0)),   # (C, hid)
            ],
            out_specs=(
                pl.BlockSpec((1, Cout, L), lambda b: (b, 0, 0)),
                pl.BlockSpec((1, Cout, 1), lambda b: (b, 0, 0)),
                pl.BlockSpec((1, 2, L), lambda b: (b, 0, 0)),
            ),
        ),
        compiler_params=pltpu.CompilerParams(
            dimension_semantics=("parallel",),
            vmem_limit_bytes=_vmem_limit(need, cap),
        ),
        cost_estimate=pl.CostEstimate(
            flops=2 * B * Cout * 9 * Cin * geom.Nc + 6 * B * Cout * geom.Nc,
            transcendentals=2 * B * Cout,
            bytes_accessed=(B * (Cin + Cout + 2) * L + Cout * 9 * Cin) * 4,
        ),
    )(h1, wmat, bias, mask, fc1_w, fc2_w)


# ---------------------------------------------------------------------------
# spatial attention: 7x7 conv (2 -> 1) + sigmoid on a flattened padded plane
# ---------------------------------------------------------------------------

def _sa_conv_kernel(pf_ref, w_ref, o_ref, *, W7, N7, ksize):
    acc = jnp.zeros((1, N7), jnp.float32)
    for c in range(2):
        for dy in range(ksize):
            for dx in range(ksize):
                wt = w_ref[c * ksize * ksize + dy * ksize + dx]   # SMEM scalar
                off = dy * W7 + dx
                acc = acc + wt * pf_ref[0, c:c + 1, off:off + N7]
    o_ref[0] = jax.nn.sigmoid(acc)


def spatial_attention(pooled, w_sa, geom):
    """pooled: (B, 2, L) canonical layout; returns sa in canonical (B, 1, L)."""
    B = pooled.shape[0]
    H, W, Hp, Wp, G0, L = geom.H, geom.W, geom.Hp, geom.Wp, geom.G0, geom.L
    k = w_sa.shape[-1]
    pad = k // 2
    W7 = W + 2 * pad
    N7 = _round_up(H * W7, 128)
    L7 = _round_up(N7 + (k - 1) * (W7 + 1), 128)

    # tiny tensors -> wrapper-side relayout is negligible HBM traffic
    core = pooled[:, :, G0:G0 + geom.core].reshape(B, 2, Hp, Wp)
    real = core[:, :, 1:1 + H, 1:1 + W]
    pp = jnp.pad(real, ((0, 0), (0, 0), (pad, pad), (pad, pad)))
    pf = pp.reshape(B, 2, (H + 2 * pad) * W7)
    pf = jnp.pad(pf, ((0, 0), (0, 0), (0, L7 - pf.shape[-1])))
    w_flat = w_sa.reshape(-1).astype(jnp.float32)             # (2*k*k,) taps

    sa = pl.pallas_call(
        functools.partial(_sa_conv_kernel, W7=W7, N7=N7, ksize=k),
        out_shape=jax.ShapeDtypeStruct((B, 1, N7), jnp.float32),
        grid_spec=pltpu.PrefetchScalarGridSpec(
            num_scalar_prefetch=0,
            grid=(B,),
            in_specs=[
                pl.BlockSpec((1, 2, L7), lambda b: (b, 0, 0)),
                pl.BlockSpec(memory_space=pltpu.MemorySpace.SMEM),
            ],
            out_specs=pl.BlockSpec((1, 1, N7), lambda b: (b, 0, 0)),
        ),
        compiler_params=pltpu.CompilerParams(dimension_semantics=("parallel",)),
    )(pf, w_flat)

    sa2d = sa[:, 0, :H * W7].reshape(B, H, W7)[:, :, :W]
    sap = jnp.pad(sa2d, ((0, 0), (1, 1), (1, 1))).reshape(B, geom.core)
    saf = jnp.pad(sap, ((0, 0), (G0, L - G0 - geom.core)))
    return saf[:, None, :]                                    # (B, 1, L)


# ---------------------------------------------------------------------------
# final streamed pass: out = leaky_relu(h2*ca*sa + residual)
# ---------------------------------------------------------------------------

def _tail_kernel(h2_ref, ca_ref, sa_ref, res_ref, o_ref, *, slope):
    v = h2_ref[0] * ca_ref[0] * sa_ref[0] + res_ref[0]
    o_ref[0] = jnp.where(v >= 0.0, v, slope * v)


def apply_sa_residual(h2, ca, sa, xres, *, slope=0.01):
    B, C, L = h2.shape
    cap = _vmem_capacity()
    tile = _pick_cols(L, bytes_per_col=(3 * C + 1) * 4 * 2, budget=cap // 6)
    nst = L // tile
    return pl.pallas_call(
        functools.partial(_tail_kernel, slope=slope),
        out_shape=jax.ShapeDtypeStruct((B, C, L), jnp.float32),
        grid_spec=pltpu.PrefetchScalarGridSpec(
            num_scalar_prefetch=0,
            grid=(B, nst),
            in_specs=[
                pl.BlockSpec((1, C, tile), lambda b, s: (b, 0, s)),
                pl.BlockSpec((1, C, 1), lambda b, s: (b, 0, 0)),
                pl.BlockSpec((1, 1, tile), lambda b, s: (b, 0, s)),
                pl.BlockSpec((1, C, tile), lambda b, s: (b, 0, s)),
            ],
            out_specs=pl.BlockSpec((1, C, tile), lambda b, s: (b, 0, s)),
        ),
        compiler_params=pltpu.CompilerParams(
            dimension_semantics=("parallel", "parallel"),
            vmem_limit_bytes=_vmem_limit(8 * C * tile * 4, cap),
        ),
        cost_estimate=pl.CostEstimate(
            flops=4 * B * C * L,
            transcendentals=0,
            bytes_accessed=(3 * B * C * L + B * L + B * C) * 4,
        ),
    )(h2, ca, sa, xres)


# ---------------------------------------------------------------------------
# Full CBAMBlock forward (inference-mode BN; inplanes == planes, stride 1)
# ---------------------------------------------------------------------------

def cbam_forward(x, params, *, mxu_dtype=jnp.float32):
    B, C, H, W = x.shape
    geom = Geom(H, W)
    xf = geom.pack(x)
    h1 = conv1_bn_relu(xf, params["conv1_w"], params["bn1"], geom,
                       mxu_dtype=mxu_dtype)
    h2, ca, pooled = conv2_bn_ca(h1, params["conv2_w"], params["bn2"],
                                 params["fc1_w"], params["fc2_w"], geom,
                                 mxu_dtype=mxu_dtype)
    sa = spatial_attention(pooled, params["sa_w"], geom)
    outf = apply_sa_residual(h2, ca, sa, xf)
    return geom.unpack(outf)


# ---------------------------------------------------------------------------
# Pure-JAX reference of the PyTorch forward pass (inference-mode BN)
# ---------------------------------------------------------------------------

def reference_cbam(x, p):
    P = jax.lax.Precision.HIGHEST

    def conv(v, w, pad):
        return jax.lax.conv_general_dilated(
            v, w, (1, 1), ((pad, pad), (pad, pad)),
            dimension_numbers=("NCHW", "OIHW", "NCHW"), precision=P)

    def bn(v, g, b, m, var, eps=1e-5):
        s = g / jnp.sqrt(var + eps)
        return v * s[None, :, None, None] + (b - m * s)[None, :, None, None]

    out = jnp.maximum(bn(conv(x, p["conv1_w"], 1), *p["bn1"]), 0.0)
    out = bn(conv(out, p["conv2_w"], 1), *p["bn2"])

    avg = jnp.mean(out, axis=(2, 3))
    mx = jnp.max(out, axis=(2, 3))

    def fc(v):
        h = jnp.maximum(jnp.dot(v, p["fc1_w"].T, precision=P), 0.0)
        return jnp.dot(h, p["fc2_w"].T, precision=P)

    ca = jax.nn.sigmoid(fc(avg) + fc(mx))[:, :, None, None]
    out = ca * out

    am = jnp.mean(out, axis=1, keepdims=True)
    amx = jnp.max(out, axis=1, keepdims=True)
    sa = jax.nn.sigmoid(conv(jnp.concatenate([am, amx], axis=1), p["sa_w"], 3))
    out = sa * out
    out = out + x
    return jnp.where(out >= 0, out, 0.01 * out)


if __name__ == "__main__":
    # planes = 64 > 16 -> ratio = 16, hidden = 4; inplanes == planes (residual)
    B, C, H, W = 2, 64, 32, 32
    ratio = 16 if C > 16 else 1
    hidden = max(C // ratio, 1)

    key = jax.random.PRNGKey(0)
    keys = jax.random.split(key, 14)
    x = jax.random.normal(keys[0], (B, C, H, W), jnp.float32)

    conv_scale = 1.0 / (3.0 * float(C) ** 0.5)
    params = {
        "conv1_w": jax.random.normal(keys[1], (C, C, 3, 3), jnp.float32) * conv_scale,
        "conv2_w": jax.random.normal(keys[2], (C, C, 3, 3), jnp.float32) * conv_scale,
        # inference-mode BatchNorm params: (gamma, beta, running_mean, running_var)
        "bn1": (1.0 + 0.1 * jax.random.normal(keys[3], (C,), jnp.float32),
                0.1 * jax.random.normal(keys[4], (C,), jnp.float32),
                0.1 * jax.random.normal(keys[5], (C,), jnp.float32),
                jax.random.uniform(keys[6], (C,), jnp.float32, 0.5, 1.5)),
        "bn2": (1.0 + 0.1 * jax.random.normal(keys[7], (C,), jnp.float32),
                0.1 * jax.random.normal(keys[8], (C,), jnp.float32),
                0.1 * jax.random.normal(keys[9], (C,), jnp.float32),
                jax.random.uniform(keys[10], (C,), jnp.float32, 0.5, 1.5)),
        "fc1_w": jax.random.normal(keys[11], (hidden, C), jnp.float32) * 0.1,
        "fc2_w": jax.random.normal(keys[12], (C, hidden), jnp.float32) * 0.1,
        "sa_w": jax.random.normal(keys[13], (1, 2, 7, 7), jnp.float32) * 0.1,
    }

    # f32 MXU inputs by default; pass mxu_dtype=jnp.bfloat16 on v6e/v7x for
    # ~2x MXU throughput (validate against tolerance).
    out = cbam_forward(x, params)
    out = jax.block_until_ready(out)

    ref = reference_cbam(x, params)
    assert out.shape == (B, C, H, W)
    err = float(jnp.max(jnp.abs(out - ref)))
    assert jnp.allclose(out, ref, atol=5e-2, rtol=5e-2), f"max abs err {err}"

    print("KERNEL_OK")
</pallas_src>

<mosaic_0001>
module attributes {stable_mosaic.version = 11 : i64} {
  func.func @_conv1_kernel(%arg0: i32, %arg1: memref<1x64x1536xf32, #tpu.memory_space<vmem>>, %arg2: memref<64x576xf32, #tpu.memory_space<vmem>>, %arg3: memref<64x1xf32, #tpu.memory_space<vmem>>, %arg4: memref<1x1280xf32, #tpu.memory_space<vmem>>, %arg5: memref<1x64x1536xf32, #tpu.memory_space<vmem>>) attributes {dimension_semantics = [#tpu.dimension_semantics<parallel>], iteration_bounds = array<i64: 2>, scalar_prefetch = 0 : i64, scratch_operands = 0 : i64, tpu.core_type = #tpu.core_type<tc>, window_params = [{transform_indices = @transform_0, window_bounds = array<i64: 1, 64, 1536>}, {pipeline_mode = #tpu.pipeline_mode<synchronous>, transform_indices = @transform_1, window_bounds = array<i64: 64, 576>}, {pipeline_mode = #tpu.pipeline_mode<synchronous>, transform_indices = @transform_2, window_bounds = array<i64: 64, 1>}, {pipeline_mode = #tpu.pipeline_mode<synchronous>, transform_indices = @transform_3, window_bounds = array<i64: 1, 1280>}, {transform_indices = @transform_4, window_bounds = array<i64: 1, 64, 1536>}]} {
    %c0 = arith.constant 0 : index
    %c0_0 = arith.constant 0 : index
    %c93 = arith.constant 93 : index
    %0 = vector.load %arg1[%c0, %c0_0, %c93] : memref<1x64x1536xf32, #tpu.memory_space<vmem>>, vector<1x64x1280xf32>
    %1 = vector.shape_cast %0 : vector<1x64x1280xf32> to vector<64x1280xf32>
    %c0_1 = arith.constant 0 : index
    %c0_2 = arith.constant 0 : index
    %c94 = arith.constant 94 : index
    %2 = vector.load %arg1[%c0_1, %c0_2, %c94] : memref<1x64x1536xf32, #tpu.memory_space<vmem>>, vector<1x64x1280xf32>
    %3 = vector.shape_cast %2 : vector<1x64x1280xf32> to vector<64x1280xf32>
    %c0_3 = arith.constant 0 : index
    %c0_4 = arith.constant 0 : index
    %c95 = arith.constant 95 : index
    %4 = vector.load %arg1[%c0_3, %c0_4, %c95] : memref<1x64x1536xf32, #tpu.memory_space<vmem>>, vector<1x64x1280xf32>
    %5 = vector.shape_cast %4 : vector<1x64x1280xf32> to vector<64x1280xf32>
    %c0_5 = arith.constant 0 : index
    %c0_6 = arith.constant 0 : index
    %c127 = arith.constant 127 : index
    %6 = vector.load %arg1[%c0_5, %c0_6, %c127] : memref<1x64x1536xf32, #tpu.memory_space<vmem>>, vector<1x64x1280xf32>
    %7 = vector.shape_cast %6 : vector<1x64x1280xf32> to vector<64x1280xf32>
    %c0_7 = arith.constant 0 : index
    %c0_8 = arith.constant 0 : index
    %c128 = arith.constant 128 : index
    %8 = vector.load %arg1[%c0_7, %c0_8, %c128] : memref<1x64x1536xf32, #tpu.memory_space<vmem>>, vector<1x64x1280xf32>
    %9 = vector.shape_cast %8 : vector<1x64x1280xf32> to vector<64x1280xf32>
    %c0_9 = arith.constant 0 : index
    %c0_10 = arith.constant 0 : index
    %c129 = arith.constant 129 : index
    %10 = vector.load %arg1[%c0_9, %c0_10, %c129] : memref<1x64x1536xf32, #tpu.memory_space<vmem>>, vector<1x64x1280xf32>
    %11 = vector.shape_cast %10 : vector<1x64x1280xf32> to vector<64x1280xf32>
    %c0_11 = arith.constant 0 : index
    %c0_12 = arith.constant 0 : index
    %c161 = arith.constant 161 : index
    %12 = vector.load %arg1[%c0_11, %c0_12, %c161] : memref<1x64x1536xf32, #tpu.memory_space<vmem>>, vector<1x64x1280xf32>
    %13 = vector.shape_cast %12 : vector<1x64x1280xf32> to vector<64x1280xf32>
    %c0_13 = arith.constant 0 : index
    %c0_14 = arith.constant 0 : index
    %c162 = arith.constant 162 : index
    %14 = vector.load %arg1[%c0_13, %c0_14, %c162] : memref<1x64x1536xf32, #tpu.memory_space<vmem>>, vector<1x64x1280xf32>
    %15 = vector.shape_cast %14 : vector<1x64x1280xf32> to vector<64x1280xf32>
    %c0_15 = arith.constant 0 : index
    %c0_16 = arith.constant 0 : index
    %c163 = arith.constant 163 : index
    %16 = vector.load %arg1[%c0_15, %c0_16, %c163] : memref<1x64x1536xf32, #tpu.memory_space<vmem>>, vector<1x64x1280xf32>
    %17 = vector.shape_cast %16 : vector<1x64x1280xf32> to vector<64x1280xf32>
    %18 = tpu.concatenate %1, %3, %5, %7, %9, %11, %13, %15, %17 in 0 : vector<64x1280xf32>, vector<64x1280xf32>, vector<64x1280xf32>, vector<64x1280xf32>, vector<64x1280xf32>, vector<64x1280xf32>, vector<64x1280xf32>, vector<64x1280xf32>, vector<64x1280xf32> -> vector<576x1280xf32>
    %c0_17 = arith.constant 0 : index
    %c0_18 = arith.constant 0 : index
    %19 = vector.load %arg2[%c0_17, %c0_18] : memref<64x576xf32, #tpu.memory_space<vmem>>, vector<64x576xf32>
    %cst = arith.constant dense<0.000000e+00> : vector<64x1280xf32>
    %20 = tpu.matmul %19, %18, %cst {dimension_numbers = #tpu.dot_dimension_numbers<[1], [0], [0], [1], [0, 0, 1, 1], [], []>} : vector<64x576xf32>, vector<576x1280xf32>, vector<64x1280xf32> -> vector<64x1280xf32>
    %c0_19 = arith.constant 0 : index
    %c0_20 = arith.constant 0 : index
    %21 = vector.load %arg3[%c0_19, %c0_20] : memref<64x1xf32, #tpu.memory_space<vmem>>, vector<64x1xf32>
    %22 = vector.broadcast %21 : vector<64x1xf32> to vector<64x1280xf32>
    %23 = arith.addf %20, %22 : vector<64x1280xf32>
    %cst_21 = arith.constant 0.000000e+00 : f32
    %24 = vector.broadcast %cst_21 : f32 to vector<64x1280xf32>
    %25 = arith.maximumf %23, %24 : vector<64x1280xf32>
    %c0_22 = arith.constant 0 : index
    %c0_23 = arith.constant 0 : index
    %26 = vector.load %arg4[%c0_22, %c0_23] : memref<1x1280xf32, #tpu.memory_space<vmem>>, vector<1x1280xf32>
    %27 = vector.broadcast %26 : vector<1x1280xf32> to vector<64x1280xf32>
    %28 = arith.mulf %25, %27 : vector<64x1280xf32>
    %cst_24 = arith.constant 0.000000e+00 : f32
    %29 = vector.broadcast %cst_24 : f32 to vector<64x128xf32>
    %30 = tpu.concatenate %29, %28, %29 in 1 : vector<64x128xf32>, vector<64x1280xf32>, vector<64x128xf32> -> vector<64x1536xf32>
    %c0_25 = arith.constant 0 : index
    %c0_26 = arith.constant 0 : index
    %c0_27 = arith.constant 0 : index
    %31 = vector.load %arg5[%c0_25, %c0_26, %c0_27] : memref<1x64x1536xf32, #tpu.memory_space<vmem>>, vector<1x64x1536xf32>
    %32 = vector.shape_cast %31 : vector<1x64x1536xf32> to vector<64x1536xf32>
    %33 = vector.shape_cast %30 : vector<64x1536xf32> to vector<1x64x1536xf32>
    tpu.vector_store %arg5[%c0_25, %c0_26, %c0_27], %33 {strides = array<i32>} : memref<1x64x1536xf32, #tpu.memory_space<vmem>>, vector<1x64x1536xf32>,
    return
  }
  func.func @transform_0(%arg0: i32) -> (i32, i32, i32) {
    %c0_i32 = arith.constant 0 : i32
    %c0_i32_0 = arith.constant 0 : i32
    %c0_i32_1 = arith.constant 0 : i32
    return %arg0, %c0_i32, %c0_i32_0 : i32, i32, i32
  }
  func.func @transform_1(%arg0: i32) -> (i32, i32) {
    %c0_i32 = arith.constant 0 : i32
    %c0_i32_0 = arith.constant 0 : i32
    %c0_i32_1 = arith.constant 0 : i32
    return %c0_i32, %c0_i32_0 : i32, i32
  }
  func.func @transform_2(%arg0: i32) -> (i32, i32) {
    %c0_i32 = arith.constant 0 : i32
    %c0_i32_0 = arith.constant 0 : i32
    %c0_i32_1 = arith.constant 0 : i32
    return %c0_i32, %c0_i32_0 : i32, i32
  }
  func.func @transform_3(%arg0: i32) -> (i32, i32) {
    %c0_i32 = arith.constant 0 : i32
    %c0_i32_0 = arith.constant 0 : i32
    %c0_i32_1 = arith.constant 0 : i32
    return %c0_i32, %c0_i32_0 : i32, i32
  }
  func.func @transform_4(%arg0: i32) -> (i32, i32, i32) {
    %c0_i32 = arith.constant 0 : i32
    %c0_i32_0 = arith.constant 0 : i32
    %c0_i32_1 = arith.constant 0 : i32
    return %arg0, %c0_i32, %c0_i32_0 : i32, i32, i32
  }
}

</mosaic_0001>

<llo_original>
// kernel: tpu_custom_call.1
$region0: #{tpu_custom_call.1}
  #allocation0 [shape = 'u32[]', space=smem, size = 0x4, offset = 0x4, fixed_abs, tag = 'smem constant byte address 0x4 - core index']
  #allocation1 [shape = 'u32[144,128]{1,0:T(1,128)}', space=vmem, size = 0x12000, scoped, tag = 'internal scratch']
  %s0 = inlined_call_operand.hbm [shape: f32[2,64,1536], index: 0, kind: input, shape index: {}]
  %s1 = inlined_call_operand.hbm [shape: f32[64,576], index: 1, kind: input, shape index: {}]
  %s2 = inlined_call_operand.vmem [shape: f32[64,1], index: 2, kind: input, shape index: {}]
  %s3 = inlined_call_operand.vmem [shape: f32[1,1280], index: 3, kind: input, shape index: {}]
  %s4 = inlined_call_operand.hbm [shape: f32[2,64,1536], index: 4, kind: output, shape index: {}]
  %s5 = sld [smem:[#allocation0]]
  $region57: #{tpu_custom_call.1} parent=0
    _
  %s7 = ssub.s32 1, %s5
  %s8 = scalar_select 0, %s7, %s5
  $region1: #{tpu_custom_call.1} parent=0
    #allocation2 [shape = 'u8[786432]{0}', space=vmem, size = 0xc0000, scoped, tag = 'input window, operand 0']
    #allocation3 [shape = 's32[2]{0}', space=sflag, size = 0x8, scoped, tag = 'scoped memory for tpu_custom_call.1']
    #allocation4 [shape = 's32[2]{0}', space=sflag, size = 0x8, scoped, tag = 'scoped memory for tpu_custom_call.1']
    #allocation5 [shape = 'u8[163840]{0}', space=vmem, size = 0x28000, scoped, tag = 'input window, operand 1, single buffered']
    #allocation6 [shape = 's32[1]{0}', space=sflag, size = 0x4, scoped, tag = 'scoped memory for tpu_custom_call.1']
    #allocation7 [shape = 'u8[786432]{0}', space=vmem, size = 0xc0000, scoped, tag = 'output window, operand 0']
    %9 = vsyncpa [#allocation3], 0
    %s10 = scalar_lea.sflag [#allocation3], 1
    %11 = vsyncpa %s10, 0
    %12 = vsyncpa [#allocation6], 0
    %13 = vsyncpa [#allocation4], 0
    %s14 = scalar_lea.sflag [#allocation4], 1
    %15 = vsyncpa %s14, 0
    loop: start=0, step=1, limit=4
    $region2: #{tpu_custom_call.1} parent=1 // loop_pre_header
      _
    $region3: #{tpu_custom_call.1} parent=1 // loop_header
      %s17 = sphi 0, %s21
      %p18 = scmp.ge.s32.totalorder %s17, 4
      %s27 = sphi 0, %s29
      %s30 = sphi 0, %s27
      %s31 = sphi 0, %s30
      %s47 = sphi 0, %s31
      %s51 = sphi 0, %s51
      %s53 = sphi 0, %s51
      %s54 = sphi 0, %s53
      %s68 = sphi 0, %s54
      %s72 = sphi 0, %s72
      %s74 = sphi 0, %s72
      %s75 = sphi 0, %s74
      %s89 = sphi 0, %s75
      %s93 = sphi 0, %s93
      %s95 = sphi 0, %s93
      %s96 = sphi 0, %s95
      %s110 = sphi 0, %s96
      %s116 = sphi 0, %s118
      %s119 = sphi 0, %s116
      %s120 = sphi 0, %s119
      %s136 = sphi 0, %s120
    $region4: #{tpu_custom_call.1} parent=1 // loop_header_branch
      %20 = sbr.rel (%p18) target = $region8
    $region5: #{tpu_custom_call.1} parent=1 // loop_body
      %s22 = ssub.s32 %s17, 1
      %s23 = ssub.s32 %s17, 2
      %s24 = sadd.s32 %s17, 1
      %s25 = ssub.s32 %s17, %s24
      %p26 = scmp.eq.s32.totalorder %s25, 0
      %s28 = sadd.s32 %s27, 1
      %s29 = scalar_select %p26, %s27, %s28
      %p32 = pneg %p26
      %p33 = scmp.eq.s32.totalorder %s17, 1
      %p34 = por %p32, %p33
      %p35 = scmp.ne.s32.totalorder %s27, %s30
      %p36 = scmp.eq.s32.totalorder %s17, 0
      %p37 = por %p35, %p36
      %p38 = scmp.ne.s32.totalorder %s27, %s30
      %p39 = scmp.eq.s32.totalorder %s22, 1
      %p40 = por %p38, %p39
      %p41 = scmp.ne.s32.totalorder %s30, %s31
      %p42 = scmp.eq.s32.totalorder %s22, 0
      %p43 = por %p41, %p42
      %p44 = scmp.ne.s32.totalorder %s30, %s31
      %p45 = scmp.eq.s32.totalorder %s23, 1
      %p46 = por %p44, %p45
      %p48 = scmp.ne.s32.totalorder %s31, %s47
      %p49 = scmp.eq.s32.totalorder %s23, 0
      %p50 = por %p48, %p49
      %s52 = sadd.s32 %s51, 1
      %p55 = scmp.eq.s32.totalorder %s17, 1
      %p56 = scmp.ne.s32.totalorder %s51, %s53
      %p57 = scmp.eq.s32.totalorder %s17, 0
      %p58 = por %p56, %p57
      %p59 = scmp.ne.s32.totalorder %s51, %s53
      %p60 = scmp.eq.s32.totalorder %s22, 1
      %p61 = por %p59, %p60
      %p62 = scmp.ne.s32.totalorder %s53, %s54
      %p63 = scmp.eq.s32.totalorder %s22, 0
      %p64 = por %p62, %p63
      %p65 = scmp.ne.s32.totalorder %s53, %s54
      %p66 = scmp.eq.s32.totalorder %s23, 1
      %p67 = por %p65, %p66
      %p69 = scmp.ne.s32.totalorder %s54, %s68
      %p70 = scmp.eq.s32.totalorder %s23, 0
      %p71 = por %p69, %p70
      %s73 = sadd.s32 %s72, 1
      %p76 = scmp.eq.s32.totalorder %s17, 1
      %p77 = scmp.ne.s32.totalorder %s72, %s74
      %p78 = scmp.eq.s32.totalorder %s17, 0
      %p79 = por %p77, %p78
      %p80 = scmp.ne.s32.totalorder %s72, %s74
      %p81 = scmp.eq.s32.totalorder %s22, 1
      %p82 = por %p80, %p81
      %p83 = scmp.ne.s32.totalorder %s74, %s75
      %p84 = scmp.eq.s32.totalorder %s22, 0
      %p85 = por %p83, %p84
      %p86 = scmp.ne.s32.totalorder %s74, %s75
      %p87 = scmp.eq.s32.totalorder %s23, 1
      %p88 = por %p86, %p87
      %p90 = scmp.ne.s32.totalorder %s75, %s89
      %p91 = scmp.eq.s32.totalorder %s23, 0
      %p92 = por %p90, %p91
      %s94 = sadd.s32 %s93, 1
      %p97 = scmp.eq.s32.totalorder %s17, 1
      %p98 = scmp.ne.s32.totalorder %s93, %s95
      %p99 = scmp.eq.s32.totalorder %s17, 0
      %p100 = por %p98, %p99
      %p101 = scmp.ne.s32.totalorder %s93, %s95
      %p102 = scmp.eq.s32.totalorder %s22, 1
      %p103 = por %p101, %p102
      %p104 = scmp.ne.s32.totalorder %s95, %s96
      %p105 = scmp.eq.s32.totalorder %s22, 0
      %p106 = por %p104, %p105
      %p107 = scmp.ne.s32.totalorder %s95, %s96
      %p108 = scmp.eq.s32.totalorder %s23, 1
      %p109 = por %p107, %p108
      %p111 = scmp.ne.s32.totalorder %s96, %s110
      %p112 = scmp.eq.s32.totalorder %s23, 0
      %p113 = por %p111, %p112
      %s114 = ssub.s32 %s17, %s24
      %p115 = scmp.eq.s32.totalorder %s114, 0
      %s117 = sadd.s32 %s116, 1
      %s118 = scalar_select %p115, %s116, %s117
      %p121 = pneg %p115
      %p122 = scmp.eq.s32.totalorder %s17, 1
      %p123 = por %p121, %p122
      %p124 = scmp.ne.s32.totalorder %s116, %s119
      %p125 = scmp.eq.s32.totalorder %s17, 0
      %p126 = por %p124, %p125
      %p127 = scmp.ne.s32.totalorder %s116, %s119
      %p128 = scmp.eq.s32.totalorder %s22, 1
      %p129 = por %p127, %p128
      %p130 = scmp.ne.s32.totalorder %s119, %s120
      %p131 = scmp.eq.s32.totalorder %s22, 0
      %p132 = por %p130, %p131
      %p133 = scmp.ne.s32.totalorder %s119, %s120
      %p134 = scmp.eq.s32.totalorder %s23, 1
      %p135 = por %p133, %p134
      %p137 = scmp.ne.s32.totalorder %s120, %s136
      %p138 = scmp.eq.s32.totalorder %s23, 0
      %p139 = por %p137, %p138
      %p140 = scmp.le.s32.totalorder 1, %s17
      %p141 = scmp.lt.s32.totalorder %s17, 3
      %p142 = pnand %p140, %p141
      %p143 = pneg %p142
      // Predicated region
      $region9: #{tpu_custom_call.1} parent=5 // pred_check
        _
      $region10: #{tpu_custom_call.1} parent=5 // pred_check_branch
        %145 = sbr.rel (%p142) target = $region12
      $region11: #{tpu_custom_call.1} parent=5 // pred_region
        %s146 = ssub.s32 %s17, 1
        // Predicated region
        $region13: #{tpu_custom_call.1} parent=11 // pred_check
          %p147 = pneg %p64
        $region14: #{tpu_custom_call.1} parent=11 // pred_check_branch
          %149 = sbr.rel (%p147) target = $region16
        $region15: #{tpu_custom_call.1} parent=11 // pred_region
          %s151 = ssub.s32 5120, 5120
          %152 = vsyncadd [#allocation6], %s151
          %s153 = sshll.u32 [#allocation5], 4
          %s154 = int_to_ptr.vmem [resolvable:$true] %s153
          %159 = dma.hbm_to_vmem [thread:$0]  %s1, 5120, %s154, [#allocation6], 640, 640, 40
        $region16: #{tpu_custom_call.1} parent=11 // pred_fallthru
          _
        // Predicated region
        $region17: #{tpu_custom_call.1} parent=11 // pred_check
          %p160 = pneg %p85
        $region18: #{tpu_custom_call.1} parent=11 // pred_check_branch
          %162 = sbr.rel (%p160) target = $region20
        $region19: #{tpu_custom_call.1} parent=11 // pred_region
          _
        $region20: #{tpu_custom_call.1} parent=11 // pred_fallthru
          _
        // Predicated region
        $region21: #{tpu_custom_call.1} parent=11 // pred_check
          %p163 = pneg %p106
        $region22: #{tpu_custom_call.1} parent=11 // pred_check_branch
          %165 = sbr.rel (%p163) target = $region24
        $region23: #{tpu_custom_call.1} parent=11 // pred_region
          _
        $region24: #{tpu_custom_call.1} parent=11 // pred_fallthru
          _
      $region12: #{tpu_custom_call.1} parent=5 // pred_fallthru
        _
      %p166 = scmp.lt.s32.totalorder %s17, 2
      // Predicated region
      $region25: #{tpu_custom_call.1} parent=5 // pred_check
        %p167 = pneg %p166
      $region26: #{tpu_custom_call.1} parent=5 // pred_check_branch
        %169 = sbr.rel (%p167) target = $region28
      $region27: #{tpu_custom_call.1} parent=5 // pred_region
        // Predicated region
        $region29: #{tpu_custom_call.1} parent=27 // pred_check
          %p170 = pneg %p37
        $region30: #{tpu_custom_call.1} parent=27 // pred_check_branch
          %172 = sbr.rel (%p170) target = $region32
        $region31: #{tpu_custom_call.1} parent=27 // pred_region
          %s173 = sand.u32 %s27, 1
          %s174 = scalar_lea.sflag [#allocation3], %s173
          %s175 = sand.u32 %s27, 1
          %s176 = smul.addr %s175, 768
          %s177 = scalar_lea.vmem [#allocation2], %s176
          %s179 = ssub.s32 12288, 12288
          %180 = vsyncadd %s174, %s179
          %s181 = smul.addr %s17, 96
          %s182 = smul.addr %s181, 128
          %s183 = scalar_lea.hbm %s0, %s182
          %s184 = sshll.u32 %s177, 4
          %s185 = int_to_ptr.vmem [resolvable:$true] %s184
          %190 = dma.hbm_to_vmem [thread:$0]  %s183, 12288, %s185, %s174, 1536, 1536, 96
        $region32: #{tpu_custom_call.1} parent=27 // pred_fallthru
          _
      $region28: #{tpu_custom_call.1} parent=5 // pred_fallthru
        _
      %p191 = scmp.le.s32.totalorder 1, %s17
      %p192 = scmp.lt.s32.totalorder %s17, 3
      %p193 = pnand %p191, %p192
      %p194 = pneg %p193
      // Predicated region
      $region33: #{tpu_custom_call.1} parent=5 // pred_check
        _
      $region34: #{tpu_custom_call.1} parent=5 // pred_check_branch
        %196 = sbr.rel (%p193) target = $region36
      $region35: #{tpu_custom_call.1} parent=5 // pred_region
        %s197 = ssub.s32 %s17, 1
        %s198 = sand.u32 %s30, 1
        %s199 = scalar_lea.sflag [#allocation3], %s198
        %s200 = sand.u32 %s30, 1
        %s201 = smul.addr %s200, 768
        %s202 = scalar_lea.vmem [#allocation2], %s201
        // Predicated region
        $region37: #{tpu_custom_call.1} parent=35 // pred_check
          %p203 = pneg %p43
        $region38: #{tpu_custom_call.1} parent=35 // pred_check_branch
          %205 = sbr.rel (%p203) target = $region40
        $region39: #{tpu_custom_call.1} parent=35 // pred_region
          %206 = dma.done %s199, 12288
        $region40: #{tpu_custom_call.1} parent=35 // pred_fallthru
          _
        // Predicated region
        $region41: #{tpu_custom_call.1} parent=35 // pred_check
          %p207 = pneg %p64
        $region42: #{tpu_custom_call.1} parent=35 // pred_check_branch
          %209 = sbr.rel (%p207) target = $region44
        $region43: #{tpu_custom_call.1} parent=35 // pred_region
          %210 = dma.done [#allocation6], 5120
        $region44: #{tpu_custom_call.1} parent=35 // pred_fallthru
          _
        %s211 = sand.u32 %s30, 1
        %s212 = scalar_lea.sflag [#allocation3], %s211
        %s213 = sand.u32 %s30, 1
        %s214 = smul.addr %s213, 768
        %s215 = scalar_lea.vmem [#allocation2], %s214
        %p216 = pneg %p43
        %p217 = pneg %p40
        %p218 = pneg %p64
        %p219 = pneg %p61
        %p220 = pneg %p85
        %p221 = pneg %p82
        %p222 = pneg %p106
        %p223 = pneg %p103
        %p224 = pneg %p132
        %p225 = pneg %p129
        %s226 = sand.u32 %s119, 1
        %s227 = scalar_lea.sflag [#allocation4], %s226
        %s228 = sand.u32 %s119, 1
        %s229 = smul.addr %s228, 768
        %s230 = scalar_lea.vmem [#allocation7], %s229
        %v231 = vld [vmem:[%s202] sm:$0xff]
        %v232 = vld [vmem:[%s202 + $0x8] sm:$0xff]
        %v233 = vld [vmem:[%s202 + $0x10] sm:$0xff]
        %v234 = vld [vmem:[%s202 + $0x18] sm:$0xff]
        %v235 = vld [vmem:[%s202 + $0x20] sm:$0xff]
        %v236 = vld [vmem:[%s202 + $0x28] sm:$0xff]
        %v237 = vld [vmem:[%s202 + $0x30] sm:$0xff]
        %v238 = vld [vmem:[%s202 + $0x38] sm:$0xff]
        %v239 = vld [vmem:[%s202 + $0x40] sm:$0xff]
        %v240 = vld [vmem:[%s202 + $0x48] sm:$0xff]
        %v241 = vld [vmem:[%s202 + $0x50] sm:$0xff]
        %v242 = vld [vmem:[%s202 + $0x60] sm:$0xff]
        %v243 = vld [vmem:[%s202 + $0x68] sm:$0xff]
        %v244 = vld [vmem:[%s202 + $0x70] sm:$0xff]
        %v245 = vld [vmem:[%s202 + $0x78] sm:$0xff]
        %v246 = vld [vmem:[%s202 + $0x80] sm:$0xff]
        %v247 = vld [vmem:[%s202 + $0x88] sm:$0xff]
        %v248 = vld [vmem:[%s202 + $0x90] sm:$0xff]
        %v249 = vld [vmem:[%s202 + $0x98] sm:$0xff]
        %v250 = vld [vmem:[%s202 + $0xa0] sm:$0xff]
        %v251 = vld [vmem:[%s202 + $0xa8] sm:$0xff]
        %v252 = vld [vmem:[%s202 + $0xb0] sm:$0xff]
        %v253 = vld [vmem:[%s202 + $0xc0] sm:$0xff]
        %v254 = vld [vmem:[%s202 + $0xc8] sm:$0xff]
        %v255 = vld [vmem:[%s202 + $0xd0] sm:$0xff]
        %v256 = vld [vmem:[%s202 + $0xd8] sm:$0xff]
        %v257 = vld [vmem:[%s202 + $0xe0] sm:$0xff]
        %v258 = vld [vmem:[%s202 + $0xe8] sm:$0xff]
        %v259 = vld [vmem:[%s202 + $0xf0] sm:$0xff]
        %v260 = vld [vmem:[%s202 + $0xf8] sm:$0xff]
        %v261 = vld [vmem:[%s202 + $0x100] sm:$0xff]
        %v262 = vld [vmem:[%s202 + $0x108] sm:$0xff]
        %v263 = vld [vmem:[%s202 + $0x110] sm:$0xff]
        %v264 = vld [vmem:[%s202 + $0x120] sm:$0xff]
        %v265 = vld [vmem:[%s202 + $0x128] sm:$0xff]
        %v266 = vld [vmem:[%s202 + $0x130] sm:$0xff]
        %v267 = vld [vmem:[%s202 + $0x138] sm:$0xff]
        %v268 = vld [vmem:[%s202 + $0x140] sm:$0xff]
        %v269 = vld [vmem:[%s202 + $0x148] sm:$0xff]
        %v270 = vld [vmem:[%s202 + $0x150] sm:$0xff]
        %v271 = vld [vmem:[%s202 + $0x158] sm:$0xff]
        %v272 = vld [vmem:[%s202 + $0x160] sm:$0xff]
        %v273 = vld [vmem:[%s202 + $0x168] sm:$0xff]
        %v274 = vld [vmem:[%s202 + $0x170] sm:$0xff]
        %v275 = vld [vmem:[%s202 + $0x180] sm:$0xff]
        %v276 = vld [vmem:[%s202 + $0x188] sm:$0xff]
        %v277 = vld [vmem:[%s202 + $0x190] sm:$0xff]
        %v278 = vld [vmem:[%s202 + $0x198] sm:$0xff]
        %v279 = vld [vmem:[%s202 + $0x1a0] sm:$0xff]
        %v280 = vld [vmem:[%s202 + $0x1a8] sm:$0xff]
        %v281 = vld [vmem:[%s202 + $0x1b0] sm:$0xff]
        %v282 = vld [vmem:[%s202 + $0x1b8] sm:$0xff]
        %v283 = vld [vmem:[%s202 + $0x1c0] sm:$0xff]
        %v284 = vld [vmem:[%s202 + $0x1c8] sm:$0xff]
        %v285 = vld [vmem:[%s202 + $0x1d0] sm:$0xff]
        %v286 = vld [vmem:[%s202 + $0x1e0] sm:$0xff]
        %v287 = vld [vmem:[%s202 + $0x1e8] sm:$0xff]
        %v288 = vld [vmem:[%s202 + $0x1f0] sm:$0xff]
        %v289 = vld [vmem:[%s202 + $0x1f8] sm:$0xff]
        %v290 = vld [vmem:[%s202 + $0x200] sm:$0xff]
        %v291 = vld [vmem:[%s202 + $0x208] sm:$0xff]
        %v292 = vld [vmem:[%s202 + $0x210] sm:$0xff]
        %v293 = vld [vmem:[%s202 + $0x218] sm:$0xff]
        %v294 = vld [vmem:[%s202 + $0x220] sm:$0xff]
        %v295 = vld [vmem:[%s202 + $0x228] sm:$0xff]
        %v296 = vld [vmem:[%s202 + $0x230] sm:$0xff]
        %v297 = vld [vmem:[%s202 + $0x240] sm:$0xff]
        %v298 = vld [vmem:[%s202 + $0x248] sm:$0xff]
        %v299 = vld [vmem:[%s202 + $0x250] sm:$0xff]
        %v300 = vld [vmem:[%s202 + $0x258] sm:$0xff]
        %v301 = vld [vmem:[%s202 + $0x260] sm:$0xff]
        %v302 = vld [vmem:[%s202 + $0x268] sm:$0xff]
        %v303 = vld [vmem:[%s202 + $0x270] sm:$0xff]
        %v304 = vld [vmem:[%s202 + $0x278] sm:$0xff]
        %v305 = vld [vmem:[%s202 + $0x280] sm:$0xff]
        %v306 = vld [vmem:[%s202 + $0x288] sm:$0xff]
        %v307 = vld [vmem:[%s202 + $0x290] sm:$0xff]
        %v308 = vld [vmem:[%s202 + $0x2a0] sm:$0xff]
        %v309 = vld [vmem:[%s202 + $0x2a8] sm:$0xff]
        %v310 = vld [vmem:[%s202 + $0x2b0] sm:$0xff]
        %v311 = vld [vmem:[%s202 + $0x2b8] sm:$0xff]
        %v312 = vld [vmem:[%s202 + $0x2c0] sm:$0xff]
        %v313 = vld [vmem:[%s202 + $0x2c8] sm:$0xff]
        %v314 = vld [vmem:[%s202 + $0x2d0] sm:$0xff]
        %v315 = vld [vmem:[%s202 + $0x2d8] sm:$0xff]
        %v316 = vld [vmem:[%s202 + $0x2e0] sm:$0xff]
        %v317 = vld [vmem:[%s202 + $0x2e8] sm:$0xff]
        %v318 = vld [vmem:[%s202 + $0x2f0] sm:$0xff]
        %v319 = vld [vmem:[%s202 + $0x8] sm:$0xff]
        %v320 = vld [vmem:[%s202 + $0x10] sm:$0xff]
        %v321 = vld [vmem:[%s202 + $0x18] sm:$0xff]
        %v322 = vld [vmem:[%s202 + $0x20] sm:$0xff]
        %v323 = vld [vmem:[%s202 + $0x28] sm:$0xff]
        %v324 = vld [vmem:[%s202 + $0x30] sm:$0xff]
        %v325 = vld [vmem:[%s202 + $0x38] sm:$0xff]
        %v326 = vld [vmem:[%s202 + $0x40] sm:$0xff]
        %v327 = vld [vmem:[%s202 + $0x48] sm:$0xff]
        %v328 = vld [vmem:[%s202 + $0x50] sm:$0xff]
        %v329 = vld [vmem:[%s202 + $0x58] sm:$0xff]
        %v330 = vld [vmem:[%s202 + $0x68] sm:$0xff]
        %v331 = vld [vmem:[%s202 + $0x70] sm:$0xff]
        %v332 = vld [vmem:[%s202 + $0x78] sm:$0xff]
        %v333 = vld [vmem:[%s202 + $0x80] sm:$0xff]
        %v334 = vld [vmem:[%s202 + $0x88] sm:$0xff]
        %v335 = vld [vmem:[%s202 + $0x90] sm:$0xff]
        %v336 = vld [vmem:[%s202 + $0x98] sm:$0xff]
        %v337 = vld [vmem:[%s202 + $0xa0] sm:$0xff]
        %v338 = vld [vmem:[%s202 + $0xa8] sm:$0xff]
        %v339 = vld [vmem:[%s202 + $0xb0] sm:$0xff]
        %v340 = vld [vmem:[%s202 + $0xb8] sm:$0xff]
        %v341 = vld [vmem:[%s202 + $0xc8] sm:$0xff]
        %v342 = vld [vmem:[%s202 + $0xd0] sm:$0xff]
        %v343 = vld [vmem:[%s202 + $0xd8] sm:$0xff]
        %v344 = vld [vmem:[%s202 + $0xe0] sm:$0xff]
        %v345 = vld [vmem:[%s202 + $0xe8] sm:$0xff]
        %v346 = vld [vmem:[%s202 + $0xf0] sm:$0xff]
        %v347 = vld [vmem:[%s202 + $0xf8] sm:$0xff]
        %v348 = vld [vmem:[%s202 + $0x100] sm:$0xff]
        %v349 = vld [vmem:[%s202 + $0x108] sm:$0xff]
        %v350 = vld [vmem:[%s202 + $0x110] sm:$0xff]
        %v351 = vld [vmem:[%s202 + $0x118] sm:$0xff]
        %v352 = vld [vmem:[%s202 + $0x128] sm:$0xff]
        %v353 = vld [vmem:[%s202 + $0x130] sm:$0xff]
        %v354 = vld [vmem:[%s202 + $0x138] sm:$0xff]
        %v355 = vld [vmem:[%s202 + $0x140] sm:$0xff]
        %v356 = vld [vmem:[%s202 + $0x148] sm:$0xff]
        %v357 = vld [vmem:[%s202 + $0x150] sm:$0xff]
        %v358 = vld [vmem:[%s202 + $0x158] sm:$0xff]
        %v359 = vld [vmem:[%s202 + $0x160] sm:$0xff]
        %v360 = vld [vmem:[%s202 + $0x168] sm:$0xff]
        %v361 = vld [vmem:[%s202 + $0x170] sm:$0xff]
        %v362 = vld [vmem:[%s202 + $0x178] sm:$0xff]
        %v363 = vld [vmem:[%s202 + $0x188] sm:$0xff]
        %v364 = vld [vmem:[%s202 + $0x190] sm:$0xff]
        %v365 = vld [vmem:[%s202 + $0x198] sm:$0xff]
        %v366 = vld [vmem:[%s202 + $0x1a0] sm:$0xff]
        %v367 = vld [vmem:[%s202 + $0x1a8] sm:$0xff]
        %v368 = vld [vmem:[%s202 + $0x1b0] sm:$0xff]
        %v369 = vld [vmem:[%s202 + $0x1b8] sm:$0xff]
        %v370 = vld [vmem:[%s202 + $0x1c0] sm:$0xff]
        %v371 = vld [vmem:[%s202 + $0x1c8] sm:$0xff]
        %v372 = vld [vmem:[%s202 + $0x1d0] sm:$0xff]
        %v373 = vld [vmem:[%s202 + $0x1d8] sm:$0xff]
        %v374 = vld [vmem:[%s202 + $0x1e8] sm:$0xff]
        %v375 = vld [vmem:[%s202 + $0x1f0] sm:$0xff]
        %v376 = vld [vmem:[%s202 + $0x1f8] sm:$0xff]
        %v377 = vld [vmem:[%s202 + $0x200] sm:$0xff]
        %v378 = vld [vmem:[%s202 + $0x208] sm:$0xff]
        %v379 = vld [vmem:[%s202 + $0x210] sm:$0xff]
        %v380 = vld [vmem:[%s202 + $0x218] sm:$0xff]
        %v381 = vld [vmem:[%s202 + $0x220] sm:$0xff]
        %v382 = vld [vmem:[%s202 + $0x228] sm:$0xff]
        %v383 = vld [vmem:[%s202 + $0x230] sm:$0xff]
        %v384 = vld [vmem:[%s202 + $0x238] sm:$0xff]
        %v385 = vld [vmem:[%s202 + $0x248] sm:$0xff]
        %v386 = vld [vmem:[%s202 + $0x250] sm:$0xff]
        %v387 = vld [vmem:[%s202 + $0x258] sm:$0xff]
        %v388 = vld [vmem:[%s202 + $0x260] sm:$0xff]
        %v389 = vld [vmem:[%s202 + $0x268] sm:$0xff]
        %v390 = vld [vmem:[%s202 + $0x270] sm:$0xff]
        %v391 = vld [vmem:[%s202 + $0x278] sm:$0xff]
        %v392 = vld [vmem:[%s202 + $0x280] sm:$0xff]
        %v393 = vld [vmem:[%s202 + $0x288] sm:$0xff]
        %v394 = vld [vmem:[%s202 + $0x290] sm:$0xff]
        %v395 = vld [vmem:[%s202 + $0x298] sm:$0xff]
        %v396 = vld [vmem:[%s202 + $0x2a8] sm:$0xff]
        %v397 = vld [vmem:[%s202 + $0x2b0] sm:$0xff]
        %v398 = vld [vmem:[%s202 + $0x2b8] sm:$0xff]
        %v399 = vld [vmem:[%s202 + $0x2c0] sm:$0xff]
        %v400 = vld [vmem:[%s202 + $0x2c8] sm:$0xff]
        %v401 = vld [vmem:[%s202 + $0x2d0] sm:$0xff]
        %v402 = vld [vmem:[%s202 + $0x2d8] sm:$0xff]
        %v403 = vld [vmem:[%s202 + $0x2e0] sm:$0xff]
        %v404 = vld [vmem:[%s202 + $0x2e8] sm:$0xff]
        %v405 = vld [vmem:[%s202 + $0x2f0] sm:$0xff]
        %v406 = vld [vmem:[%s202 + $0x2f8] sm:$0xff]
        %495 = vrot.lane.b32.xlu0 %v231, 127
        %v496 = vpop.permute.xlu0 %495
        %497 = vrot.lane.b32.xlu0 %v232, 127
        %v498 = vpop.permute.xlu0 %497
        %499 = vrot.lane.b32.xlu0 %v233, 127
        %v500 = vpop.permute.xlu0 %499
        %501 = vrot.lane.b32.xlu0 %v234, 127
        %v502 = vpop.permute.xlu0 %501
        %503 = vrot.lane.b32.xlu0 %v235, 127
        %v504 = vpop.permute.xlu0 %503
        %505 = vrot.lane.b32.xlu0 %v236, 127
        %v506 = vpop.permute.xlu0 %505
        %507 = vrot.lane.b32.xlu0 %v237, 127
        %v508 = vpop.permute.xlu0 %507
        %509 = vrot.lane.b32.xlu0 %v238, 127
        %v510 = vpop.permute.xlu0 %509
        %511 = vrot.lane.b32.xlu0 %v239, 127
        %v512 = vpop.permute.xlu0 %511
        %513 = vrot.lane.b32.xlu0 %v240, 127
        %v514 = vpop.permute.xlu0 %513
        %515 = vrot.lane.b32.xlu0 %v241, 127
        %v516 = vpop.permute.xlu0 %515
        %517 = vrot.lane.b32.xlu0 %v242, 127
        %v518 = vpop.permute.xlu0 %517
        %519 = vrot.lane.b32.xlu0 %v243, 127
        %v520 = vpop.permute.xlu0 %519
        %521 = vrot.lane.b32.xlu0 %v244, 127
        %v522 = vpop.permute.xlu0 %521
        %523 = vrot.lane.b32.xlu0 %v245, 127
        %v524 = vpop.permute.xlu0 %523
        %525 = vrot.lane.b32.xlu0 %v246, 127
        %v526 = vpop.permute.xlu0 %525
        %527 = vrot.lane.b32.xlu0 %v247, 127
        %v528 = vpop.permute.xlu0 %527
        %529 = vrot.lane.b32.xlu0 %v248, 127
        %v530 = vpop.permute.xlu0 %529
        %531 = vrot.lane.b32.xlu0 %v249, 127
        %v532 = vpop.permute.xlu0 %531
        %533 = vrot.lane.b32.xlu0 %v250, 127
        %v534 = vpop.permute.xlu0 %533
        %535 = vrot.lane.b32.xlu0 %v251, 127
        %v536 = vpop.permute.xlu0 %535
        %537 = vrot.lane.b32.xlu0 %v252, 127
        %v538 = vpop.permute.xlu0 %537
        %539 = vrot.lane.b32.xlu0 %v253, 127
        %v540 = vpop.permute.xlu0 %539
        %541 = vrot.lane.b32.xlu0 %v254, 127
        %v542 = vpop.permute.xlu0 %541
        %543 = vrot.lane.b32.xlu0 %v255, 127
        %v544 = vpop.permute.xlu0 %543
        %545 = vrot.lane.b32.xlu0 %v256, 127
        %v546 = vpop.permute.xlu0 %545
        %547 = vrot.lane.b32.xlu0 %v257, 127
        %v548 = vpop.permute.xlu0 %547
        %549 = vrot.lane.b32.xlu0 %v258, 127
        %v550 = vpop.permute.xlu0 %549
        %551 = vrot.lane.b32.xlu0 %v259, 127
        %v552 = vpop.permute.xlu0 %551
        %553 = vrot.lane.b32.xlu0 %v260, 127
        %v554 = vpop.permute.xlu0 %553
        %555 = vrot.lane.b32.xlu0 %v261, 127
        %v556 = vpop.permute.xlu0 %555
        %557 = vrot.lane.b32.xlu0 %v262, 127
        %v558 = vpop.permute.xlu0 %557
        %559 = vrot.lane.b32.xlu0 %v263, 127
        %v560 = vpop.permute.xlu0 %559
        %561 = vrot.lane.b32.xlu0 %v264, 127
        %v562 = vpop.permute.xlu0 %561
        %563 = vrot.lane.b32.xlu0 %v265, 127
        %v564 = vpop.permute.xlu0 %563
        %565 = vrot.lane.b32.xlu0 %v266, 127
        %v566 = vpop.permute.xlu0 %565
        %567 = vrot.lane.b32.xlu0 %v267, 127
        %v568 = vpop.permute.xlu0 %567
        %569 = vrot.lane.b32.xlu0 %v268, 127
        %v570 = vpop.permute.xlu0 %569
        %571 = vrot.lane.b32.xlu0 %v269, 127
        %v572 = vpop.permute.xlu0 %571
        %573 = vrot.lane.b32.xlu0 %v270, 127
        %v574 = vpop.permute.xlu0 %573
        %575 = vrot.lane.b32.xlu0 %v271, 127
        %v576 = vpop.permute.xlu0 %575
        %577 = vrot.lane.b32.xlu0 %v272, 127
        %v578 = vpop.permute.xlu0 %577
        %579 = vrot.lane.b32.xlu0 %v273, 127
        %v580 = vpop.permute.xlu0 %579
        %581 = vrot.lane.b32.xlu0 %v274, 127
        %v582 = vpop.permute.xlu0 %581
        %583 = vrot.lane.b32.xlu0 %v275, 127
        %v584 = vpop.permute.xlu0 %583
        %585 = vrot.lane.b32.xlu0 %v276, 127
        %v586 = vpop.permute.xlu0 %585
        %587 = vrot.lane.b32.xlu0 %v277, 127
        %v588 = vpop.permute.xlu0 %587
        %589 = vrot.lane.b32.xlu0 %v278, 127
        %v590 = vpop.permute.xlu0 %589
        %591 = vrot.lane.b32.xlu0 %v279, 127
        %v592 = vpop.permute.xlu0 %591
        %593 = vrot.lane.b32.xlu0 %v280, 127
        %v594 = vpop.permute.xlu0 %593
        %595 = vrot.lane.b32.xlu0 %v281, 127
        %v596 = vpop.permute.xlu0 %595
        %597 = vrot.lane.b32.xlu0 %v282, 127
        %v598 = vpop.permute.xlu0 %597
        %599 = vrot.lane.b32.xlu0 %v283, 127
        %v600 = vpop.permute.xlu0 %599
        %601 = vrot.lane.b32.xlu0 %v284, 127
        %v602 = vpop.permute.xlu0 %601
        %603 = vrot.lane.b32.xlu0 %v285, 127
        %v604 = vpop.permute.xlu0 %603
        %605 = vrot.lane.b32.xlu0 %v286, 127
        %v606 = vpop.permute.xlu0 %605
        %607 = vrot.lane.b32.xlu0 %v287, 127
        %v608 = vpop.permute.xlu0 %607
        %609 = vrot.lane.b32.xlu0 %v288, 127
        %v610 = vpop.permute.xlu0 %609
        %611 = vrot.lane.b32.xlu0 %v289, 127
        %v612 = vpop.permute.xlu0 %611
        %613 = vrot.lane.b32.xlu0 %v290, 127
        %v614 = vpop.permute.xlu0 %613
        %615 = vrot.lane.b32.xlu0 %v291, 127
        %v616 = vpop.permute.xlu0 %615
        %617 = vrot.lane.b32.xlu0 %v292, 127
        %v618 = vpop.permute.xlu0 %617
        %619 = vrot.lane.b32.xlu0 %v293, 127
        %v620 = vpop.permute.xlu0 %619
        %621 = vrot.lane.b32.xlu0 %v294, 127
        %v622 = vpop.permute.xlu0 %621
        %623 = vrot.lane.b32.xlu0 %v295, 127
        %v624 = vpop.permute.xlu0 %623
        %625 = vrot.lane.b32.xlu0 %v296, 127
        %v626 = vpop.permute.xlu0 %625
        %627 = vrot.lane.b32.xlu0 %v297, 127
        %v628 = vpop.permute.xlu0 %627
        %629 = vrot.lane.b32.xlu0 %v298, 127
        %v630 = vpop.permute.xlu0 %629
        %631 = vrot.lane.b32.xlu0 %v299, 127
        %v632 = vpop.permute.xlu0 %631
        %633 = vrot.lane.b32.xlu0 %v300, 127
        %v634 = vpop.permute.xlu0 %633
        %635 = vrot.lane.b32.xlu0 %v301, 127
        %v636 = vpop.permute.xlu0 %635
        %637 = vrot.lane.b32.xlu0 %v302, 127
        %v638 = vpop.permute.xlu0 %637
        %639 = vrot.lane.b32.xlu0 %v303, 127
        %v640 = vpop.permute.xlu0 %639
        %641 = vrot.lane.b32.xlu0 %v304, 127
        %v642 = vpop.permute.xlu0 %641
        %643 = vrot.lane.b32.xlu0 %v305, 127
        %v644 = vpop.permute.xlu0 %643
        %645 = vrot.lane.b32.xlu0 %v306, 127
        %v646 = vpop.permute.xlu0 %645
        %647 = vrot.lane.b32.xlu0 %v307, 127
        %v648 = vpop.permute.xlu0 %647
        %649 = vrot.lane.b32.xlu0 %v308, 127
        %v650 = vpop.permute.xlu0 %649
        %651 = vrot.lane.b32.xlu0 %v309, 127
        %v652 = vpop.permute.xlu0 %651
        %653 = vrot.lane.b32.xlu0 %v310, 127
        %v654 = vpop.permute.xlu0 %653
        %655 = vrot.lane.b32.xlu0 %v311, 127
        %v656 = vpop.permute.xlu0 %655
        %657 = vrot.lane.b32.xlu0 %v312, 127
        %v658 = vpop.permute.xlu0 %657
        %659 = vrot.lane.b32.xlu0 %v313, 127
        %v660 = vpop.permute.xlu0 %659
        %661 = vrot.lane.b32.xlu0 %v314, 127
        %v662 = vpop.permute.xlu0 %661
        %663 = vrot.lane.b32.xlu0 %v315, 127
        %v664 = vpop.permute.xlu0 %663
        %665 = vrot.lane.b32.xlu0 %v316, 127
        %v666 = vpop.permute.xlu0 %665
        %667 = vrot.lane.b32.xlu0 %v317, 127
        %v668 = vpop.permute.xlu0 %667
        %669 = vrot.lane.b32.xlu0 %v318, 127
        %v670 = vpop.permute.xlu0 %669
        %vm671 = vcmask 1039360
        %v672 = vsel %vm671, %v496, %v498
        %v673 = vsel %vm671, %v498, %v500
        %v674 = vsel %vm671, %v500, %v502
        %v675 = vsel %vm671, %v502, %v504
        %v676 = vsel %vm671, %v504, %v506
        %v677 = vsel %vm671, %v506, %v508
        %v678 = vsel %vm671, %v508, %v510
        %v679 = vsel %vm671, %v510, %v512
        %v680 = vsel %vm671, %v512, %v514
        %v681 = vsel %vm671, %v514, %v516
        %v682 = vsel %vm671, %v518, %v520
        %v683 = vsel %vm671, %v520, %v522
        %v684 = vsel %vm671, %v522, %v524
        %v685 = vsel %vm671, %v524, %v526
        %v686 = vsel %vm671, %v526, %v528
        %v687 = vsel %vm671, %v528, %v530
        %v688 = vsel %vm671, %v530, %v532
        %v689 = vsel %vm671, %v532, %v534
        %v690 = vsel %vm671, %v534, %v536
        %v691 = vsel %vm671, %v536, %v538
        %v692 = vsel %vm671, %v540, %v542
        %v693 = vsel %vm671, %v542, %v544
        %v694 = vsel %vm671, %v544, %v546
        %v695 = vsel %vm671, %v546, %v548
        %v696 = vsel %vm671, %v548, %v550
        %v697 = vsel %vm671, %v550, %v552
        %v698 = vsel %vm671, %v552, %v554
        %v699 = vsel %vm671, %v554, %v556
        %v700 = vsel %vm671, %v556, %v558
        %v701 = vsel %vm671, %v558, %v560
        %v702 = vsel %vm671, %v562, %v564
        %v703 = vsel %vm671, %v564, %v566
        %v704 = vsel %vm671, %v566, %v568
        %v705 = vsel %vm671, %v568, %v570
        %v706 = vsel %vm671, %v570, %v572
        %v707 = vsel %vm671, %v572, %v574
        %v708 = vsel %vm671, %v574, %v576
        %v709 = vsel %vm671, %v576, %v578
        %v710 = vsel %vm671, %v578, %v580
        %v711 = vsel %vm671, %v580, %v582
        %v712 = vsel %vm671, %v584, %v586
        %v713 = vsel %vm671, %v586, %v588
        %v714 = vsel %vm671, %v588, %v590
        %v715 = vsel %vm671, %v590, %v592
        %v716 = vsel %vm671, %v592, %v594
        %v717 = vsel %vm671, %v594, %v596
        %v718 = vsel %vm671, %v596, %v598
        %v719 = vsel %vm671, %v598, %v600
        %v720 = vsel %vm671, %v600, %v602
        %v721 = vsel %vm671, %v602, %v604
        %v722 = vsel %vm671, %v606, %v608
        %v723 = vsel %vm671, %v608, %v610
        %v724 = vsel %vm671, %v610, %v612
        %v725 = vsel %vm671, %v612, %v614
        %v726 = vsel %vm671, %v614, %v616
        %v727 = vsel %vm671, %v616, %v618
        %v728 = vsel %vm671, %v618, %v620
        %v729 = vsel %vm671, %v620, %v622
        %v730 = vsel %vm671, %v622, %v624
        %v731 = vsel %vm671, %v624, %v626
        %v732 = vsel %vm671, %v628, %v630
        %v733 = vsel %vm671, %v630, %v632
        %v734 = vsel %vm671, %v632, %v634
        %v735 = vsel %vm671, %v634, %v636
        %v736 = vsel %vm671, %v636, %v638
        %v737 = vsel %vm671, %v638, %v640
        %v738 = vsel %vm671, %v640, %v642
        %v739 = vsel %vm671, %v642, %v644
        %v740 = vsel %vm671, %v644, %v646
        %v741 = vsel %vm671, %v646, %v648
        %v742 = vsel %vm671, %v650, %v652
        %v743 = vsel %vm671, %v652, %v654
        %v744 = vsel %vm671, %v654, %v656
        %v745 = vsel %vm671, %v656, %v658
        %v746 = vsel %vm671, %v658, %v660
        %v747 = vsel %vm671, %v660, %v662
        %v748 = vsel %vm671, %v662, %v664
        %v749 = vsel %vm671, %v664, %v666
        %v750 = vsel %vm671, %v666, %v668
        %v751 = vsel %vm671, %v668, %v670
        %752 = vrot.lane.b32.xlu0 %v231, 126
        %v753 = vpop.permute.xlu0 %752
        %754 = vrot.lane.b32.xlu0 %v232, 126
        %v755 = vpop.permute.xlu0 %754
        %756 = vrot.lane.b32.xlu0 %v233, 126
        %v757 = vpop.permute.xlu0 %756
        %758 = vrot.lane.b32.xlu0 %v234, 126
        %v759 = vpop.permute.xlu0 %758
        %760 = vrot.lane.b32.xlu0 %v235, 126
        %v761 = vpop.permute.xlu0 %760
        %762 = vrot.lane.b32.xlu0 %v236, 126
        %v763 = vpop.permute.xlu0 %762
        %764 = vrot.lane.b32.xlu0 %v237, 126
        %v765 = vpop.permute.xlu0 %764
        %766 = vrot.lane.b32.xlu0 %v238, 126
        %v767 = vpop.permute.xlu0 %766
        %768 = vrot.lane.b32.xlu0 %v239, 126
        %v769 = vpop.permute.xlu0 %768
        %770 = vrot.lane.b32.xlu0 %v240, 126
        %v771 = vpop.permute.xlu0 %770
        %772 = vrot.lane.b32.xlu0 %v241, 126
        %v773 = vpop.permute.xlu0 %772
        %774 = vrot.lane.b32.xlu0 %v242, 126
        %v775 = vpop.permute.xlu0 %774
        %776 = vrot.lane.b32.xlu0 %v243, 126
        %v777 = vpop.permute.xlu0 %776
        %778 = vrot.lane.b32.xlu0 %v244, 126
        %v779 = vpop.permute.xlu0 %778
        %780 = vrot.lane.b32.xlu0 %v245, 126
        %v781 = vpop.permute.xlu0 %780
        %782 = vrot.lane.b32.xlu0 %v246, 126
        %v783 = vpop.permute.xlu0 %782
        %784 = vrot.lane.b32.xlu0 %v247, 126
        %v785 = vpop.permute.xlu0 %784
        %786 = vrot.lane.b32.xlu0 %v248, 126
        %v787 = vpop.permute.xlu0 %786
        %788 = vrot.lane.b32.xlu0 %v249, 126
        %v789 = vpop.permute.xlu0 %788
        %790 = vrot.lane.b32.xlu0 %v250, 126
        %v791 = vpop.permute.xlu0 %790
        %792 = vrot.lane.b32.xlu0 %v251, 126
        %v793 = vpop.permute.xlu0 %792
        %794 = vrot.lane.b32.xlu0 %v252, 126
        %v795 = vpop.permute.xlu0 %794
        %796 = vrot.lane.b32.xlu0 %v253, 126
        %v797 = vpop.permute.xlu0 %796
        %798 = vrot.lane.b32.xlu0 %v254, 126
        %v799 = vpop.permute.xlu0 %798
        %800 = vrot.lane.b32.xlu0 %v255, 126
        %v801 = vpop.permute.xlu0 %800
        %802 = vrot.lane.b32.xlu0 %v256, 126
        %v803 = vpop.permute.xlu0 %802
        %804 = vrot.lane.b32.xlu0 %v257, 126
        %v805 = vpop.permute.xlu0 %804
        %806 = vrot.lane.b32.xlu0 %v258, 126
        %v807 = vpop.permute.xlu0 %806
        %808 = vrot.lane.b32.xlu0 %v259, 126
        %v809 = vpop.permute.xlu0 %808
        %810 = vrot.lane.b32.xlu0 %v260, 126
        %v811 = vpop.permute.xlu0 %810
        %812 = vrot.lane.b32.xlu0 %v261, 126
        %v813 = vpop.permute.xlu0 %812
        %814 = vrot.lane.b32.xlu0 %v262, 126
        %v815 = vpop.permute.xlu0 %814
        %816 = vrot.lane.b32.xlu0 %v263, 126
        %v817 = vpop.permute.xlu0 %816
        %818 = vrot.lane.b32.xlu0 %v264, 126
        %v819 = vpop.permute.xlu0 %818
        %820 = vrot.lane.b32.xlu0 %v265, 126
        %v821 = vpop.permute.xlu0 %820
        %822 = vrot.lane.b32.xlu0 %v266, 126
        %v823 = vpop.permute.xlu0 %822
        %824 = vrot.lane.b32.xlu0 %v267, 126
        %v825 = vpop.permute.xlu0 %824
        %826 = vrot.lane.b32.xlu0 %v268, 126
        %v827 = vpop.permute.xlu0 %826
        %828 = vrot.lane.b32.xlu0 %v269, 126
        %v829 = vpop.permute.xlu0 %828
        %830 = vrot.lane.b32.xlu0 %v270, 126
        %v831 = vpop.permute.xlu0 %830
        %832 = vrot.lane.b32.xlu0 %v271, 126
        %v833 = vpop.permute.xlu0 %832
        %834 = vrot.lane.b32.xlu0 %v272, 126
        %v835 = vpop.permute.xlu0 %834
        %836 = vrot.lane.b32.xlu0 %v273, 126
        %v837 = vpop.permute.xlu0 %836
        %838 = vrot.lane.b32.xlu0 %v274, 126
        %v839 = vpop.permute.xlu0 %838
        %840 = vrot.lane.b32.xlu0 %v275, 126
        %v841 = vpop.permute.xlu0 %840
        %842 = vrot.lane.b32.xlu0 %v276, 126
        %v843 = vpop.permute.xlu0 %842
        %844 = vrot.lane.b32.xlu0 %v277, 126
        %v845 = vpop.permute.xlu0 %844
        %846 = vrot.lane.b32.xlu0 %v278, 126
        %v847 = vpop.permute.xlu0 %846
        %848 = vrot.lane.b32.xlu0 %v279, 126
        %v849 = vpop.permute.xlu0 %848
        %850 = vrot.lane.b32.xlu0 %v280, 126
        %v851 = vpop.permute.xlu0 %850
        %852 = vrot.lane.b32.xlu0 %v281, 126
        %v853 = vpop.permute.xlu0 %852
        %854 = vrot.lane.b32.xlu0 %v282, 126
        %v855 = vpop.permute.xlu0 %854
        %856 = vrot.lane.b32.xlu0 %v283, 126
        %v857 = vpop.permute.xlu0 %856
        %858 = vrot.lane.b32.xlu0 %v284, 126
        %v859 = vpop.permute.xlu0 %858
        %860 = vrot.lane.b32.xlu0 %v285, 126
        %v861 = vpop.permute.xlu0 %860
        %862 = vrot.lane.b32.xlu0 %v286, 126
        %v863 = vpop.permute.xlu0 %862
        %864 = vrot.lane.b32.xlu0 %v287, 126
        %v865 = vpop.permute.xlu0 %864
        %866 = vrot.lane.b32.xlu0 %v288, 126
        %v867 = vpop.permute.xlu0 %866
        %868 = vrot.lane.b32.xlu0 %v289, 126
        %v869 = vpop.permute.xlu0 %868
        %870 = vrot.lane.b32.xlu0 %v290, 126
        %v871 = vpop.permute.xlu0 %870
        %872 = vrot.lane.b32.xlu0 %v291, 126
        %v873 = vpop.permute.xlu0 %872
        %874 = vrot.lane.b32.xlu0 %v292, 126
        %v875 = vpop.permute.xlu0 %874
        %876 = vrot.lane.b32.xlu0 %v293, 126
        %v877 = vpop.permute.xlu0 %876
        %878 = vrot.lane.b32.xlu0 %v294, 126
        %v879 = vpop.permute.xlu0 %878
        %880 = vrot.lane.b32.xlu0 %v295, 126
        %v881 = vpop.permute.xlu0 %880
        %882 = vrot.lane.b32.xlu0 %v296, 126
        %v883 = vpop.permute.xlu0 %882
        %884 = vrot.lane.b32.xlu0 %v297, 126
        %v885 = vpop.permute.xlu0 %884
        %886 = vrot.lane.b32.xlu0 %v298, 126
        %v887 = vpop.permute.xlu0 %886
        %888 = vrot.lane.b32.xlu0 %v299, 126
        %v889 = vpop.permute.xlu0 %888
        %890 = vrot.lane.b32.xlu0 %v300, 126
        %v891 = vpop.permute.xlu0 %890
        %892 = vrot.lane.b32.xlu0 %v301, 126
        %v893 = vpop.permute.xlu0 %892
        %894 = vrot.lane.b32.xlu0 %v302, 126
        %v895 = vpop.permute.xlu0 %894
        %896 = vrot.lane.b32.xlu0 %v303, 126
        %v897 = vpop.permute.xlu0 %896
        %898 = vrot.lane.b32.xlu0 %v304, 126
        %v899 = vpop.permute.xlu0 %898
        %900 = vrot.lane.b32.xlu0 %v305, 126
        %v901 = vpop.permute.xlu0 %900
        %902 = vrot.lane.b32.xlu0 %v306, 126
        %v903 = vpop.permute.xlu0 %902
        %904 = vrot.lane.b32.xlu0 %v307, 126
        %v905 = vpop.permute.xlu0 %904
        %906 = vrot.lane.b32.xlu0 %v308, 126
        %v907 = vpop.permute.xlu0 %906
        %908 = vrot.lane.b32.xlu0 %v309, 126
        %v909 = vpop.permute.xlu0 %908
        %910 = vrot.lane.b32.xlu0 %v310, 126
        %v911 = vpop.permute.xlu0 %910
        %912 = vrot.lane.b32.xlu0 %v311, 126
        %v913 = vpop.permute.xlu0 %912
        %914 = vrot.lane.b32.xlu0 %v312, 126
        %v915 = vpop.permute.xlu0 %914
        %916 = vrot.lane.b32.xlu0 %v313, 126
        %v917 = vpop.permute.xlu0 %916
        %918 = vrot.lane.b32.xlu0 %v314, 126
        %v919 = vpop.permute.xlu0 %918
        %920 = vrot.lane.b32.xlu0 %v315, 126
        %v921 = vpop.permute.xlu0 %920
        %922 = vrot.lane.b32.xlu0 %v316, 126
        %v923 = vpop.permute.xlu0 %922
        %924 = vrot.lane.b32.xlu0 %v317, 126
        %v925 = vpop.permute.xlu0 %924
        %926 = vrot.lane.b32.xlu0 %v318, 126
        %v927 = vpop.permute.xlu0 %926
        %vm928 = vcmask 1031168
        %v929 = vsel %vm928, %v753, %v755
        %v930 = vsel %vm928, %v755, %v757
        %v931 = vsel %vm928, %v757, %v759
        %v932 = vsel %vm928, %v759, %v761
        %v933 = vsel %vm928, %v761, %v763
        %v934 = vsel %vm928, %v763, %v765
        %v935 = vsel %vm928, %v765, %v767
        %v936 = vsel %vm928, %v767, %v769
        %v937 = vsel %vm928, %v769, %v771
        %v938 = vsel %vm928, %v771, %v773
        %v939 = vsel %vm928, %v775, %v777
        %v940 = vsel %vm928, %v777, %v779
        %v941 = vsel %vm928, %v779, %v781
        %v942 = vsel %vm928, %v781, %v783
        %v943 = vsel %vm928, %v783, %v785
        %v944 = vsel %vm928, %v785, %v787
        %v945 = vsel %vm928, %v787, %v789
        %v946 = vsel %vm928, %v789, %v791
        %v947 = vsel %vm928, %v791, %v793
        %v948 = vsel %vm928, %v793, %v795
        %v949 = vsel %vm928, %v797, %v799
        %v950 = vsel %vm928, %v799, %v801
        %v951 = vsel %vm928, %v801, %v803
        %v952 = vsel %vm928, %v803, %v805
        %v953 = vsel %vm928, %v805, %v807
        %v954 = vsel %vm928, %v807, %v809
        %v955 = vsel %vm928, %v809, %v811
        %v956 = vsel %vm928, %v811, %v813
        %v957 = vsel %vm928, %v813, %v815
        %v958 = vsel %vm928, %v815, %v817
        %v959 = vsel %vm928, %v819, %v821
        %v960 = vsel %vm928, %v821, %v823
        %v961 = vsel %vm928, %v823, %v825
        %v962 = vsel %vm928, %v825, %v827
        %v963 = vsel %vm928, %v827, %v829
        %v964 = vsel %vm928, %v829, %v831
        %v965 = vsel %vm928, %v831, %v833
        %v966 = vsel %vm928, %v833, %v835
        %v967 = vsel %vm928, %v835, %v837
        %v968 = vsel %vm928, %v837, %v839
        %v969 = vsel %vm928, %v841, %v843
        %v970 = vsel %vm928, %v843, %v845
        %v971 = vsel %vm928, %v845, %v847
        %v972 = vsel %vm928, %v847, %v849
        %v973 = vsel %vm928, %v849, %v851
        %v974 = vsel %vm928, %v851, %v853
        %v975 = vsel %vm928, %v853, %v855
        %v976 = vsel %vm928, %v855, %v857
        %v977 = vsel %vm928, %v857, %v859
        %v978 = vsel %vm928, %v859, %v861
        %v979 = vsel %vm928, %v863, %v865
        %v980 = vsel %vm928, %v865, %v867
        %v981 = vsel %vm928, %v867, %v869
        %v982 = vsel %vm928, %v869, %v871
        %v983 = vsel %vm928, %v871, %v873
        %v984 = vsel %vm928, %v873, %v875
        %v985 = vsel %vm928, %v875, %v877
        %v986 = vsel %vm928, %v877, %v879
        %v987 = vsel %vm928, %v879, %v881
        %v988 = vsel %vm928, %v881, %v883
        %v989 = vsel %vm928, %v885, %v887
        %v990 = vsel %vm928, %v887, %v889
        %v991 = vsel %vm928, %v889, %v891
        %v992 = vsel %vm928, %v891, %v893
        %v993 = vsel %vm928, %v893, %v895
        %v994 = vsel %vm928, %v895, %v897
        %v995 = vsel %vm928, %v897, %v899
        %v996 = vsel %vm928, %v899, %v901
        %v997 = vsel %vm928, %v901, %v903
        %v998 = vsel %vm928, %v903, %v905
        %v999 = vsel %vm928, %v907, %v909
        %v1000 = vsel %vm928, %v909, %v911
        %v1001 = vsel %vm928, %v911, %v913
        %v1002 = vsel %vm928, %v913, %v915
        %v1003 = vsel %vm928, %v915, %v917
        %v1004 = vsel %vm928, %v917, %v919
        %v1005 = vsel %vm928, %v919, %v921
        %v1006 = vsel %vm928, %v921, %v923
        %v1007 = vsel %vm928, %v923, %v925
        %v1008 = vsel %vm928, %v925, %v927
        %1009 = vrot.lane.b32.xlu0 %v231, 94
        %v1010 = vpop.permute.xlu0 %1009
        %1011 = vrot.lane.b32.xlu0 %v232, 94
        %v1012 = vpop.permute.xlu0 %1011
        %1013 = vrot.lane.b32.xlu0 %v233, 94
        %v1014 = vpop.permute.xlu0 %1013
        %1015 = vrot.lane.b32.xlu0 %v234, 94
        %v1016 = vpop.permute.xlu0 %1015
        %1017 = vrot.lane.b32.xlu0 %v235, 94
        %v1018 = vpop.permute.xlu0 %1017
        %1019 = vrot.lane.b32.xlu0 %v236, 94
        %v1020 = vpop.permute.xlu0 %1019
        %1021 = vrot.lane.b32.xlu0 %v237, 94
        %v1022 = vpop.permute.xlu0 %1021
        %1023 = vrot.lane.b32.xlu0 %v238, 94
        %v1024 = vpop.permute.xlu0 %1023
        %1025 = vrot.lane.b32.xlu0 %v239, 94
        %v1026 = vpop.permute.xlu0 %1025
        %1027 = vrot.lane.b32.xlu0 %v240, 94
        %v1028 = vpop.permute.xlu0 %1027
        %1029 = vrot.lane.b32.xlu0 %v241, 94
        %v1030 = vpop.permute.xlu0 %1029
        %1031 = vrot.lane.b32.xlu0 %v242, 94
        %v1032 = vpop.permute.xlu0 %1031
        %1033 = vrot.lane.b32.xlu0 %v243, 94
        %v1034 = vpop.permute.xlu0 %1033
        %1035 = vrot.lane.b32.xlu0 %v244, 94
        %v1036 = vpop.permute.xlu0 %1035
        %1037 = vrot.lane.b32.xlu0 %v245, 94
        %v1038 = vpop.permute.xlu0 %1037
        %1039 = vrot.lane.b32.xlu0 %v246, 94
        %v1040 = vpop.permute.xlu0 %1039
        %1041 = vrot.lane.b32.xlu0 %v247, 94
        %v1042 = vpop.permute.xlu0 %1041
        %1043 = vrot.lane.b32.xlu0 %v248, 94
        %v1044 = vpop.permute.xlu0 %1043
        %1045 = vrot.lane.b32.xlu0 %v249, 94
        %v1046 = vpop.permute.xlu0 %1045
        %1047 = vrot.lane.b32.xlu0 %v250, 94
        %v1048 = vpop.permute.xlu0 %1047
        %1049 = vrot.lane.b32.xlu0 %v251, 94
        %v1050 = vpop.permute.xlu0 %1049
        %1051 = vrot.lane.b32.xlu0 %v252, 94
        %v1052 = vpop.permute.xlu0 %1051
        %1053 = vrot.lane.b32.xlu0 %v253, 94
        %v1054 = vpop.permute.xlu0 %1053
        %1055 = vrot.lane.b32.xlu0 %v254, 94
        %v1056 = vpop.permute.xlu0 %1055
        %1057 = vrot.lane.b32.xlu0 %v255, 94
        %v1058 = vpop.permute.xlu0 %1057
        %1059 = vrot.lane.b32.xlu0 %v256, 94
        %v1060 = vpop.permute.xlu0 %1059
        %1061 = vrot.lane.b32.xlu0 %v257, 94
        %v1062 = vpop.permute.xlu0 %1061
        %1063 = vrot.lane.b32.xlu0 %v258, 94
        %v1064 = vpop.permute.xlu0 %1063
        %1065 = vrot.lane.b32.xlu0 %v259, 94
        %v1066 = vpop.permute.xlu0 %1065
        %1067 = vrot.lane.b32.xlu0 %v260, 94
        %v1068 = vpop.permute.xlu0 %1067
        %1069 = vrot.lane.b32.xlu0 %v261, 94
        %v1070 = vpop.permute.xlu0 %1069
        %1071 = vrot.lane.b32.xlu0 %v262, 94
        %v1072 = vpop.permute.xlu0 %1071
        %1073 = vrot.lane.b32.xlu0 %v263, 94
        %v1074 = vpop.permute.xlu0 %1073
        %1075 = vrot.lane.b32.xlu0 %v264, 94
        %v1076 = vpop.permute.xlu0 %1075
        %1077 = vrot.lane.b32.xlu0 %v265, 94
        %v1078 = vpop.permute.xlu0 %1077
        %1079 = vrot.lane.b32.xlu0 %v266, 94
        %v1080 = vpop.permute.xlu0 %1079
        %1081 = vrot.lane.b32.xlu0 %v267, 94
        %v1082 = vpop.permute.xlu0 %1081
        %1083 = vrot.lane.b32.xlu0 %v268, 94
        %v1084 = vpop.permute.xlu0 %1083
        %1085 = vrot.lane.b32.xlu0 %v269, 94
        %v1086 = vpop.permute.xlu0 %1085
        %1087 = vrot.lane.b32.xlu0 %v270, 94
        %v1088 = vpop.permute.xlu0 %1087
        %1089 = vrot.lane.b32.xlu0 %v271, 94
        %v1090 = vpop.permute.xlu0 %1089
        %1091 = vrot.lane.b32.xlu0 %v272, 94
        %v1092 = vpop.permute.xlu0 %1091
        %1093 = vrot.lane.b32.xlu0 %v273, 94
        %v1094 = vpop.permute.xlu0 %1093
        %1095 = vrot.lane.b32.xlu0 %v274, 94
        %v1096 = vpop.permute.xlu0 %1095
        %1097 = vrot.lane.b32.xlu0 %v275, 94
        %v1098 = vpop.permute.xlu0 %1097
        %1099 = vrot.lane.b32.xlu0 %v276, 94
        %v1100 = vpop.permute.xlu0 %1099
        %1101 = vrot.lane.b32.xlu0 %v277, 94
        %v1102 = vpop.permute.xlu0 %1101
        %1103 = vrot.lane.b32.xlu0 %v278, 94
        %v1104 = vpop.permute.xlu0 %1103
        %1105 = vrot.lane.b32.xlu0 %v279, 94
        %v1106 = vpop.permute.xlu0 %1105
        %1107 = vrot.lane.b32.xlu0 %v280, 94
        %v1108 = vpop.permute.xlu0 %1107
        %1109 = vrot.lane.b32.xlu0 %v281, 94
        %v1110 = vpop.permute.xlu0 %1109
        %1111 = vrot.lane.b32.xlu0 %v282, 94
        %v1112 = vpop.permute.xlu0 %1111
        %1113 = vrot.lane.b32.xlu0 %v283, 94
        %v1114 = vpop.permute.xlu0 %1113
        %1115 = vrot.lane.b32.xlu0 %v284, 94
        %v1116 = vpop.permute.xlu0 %1115
        %1117 = vrot.lane.b32.xlu0 %v285, 94
        %v1118 = vpop.permute.xlu0 %1117
        %1119 = vrot.lane.b32.xlu0 %v286, 94
        %v1120 = vpop.permute.xlu0 %1119
        %1121 = vrot.lane.b32.xlu0 %v287, 94
        %v1122 = vpop.permute.xlu0 %1121
        %1123 = vrot.lane.b32.xlu0 %v288, 94
        %v1124 = vpop.permute.xlu0 %1123
        %1125 = vrot.lane.b32.xlu0 %v289, 94
        %v1126 = vpop.permute.xlu0 %1125
        %1127 = vrot.lane.b32.xlu0 %v290, 94
        %v1128 = vpop.permute.xlu0 %1127
        %1129 = vrot.lane.b32.xlu0 %v291, 94
        %v1130 = vpop.permute.xlu0 %1129
        %1131 = vrot.lane.b32.xlu0 %v292, 94
        %v1132 = vpop.permute.xlu0 %1131
        %1133 = vrot.lane.b32.xlu0 %v293, 94
        %v1134 = vpop.permute.xlu0 %1133
        %1135 = vrot.lane.b32.xlu0 %v294, 94
        %v1136 = vpop.permute.xlu0 %1135
        %1137 = vrot.lane.b32.xlu0 %v295, 94
        %v1138 = vpop.permute.xlu0 %1137
        %1139 = vrot.lane.b32.xlu0 %v296, 94
        %v1140 = vpop.permute.xlu0 %1139
        %1141 = vrot.lane.b32.xlu0 %v297, 94
        %v1142 = vpop.permute.xlu0 %1141
        %1143 = vrot.lane.b32.xlu0 %v298, 94
        %v1144 = vpop.permute.xlu0 %1143
        %1145 = vrot.lane.b32.xlu0 %v299, 94
        %v1146 = vpop.permute.xlu0 %1145
        %1147 = vrot.lane.b32.xlu0 %v300, 94
        %v1148 = vpop.permute.xlu0 %1147
        %1149 = vrot.lane.b32.xlu0 %v301, 94
        %v1150 = vpop.permute.xlu0 %1149
        %1151 = vrot.lane.b32.xlu0 %v302, 94
        %v1152 = vpop.permute.xlu0 %1151
        %1153 = vrot.lane.b32.xlu0 %v303, 94
        %v1154 = vpop.permute.xlu0 %1153
        %1155 = vrot.lane.b32.xlu0 %v304, 94
        %v1156 = vpop.permute.xlu0 %1155
        %1157 = vrot.lane.b32.xlu0 %v305, 94
        %v1158 = vpop.permute.xlu0 %1157
        %1159 = vrot.lane.b32.xlu0 %v306, 94
        %v1160 = vpop.permute.xlu0 %1159
        %1161 = vrot.lane.b32.xlu0 %v307, 94
        %v1162 = vpop.permute.xlu0 %1161
        %1163 = vrot.lane.b32.xlu0 %v308, 94
        %v1164 = vpop.permute.xlu0 %1163
        %1165 = vrot.lane.b32.xlu0 %v309, 94
        %v1166 = vpop.permute.xlu0 %1165
        %1167 = vrot.lane.b32.xlu0 %v310, 94
        %v1168 = vpop.permute.xlu0 %1167
        %1169 = vrot.lane.b32.xlu0 %v311, 94
        %v1170 = vpop.permute.xlu0 %1169
        %1171 = vrot.lane.b32.xlu0 %v312, 94
        %v1172 = vpop.permute.xlu0 %1171
        %1173 = vrot.lane.b32.xlu0 %v313, 94
        %v1174 = vpop.permute.xlu0 %1173
        %1175 = vrot.lane.b32.xlu0 %v314, 94
        %v1176 = vpop.permute.xlu0 %1175
        %1177 = vrot.lane.b32.xlu0 %v315, 94
        %v1178 = vpop.permute.xlu0 %1177
        %1179 = vrot.lane.b32.xlu0 %v316, 94
        %v1180 = vpop.permute.xlu0 %1179
        %1181 = vrot.lane.b32.xlu0 %v317, 94
        %v1182 = vpop.permute.xlu0 %1181
        %1183 = vrot.lane.b32.xlu0 %v318, 94
        %v1184 = vpop.permute.xlu0 %1183
        %vm1185 = vcmask 769024
        %v1186 = vsel %vm1185, %v1010, %v1012
        %v1187 = vsel %vm1185, %v1012, %v1014
        %v1188 = vsel %vm1185, %v1014, %v1016
        %v1189 = vsel %vm1185, %v1016, %v1018
        %v1190 = vsel %vm1185, %v1018, %v1020
        %v1191 = vsel %vm1185, %v1020, %v1022
        %v1192 = vsel %vm1185, %v1022, %v1024
        %v1193 = vsel %vm1185, %v1024, %v1026
        %v1194 = vsel %vm1185, %v1026, %v1028
        %v1195 = vsel %vm1185, %v1028, %v1030
        %v1196 = vsel %vm1185, %v1032, %v1034
        %v1197 = vsel %vm1185, %v1034, %v1036
        %v1198 = vsel %vm1185, %v1036, %v1038
        %v1199 = vsel %vm1185, %v1038, %v1040
        %v1200 = vsel %vm1185, %v1040, %v1042
        %v1201 = vsel %vm1185, %v1042, %v1044
        %v1202 = vsel %vm1185, %v1044, %v1046
        %v1203 = vsel %vm1185, %v1046, %v1048
        %v1204 = vsel %vm1185, %v1048, %v1050
        %v1205 = vsel %vm1185, %v1050, %v1052
        %v1206 = vsel %vm1185, %v1054, %v1056
        %v1207 = vsel %vm1185, %v1056, %v1058
        %v1208 = vsel %vm1185, %v1058, %v1060
        %v1209 = vsel %vm1185, %v1060, %v1062
        %v1210 = vsel %vm1185, %v1062, %v1064
        %v1211 = vsel %vm1185, %v1064, %v1066
        %v1212 = vsel %vm1185, %v1066, %v1068
        %v1213 = vsel %vm1185, %v1068, %v1070
        %v1214 = vsel %vm1185, %v1070, %v1072
        %v1215 = vsel %vm1185, %v1072, %v1074
        %v1216 = vsel %vm1185, %v1076, %v1078
        %v1217 = vsel %vm1185, %v1078, %v1080
        %v1218 = vsel %vm1185, %v1080, %v1082
        %v1219 = vsel %vm1185, %v1082, %v1084
        %v1220 = vsel %vm1185, %v1084, %v1086
        %v1221 = vsel %vm1185, %v1086, %v1088
        %v1222 = vsel %vm1185, %v1088, %v1090
        %v1223 = vsel %vm1185, %v1090, %v1092
        %v1224 = vsel %vm1185, %v1092, %v1094
        %v1225 = vsel %vm1185, %v1094, %v1096
        %v1226 = vsel %vm1185, %v1098, %v1100
        %v1227 = vsel %vm1185, %v1100, %v1102
        %v1228 = vsel %vm1185, %v1102, %v1104
        %v1229 = vsel %vm1185, %v1104, %v1106
        %v1230 = vsel %vm1185, %v1106, %v1108
        %v1231 = vsel %vm1185, %v1108, %v1110
        %v1232 = vsel %vm1185, %v1110, %v1112
        %v1233 = vsel %vm1185, %v1112, %v1114
        %v1234 = vsel %vm1185, %v1114, %v1116
        %v1235 = vsel %vm1185, %v1116, %v1118
        %v1236 = vsel %vm1185, %v1120, %v1122
        %v1237 = vsel %vm1185, %v1122, %v1124
        %v1238 = vsel %vm1185, %v1124, %v1126
        %v1239 = vsel %vm1185, %v1126, %v1128
        %v1240 = vsel %vm1185, %v1128, %v1130
        %v1241 = vsel %vm1185, %v1130, %v1132
        %v1242 = vsel %vm1185, %v1132, %v1134
        %v1243 = vsel %vm1185, %v1134, %v1136
        %v1244 = vsel %vm1185, %v1136, %v1138
        %v1245 = vsel %vm1185, %v1138, %v1140
        %v1246 = vsel %vm1185, %v1142, %v1144
        %v1247 = vsel %vm1185, %v1144, %v1146
        %v1248 = vsel %vm1185, %v1146, %v1148
        %v1249 = vsel %vm1185, %v1148, %v1150
        %v1250 = vsel %vm1185, %v1150, %v1152
        %v1251 = vsel %vm1185, %v1152, %v1154
        %v1252 = vsel %vm1185, %v1154, %v1156
        %v1253 = vsel %vm1185, %v1156, %v1158
        %v1254 = vsel %vm1185, %v1158, %v1160
        %v1255 = vsel %vm1185, %v1160, %v1162
        %v1256 = vsel %vm1185, %v1164, %v1166
        %v1257 = vsel %vm1185, %v1166, %v1168
        %v1258 = vsel %vm1185, %v1168, %v1170
        %v1259 = vsel %vm1185, %v1170, %v1172
        %v1260 = vsel %vm1185, %v1172, %v1174
        %v1261 = vsel %vm1185, %v1174, %v1176
        %v1262 = vsel %vm1185, %v1176, %v1178
        %v1263 = vsel %vm1185, %v1178, %v1180
        %v1264 = vsel %vm1185, %v1180, %v1182
        %v1265 = vsel %vm1185, %v1182, %v1184
        %1266 = vrot.lane.b32.xlu0 %v232, 93
        %v1267 = vpop.permute.xlu0 %1266
        %1268 = vrot.lane.b32.xlu0 %v233, 93
        %v1269 = vpop.permute.xlu0 %1268
        %1270 = vrot.lane.b32.xlu0 %v234, 93
        %v1271 = vpop.permute.xlu0 %1270
        %1272 = vrot.lane.b32.xlu0 %v235, 93
        %v1273 = vpop.permute.xlu0 %1272
        %1274 = vrot.lane.b32.xlu0 %v236, 93
        %v1275 = vpop.permute.xlu0 %1274
        %1276 = vrot.lane.b32.xlu0 %v237, 93
        %v1277 = vpop.permute.xlu0 %1276
        %1278 = vrot.lane.b32.xlu0 %v238, 93
        %v1279 = vpop.permute.xlu0 %1278
        %1280 = vrot.lane.b32.xlu0 %v239, 93
        %v1281 = vpop.permute.xlu0 %1280
        %1282 = vrot.lane.b32.xlu0 %v240, 93
        %v1283 = vpop.permute.xlu0 %1282
        %1284 = vrot.lane.b32.xlu0 %v241, 93
        %v1285 = vpop.permute.xlu0 %1284
        %1286 = vrot.lane.b32.xlu0 %v243, 93
        %v1287 = vpop.permute.xlu0 %1286
        %1288 = vrot.lane.b32.xlu0 %v244, 93
        %v1289 = vpop.permute.xlu0 %1288
        %1290 = vrot.lane.b32.xlu0 %v245, 93
        %v1291 = vpop.permute.xlu0 %1290
        %1292 = vrot.lane.b32.xlu0 %v246, 93
        %v1293 = vpop.permute.xlu0 %1292
        %1294 = vrot.lane.b32.xlu0 %v247, 93
        %v1295 = vpop.permute.xlu0 %1294
        %1296 = vrot.lane.b32.xlu0 %v248, 93
        %v1297 = vpop.permute.xlu0 %1296
        %1298 = vrot.lane.b32.xlu0 %v249, 93
        %v1299 = vpop.permute.xlu0 %1298
        %1300 = vrot.lane.b32.xlu0 %v250, 93
        %v1301 = vpop.permute.xlu0 %1300
        %1302 = vrot.lane.b32.xlu0 %v251, 93
        %v1303 = vpop.permute.xlu0 %1302
        %1304 = vrot.lane.b32.xlu0 %v252, 93
        %v1305 = vpop.permute.xlu0 %1304
        %1306 = vrot.lane.b32.xlu0 %v254, 93
        %v1307 = vpop.permute.xlu0 %1306
        %1308 = vrot.lane.b32.xlu0 %v255, 93
        %v1309 = vpop.permute.xlu0 %1308
        %1310 = vrot.lane.b32.xlu0 %v256, 93
        %v1311 = vpop.permute.xlu0 %1310
        %1312 = vrot.lane.b32.xlu0 %v257, 93
        %v1313 = vpop.permute.xlu0 %1312
        %1314 = vrot.lane.b32.xlu0 %v258, 93
        %v1315 = vpop.permute.xlu0 %1314
        %1316 = vrot.lane.b32.xlu0 %v259, 93
        %v1317 = vpop.permute.xlu0 %1316
        %1318 = vrot.lane.b32.xlu0 %v260, 93
        %v1319 = vpop.permute.xlu0 %1318
        %1320 = vrot.lane.b32.xlu0 %v261, 93
        %v1321 = vpop.permute.xlu0 %1320
        %1322 = vrot.lane.b32.xlu0 %v262, 93
        %v1323 = vpop.permute.xlu0 %1322
        %1324 = vrot.lane.b32.xlu0 %v263, 93
        %v1325 = vpop.permute.xlu0 %1324
        %1326 = vrot.lane.b32.xlu0 %v265, 93
        %v1327 = vpop.permute.xlu0 %1326
        %1328 = vrot.lane.b32.xlu0 %v266, 93
        %v1329 = vpop.permute.xlu0 %1328
        %1330 = vrot.lane.b32.xlu0 %v267, 93
        %v1331 = vpop.permute.xlu0 %1330
        %1332 = vrot.lane.b32.xlu0 %v268, 93
        %v1333 = vpop.permute.xlu0 %1332
        %1334 = vrot.lane.b32.xlu0 %v269, 93
        %v1335 = vpop.permute.xlu0 %1334
        %1336 = vrot.lane.b32.xlu0 %v270, 93
        %v1337 = vpop.permute.xlu0 %1336
        %1338 = vrot.lane.b32.xlu0 %v271, 93
        %v1339 = vpop.permute.xlu0 %1338
        %1340 = vrot.lane.b32.xlu0 %v272, 93
        %v1341 = vpop.permute.xlu0 %1340
        %1342 = vrot.lane.b32.xlu0 %v273, 93
        %v1343 = vpop.permute.xlu0 %1342
        %1344 = vrot.lane.b32.xlu0 %v274, 93
        %v1345 = vpop.permute.xlu0 %1344
        %1346 = vrot.lane.b32.xlu0 %v276, 93
        %v1347 = vpop.permute.xlu0 %1346
        %1348 = vrot.lane.b32.xlu0 %v277, 93
        %v1349 = vpop.permute.xlu0 %1348
        %1350 = vrot.lane.b32.xlu0 %v278, 93
        %v1351 = vpop.permute.xlu0 %1350
        %1352 = vrot.lane.b32.xlu0 %v279, 93
        %v1353 = vpop.permute.xlu0 %1352
        %1354 = vrot.lane.b32.xlu0 %v280, 93
        %v1355 = vpop.permute.xlu0 %1354
        %1356 = vrot.lane.b32.xlu0 %v281, 93
        %v1357 = vpop.permute.xlu0 %1356
        %1358 = vrot.lane.b32.xlu0 %v282, 93
        %v1359 = vpop.permute.xlu0 %1358
        %1360 = vrot.lane.b32.xlu0 %v283, 93
        %v1361 = vpop.permute.xlu0 %1360
        %1362 = vrot.lane.b32.xlu0 %v284, 93
        %v1363 = vpop.permute.xlu0 %1362
        %1364 = vrot.lane.b32.xlu0 %v285, 93
        %v1365 = vpop.permute.xlu0 %1364
        %1366 = vrot.lane.b32.xlu0 %v287, 93
        %v1367 = vpop.permute.xlu0 %1366
        %1368 = vrot.lane.b32.xlu0 %v288, 93
        %v1369 = vpop.permute.xlu0 %1368
        %1370 = vrot.lane.b32.xlu0 %v289, 93
        %v1371 = vpop.permute.xlu0 %1370
        %1372 = vrot.lane.b32.xlu0 %v290, 93
        %v1373 = vpop.permute.xlu0 %1372
        %1374 = vrot.lane.b32.xlu0 %v291, 93
        %v1375 = vpop.permute.xlu0 %1374
        %1376 = vrot.lane.b32.xlu0 %v292, 93
        %v1377 = vpop.permute.xlu0 %1376
        %1378 = vrot.lane.b32.xlu0 %v293, 93
        %v1379 = vpop.permute.xlu0 %1378
        %1380 = vrot.lane.b32.xlu0 %v294, 93
        %v1381 = vpop.permute.xlu0 %1380
        %1382 = vrot.lane.b32.xlu0 %v295, 93
        %v1383 = vpop.permute.xlu0 %1382
        %1384 = vrot.lane.b32.xlu0 %v296, 93
        %v1385 = vpop.permute.xlu0 %1384
        %1386 = vrot.lane.b32.xlu0 %v298, 93
        %v1387 = vpop.permute.xlu0 %1386
        %1388 = vrot.lane.b32.xlu0 %v299, 93
        %v1389 = vpop.permute.xlu0 %1388
        %1390 = vrot.lane.b32.xlu0 %v300, 93
        %v1391 = vpop.permute.xlu0 %1390
        %1392 = vrot.lane.b32.xlu0 %v301, 93
        %v1393 = vpop.permute.xlu0 %1392
        %1394 = vrot.lane.b32.xlu0 %v302, 93
        %v1395 = vpop.permute.xlu0 %1394
        %1396 = vrot.lane.b32.xlu0 %v303, 93
        %v1397 = vpop.permute.xlu0 %1396
        %1398 = vrot.lane.b32.xlu0 %v304, 93
        %v1399 = vpop.permute.xlu0 %1398
        %1400 = vrot.lane.b32.xlu0 %v305, 93
        %v1401 = vpop.permute.xlu0 %1400
        %1402 = vrot.lane.b32.xlu0 %v306, 93
        %v1403 = vpop.permute.xlu0 %1402
        %1404 = vrot.lane.b32.xlu0 %v307, 93
        %v1405 = vpop.permute.xlu0 %1404
        %1406 = vrot.lane.b32.xlu0 %v309, 93
        %v1407 = vpop.permute.xlu0 %1406
        %1408 = vrot.lane.b32.xlu0 %v310, 93
        %v1409 = vpop.permute.xlu0 %1408
        %1410 = vrot.lane.b32.xlu0 %v311, 93
        %v1411 = vpop.permute.xlu0 %1410
        %1412 = vrot.lane.b32.xlu0 %v312, 93
        %v1413 = vpop.permute.xlu0 %1412
        %1414 = vrot.lane.b32.xlu0 %v313, 93
        %v1415 = vpop.permute.xlu0 %1414
        %1416 = vrot.lane.b32.xlu0 %v314, 93
        %v1417 = vpop.permute.xlu0 %1416
        %1418 = vrot.lane.b32.xlu0 %v315, 93
        %v1419 = vpop.permute.xlu0 %1418
        %1420 = vrot.lane.b32.xlu0 %v316, 93
        %v1421 = vpop.permute.xlu0 %1420
        %1422 = vrot.lane.b32.xlu0 %v317, 93
        %v1423 = vpop.permute.xlu0 %1422
        %1424 = vrot.lane.b32.xlu0 %v318, 93
        %v1425 = vpop.permute.xlu0 %1424
        %vm1426 = vcmask 760832
        %v1427 = vsel %vm1426, %v1267, %v1269
        %v1428 = vsel %vm1426, %v1269, %v1271
        %v1429 = vsel %vm1426, %v1271, %v1273
        %v1430 = vsel %vm1426, %v1273, %v1275
        %v1431 = vsel %vm1426, %v1275, %v1277
        %v1432 = vsel %vm1426, %v1277, %v1279
        %v1433 = vsel %vm1426, %v1279, %v1281
        %v1434 = vsel %vm1426, %v1281, %v1283
        %v1435 = vsel %vm1426, %v1283, %v1285
        %v1436 = vsel %vm1426, %v1287, %v1289
        %v1437 = vsel %vm1426, %v1289, %v1291
        %v1438 = vsel %vm1426, %v1291, %v1293
        %v1439 = vsel %vm1426, %v1293, %v1295
        %v1440 = vsel %vm1426, %v1295, %v1297
        %v1441 = vsel %vm1426, %v1297, %v1299
        %v1442 = vsel %vm1426, %v1299, %v1301
        %v1443 = vsel %vm1426, %v1301, %v1303
        %v1444 = vsel %vm1426, %v1303, %v1305
        %v1445 = vsel %vm1426, %v1307, %v1309
        %v1446 = vsel %vm1426, %v1309, %v1311
        %v1447 = vsel %vm1426, %v1311, %v1313
        %v1448 = vsel %vm1426, %v1313, %v1315
        %v1449 = vsel %vm1426, %v1315, %v1317
        %v1450 = vsel %vm1426, %v1317, %v1319
        %v1451 = vsel %vm1426, %v1319, %v1321
        %v1452 = vsel %vm1426, %v1321, %v1323
        %v1453 = vsel %vm1426, %v1323, %v1325
        %v1454 = vsel %vm1426, %v1327, %v1329
        %v1455 = vsel %vm1426, %v1329, %v1331
        %v1456 = vsel %vm1426, %v1331, %v1333
        %v1457 = vsel %vm1426, %v1333, %v1335
        %v1458 = vsel %vm1426, %v1335, %v1337
        %v1459 = vsel %vm1426, %v1337, %v1339
        %v1460 = vsel %vm1426, %v1339, %v1341
        %v1461 = vsel %vm1426, %v1341, %v1343
        %v1462 = vsel %vm1426, %v1343, %v1345
        %v1463 = vsel %vm1426, %v1347, %v1349
        %v1464 = vsel %vm1426, %v1349, %v1351
        %v1465 = vsel %vm1426, %v1351, %v1353
        %v1466 = vsel %vm1426, %v1353, %v1355
        %v1467 = vsel %vm1426, %v1355, %v1357
        %v1468 = vsel %vm1426, %v1357, %v1359
        %v1469 = vsel %vm1426, %v1359, %v1361
        %v1470 = vsel %vm1426, %v1361, %v1363
        %v1471 = vsel %vm1426, %v1363, %v1365
        %v1472 = vsel %vm1426, %v1367, %v1369
        %v1473 = vsel %vm1426, %v1369, %v1371
        %v1474 = vsel %vm1426, %v1371, %v1373
        %v1475 = vsel %vm1426, %v1373, %v1375
        %v1476 = vsel %vm1426, %v1375, %v1377
        %v1477 = vsel %vm1426, %v1377, %v1379
        %v1478 = vsel %vm1426, %v1379, %v1381
        %v1479 = vsel %vm1426, %v1381, %v1383
        %v1480 = vsel %vm1426, %v1383, %v1385
        %v1481 = vsel %vm1426, %v1387, %v1389
        %v1482 = vsel %vm1426, %v1389, %v1391
        %v1483 = vsel %vm1426, %v1391, %v1393
        %v1484 = vsel %vm1426, %v1393, %v1395
        %v1485 = vsel %vm1426, %v1395, %v1397
        %v1486 = vsel %vm1426, %v1397, %v1399
        %v1487 = vsel %vm1426, %v1399, %v1401
        %v1488 = vsel %vm1426, %v1401, %v1403
        %v1489 = vsel %vm1426, %v1403, %v1405
        %v1490 = vsel %vm1426, %v1407, %v1409
        %v1491 = vsel %vm1426, %v1409, %v1411
        %v1492 = vsel %vm1426, %v1411, %v1413
        %v1493 = vsel %vm1426, %v1413, %v1415
        %v1494 = vsel %vm1426, %v1415, %v1417
        %v1495 = vsel %vm1426, %v1417, %v1419
        %v1496 = vsel %vm1426, %v1419, %v1421
        %v1497 = vsel %vm1426, %v1421, %v1423
        %v1498 = vsel %vm1426, %v1423, %v1425
        %1587 = vrot.lane.b32.xlu0 %v319, 92
        %v1588 = vpop.permute.xlu0 %1587
        %1589 = vrot.lane.b32.xlu0 %v320, 92
        %v1590 = vpop.permute.xlu0 %1589
        %1591 = vrot.lane.b32.xlu0 %v321, 92
        %v1592 = vpop.permute.xlu0 %1591
        %1593 = vrot.lane.b32.xlu0 %v322, 92
        %v1594 = vpop.permute.xlu0 %1593
        %1595 = vrot.lane.b32.xlu0 %v323, 92
        %v1596 = vpop.permute.xlu0 %1595
        %1597 = vrot.lane.b32.xlu0 %v324, 92
        %v1598 = vpop.permute.xlu0 %1597
        %1599 = vrot.lane.b32.xlu0 %v325, 92
        %v1600 = vpop.permute.xlu0 %1599
        %1601 = vrot.lane.b32.xlu0 %v326, 92
        %v1602 = vpop.permute.xlu0 %1601
        %1603 = vrot.lane.b32.xlu0 %v327, 92
        %v1604 = vpop.permute.xlu0 %1603
        %1605 = vrot.lane.b32.xlu0 %v328, 92
        %v1606 = vpop.permute.xlu0 %1605
        %1607 = vrot.lane.b32.xlu0 %v329, 92
        %v1608 = vpop.permute.xlu0 %1607
        %1609 = vrot.lane.b32.xlu0 %v330, 92
        %v1610 = vpop.permute.xlu0 %1609
        %1611 = vrot.lane.b32.xlu0 %v331, 92
        %v1612 = vpop.permute.xlu0 %1611
        %1613 = vrot.lane.b32.xlu0 %v332, 92
        %v1614 = vpop.permute.xlu0 %1613
        %1615 = vrot.lane.b32.xlu0 %v333, 92
        %v1616 = vpop.permute.xlu0 %1615
        %1617 = vrot.lane.b32.xlu0 %v334, 92
        %v1618 = vpop.permute.xlu0 %1617
        %1619 = vrot.lane.b32.xlu0 %v335, 92
        %v1620 = vpop.permute.xlu0 %1619
        %1621 = vrot.lane.b32.xlu0 %v336, 92
        %v1622 = vpop.permute.xlu0 %1621
        %1623 = vrot.lane.b32.xlu0 %v337, 92
        %v1624 = vpop.permute.xlu0 %1623
        %1625 = vrot.lane.b32.xlu0 %v338, 92
        %v1626 = vpop.permute.xlu0 %1625
        %1627 = vrot.lane.b32.xlu0 %v339, 92
        %v1628 = vpop.permute.xlu0 %1627
        %1629 = vrot.lane.b32.xlu0 %v340, 92
        %v1630 = vpop.permute.xlu0 %1629
        %1631 = vrot.lane.b32.xlu0 %v341, 92
        %v1632 = vpop.permute.xlu0 %1631
        %1633 = vrot.lane.b32.xlu0 %v342, 92
        %v1634 = vpop.permute.xlu0 %1633
        %1635 = vrot.lane.b32.xlu0 %v343, 92
        %v1636 = vpop.permute.xlu0 %1635
        %1637 = vrot.lane.b32.xlu0 %v344, 92
        %v1638 = vpop.permute.xlu0 %1637
        %1639 = vrot.lane.b32.xlu0 %v345, 92
        %v1640 = vpop.permute.xlu0 %1639
        %1641 = vrot.lane.b32.xlu0 %v346, 92
        %v1642 = vpop.permute.xlu0 %1641
        %1643 = vrot.lane.b32.xlu0 %v347, 92
        %v1644 = vpop.permute.xlu0 %1643
        %1645 = vrot.lane.b32.xlu0 %v348, 92
        %v1646 = vpop.permute.xlu0 %1645
        %1647 = vrot.lane.b32.xlu0 %v349, 92
        %v1648 = vpop.permute.xlu0 %1647
        %1649 = vrot.lane.b32.xlu0 %v350, 92
        %v1650 = vpop.permute.xlu0 %1649
        %1651 = vrot.lane.b32.xlu0 %v351, 92
        %v1652 = vpop.permute.xlu0 %1651
        %1653 = vrot.lane.b32.xlu0 %v352, 92
        %v1654 = vpop.permute.xlu0 %1653
        %1655 = vrot.lane.b32.xlu0 %v353, 92
        %v1656 = vpop.permute.xlu0 %1655
        %1657 = vrot.lane.b32.xlu0 %v354, 92
        %v1658 = vpop.permute.xlu0 %1657
        %1659 = vrot.lane.b32.xlu0 %v355, 92
        %v1660 = vpop.permute.xlu0 %1659
        %1661 = vrot.lane.b32.xlu0 %v356, 92
        %v1662 = vpop.permute.xlu0 %1661
        %1663 = vrot.lane.b32.xlu0 %v357, 92
        %v1664 = vpop.permute.xlu0 %1663
        %1665 = vrot.lane.b32.xlu0 %v358, 92
        %v1666 = vpop.permute.xlu0 %1665
        %1667 = vrot.lane.b32.xlu0 %v359, 92
        %v1668 = vpop.permute.xlu0 %1667
        %1669 = vrot.lane.b32.xlu0 %v360, 92
        %v1670 = vpop.permute.xlu0 %1669
        %1671 = vrot.lane.b32.xlu0 %v361, 92
        %v1672 = vpop.permute.xlu0 %1671
        %1673 = vrot.lane.b32.xlu0 %v362, 92
        %v1674 = vpop.permute.xlu0 %1673
        %1675 = vrot.lane.b32.xlu0 %v363, 92
        %v1676 = vpop.permute.xlu0 %1675
        %1677 = vrot.lane.b32.xlu0 %v364, 92
        %v1678 = vpop.permute.xlu0 %1677
        %1679 = vrot.lane.b32.xlu0 %v365, 92
        %v1680 = vpop.permute.xlu0 %1679
        %1681 = vrot.lane.b32.xlu0 %v366, 92
        %v1682 = vpop.permute.xlu0 %1681
        %1683 = vrot.lane.b32.xlu0 %v367, 92
        %v1684 = vpop.permute.xlu0 %1683
        %1685 = vrot.lane.b32.xlu0 %v368, 92
        %v1686 = vpop.permute.xlu0 %1685
        %1687 = vrot.lane.b32.xlu0 %v369, 92
        %v1688 = vpop.permute.xlu0 %1687
        %1689 = vrot.lane.b32.xlu0 %v370, 92
        %v1690 = vpop.permute.xlu0 %1689
        %1691 = vrot.lane.b32.xlu0 %v371, 92
        %v1692 = vpop.permute.xlu0 %1691
        %1693 = vrot.lane.b32.xlu0 %v372, 92
        %v1694 = vpop.permute.xlu0 %1693
        %1695 = vrot.lane.b32.xlu0 %v373, 92
        %v1696 = vpop.permute.xlu0 %1695
        %1697 = vrot.lane.b32.xlu0 %v374, 92
        %v1698 = vpop.permute.xlu0 %1697
        %1699 = vrot.lane.b32.xlu0 %v375, 92
        %v1700 = vpop.permute.xlu0 %1699
        %1701 = vrot.lane.b32.xlu0 %v376, 92
        %v1702 = vpop.permute.xlu0 %1701
        %1703 = vrot.lane.b32.xlu0 %v377, 92
        %v1704 = vpop.permute.xlu0 %1703
        %1705 = vrot.lane.b32.xlu0 %v378, 92
        %v1706 = vpop.permute.xlu0 %1705
        %1707 = vrot.lane.b32.xlu0 %v379, 92
        %v1708 = vpop.permute.xlu0 %1707
        %1709 = vrot.lane.b32.xlu0 %v380, 92
        %v1710 = vpop.permute.xlu0 %1709
        %1711 = vrot.lane.b32.xlu0 %v381, 92
        %v1712 = vpop.permute.xlu0 %1711
        %1713 = vrot.lane.b32.xlu0 %v382, 92
        %v1714 = vpop.permute.xlu0 %1713
        %1715 = vrot.lane.b32.xlu0 %v383, 92
        %v1716 = vpop.permute.xlu0 %1715
        %1717 = vrot.lane.b32.xlu0 %v384, 92
        %v1718 = vpop.permute.xlu0 %1717
        %1719 = vrot.lane.b32.xlu0 %v385, 92
        %v1720 = vpop.permute.xlu0 %1719
        %1721 = vrot.lane.b32.xlu0 %v386, 92
        %v1722 = vpop.permute.xlu0 %1721
        %1723 = vrot.lane.b32.xlu0 %v387, 92
        %v1724 = vpop.permute.xlu0 %1723
        %1725 = vrot.lane.b32.xlu0 %v388, 92
        %v1726 = vpop.permute.xlu0 %1725
        %1727 = vrot.lane.b32.xlu0 %v389, 92
        %v1728 = vpop.permute.xlu0 %1727
        %1729 = vrot.lane.b32.xlu0 %v390, 92
        %v1730 = vpop.permute.xlu0 %1729
        %1731 = vrot.lane.b32.xlu0 %v391, 92
        %v1732 = vpop.permute.xlu0 %1731
        %1733 = vrot.lane.b32.xlu0 %v392, 92
        %v1734 = vpop.permute.xlu0 %1733
        %1735 = vrot.lane.b32.xlu0 %v393, 92
        %v1736 = vpop.permute.xlu0 %1735
        %1737 = vrot.lane.b32.xlu0 %v394, 92
        %v1738 = vpop.permute.xlu0 %1737
        %1739 = vrot.lane.b32.xlu0 %v395, 92
        %v1740 = vpop.permute.xlu0 %1739
        %1741 = vrot.lane.b32.xlu0 %v396, 92
        %v1742 = vpop.permute.xlu0 %1741
        %1743 = vrot.lane.b32.xlu0 %v397, 92
        %v1744 = vpop.permute.xlu0 %1743
        %1745 = vrot.lane.b32.xlu0 %v398, 92
        %v1746 = vpop.permute.xlu0 %1745
        %1747 = vrot.lane.b32.xlu0 %v399, 92
        %v1748 = vpop.permute.xlu0 %1747
        %1749 = vrot.lane.b32.xlu0 %v400, 92
        %v1750 = vpop.permute.xlu0 %1749
        %1751 = vrot.lane.b32.xlu0 %v401, 92
        %v1752 = vpop.permute.xlu0 %1751
        %1753 = vrot.lane.b32.xlu0 %v402, 92
        %v1754 = vpop.permute.xlu0 %1753
        %1755 = vrot.lane.b32.xlu0 %v403, 92
        %v1756 = vpop.permute.xlu0 %1755
        %1757 = vrot.lane.b32.xlu0 %v404, 92
        %v1758 = vpop.permute.xlu0 %1757
        %1759 = vrot.lane.b32.xlu0 %v405, 92
        %v1760 = vpop.permute.xlu0 %1759
        %1761 = vrot.lane.b32.xlu0 %v406, 92
        %v1762 = vpop.permute.xlu0 %1761
        %vm1763 = vcmask 752640
        %v1764 = vsel %vm1763, %v1588, %v1590
        %v1765 = vsel %vm1763, %v1590, %v1592
        %v1766 = vsel %vm1763, %v1592, %v1594
        %v1767 = vsel %vm1763, %v1594, %v1596
        %v1768 = vsel %vm1763, %v1596, %v1598
        %v1769 = vsel %vm1763, %v1598, %v1600
        %v1770 = vsel %vm1763, %v1600, %v1602
        %v1771 = vsel %vm1763, %v1602, %v1604
        %v1772 = vsel %vm1763, %v1604, %v1606
        %v1773 = vsel %vm1763, %v1606, %v1608
        %v1774 = vsel %vm1763, %v1610, %v1612
        %v1775 = vsel %vm1763, %v1612, %v1614
        %v1776 = vsel %vm1763, %v1614, %v1616
        %v1777 = vsel %vm1763, %v1616, %v1618
        %v1778 = vsel %vm1763, %v1618, %v1620
        %v1779 = vsel %vm1763, %v1620, %v1622
        %v1780 = vsel %vm1763, %v1622, %v1624
        %v1781 = vsel %vm1763, %v1624, %v1626
        %v1782 = vsel %vm1763, %v1626, %v1628
        %v1783 = vsel %vm1763, %v1628, %v1630
        %v1784 = vsel %vm1763, %v1632, %v1634
        %v1785 = vsel %vm1763, %v1634, %v1636
        %v1786 = vsel %vm1763, %v1636, %v1638
        %v1787 = vsel %vm1763, %v1638, %v1640
        %v1788 = vsel %vm1763, %v1640, %v1642
        %v1789 = vsel %vm1763, %v1642, %v1644
        %v1790 = vsel %vm1763, %v1644, %v1646
        %v1791 = vsel %vm1763, %v1646, %v1648
        %v1792 = vsel %vm1763, %v1648, %v1650
        %v1793 = vsel %vm1763, %v1650, %v1652
        %v1794 = vsel %vm1763, %v1654, %v1656
        %v1795 = vsel %vm1763, %v1656, %v1658
        %v1796 = vsel %vm1763, %v1658, %v1660
        %v1797 = vsel %vm1763, %v1660, %v1662
        %v1798 = vsel %vm1763, %v1662, %v1664
        %v1799 = vsel %vm1763, %v1664, %v1666
        %v1800 = vsel %vm1763, %v1666, %v1668
        %v1801 = vsel %vm1763, %v1668, %v1670
        %v1802 = vsel %vm1763, %v1670, %v1672
        %v1803 = vsel %vm1763, %v1672, %v1674
        %v1804 = vsel %vm1763, %v1676, %v1678
        %v1805 = vsel %vm1763, %v1678, %v1680
        %v1806 = vsel %vm1763, %v1680, %v1682
        %v1807 = vsel %vm1763, %v1682, %v1684
        %v1808 = vsel %vm1763, %v1684, %v1686
        %v1809 = vsel %vm1763, %v1686, %v1688
        %v1810 = vsel %vm1763, %v1688, %v1690
        %v1811 = vsel %vm1763, %v1690, %v1692
        %v1812 = vsel %vm1763, %v1692, %v1694
        %v1813 = vsel %vm1763, %v1694, %v1696
        %v1814 = vsel %vm1763, %v1698, %v1700
        %v1815 = vsel %vm1763, %v1700, %v1702
        %v1816 = vsel %vm1763, %v1702, %v1704
        %v1817 = vsel %vm1763, %v1704, %v1706
        %v1818 = vsel %vm1763, %v1706, %v1708
        %v1819 = vsel %vm1763, %v1708, %v1710
        %v1820 = vsel %vm1763, %v1710, %v1712
        %v1821 = vsel %vm1763, %v1712, %v1714
        %v1822 = vsel %vm1763, %v1714, %v1716
        %v1823 = vsel %vm1763, %v1716, %v1718
        %v1824 = vsel %vm1763, %v1720, %v1722
        %v1825 = vsel %vm1763, %v1722, %v1724
        %v1826 = vsel %vm1763, %v1724, %v1726
        %v1827 = vsel %vm1763, %v1726, %v1728
        %v1828 = vsel %vm1763, %v1728, %v1730
        %v1829 = vsel %vm1763, %v1730, %v1732
        %v1830 = vsel %vm1763, %v1732, %v1734
        %v1831 = vsel %vm1763, %v1734, %v1736
        %v1832 = vsel %vm1763, %v1736, %v1738
        %v1833 = vsel %vm1763, %v1738, %v1740
        %v1834 = vsel %vm1763, %v1742, %v1744
        %v1835 = vsel %vm1763, %v1744, %v1746
        %v1836 = vsel %vm1763, %v1746, %v1748
        %v1837 = vsel %vm1763, %v1748, %v1750
        %v1838 = vsel %vm1763, %v1750, %v1752
        %v1839 = vsel %vm1763, %v1752, %v1754
        %v1840 = vsel %vm1763, %v1754, %v1756
        %v1841 = vsel %vm1763, %v1756, %v1758
        %v1842 = vsel %vm1763, %v1758, %v1760
        %v1843 = vsel %vm1763, %v1760, %v1762
        %1844 = vrot.lane.b32.xlu0 %v319, 60
        %v1845 = vpop.permute.xlu0 %1844
        %1846 = vrot.lane.b32.xlu0 %v320, 60
        %v1847 = vpop.permute.xlu0 %1846
        %1848 = vrot.lane.b32.xlu0 %v321, 60
        %v1849 = vpop.permute.xlu0 %1848
        %1850 = vrot.lane.b32.xlu0 %v322, 60
        %v1851 = vpop.permute.xlu0 %1850
        %1852 = vrot.lane.b32.xlu0 %v323, 60
        %v1853 = vpop.permute.xlu0 %1852
        %1854 = vrot.lane.b32.xlu0 %v324, 60
        %v1855 = vpop.permute.xlu0 %1854
        %1856 = vrot.lane.b32.xlu0 %v325, 60
        %v1857 = vpop.permute.xlu0 %1856
        %1858 = vrot.lane.b32.xlu0 %v326, 60
        %v1859 = vpop.permute.xlu0 %1858
        %1860 = vrot.lane.b32.xlu0 %v327, 60
        %v1861 = vpop.permute.xlu0 %1860
        %1862 = vrot.lane.b32.xlu0 %v328, 60
        %v1863 = vpop.permute.xlu0 %1862
        %1864 = vrot.lane.b32.xlu0 %v329, 60
        %v1865 = vpop.permute.xlu0 %1864
        %1866 = vrot.lane.b32.xlu0 %v330, 60
        %v1867 = vpop.permute.xlu0 %1866
        %1868 = vrot.lane.b32.xlu0 %v331, 60
        %v1869 = vpop.permute.xlu0 %1868
        %1870 = vrot.lane.b32.xlu0 %v332, 60
        %v1871 = vpop.permute.xlu0 %1870
        %1872 = vrot.lane.b32.xlu0 %v333, 60
        %v1873 = vpop.permute.xlu0 %1872
        %1874 = vrot.lane.b32.xlu0 %v334, 60
        %v1875 = vpop.permute.xlu0 %1874
        %1876 = vrot.lane.b32.xlu0 %v335, 60
        %v1877 = vpop.permute.xlu0 %1876
        %1878 = vrot.lane.b32.xlu0 %v336, 60
        %v1879 = vpop.permute.xlu0 %1878
        %1880 = vrot.lane.b32.xlu0 %v337, 60
        %v1881 = vpop.permute.xlu0 %1880
        %1882 = vrot.lane.b32.xlu0 %v338, 60
        %v1883 = vpop.permute.xlu0 %1882
        %1884 = vrot.lane.b32.xlu0 %v339, 60
        %v1885 = vpop.permute.xlu0 %1884
        %1886 = vrot.lane.b32.xlu0 %v340, 60
        %v1887 = vpop.permute.xlu0 %1886
        %1888 = vrot.lane.b32.xlu0 %v341, 60
        %v1889 = vpop.permute.xlu0 %1888
        %1890 = vrot.lane.b32.xlu0 %v342, 60
        %v1891 = vpop.permute.xlu0 %1890
        %1892 = vrot.lane.b32.xlu0 %v343, 60
        %v1893 = vpop.permute.xlu0 %1892
        %1894 = vrot.lane.b32.xlu0 %v344, 60
        %v1895 = vpop.permute.xlu0 %1894
        %1896 = vrot.lane.b32.xlu0 %v345, 60
        %v1897 = vpop.permute.xlu0 %1896
        %1898 = vrot.lane.b32.xlu0 %v346, 60
        %v1899 = vpop.permute.xlu0 %1898
        %1900 = vrot.lane.b32.xlu0 %v347, 60
        %v1901 = vpop.permute.xlu0 %1900
        %1902 = vrot.lane.b32.xlu0 %v348, 60
        %v1903 = vpop.permute.xlu0 %1902
        %1904 = vrot.lane.b32.xlu0 %v349, 60
        %v1905 = vpop.permute.xlu0 %1904
        %1906 = vrot.lane.b32.xlu0 %v350, 60
        %v1907 = vpop.permute.xlu0 %1906
        %1908 = vrot.lane.b32.xlu0 %v351, 60
        %v1909 = vpop.permute.xlu0 %1908
        %1910 = vrot.lane.b32.xlu0 %v352, 60
        %v1911 = vpop.permute.xlu0 %1910
        %1912 = vrot.lane.b32.xlu0 %v353, 60
        %v1913 = vpop.permute.xlu0 %1912
        %1914 = vrot.lane.b32.xlu0 %v354, 60
        %v1915 = vpop.permute.xlu0 %1914
        %1916 = vrot.lane.b32.xlu0 %v355, 60
        %v1917 = vpop.permute.xlu0 %1916
        %1918 = vrot.lane.b32.xlu0 %v356, 60
        %v1919 = vpop.permute.xlu0 %1918
        %1920 = vrot.lane.b32.xlu0 %v357, 60
        %v1921 = vpop.permute.xlu0 %1920
        %1922 = vrot.lane.b32.xlu0 %v358, 60
        %v1923 = vpop.permute.xlu0 %1922
        %1924 = vrot.lane.b32.xlu0 %v359, 60
        %v1925 = vpop.permute.xlu0 %1924
        %1926 = vrot.lane.b32.xlu0 %v360, 60
        %v1927 = vpop.permute.xlu0 %1926
        %1928 = vrot.lane.b32.xlu0 %v361, 60
        %v1929 = vpop.permute.xlu0 %1928
        %1930 = vrot.lane.b32.xlu0 %v362, 60
        %v1931 = vpop.permute.xlu0 %1930
        %1932 = vrot.lane.b32.xlu0 %v363, 60
        %v1933 = vpop.permute.xlu0 %1932
        %1934 = vrot.lane.b32.xlu0 %v364, 60
        %v1935 = vpop.permute.xlu0 %1934
        %1936 = vrot.lane.b32.xlu0 %v365, 60
        %v1937 = vpop.permute.xlu0 %1936
        %1938 = vrot.lane.b32.xlu0 %v366, 60
        %v1939 = vpop.permute.xlu0 %1938
        %1940 = vrot.lane.b32.xlu0 %v367, 60
        %v1941 = vpop.permute.xlu0 %1940
        %1942 = vrot.lane.b32.xlu0 %v368, 60
        %v1943 = vpop.permute.xlu0 %1942
        %1944 = vrot.lane.b32.xlu0 %v369, 60
        %v1945 = vpop.permute.xlu0 %1944
        %1946 = vrot.lane.b32.xlu0 %v370, 60
        %v1947 = vpop.permute.xlu0 %1946
        %1948 = vrot.lane.b32.xlu0 %v371, 60
        %v1949 = vpop.permute.xlu0 %1948
        %1950 = vrot.lane.b32.xlu0 %v372, 60
        %v1951 = vpop.permute.xlu0 %1950
        %1952 = vrot.lane.b32.xlu0 %v373, 60
        %v1953 = vpop.permute.xlu0 %1952
        %1954 = vrot.lane.b32.xlu0 %v374, 60
        %v1955 = vpop.permute.xlu0 %1954
        %1956 = vrot.lane.b32.xlu0 %v375, 60
        %v1957 = vpop.permute.xlu0 %1956
        %1958 = vrot.lane.b32.xlu0 %v376, 60
        %v1959 = vpop.permute.xlu0 %1958
        %1960 = vrot.lane.b32.xlu0 %v377, 60
        %v1961 = vpop.permute.xlu0 %1960
        %1962 = vrot.lane.b32.xlu0 %v378, 60
        %v1963 = vpop.permute.xlu0 %1962
        %1964 = vrot.lane.b32.xlu0 %v379, 60
        %v1965 = vpop.permute.xlu0 %1964
        %1966 = vrot.lane.b32.xlu0 %v380, 60
        %v1967 = vpop.permute.xlu0 %1966
        %1968 = vrot.lane.b32.xlu0 %v381, 60
        %v1969 = vpop.permute.xlu0 %1968
        %1970 = vrot.lane.b32.xlu0 %v382, 60
        %v1971 = vpop.permute.xlu0 %1970
        %1972 = vrot.lane.b32.xlu0 %v383, 60
        %v1973 = vpop.permute.xlu0 %1972
        %1974 = vrot.lane.b32.xlu0 %v384, 60
        %v1975 = vpop.permute.xlu0 %1974
        %1976 = vrot.lane.b32.xlu0 %v385, 60
        %v1977 = vpop.permute.xlu0 %1976
        %1978 = vrot.lane.b32.xlu0 %v386, 60
        %v1979 = vpop.permute.xlu0 %1978
        %1980 = vrot.lane.b32.xlu0 %v387, 60
        %v1981 = vpop.permute.xlu0 %1980
        %1982 = vrot.lane.b32.xlu0 %v388, 60
        %v1983 = vpop.permute.xlu0 %1982
        %1984 = vrot.lane.b32.xlu0 %v389, 60
        %v1985 = vpop.permute.xlu0 %1984
        %1986 = vrot.lane.b32.xlu0 %v390, 60
        %v1987 = vpop.permute.xlu0 %1986
        %1988 = vrot.lane.b32.xlu0 %v391, 60
        %v1989 = vpop.permute.xlu0 %1988
        %1990 = vrot.lane.b32.xlu0 %v392, 60
        %v1991 = vpop.permute.xlu0 %1990
        %1992 = vrot.lane.b32.xlu0 %v393, 60
        %v1993 = vpop.permute.xlu0 %1992
        %1994 = vrot.lane.b32.xlu0 %v394, 60
        %v1995 = vpop.permute.xlu0 %1994
        %1996 = vrot.lane.b32.xlu0 %v395, 60
        %v1997 = vpop.permute.xlu0 %1996
        %1998 = vrot.lane.b32.xlu0 %v396, 60
        %v1999 = vpop.permute.xlu0 %1998
        %2000 = vrot.lane.b32.xlu0 %v397, 60
        %v2001 = vpop.permute.xlu0 %2000
        %2002 = vrot.lane.b32.xlu0 %v398, 60
        %v2003 = vpop.permute.xlu0 %2002
        %2004 = vrot.lane.b32.xlu0 %v399, 60
        %v2005 = vpop.permute.xlu0 %2004
        %2006 = vrot.lane.b32.xlu0 %v400, 60
        %v2007 = vpop.permute.xlu0 %2006
        %2008 = vrot.lane.b32.xlu0 %v401, 60
        %v2009 = vpop.permute.xlu0 %2008
        %2010 = vrot.lane.b32.xlu0 %v402, 60
        %v2011 = vpop.permute.xlu0 %2010
        %2012 = vrot.lane.b32.xlu0 %v403, 60
        %v2013 = vpop.permute.xlu0 %2012
        %2014 = vrot.lane.b32.xlu0 %v404, 60
        %v2015 = vpop.permute.xlu0 %2014
        %2016 = vrot.lane.b32.xlu0 %v405, 60
        %v2017 = vpop.permute.xlu0 %2016
        %2018 = vrot.lane.b32.xlu0 %v406, 60
        %v2019 = vpop.permute.xlu0 %2018
        %vm2020 = vcmask 490496
        %v2021 = vsel %vm2020, %v1845, %v1847
        %v2022 = vsel %vm2020, %v1847, %v1849
        %v2023 = vsel %vm2020, %v1849, %v1851
        %v2024 = vsel %vm2020, %v1851, %v1853
        %v2025 = vsel %vm2020, %v1853, %v1855
        %v2026 = vsel %vm2020, %v1855, %v1857
        %v2027 = vsel %vm2020, %v1857, %v1859
        %v2028 = vsel %vm2020, %v1859, %v1861
        %v2029 = vsel %vm2020, %v1861, %v1863
        %v2030 = vsel %vm2020, %v1863, %v1865
        %v2031 = vsel %vm2020, %v1867, %v1869
        %v2032 = vsel %vm2020, %v1869, %v1871
        %v2033 = vsel %vm2020, %v1871, %v1873
        %v2034 = vsel %vm2020, %v1873, %v1875
        %v2035 = vsel %vm2020, %v1875, %v1877
        %v2036 = vsel %vm2020, %v1877, %v1879
        %v2037 = vsel %vm2020, %v1879, %v1881
        %v2038 = vsel %vm2020, %v1881, %v1883
        %v2039 = vsel %vm2020, %v1883, %v1885
        %v2040 = vsel %vm2020, %v1885, %v1887
        %v2041 = vsel %vm2020, %v1889, %v1891
        %v2042 = vsel %vm2020, %v1891, %v1893
        %v2043 = vsel %vm2020, %v1893, %v1895
        %v2044 = vsel %vm2020, %v1895, %v1897
        %v2045 = vsel %vm2020, %v1897, %v1899
        %v2046 = vsel %vm2020, %v1899, %v1901
        %v2047 = vsel %vm2020, %v1901, %v1903
        %v2048 = vsel %vm2020, %v1903, %v1905
        %v2049 = vsel %vm2020, %v1905, %v1907
        %v2050 = vsel %vm2020, %v1907, %v1909
        %v2051 = vsel %vm2020, %v1911, %v1913
        %v2052 = vsel %vm2020, %v1913, %v1915
        %v2053 = vsel %vm2020, %v1915, %v1917
        %v2054 = vsel %vm2020, %v1917, %v1919
        %v2055 = vsel %vm2020, %v1919, %v1921
        %v2056 = vsel %vm2020, %v1921, %v1923
        %v2057 = vsel %vm2020, %v1923, %v1925
        %v2058 = vsel %vm2020, %v1925, %v1927
        %v2059 = vsel %vm2020, %v1927, %v1929
        %v2060 = vsel %vm2020, %v1929, %v1931
        %v2061 = vsel %vm2020, %v1933, %v1935
        %v2062 = vsel %vm2020, %v1935, %v1937
        %v2063 = vsel %vm2020, %v1937, %v1939
        %v2064 = vsel %vm2020, %v1939, %v1941
        %v2065 = vsel %vm2020, %v1941, %v1943
        %v2066 = vsel %vm2020, %v1943, %v1945
        %v2067 = vsel %vm2020, %v1945, %v1947
        %v2068 = vsel %vm2020, %v1947, %v1949
        %v2069 = vsel %vm2020, %v1949, %v1951
        %v2070 = vsel %vm2020, %v1951, %v1953
        %v2071 = vsel %vm2020, %v1955, %v1957
        %v2072 = vsel %vm2020, %v1957, %v1959
        %v2073 = vsel %vm2020, %v1959, %v1961
        %v2074 = vsel %vm2020, %v1961, %v1963
        %v2075 = vsel %vm2020, %v1963, %v1965
        %v2076 = vsel %vm2020, %v1965, %v1967
        %v2077 = vsel %vm2020, %v1967, %v1969
        %v2078 = vsel %vm2020, %v1969, %v1971
        %v2079 = vsel %vm2020, %v1971, %v1973
        %v2080 = vsel %vm2020, %v1973, %v1975
        %v2081 = vsel %vm2020, %v1977, %v1979
        %v2082 = vsel %vm2020, %v1979, %v1981
        %v2083 = vsel %vm2020, %v1981, %v1983
        %v2084 = vsel %vm2020, %v1983, %v1985
        %v2085 = vsel %vm2020, %v1985, %v1987
        %v2086 = vsel %vm2020, %v1987, %v1989
        %v2087 = vsel %vm2020, %v1989, %v1991
        %v2088 = vsel %vm2020, %v1991, %v1993
        %v2089 = vsel %vm2020, %v1993, %v1995
        %v2090 = vsel %vm2020, %v1995, %v1997
        %v2091 = vsel %vm2020, %v1999, %v2001
        %v2092 = vsel %vm2020, %v2001, %v2003
        %v2093 = vsel %vm2020, %v2003, %v2005
        %v2094 = vsel %vm2020, %v2005, %v2007
        %v2095 = vsel %vm2020, %v2007, %v2009
        %v2096 = vsel %vm2020, %v2009, %v2011
        %v2097 = vsel %vm2020, %v2011, %v2013
        %v2098 = vsel %vm2020, %v2013, %v2015
        %v2099 = vsel %vm2020, %v2015, %v2017
        %v2100 = vsel %vm2020, %v2017, %v2019
        %2101 = vrot.lane.b32.xlu0 %v319, 59
        %v2102 = vpop.permute.xlu0 %2101
        %2103 = vrot.lane.b32.xlu0 %v320, 59
        %v2104 = vpop.permute.xlu0 %2103
        %2105 = vrot.lane.b32.xlu0 %v321, 59
        %v2106 = vpop.permute.xlu0 %2105
        %2107 = vrot.lane.b32.xlu0 %v322, 59
        %v2108 = vpop.permute.xlu0 %2107
        %2109 = vrot.lane.b32.xlu0 %v323, 59
        %v2110 = vpop.permute.xlu0 %2109
        %2111 = vrot.lane.b32.xlu0 %v324, 59
        %v2112 = vpop.permute.xlu0 %2111
        %2113 = vrot.lane.b32.xlu0 %v325, 59
        %v2114 = vpop.permute.xlu0 %2113
        %2115 = vrot.lane.b32.xlu0 %v326, 59
        %v2116 = vpop.permute.xlu0 %2115
        %2117 = vrot.lane.b32.xlu0 %v327, 59
        %v2118 = vpop.permute.xlu0 %2117
        %2119 = vrot.lane.b32.xlu0 %v328, 59
        %v2120 = vpop.permute.xlu0 %2119
        %2121 = vrot.lane.b32.xlu0 %v329, 59
        %v2122 = vpop.permute.xlu0 %2121
        %2123 = vrot.lane.b32.xlu0 %v330, 59
        %v2124 = vpop.permute.xlu0 %2123
        %2125 = vrot.lane.b32.xlu0 %v331, 59
        %v2126 = vpop.permute.xlu0 %2125
        %2127 = vrot.lane.b32.xlu0 %v332, 59
        %v2128 = vpop.permute.xlu0 %2127
        %2129 = vrot.lane.b32.xlu0 %v333, 59
        %v2130 = vpop.permute.xlu0 %2129
        %2131 = vrot.lane.b32.xlu0 %v334, 59
        %v2132 = vpop.permute.xlu0 %2131
        %2133 = vrot.lane.b32.xlu0 %v335, 59
        %v2134 = vpop.permute.xlu0 %2133
        %2135 = vrot.lane.b32.xlu0 %v336, 59
        %v2136 = vpop.permute.xlu0 %2135
        %2137 = vrot.lane.b32.xlu0 %v337, 59
        %v2138 = vpop.permute.xlu0 %2137
        %2139 = vrot.lane.b32.xlu0 %v338, 59
        %v2140 = vpop.permute.xlu0 %2139
        %2141 = vrot.lane.b32.xlu0 %v339, 59
        %v2142 = vpop.permute.xlu0 %2141
        %2143 = vrot.lane.b32.xlu0 %v340, 59
        %v2144 = vpop.permute.xlu0 %2143
        %2145 = vrot.lane.b32.xlu0 %v341, 59
        %v2146 = vpop.permute.xlu0 %2145
        %2147 = vrot.lane.b32.xlu0 %v342, 59
        %v2148 = vpop.permute.xlu0 %2147
        %2149 = vrot.lane.b32.xlu0 %v343, 59
        %v2150 = vpop.permute.xlu0 %2149
        %2151 = vrot.lane.b32.xlu0 %v344, 59
        %v2152 = vpop.permute.xlu0 %2151
        %2153 = vrot.lane.b32.xlu0 %v345, 59
        %v2154 = vpop.permute.xlu0 %2153
        %2155 = vrot.lane.b32.xlu0 %v346, 59
        %v2156 = vpop.permute.xlu0 %2155
        %2157 = vrot.lane.b32.xlu0 %v347, 59
        %v2158 = vpop.permute.xlu0 %2157
        %2159 = vrot.lane.b32.xlu0 %v348, 59
        %v2160 = vpop.permute.xlu0 %2159
        %2161 = vrot.lane.b32.xlu0 %v349, 59
        %v2162 = vpop.permute.xlu0 %2161
        %2163 = vrot.lane.b32.xlu0 %v350, 59
        %v2164 = vpop.permute.xlu0 %2163
        %2165 = vrot.lane.b32.xlu0 %v351, 59
        %v2166 = vpop.permute.xlu0 %2165
        %2167 = vrot.lane.b32.xlu0 %v352, 59
        %v2168 = vpop.permute.xlu0 %2167
        %2169 = vrot.lane.b32.xlu0 %v353, 59
        %v2170 = vpop.permute.xlu0 %2169
        %2171 = vrot.lane.b32.xlu0 %v354, 59
        %v2172 = vpop.permute.xlu0 %2171
        %2173 = vrot.lane.b32.xlu0 %v355, 59
        %v2174 = vpop.permute.xlu0 %2173
        %2175 = vrot.lane.b32.xlu0 %v356, 59
        %v2176 = vpop.permute.xlu0 %2175
        %2177 = vrot.lane.b32.xlu0 %v357, 59
        %v2178 = vpop.permute.xlu0 %2177
        %2179 = vrot.lane.b32.xlu0 %v358, 59
        %v2180 = vpop.permute.xlu0 %2179
        %2181 = vrot.lane.b32.xlu0 %v359, 59
        %v2182 = vpop.permute.xlu0 %2181
        %2183 = vrot.lane.b32.xlu0 %v360, 59
        %v2184 = vpop.permute.xlu0 %2183
        %2185 = vrot.lane.b32.xlu0 %v361, 59
        %v2186 = vpop.permute.xlu0 %2185
        %2187 = vrot.lane.b32.xlu0 %v362, 59
        %v2188 = vpop.permute.xlu0 %2187
        %2189 = vrot.lane.b32.xlu0 %v363, 59
        %v2190 = vpop.permute.xlu0 %2189
        %2191 = vrot.lane.b32.xlu0 %v364, 59
        %v2192 = vpop.permute.xlu0 %2191
        %2193 = vrot.lane.b32.xlu0 %v365, 59
        %v2194 = vpop.permute.xlu0 %2193
        %2195 = vrot.lane.b32.xlu0 %v366, 59
        %v2196 = vpop.permute.xlu0 %2195
        %2197 = vrot.lane.b32.xlu0 %v367, 59
        %v2198 = vpop.permute.xlu0 %2197
        %2199 = vrot.lane.b32.xlu0 %v368, 59
        %v2200 = vpop.permute.xlu0 %2199
        %2201 = vrot.lane.b32.xlu0 %v369, 59
        %v2202 = vpop.permute.xlu0 %2201
        %2203 = vrot.lane.b32.xlu0 %v370, 59
        %v2204 = vpop.permute.xlu0 %2203
        %2205 = vrot.lane.b32.xlu0 %v371, 59
        %v2206 = vpop.permute.xlu0 %2205
        %2207 = vrot.lane.b32.xlu0 %v372, 59
        %v2208 = vpop.permute.xlu0 %2207
        %2209 = vrot.lane.b32.xlu0 %v373, 59
        %v2210 = vpop.permute.xlu0 %2209
        %2211 = vrot.lane.b32.xlu0 %v374, 59
        %v2212 = vpop.permute.xlu0 %2211
        %2213 = vrot.lane.b32.xlu0 %v375, 59
        %v2214 = vpop.permute.xlu0 %2213
        %2215 = vrot.lane.b32.xlu0 %v376, 59
        %v2216 = vpop.permute.xlu0 %2215
        %2217 = vrot.lane.b32.xlu0 %v377, 59
        %v2218 = vpop.permute.xlu0 %2217
        %2219 = vrot.lane.b32.xlu0 %v378, 59
        %v2220 = vpop.permute.xlu0 %2219
        %2221 = vrot.lane.b32.xlu0 %v379, 59
        %v2222 = vpop.permute.xlu0 %2221
        %2223 = vrot.lane.b32.xlu0 %v380, 59
        %v2224 = vpop.permute.xlu0 %2223
        %2225 = vrot.lane.b32.xlu0 %v381, 59
        %v2226 = vpop.permute.xlu0 %2225
        %2227 = vrot.lane.b32.xlu0 %v382, 59
        %v2228 = vpop.permute.xlu0 %2227
        %2229 = vrot.lane.b32.xlu0 %v383, 59
        %v2230 = vpop.permute.xlu0 %2229
        %2231 = vrot.lane.b32.xlu0 %v384, 59
        %v2232 = vpop.permute.xlu0 %2231
        %2233 = vrot.lane.b32.xlu0 %v385, 59
        %v2234 = vpop.permute.xlu0 %2233
        %2235 = vrot.lane.b32.xlu0 %v386, 59
        %v2236 = vpop.permute.xlu0 %2235
        %2237 = vrot.lane.b32.xlu0 %v387, 59
        %v2238 = vpop.permute.xlu0 %2237
        %2239 = vrot.lane.b32.xlu0 %v388, 59
        %v2240 = vpop.permute.xlu0 %2239
        %2241 = vrot.lane.b32.xlu0 %v389, 59
        %v2242 = vpop.permute.xlu0 %2241
        %2243 = vrot.lane.b32.xlu0 %v390, 59
        %v2244 = vpop.permute.xlu0 %2243
        %2245 = vrot.lane.b32.xlu0 %v391, 59
        %v2246 = vpop.permute.xlu0 %2245
        %2247 = vrot.lane.b32.xlu0 %v392, 59
        %v2248 = vpop.permute.xlu0 %2247
        %2249 = vrot.lane.b32.xlu0 %v393, 59
        %v2250 = vpop.permute.xlu0 %2249
        %2251 = vrot.lane.b32.xlu0 %v394, 59
        %v2252 = vpop.permute.xlu0 %2251
        %2253 = vrot.lane.b32.xlu0 %v395, 59
        %v2254 = vpop.permute.xlu0 %2253
        %2255 = vrot.lane.b32.xlu0 %v396, 59
        %v2256 = vpop.permute.xlu0 %2255
        %2257 = vrot.lane.b32.xlu0 %v397, 59
        %v2258 = vpop.permute.xlu0 %2257
        %2259 = vrot.lane.b32.xlu0 %v398, 59
        %v2260 = vpop.permute.xlu0 %2259
        %2261 = vrot.lane.b32.xlu0 %v399, 59
        %v2262 = vpop.permute.xlu0 %2261
        %2263 = vrot.lane.b32.xlu0 %v400, 59
        %v2264 = vpop.permute.xlu0 %2263
        %2265 = vrot.lane.b32.xlu0 %v401, 59
        %v2266 = vpop.permute.xlu0 %2265
        %2267 = vrot.lane.b32.xlu0 %v402, 59
        %v2268 = vpop.permute.xlu0 %2267
        %2269 = vrot.lane.b32.xlu0 %v403, 59
        %v2270 = vpop.permute.xlu0 %2269
        %2271 = vrot.lane.b32.xlu0 %v404, 59
        %v2272 = vpop.permute.xlu0 %2271
        %2273 = vrot.lane.b32.xlu0 %v405, 59
        %v2274 = vpop.permute.xlu0 %2273
        %2275 = vrot.lane.b32.xlu0 %v406, 59
        %v2276 = vpop.permute.xlu0 %2275
        %vm2277 = vcmask 482304
        %v2278 = vsel %vm2277, %v2102, %v2104
        %v2279 = vsel %vm2277, %v2104, %v2106
        %v2280 = vsel %vm2277, %v2106, %v2108
        %v2281 = vsel %vm2277, %v2108, %v2110
        %v2282 = vsel %vm2277, %v2110, %v2112
        %v2283 = vsel %vm2277, %v2112, %v2114
        %v2284 = vsel %vm2277, %v2114, %v2116
        %v2285 = vsel %vm2277, %v2116, %v2118
        %v2286 = vsel %vm2277, %v2118, %v2120
        %v2287 = vsel %vm2277, %v2120, %v2122
        %v2288 = vsel %vm2277, %v2124, %v2126
        %v2289 = vsel %vm2277, %v2126, %v2128
        %v2290 = vsel %vm2277, %v2128, %v2130
        %v2291 = vsel %vm2277, %v2130, %v2132
        %v2292 = vsel %vm2277, %v2132, %v2134
        %v2293 = vsel %vm2277, %v2134, %v2136
        %v2294 = vsel %vm2277, %v2136, %v2138
        %v2295 = vsel %vm2277, %v2138, %v2140
        %v2296 = vsel %vm2277, %v2140, %v2142
        %v2297 = vsel %vm2277, %v2142, %v2144
        %v2298 = vsel %vm2277, %v2146, %v2148
        %v2299 = vsel %vm2277, %v2148, %v2150
        %v2300 = vsel %vm2277, %v2150, %v2152
        %v2301 = vsel %vm2277, %v2152, %v2154
        %v2302 = vsel %vm2277, %v2154, %v2156
        %v2303 = vsel %vm2277, %v2156, %v2158
        %v2304 = vsel %vm2277, %v2158, %v2160
        %v2305 = vsel %vm2277, %v2160, %v2162
        %v2306 = vsel %vm2277, %v2162, %v2164
        %v2307 = vsel %vm2277, %v2164, %v2166
        %v2308 = vsel %vm2277, %v2168, %v2170
        %v2309 = vsel %vm2277, %v2170, %v2172
        %v2310 = vsel %vm2277, %v2172, %v2174
        %v2311 = vsel %vm2277, %v2174, %v2176
        %v2312 = vsel %vm2277, %v2176, %v2178
        %v2313 = vsel %vm2277, %v2178, %v2180
        %v2314 = vsel %vm2277, %v2180, %v2182
        %v2315 = vsel %vm2277, %v2182, %v2184
        %v2316 = vsel %vm2277, %v2184, %v2186
        %v2317 = vsel %vm2277, %v2186, %v2188
        %v2318 = vsel %vm2277, %v2190, %v2192
        %v2319 = vsel %vm2277, %v2192, %v2194
        %v2320 = vsel %vm2277, %v2194, %v2196
        %v2321 = vsel %vm2277, %v2196, %v2198
        %v2322 = vsel %vm2277, %v2198, %v2200
        %v2323 = vsel %vm2277, %v2200, %v2202
        %v2324 = vsel %vm2277, %v2202, %v2204
        %v2325 = vsel %vm2277, %v2204, %v2206
        %v2326 = vsel %vm2277, %v2206, %v2208
        %v2327 = vsel %vm2277, %v2208, %v2210
        %v2328 = vsel %vm2277, %v2212, %v2214
        %v2329 = vsel %vm2277, %v2214, %v2216
        %v2330 = vsel %vm2277, %v2216, %v2218
        %v2331 = vsel %vm2277, %v2218, %v2220
        %v2332 = vsel %vm2277, %v2220, %v2222
        %v2333 = vsel %vm2277, %v2222, %v2224
        %v2334 = vsel %vm2277, %v2224, %v2226
        %v2335 = vsel %vm2277, %v2226, %v2228
        %v2336 = vsel %vm2277, %v2228, %v2230
        %v2337 = vsel %vm2277, %v2230, %v2232
        %v2338 = vsel %vm2277, %v2234, %v2236
        %v2339 = vsel %vm2277, %v2236, %v2238
        %v2340 = vsel %vm2277, %v2238, %v2240
        %v2341 = vsel %vm2277, %v2240, %v2242
        %v2342 = vsel %vm2277, %v2242, %v2244
        %v2343 = vsel %vm2277, %v2244, %v2246
        %v2344 = vsel %vm2277, %v2246, %v2248
        %v2345 = vsel %vm2277, %v2248, %v2250
        %v2346 = vsel %vm2277, %v2250, %v2252
        %v2347 = vsel %vm2277, %v2252, %v2254
        %v2348 = vsel %vm2277, %v2256, %v2258
        %v2349 = vsel %vm2277, %v2258, %v2260
        %v2350 = vsel %vm2277, %v2260, %v2262
        %v2351 = vsel %vm2277, %v2262, %v2264
        %v2352 = vsel %vm2277, %v2264, %v2266
        %v2353 = vsel %vm2277, %v2266, %v2268
        %v2354 = vsel %vm2277, %v2268, %v2270
        %v2355 = vsel %vm2277, %v2270, %v2272
        %v2356 = vsel %vm2277, %v2272, %v2274
        %v2357 = vsel %vm2277, %v2274, %v2276
        %2358 = vrot.lane.b32.xlu0 %v319, 58
        %v2359 = vpop.permute.xlu0 %2358
        %2360 = vrot.lane.b32.xlu0 %v320, 58
        %v2361 = vpop.permute.xlu0 %2360
        %2362 = vrot.lane.b32.xlu0 %v321, 58
        %v2363 = vpop.permute.xlu0 %2362
        %2364 = vrot.lane.b32.xlu0 %v322, 58
        %v2365 = vpop.permute.xlu0 %2364
        %2366 = vrot.lane.b32.xlu0 %v323, 58
        %v2367 = vpop.permute.xlu0 %2366
        %2368 = vrot.lane.b32.xlu0 %v324, 58
        %v2369 = vpop.permute.xlu0 %2368
        %2370 = vrot.lane.b32.xlu0 %v325, 58
        %v2371 = vpop.permute.xlu0 %2370
        %2372 = vrot.lane.b32.xlu0 %v326, 58
        %v2373 = vpop.permute.xlu0 %2372
        %2374 = vrot.lane.b32.xlu0 %v327, 58
        %v2375 = vpop.permute.xlu0 %2374
        %2376 = vrot.lane.b32.xlu0 %v328, 58
        %v2377 = vpop.permute.xlu0 %2376
        %2378 = vrot.lane.b32.xlu0 %v329, 58
        %v2379 = vpop.permute.xlu0 %2378
        %2380 = vrot.lane.b32.xlu0 %v330, 58
        %v2381 = vpop.permute.xlu0 %2380
        %2382 = vrot.lane.b32.xlu0 %v331, 58
        %v2383 = vpop.permute.xlu0 %2382
        %2384 = vrot.lane.b32.xlu0 %v332, 58
        %v2385 = vpop.permute.xlu0 %2384
        %2386 = vrot.lane.b32.xlu0 %v333, 58
        %v2387 = vpop.permute.xlu0 %2386
        %2388 = vrot.lane.b32.xlu0 %v334, 58
        %v2389 = vpop.permute.xlu0 %2388
        %2390 = vrot.lane.b32.xlu0 %v335, 58
        %v2391 = vpop.permute.xlu0 %2390
        %2392 = vrot.lane.b32.xlu0 %v336, 58
        %v2393 = vpop.permute.xlu0 %2392
        %2394 = vrot.lane.b32.xlu0 %v337, 58
        %v2395 = vpop.permute.xlu0 %2394
        %2396 = vrot.lane.b32.xlu0 %v338, 58
        %v2397 = vpop.permute.xlu0 %2396
        %2398 = vrot.lane.b32.xlu0 %v339, 58
        %v2399 = vpop.permute.xlu0 %2398
        %2400 = vrot.lane.b32.xlu0 %v340, 58
        %v2401 = vpop.permute.xlu0 %2400
        %2402 = vrot.lane.b32.xlu0 %v341, 58
        %v2403 = vpop.permute.xlu0 %2402
        %2404 = vrot.lane.b32.xlu0 %v342, 58
        %v2405 = vpop.permute.xlu0 %2404
        %2406 = vrot.lane.b32.xlu0 %v343, 58
        %v2407 = vpop.permute.xlu0 %2406
        %2408 = vrot.lane.b32.xlu0 %v344, 58
        %v2409 = vpop.permute.xlu0 %2408
        %2410 = vrot.lane.b32.xlu0 %v345, 58
        %v2411 = vpop.permute.xlu0 %2410
        %2412 = vrot.lane.b32.xlu0 %v346, 58
        %v2413 = vpop.permute.xlu0 %2412
        %2414 = vrot.lane.b32.xlu0 %v347, 58
        %v2415 = vpop.permute.xlu0 %2414
        %2416 = vrot.lane.b32.xlu0 %v348, 58
        %v2417 = vpop.permute.xlu0 %2416
        %2418 = vrot.lane.b32.xlu0 %v349, 58
        %v2419 = vpop.permute.xlu0 %2418
        %2420 = vrot.lane.b32.xlu0 %v350, 58
        %v2421 = vpop.permute.xlu0 %2420
        %2422 = vrot.lane.b32.xlu0 %v351, 58
        %v2423 = vpop.permute.xlu0 %2422
        %2424 = vrot.lane.b32.xlu0 %v352, 58
        %v2425 = vpop.permute.xlu0 %2424
        %2426 = vrot.lane.b32.xlu0 %v353, 58
        %v2427 = vpop.permute.xlu0 %2426
        %2428 = vrot.lane.b32.xlu0 %v354, 58
        %v2429 = vpop.permute.xlu0 %2428
        %2430 = vrot.lane.b32.xlu0 %v355, 58
        %v2431 = vpop.permute.xlu0 %2430
        %2432 = vrot.lane.b32.xlu0 %v356, 58
        %v2433 = vpop.permute.xlu0 %2432
        %2434 = vrot.lane.b32.xlu0 %v357, 58
        %v2435 = vpop.permute.xlu0 %2434
        %2436 = vrot.lane.b32.xlu0 %v358, 58
        %v2437 = vpop.permute.xlu0 %2436
        %2438 = vrot.lane.b32.xlu0 %v359, 58
        %v2439 = vpop.permute.xlu0 %2438
        %2440 = vrot.lane.b32.xlu0 %v360, 58
        %v2441 = vpop.permute.xlu0 %2440
        %2442 = vrot.lane.b32.xlu0 %v361, 58
        %v2443 = vpop.permute.xlu0 %2442
        %2444 = vrot.lane.b32.xlu0 %v362, 58
        %v2445 = vpop.permute.xlu0 %2444
        %2446 = vrot.lane.b32.xlu0 %v363, 58
        %v2447 = vpop.permute.xlu0 %2446
        %2448 = vrot.lane.b32.xlu0 %v364, 58
        %v2449 = vpop.permute.xlu0 %2448
        %2450 = vrot.lane.b32.xlu0 %v365, 58
        %v2451 = vpop.permute.xlu0 %2450
        %2452 = vrot.lane.b32.xlu0 %v366, 58
        %v2453 = vpop.permute.xlu0 %2452
        %2454 = vrot.lane.b32.xlu0 %v367, 58
        %v2455 = vpop.permute.xlu0 %2454
        %2456 = vrot.lane.b32.xlu0 %v368, 58
        %v2457 = vpop.permute.xlu0 %2456
        %2458 = vrot.lane.b32.xlu0 %v369, 58
        %v2459 = vpop.permute.xlu0 %2458
        %2460 = vrot.lane.b32.xlu0 %v370, 58
        %v2461 = vpop.permute.xlu0 %2460
        %2462 = vrot.lane.b32.xlu0 %v371, 58
        %v2463 = vpop.permute.xlu0 %2462
        %2464 = vrot.lane.b32.xlu0 %v372, 58
        %v2465 = vpop.permute.xlu0 %2464
        %2466 = vrot.lane.b32.xlu0 %v373, 58
        %v2467 = vpop.permute.xlu0 %2466
        %2468 = vrot.lane.b32.xlu0 %v374, 58
        %v2469 = vpop.permute.xlu0 %2468
        %2470 = vrot.lane.b32.xlu0 %v375, 58
        %v2471 = vpop.permute.xlu0 %2470
        %2472 = vrot.lane.b32.xlu0 %v376, 58
        %v2473 = vpop.permute.xlu0 %2472
        %2474 = vrot.lane.b32.xlu0 %v377, 58
        %v2475 = vpop.permute.xlu0 %2474
        %2476 = vrot.lane.b32.xlu0 %v378, 58
        %v2477 = vpop.permute.xlu0 %2476
        %2478 = vrot.lane.b32.xlu0 %v379, 58
        %v2479 = vpop.permute.xlu0 %2478
        %2480 = vrot.lane.b32.xlu0 %v380, 58
        %v2481 = vpop.permute.xlu0 %2480
        %2482 = vrot.lane.b32.xlu0 %v381, 58
        %v2483 = vpop.permute.xlu0 %2482
        %2484 = vrot.lane.b32.xlu0 %v382, 58
        %v2485 = vpop.permute.xlu0 %2484
        %2486 = vrot.lane.b32.xlu0 %v383, 58
        %v2487 = vpop.permute.xlu0 %2486
        %2488 = vrot.lane.b32.xlu0 %v384, 58
        %v2489 = vpop.permute.xlu0 %2488
        %2490 = vrot.lane.b32.xlu0 %v385, 58
        %v2491 = vpop.permute.xlu0 %2490
        %2492 = vrot.lane.b32.xlu0 %v386, 58
        %v2493 = vpop.permute.xlu0 %2492
        %2494 = vrot.lane.b32.xlu0 %v387, 58
        %v2495 = vpop.permute.xlu0 %2494
        %2496 = vrot.lane.b32.xlu0 %v388, 58
        %v2497 = vpop.permute.xlu0 %2496
        %2498 = vrot.lane.b32.xlu0 %v389, 58
        %v2499 = vpop.permute.xlu0 %2498
        %2500 = vrot.lane.b32.xlu0 %v390, 58
        %v2501 = vpop.permute.xlu0 %2500
        %2502 = vrot.lane.b32.xlu0 %v391, 58
        %v2503 = vpop.permute.xlu0 %2502
        %2504 = vrot.lane.b32.xlu0 %v392, 58
        %v2505 = vpop.permute.xlu0 %2504
        %2506 = vrot.lane.b32.xlu0 %v393, 58
        %v2507 = vpop.permute.xlu0 %2506
        %2508 = vrot.lane.b32.xlu0 %v394, 58
        %v2509 = vpop.permute.xlu0 %2508
        %2510 = vrot.lane.b32.xlu0 %v395, 58
        %v2511 = vpop.permute.xlu0 %2510
        %2512 = vrot.lane.b32.xlu0 %v396, 58
        %v2513 = vpop.permute.xlu0 %2512
        %2514 = vrot.lane.b32.xlu0 %v397, 58
        %v2515 = vpop.permute.xlu0 %2514
        %2516 = vrot.lane.b32.xlu0 %v398, 58
        %v2517 = vpop.permute.xlu0 %2516
        %2518 = vrot.lane.b32.xlu0 %v399, 58
        %v2519 = vpop.permute.xlu0 %2518
        %2520 = vrot.lane.b32.xlu0 %v400, 58
        %v2521 = vpop.permute.xlu0 %2520
        %2522 = vrot.lane.b32.xlu0 %v401, 58
        %v2523 = vpop.permute.xlu0 %2522
        %2524 = vrot.lane.b32.xlu0 %v402, 58
        %v2525 = vpop.permute.xlu0 %2524
        %2526 = vrot.lane.b32.xlu0 %v403, 58
        %v2527 = vpop.permute.xlu0 %2526
        %2528 = vrot.lane.b32.xlu0 %v404, 58
        %v2529 = vpop.permute.xlu0 %2528
        %2530 = vrot.lane.b32.xlu0 %v405, 58
        %v2531 = vpop.permute.xlu0 %2530
        %2532 = vrot.lane.b32.xlu0 %v406, 58
        %v2533 = vpop.permute.xlu0 %2532
        %vm2534 = vcmask 474112
        %v2535 = vsel %vm2534, %v2359, %v2361
        %v2536 = vsel %vm2534, %v2361, %v2363
        %v2537 = vsel %vm2534, %v2363, %v2365
        %v2538 = vsel %vm2534, %v2365, %v2367
        %v2539 = vsel %vm2534, %v2367, %v2369
        %v2540 = vsel %vm2534, %v2369, %v2371
        %v2541 = vsel %vm2534, %v2371, %v2373
        %v2542 = vsel %vm2534, %v2373, %v2375
        %v2543 = vsel %vm2534, %v2375, %v2377
        %v2544 = vsel %vm2534, %v2377, %v2379
        %v2545 = vsel %vm2534, %v2381, %v2383
        %v2546 = vsel %vm2534, %v2383, %v2385
        %v2547 = vsel %vm2534, %v2385, %v2387
        %v2548 = vsel %vm2534, %v2387, %v2389
        %v2549 = vsel %vm2534, %v2389, %v2391
        %v2550 = vsel %vm2534, %v2391, %v2393
        %v2551 = vsel %vm2534, %v2393, %v2395
        %v2552 = vsel %vm2534, %v2395, %v2397
        %v2553 = vsel %vm2534, %v2397, %v2399
        %v2554 = vsel %vm2534, %v2399, %v2401
        %v2555 = vsel %vm2534, %v2403, %v2405
        %v2556 = vsel %vm2534, %v2405, %v2407
        %v2557 = vsel %vm2534, %v2407, %v2409
        %v2558 = vsel %vm2534, %v2409, %v2411
        %v2559 = vsel %vm2534, %v2411, %v2413
        %v2560 = vsel %vm2534, %v2413, %v2415
        %v2561 = vsel %vm2534, %v2415, %v2417
        %v2562 = vsel %vm2534, %v2417, %v2419
        %v2563 = vsel %vm2534, %v2419, %v2421
        %v2564 = vsel %vm2534, %v2421, %v2423
        %v2565 = vsel %vm2534, %v2425, %v2427
        %v2566 = vsel %vm2534, %v2427, %v2429
        %v2567 = vsel %vm2534, %v2429, %v2431
        %v2568 = vsel %vm2534, %v2431, %v2433
        %v2569 = vsel %vm2534, %v2433, %v2435
        %v2570 = vsel %vm2534, %v2435, %v2437
        %v2571 = vsel %vm2534, %v2437, %v2439
        %v2572 = vsel %vm2534, %v2439, %v2441
        %v2573 = vsel %vm2534, %v2441, %v2443
        %v2574 = vsel %vm2534, %v2443, %v2445
        %v2575 = vsel %vm2534, %v2447, %v2449
        %v2576 = vsel %vm2534, %v2449, %v2451
        %v2577 = vsel %vm2534, %v2451, %v2453
        %v2578 = vsel %vm2534, %v2453, %v2455
        %v2579 = vsel %vm2534, %v2455, %v2457
        %v2580 = vsel %vm2534, %v2457, %v2459
        %v2581 = vsel %vm2534, %v2459, %v2461
        %v2582 = vsel %vm2534, %v2461, %v2463
        %v2583 = vsel %vm2534, %v2463, %v2465
        %v2584 = vsel %vm2534, %v2465, %v2467
        %v2585 = vsel %vm2534, %v2469, %v2471
        %v2586 = vsel %vm2534, %v2471, %v2473
        %v2587 = vsel %vm2534, %v2473, %v2475
        %v2588 = vsel %vm2534, %v2475, %v2477
        %v2589 = vsel %vm2534, %v2477, %v2479
        %v2590 = vsel %vm2534, %v2479, %v2481
        %v2591 = vsel %vm2534, %v2481, %v2483
        %v2592 = vsel %vm2534, %v2483, %v2485
        %v2593 = vsel %vm2534, %v2485, %v2487
        %v2594 = vsel %vm2534, %v2487, %v2489
        %v2595 = vsel %vm2534, %v2491, %v2493
        %v2596 = vsel %vm2534, %v2493, %v2495
        %v2597 = vsel %vm2534, %v2495, %v2497
        %v2598 = vsel %vm2534, %v2497, %v2499
        %v2599 = vsel %vm2534, %v2499, %v2501
        %v2600 = vsel %vm2534, %v2501, %v2503
        %v2601 = vsel %vm2534, %v2503, %v2505
        %v2602 = vsel %vm2534, %v2505, %v2507
        %v2603 = vsel %vm2534, %v2507, %v2509
        %v2604 = vsel %vm2534, %v2509, %v2511
        %v2605 = vsel %vm2534, %v2513, %v2515
        %v2606 = vsel %vm2534, %v2515, %v2517
        %v2607 = vsel %vm2534, %v2517, %v2519
        %v2608 = vsel %vm2534, %v2519, %v2521
        %v2609 = vsel %vm2534, %v2521, %v2523
        %v2610 = vsel %vm2534, %v2523, %v2525
        %v2611 = vsel %vm2534, %v2525, %v2527
        %v2612 = vsel %vm2534, %v2527, %v2529
        %v2613 = vsel %vm2534, %v2529, %v2531
        %v2614 = vsel %vm2534, %v2531, %v2533
        %v2615 = vld [vmem:[#allocation5] sm:$0xff]
        %v2616 = vld [vmem:[#allocation5 + $0x8] sm:$0xff]
        %v2617 = vld [vmem:[#allocation5 + $0x10] sm:$0xff]
        %v2618 = vld [vmem:[#allocation5 + $0x18] sm:$0xff]
        %v2619 = vld [vmem:[#allocation5 + $0x20] sm:$0xff]
        %v2620 = vld [vmem:[#allocation5 + $0x28] sm:$0xff]
        %v2621 = vld [vmem:[#allocation5 + $0x30] sm:$0xff]
        %v2622 = vld [vmem:[#allocation5 + $0x38] sm:$0xff]
        %v2623 = vld [vmem:[#allocation5 + $0x40] sm:$0xff]
        %v2624 = vld [vmem:[#allocation5 + $0x48] sm:$0xff]
        %v2625 = vld [vmem:[#allocation5 + $0x50] sm:$0xff]
        %v2626 = vld [vmem:[#allocation5 + $0x58] sm:$0xff]
        %v2627 = vld [vmem:[#allocation5 + $0x60] sm:$0xff]
        %v2628 = vld [vmem:[#allocation5 + $0x68] sm:$0xff]
        %v2629 = vld [vmem:[#allocation5 + $0x70] sm:$0xff]
        %v2630 = vld [vmem:[#allocation5 + $0x78] sm:$0xff]
        %v2631 = vld [vmem:[#allocation5 + $0x80] sm:$0xff]
        %v2632 = vld [vmem:[#allocation5 + $0x88] sm:$0xff]
        %v2633 = vld [vmem:[#allocation5 + $0x90] sm:$0xff]
        %v2634 = vld [vmem:[#allocation5 + $0x98] sm:$0xff]
        %v2635 = vld [vmem:[#allocation5 + $0xa0] sm:$0xff]
        %v2636 = vld [vmem:[#allocation5 + $0xa8] sm:$0xff]
        %v2637 = vld [vmem:[#allocation5 + $0xb0] sm:$0xff]
        %v2638 = vld [vmem:[#allocation5 + $0xb8] sm:$0xff]
        %v2639 = vld [vmem:[#allocation5 + $0xc0] sm:$0xff]
        %v2640 = vld [vmem:[#allocation5 + $0xc8] sm:$0xff]
        %v2641 = vld [vmem:[#allocation5 + $0xd0] sm:$0xff]
        %v2642 = vld [vmem:[#allocation5 + $0xd8] sm:$0xff]
        %v2643 = vld [vmem:[#allocation5 + $0xe0] sm:$0xff]
        %v2644 = vld [vmem:[#allocation5 + $0xe8] sm:$0xff]
        %v2645 = vld [vmem:[#allocation5 + $0xf0] sm:$0xff]
        %v2646 = vld [vmem:[#allocation5 + $0xf8] sm:$0xff]
        %v2647 = vld [vmem:[#allocation5 + $0x100] sm:$0xff]
        %v2648 = vld [vmem:[#allocation5 + $0x108] sm:$0xff]
        %v2649 = vld [vmem:[#allocation5 + $0x110] sm:$0xff]
        %v2650 = vld [vmem:[#allocation5 + $0x118] sm:$0xff]
        %v2651 = vld [vmem:[#allocation5 + $0x120] sm:$0xff]
        %v2652 = vld [vmem:[#allocation5 + $0x128] sm:$0xff]
        %v2653 = vld [vmem:[#allocation5 + $0x130] sm:$0xff]
        %v2654 = vld [vmem:[#allocation5 + $0x138] sm:$0xff]
        %v2655 = vld [vmem:[%s2] sm:$0xff]
        %v2656 = vld [vmem:[%s2 + $0x8] sm:$0xff]
        %v2657 = vld [vmem:[%s2 + $0x10] sm:$0xff]
        %v2658 = vld [vmem:[%s2 + $0x18] sm:$0xff]
        %v2659 = vld [vmem:[%s2 + $0x20] sm:$0xff]
        %v2660 = vld [vmem:[%s2 + $0x28] sm:$0xff]
        %v2661 = vld [vmem:[%s2 + $0x30] sm:$0xff]
        %v2662 = vld [vmem:[%s2 + $0x38] sm:$0xff]
        %2664 = vset.pattern.permute.xlu0 0
        %2665 = vperm.xlu0 %2664, %v2655
        %v2666 = vpop.permute.xlu0 %2665
        %2669 = vset.pattern.permute.xlu0 0
        %2670 = vperm.xlu0 %2669, %v2656
        %v2671 = vpop.permute.xlu0 %2670
        %2674 = vset.pattern.permute.xlu0 0
        %2675 = vperm.xlu0 %2674, %v2657
        %v2676 = vpop.permute.xlu0 %2675
        %2679 = vset.pattern.permute.xlu0 0
        %2680 = vperm.xlu0 %2679, %v2658
        %v2681 = vpop.permute.xlu0 %2680
        %2684 = vset.pattern.permute.xlu0 0
        %2685 = vperm.xlu0 %2684, %v2659
        %v2686 = vpop.permute.xlu0 %2685
        %2689 = vset.pattern.permute.xlu0 0
        %2690 = vperm.xlu0 %2689, %v2660
        %v2691 = vpop.permute.xlu0 %2690
        %2694 = vset.pattern.permute.xlu0 0
        %2695 = vperm.xlu0 %2694, %v2661
        %v2696 = vpop.permute.xlu0 %2695
        %2699 = vset.pattern.permute.xlu0 0
        %2700 = vperm.xlu0 %2699, %v2662
        %v2701 = vpop.permute.xlu0 %2700
        %2703 = vrot.lane.b32.xlu0 %v231, 35
        %v2704 = vpop.permute.xlu0 %2703
        %2705 = vrot.lane.b32.xlu0 %v232, 35
        %v2706 = vpop.permute.xlu0 %2705
        %2707 = vrot.lane.b32.xlu0 %v233, 35
        %v2708 = vpop.permute.xlu0 %2707
        %2709 = vrot.lane.b32.xlu0 %v234, 35
        %v2710 = vpop.permute.xlu0 %2709
        %2711 = vrot.lane.b32.xlu0 %v235, 35
        %v2712 = vpop.permute.xlu0 %2711
        %2713 = vrot.lane.b32.xlu0 %v236, 35
        %v2714 = vpop.permute.xlu0 %2713
        %2715 = vrot.lane.b32.xlu0 %v237, 35
        %v2716 = vpop.permute.xlu0 %2715
        %2717 = vrot.lane.b32.xlu0 %v238, 35
        %v2718 = vpop.permute.xlu0 %2717
        %2719 = vrot.lane.b32.xlu0 %v239, 35
        %v2720 = vpop.permute.xlu0 %2719
        %2721 = vrot.lane.b32.xlu0 %v240, 35
        %v2722 = vpop.permute.xlu0 %2721
        %2723 = vrot.lane.b32.xlu0 %v241, 35
        %v2724 = vpop.permute.xlu0 %2723
        %2725 = vrot.lane.b32.xlu0 %v242, 35
        %v2726 = vpop.permute.xlu0 %2725
        %2727 = vrot.lane.b32.xlu0 %v243, 35
        %v2728 = vpop.permute.xlu0 %2727
        %2729 = vrot.lane.b32.xlu0 %v244, 35
        %v2730 = vpop.permute.xlu0 %2729
        %2731 = vrot.lane.b32.xlu0 %v245, 35
        %v2732 = vpop.permute.xlu0 %2731
        %2733 = vrot.lane.b32.xlu0 %v246, 35
        %v2734 = vpop.permute.xlu0 %2733
        %2735 = vrot.lane.b32.xlu0 %v247, 35
        %v2736 = vpop.permute.xlu0 %2735
        %2737 = vrot.lane.b32.xlu0 %v248, 35
        %v2738 = vpop.permute.xlu0 %2737
        %2739 = vrot.lane.b32.xlu0 %v249, 35
        %v2740 = vpop.permute.xlu0 %2739
        %2741 = vrot.lane.b32.xlu0 %v250, 35
        %v2742 = vpop.permute.xlu0 %2741
        %2743 = vrot.lane.b32.xlu0 %v251, 35
        %v2744 = vpop.permute.xlu0 %2743
        %2745 = vrot.lane.b32.xlu0 %v252, 35
        %v2746 = vpop.permute.xlu0 %2745
        %2747 = vrot.lane.b32.xlu0 %v253, 35
        %v2748 = vpop.permute.xlu0 %2747
        %2749 = vrot.lane.b32.xlu0 %v254, 35
        %v2750 = vpop.permute.xlu0 %2749
        %2751 = vrot.lane.b32.xlu0 %v255, 35
        %v2752 = vpop.permute.xlu0 %2751
        %2753 = vrot.lane.b32.xlu0 %v256, 35
        %v2754 = vpop.permute.xlu0 %2753
        %2755 = vrot.lane.b32.xlu0 %v257, 35
        %v2756 = vpop.permute.xlu0 %2755
        %2757 = vrot.lane.b32.xlu0 %v258, 35
        %v2758 = vpop.permute.xlu0 %2757
        %2759 = vrot.lane.b32.xlu0 %v259, 35
        %v2760 = vpop.permute.xlu0 %2759
        %2761 = vrot.lane.b32.xlu0 %v260, 35
        %v2762 = vpop.permute.xlu0 %2761
        %2763 = vrot.lane.b32.xlu0 %v261, 35
        %v2764 = vpop.permute.xlu0 %2763
        %2765 = vrot.lane.b32.xlu0 %v262, 35
        %v2766 = vpop.permute.xlu0 %2765
        %2767 = vrot.lane.b32.xlu0 %v263, 35
        %v2768 = vpop.permute.xlu0 %2767
        %2769 = vrot.lane.b32.xlu0 %v264, 35
        %v2770 = vpop.permute.xlu0 %2769
        %2771 = vrot.lane.b32.xlu0 %v265, 35
        %v2772 = vpop.permute.xlu0 %2771
        %2773 = vrot.lane.b32.xlu0 %v266, 35
        %v2774 = vpop.permute.xlu0 %2773
        %2775 = vrot.lane.b32.xlu0 %v267, 35
        %v2776 = vpop.permute.xlu0 %2775
        %2777 = vrot.lane.b32.xlu0 %v268, 35
        %v2778 = vpop.permute.xlu0 %2777
        %2779 = vrot.lane.b32.xlu0 %v269, 35
        %v2780 = vpop.permute.xlu0 %2779
        %2781 = vrot.lane.b32.xlu0 %v270, 35
        %v2782 = vpop.permute.xlu0 %2781
        %2783 = vrot.lane.b32.xlu0 %v271, 35
        %v2784 = vpop.permute.xlu0 %2783
        %2785 = vrot.lane.b32.xlu0 %v272, 35
        %v2786 = vpop.permute.xlu0 %2785
        %2787 = vrot.lane.b32.xlu0 %v273, 35
        %v2788 = vpop.permute.xlu0 %2787
        %2789 = vrot.lane.b32.xlu0 %v274, 35
        %v2790 = vpop.permute.xlu0 %2789
        %2791 = vrot.lane.b32.xlu0 %v275, 35
        %v2792 = vpop.permute.xlu0 %2791
        %2793 = vrot.lane.b32.xlu0 %v276, 35
        %v2794 = vpop.permute.xlu0 %2793
        %2795 = vrot.lane.b32.xlu0 %v277, 35
        %v2796 = vpop.permute.xlu0 %2795
        %2797 = vrot.lane.b32.xlu0 %v278, 35
        %v2798 = vpop.permute.xlu0 %2797
        %2799 = vrot.lane.b32.xlu0 %v279, 35
        %v2800 = vpop.permute.xlu0 %2799
        %2801 = vrot.lane.b32.xlu0 %v280, 35
        %v2802 = vpop.permute.xlu0 %2801
        %2803 = vrot.lane.b32.xlu0 %v281, 35
        %v2804 = vpop.permute.xlu0 %2803
        %2805 = vrot.lane.b32.xlu0 %v282, 35
        %v2806 = vpop.permute.xlu0 %2805
        %2807 = vrot.lane.b32.xlu0 %v283, 35
        %v2808 = vpop.permute.xlu0 %2807
        %2809 = vrot.lane.b32.xlu0 %v284, 35
        %v2810 = vpop.permute.xlu0 %2809
        %2811 = vrot.lane.b32.xlu0 %v285, 35
        %v2812 = vpop.permute.xlu0 %2811
        %2813 = vrot.lane.b32.xlu0 %v286, 35
        %v2814 = vpop.permute.xlu0 %2813
        %2815 = vrot.lane.b32.xlu0 %v287, 35
        %v2816 = vpop.permute.xlu0 %2815
        %2817 = vrot.lane.b32.xlu0 %v288, 35
        %v2818 = vpop.permute.xlu0 %2817
        %2819 = vrot.lane.b32.xlu0 %v289, 35
        %v2820 = vpop.permute.xlu0 %2819
        %2821 = vrot.lane.b32.xlu0 %v290, 35
        %v2822 = vpop.permute.xlu0 %2821
        %2823 = vrot.lane.b32.xlu0 %v291, 35
        %v2824 = vpop.permute.xlu0 %2823
        %2825 = vrot.lane.b32.xlu0 %v292, 35
        %v2826 = vpop.permute.xlu0 %2825
        %2827 = vrot.lane.b32.xlu0 %v293, 35
        %v2828 = vpop.permute.xlu0 %2827
        %2829 = vrot.lane.b32.xlu0 %v294, 35
        %v2830 = vpop.permute.xlu0 %2829
        %2831 = vrot.lane.b32.xlu0 %v295, 35
        %v2832 = vpop.permute.xlu0 %2831
        %2833 = vrot.lane.b32.xlu0 %v296, 35
        %v2834 = vpop.permute.xlu0 %2833
        %2835 = vrot.lane.b32.xlu0 %v297, 35
        %v2836 = vpop.permute.xlu0 %2835
        %2837 = vrot.lane.b32.xlu0 %v298, 35
        %v2838 = vpop.permute.xlu0 %2837
        %2839 = vrot.lane.b32.xlu0 %v299, 35
        %v2840 = vpop.permute.xlu0 %2839
        %2841 = vrot.lane.b32.xlu0 %v300, 35
        %v2842 = vpop.permute.xlu0 %2841
        %2843 = vrot.lane.b32.xlu0 %v301, 35
        %v2844 = vpop.permute.xlu0 %2843
        %2845 = vrot.lane.b32.xlu0 %v302, 35
        %v2846 = vpop.permute.xlu0 %2845
        %2847 = vrot.lane.b32.xlu0 %v303, 35
        %v2848 = vpop.permute.xlu0 %2847
        %2849 = vrot.lane.b32.xlu0 %v304, 35
        %v2850 = vpop.permute.xlu0 %2849
        %2851 = vrot.lane.b32.xlu0 %v305, 35
        %v2852 = vpop.permute.xlu0 %2851
        %2853 = vrot.lane.b32.xlu0 %v306, 35
        %v2854 = vpop.permute.xlu0 %2853
        %2855 = vrot.lane.b32.xlu0 %v307, 35
        %v2856 = vpop.permute.xlu0 %2855
        %2857 = vrot.lane.b32.xlu0 %v308, 35
        %v2858 = vpop.permute.xlu0 %2857
        %2859 = vrot.lane.b32.xlu0 %v309, 35
        %v2860 = vpop.permute.xlu0 %2859
        %2861 = vrot.lane.b32.xlu0 %v310, 35
        %v2862 = vpop.permute.xlu0 %2861
        %2863 = vrot.lane.b32.xlu0 %v311, 35
        %v2864 = vpop.permute.xlu0 %2863
        %2865 = vrot.lane.b32.xlu0 %v312, 35
        %v2866 = vpop.permute.xlu0 %2865
        %2867 = vrot.lane.b32.xlu0 %v313, 35
        %v2868 = vpop.permute.xlu0 %2867
        %2869 = vrot.lane.b32.xlu0 %v314, 35
        %v2870 = vpop.permute.xlu0 %2869
        %2871 = vrot.lane.b32.xlu0 %v315, 35
        %v2872 = vpop.permute.xlu0 %2871
        %2873 = vrot.lane.b32.xlu0 %v316, 35
        %v2874 = vpop.permute.xlu0 %2873
        %2875 = vrot.lane.b32.xlu0 %v317, 35
        %v2876 = vpop.permute.xlu0 %2875
        %2877 = vrot.lane.b32.xlu0 %v318, 35
        %v2878 = vpop.permute.xlu0 %2877
        %2879 = vrot.lane.b32.xlu0 %v672, 35
        %v2880 = vpop.permute.xlu0 %2879
        %2881 = vrot.lane.b32.xlu0 %v673, 35
        %v2882 = vpop.permute.xlu0 %2881
        %2883 = vrot.lane.b32.xlu0 %v674, 35
        %v2884 = vpop.permute.xlu0 %2883
        %2885 = vrot.lane.b32.xlu0 %v675, 35
        %v2886 = vpop.permute.xlu0 %2885
        %2887 = vrot.lane.b32.xlu0 %v676, 35
        %v2888 = vpop.permute.xlu0 %2887
        %2889 = vrot.lane.b32.xlu0 %v677, 35
        %v2890 = vpop.permute.xlu0 %2889
        %2891 = vrot.lane.b32.xlu0 %v678, 35
        %v2892 = vpop.permute.xlu0 %2891
        %2893 = vrot.lane.b32.xlu0 %v679, 35
        %v2894 = vpop.permute.xlu0 %2893
        %2895 = vrot.lane.b32.xlu0 %v680, 35
        %v2896 = vpop.permute.xlu0 %2895
        %2897 = vrot.lane.b32.xlu0 %v681, 35
        %v2898 = vpop.permute.xlu0 %2897
        %2899 = vrot.lane.b32.xlu0 %v516, 35
        %v2900 = vpop.permute.xlu0 %2899
        %2901 = vrot.lane.b32.xlu0 %v682, 35
        %v2902 = vpop.permute.xlu0 %2901
        %2903 = vrot.lane.b32.xlu0 %v683, 35
        %v2904 = vpop.permute.xlu0 %2903
        %2905 = vrot.lane.b32.xlu0 %v684, 35
        %v2906 = vpop.permute.xlu0 %2905
        %2907 = vrot.lane.b32.xlu0 %v685, 35
        %v2908 = vpop.permute.xlu0 %2907
        %2909 = vrot.lane.b32.xlu0 %v686, 35
        %v2910 = vpop.permute.xlu0 %2909
        %2911 = vrot.lane.b32.xlu0 %v687, 35
        %v2912 = vpop.permute.xlu0 %2911
        %2913 = vrot.lane.b32.xlu0 %v688, 35
        %v2914 = vpop.permute.xlu0 %2913
        %2915 = vrot.lane.b32.xlu0 %v689, 35
        %v2916 = vpop.permute.xlu0 %2915
        %2917 = vrot.lane.b32.xlu0 %v690, 35
        %v2918 = vpop.permute.xlu0 %2917
        %2919 = vrot.lane.b32.xlu0 %v691, 35
        %v2920 = vpop.permute.xlu0 %2919
        %2921 = vrot.lane.b32.xlu0 %v538, 35
        %v2922 = vpop.permute.xlu0 %2921
        %2923 = vrot.lane.b32.xlu0 %v692, 35
        %v2924 = vpop.permute.xlu0 %2923
        %2925 = vrot.lane.b32.xlu0 %v693, 35
        %v2926 = vpop.permute.xlu0 %2925
        %2927 = vrot.lane.b32.xlu0 %v694, 35
        %v2928 = vpop.permute.xlu0 %2927
        %2929 = vrot.lane.b32.xlu0 %v695, 35
        %v2930 = vpop.permute.xlu0 %2929
        %2931 = vrot.lane.b32.xlu0 %v696, 35
        %v2932 = vpop.permute.xlu0 %2931
        %2933 = vrot.lane.b32.xlu0 %v697, 35
        %v2934 = vpop.permute.xlu0 %2933
        %2935 = vrot.lane.b32.xlu0 %v698, 35
        %v2936 = vpop.permute.xlu0 %2935
        %2937 = vrot.lane.b32.xlu0 %v699, 35
        %v2938 = vpop.permute.xlu0 %2937
        %2939 = vrot.lane.b32.xlu0 %v700, 35
        %v2940 = vpop.permute.xlu0 %2939
        %2941 = vrot.lane.b32.xlu0 %v701, 35
        %v2942 = vpop.permute.xlu0 %2941
        %2943 = vrot.lane.b32.xlu0 %v560, 35
        %v2944 = vpop.permute.xlu0 %2943
        %2945 = vrot.lane.b32.xlu0 %v702, 35
        %v2946 = vpop.permute.xlu0 %2945
        %2947 = vrot.lane.b32.xlu0 %v703, 35
        %v2948 = vpop.permute.xlu0 %2947
        %2949 = vrot.lane.b32.xlu0 %v704, 35
        %v2950 = vpop.permute.xlu0 %2949
        %2951 = vrot.lane.b32.xlu0 %v705, 35
        %v2952 = vpop.permute.xlu0 %2951
        %2953 = vrot.lane.b32.xlu0 %v706, 35
        %v2954 = vpop.permute.xlu0 %2953
        %2955 = vrot.lane.b32.xlu0 %v707, 35
        %v2956 = vpop.permute.xlu0 %2955
        %2957 = vrot.lane.b32.xlu0 %v708, 35
        %v2958 = vpop.permute.xlu0 %2957
        %2959 = vrot.lane.b32.xlu0 %v709, 35
        %v2960 = vpop.permute.xlu0 %2959
        %2961 = vrot.lane.b32.xlu0 %v710, 35
        %v2962 = vpop.permute.xlu0 %2961
        %2963 = vrot.lane.b32.xlu0 %v711, 35
        %v2964 = vpop.permute.xlu0 %2963
        %2965 = vrot.lane.b32.xlu0 %v582, 35
        %v2966 = vpop.permute.xlu0 %2965
        %2967 = vrot.lane.b32.xlu0 %v712, 35
        %v2968 = vpop.permute.xlu0 %2967
        %2969 = vrot.lane.b32.xlu0 %v713, 35
        %v2970 = vpop.permute.xlu0 %2969
        %2971 = vrot.lane.b32.xlu0 %v714, 35
        %v2972 = vpop.permute.xlu0 %2971
        %2973 = vrot.lane.b32.xlu0 %v715, 35
        %v2974 = vpop.permute.xlu0 %2973
        %2975 = vrot.lane.b32.xlu0 %v716, 35
        %v2976 = vpop.permute.xlu0 %2975
        %2977 = vrot.lane.b32.xlu0 %v717, 35
        %v2978 = vpop.permute.xlu0 %2977
        %2979 = vrot.lane.b32.xlu0 %v718, 35
        %v2980 = vpop.permute.xlu0 %2979
        %2981 = vrot.lane.b32.xlu0 %v719, 35
        %v2982 = vpop.permute.xlu0 %2981
        %2983 = vrot.lane.b32.xlu0 %v720, 35
        %v2984 = vpop.permute.xlu0 %2983
        %2985 = vrot.lane.b32.xlu0 %v721, 35
        %v2986 = vpop.permute.xlu0 %2985
        %2987 = vrot.lane.b32.xlu0 %v604, 35
        %v2988 = vpop.permute.xlu0 %2987
        %2989 = vrot.lane.b32.xlu0 %v722, 35
        %v2990 = vpop.permute.xlu0 %2989
        %2991 = vrot.lane.b32.xlu0 %v723, 35
        %v2992 = vpop.permute.xlu0 %2991
        %2993 = vrot.lane.b32.xlu0 %v724, 35
        %v2994 = vpop.permute.xlu0 %2993
        %2995 = vrot.lane.b32.xlu0 %v725, 35
        %v2996 = vpop.permute.xlu0 %2995
        %2997 = vrot.lane.b32.xlu0 %v726, 35
        %v2998 = vpop.permute.xlu0 %2997
        %2999 = vrot.lane.b32.xlu0 %v727, 35
        %v3000 = vpop.permute.xlu0 %2999
        %3001 = vrot.lane.b32.xlu0 %v728, 35
        %v3002 = vpop.permute.xlu0 %3001
        %3003 = vrot.lane.b32.xlu0 %v729, 35
        %v3004 = vpop.permute.xlu0 %3003
        %3005 = vrot.lane.b32.xlu0 %v730, 35
        %v3006 = vpop.permute.xlu0 %3005
        %3007 = vrot.lane.b32.xlu0 %v731, 35
        %v3008 = vpop.permute.xlu0 %3007
        %3009 = vrot.lane.b32.xlu0 %v626, 35
        %v3010 = vpop.permute.xlu0 %3009
        %3011 = vrot.lane.b32.xlu0 %v732, 35
        %v3012 = vpop.permute.xlu0 %3011
        %3013 = vrot.lane.b32.xlu0 %v733, 35
        %v3014 = vpop.permute.xlu0 %3013
        %3015 = vrot.lane.b32.xlu0 %v734, 35
        %v3016 = vpop.permute.xlu0 %3015
        %3017 = vrot.lane.b32.xlu0 %v735, 35
        %v3018 = vpop.permute.xlu0 %3017
        %3019 = vrot.lane.b32.xlu0 %v736, 35
        %v3020 = vpop.permute.xlu0 %3019
        %3021 = vrot.lane.b32.xlu0 %v737, 35
        %v3022 = vpop.permute.xlu0 %3021
        %3023 = vrot.lane.b32.xlu0 %v738, 35
        %v3024 = vpop.permute.xlu0 %3023
        %3025 = vrot.lane.b32.xlu0 %v739, 35
        %v3026 = vpop.permute.xlu0 %3025
        %3027 = vrot.lane.b32.xlu0 %v740, 35
        %v3028 = vpop.permute.xlu0 %3027
        %3029 = vrot.lane.b32.xlu0 %v741, 35
        %v3030 = vpop.permute.xlu0 %3029
        %3031 = vrot.lane.b32.xlu0 %v648, 35
        %v3032 = vpop.permute.xlu0 %3031
        %3033 = vrot.lane.b32.xlu0 %v742, 35
        %v3034 = vpop.permute.xlu0 %3033
        %3035 = vrot.lane.b32.xlu0 %v743, 35
        %v3036 = vpop.permute.xlu0 %3035
        %3037 = vrot.lane.b32.xlu0 %v744, 35
        %v3038 = vpop.permute.xlu0 %3037
        %3039 = vrot.lane.b32.xlu0 %v745, 35
        %v3040 = vpop.permute.xlu0 %3039
        %3041 = vrot.lane.b32.xlu0 %v746, 35
        %v3042 = vpop.permute.xlu0 %3041
        %3043 = vrot.lane.b32.xlu0 %v747, 35
        %v3044 = vpop.permute.xlu0 %3043
        %3045 = vrot.lane.b32.xlu0 %v748, 35
        %v3046 = vpop.permute.xlu0 %3045
        %3047 = vrot.lane.b32.xlu0 %v749, 35
        %v3048 = vpop.permute.xlu0 %3047
        %3049 = vrot.lane.b32.xlu0 %v750, 35
        %v3050 = vpop.permute.xlu0 %3049
        %3051 = vrot.lane.b32.xlu0 %v751, 35
        %v3052 = vpop.permute.xlu0 %3051
        %3053 = vrot.lane.b32.xlu0 %v670, 35
        %v3054 = vpop.permute.xlu0 %3053
        %3055 = vrot.lane.b32.xlu0 %v929, 35
        %v3056 = vpop.permute.xlu0 %3055
        %3057 = vrot.lane.b32.xlu0 %v930, 35
        %v3058 = vpop.permute.xlu0 %3057
        %3059 = vrot.lane.b32.xlu0 %v931, 35
        %v3060 = vpop.permute.xlu0 %3059
        %3061 = vrot.lane.b32.xlu0 %v932, 35
        %v3062 = vpop.permute.xlu0 %3061
        %3063 = vrot.lane.b32.xlu0 %v933, 35
        %v3064 = vpop.permute.xlu0 %3063
        %3065 = vrot.lane.b32.xlu0 %v934, 35
        %v3066 = vpop.permute.xlu0 %3065
        %3067 = vrot.lane.b32.xlu0 %v935, 35
        %v3068 = vpop.permute.xlu0 %3067
        %3069 = vrot.lane.b32.xlu0 %v936, 35
        %v3070 = vpop.permute.xlu0 %3069
        %3071 = vrot.lane.b32.xlu0 %v937, 35
        %v3072 = vpop.permute.xlu0 %3071
        %3073 = vrot.lane.b32.xlu0 %v938, 35
        %v3074 = vpop.permute.xlu0 %3073
        %3075 = vrot.lane.b32.xlu0 %v773, 35
        %v3076 = vpop.permute.xlu0 %3075
        %3077 = vrot.lane.b32.xlu0 %v939, 35
        %v3078 = vpop.permute.xlu0 %3077
        %3079 = vrot.lane.b32.xlu0 %v940, 35
        %v3080 = vpop.permute.xlu0 %3079
        %3081 = vrot.lane.b32.xlu0 %v941, 35
        %v3082 = vpop.permute.xlu0 %3081
        %3083 = vrot.lane.b32.xlu0 %v942, 35
        %v3084 = vpop.permute.xlu0 %3083
        %3085 = vrot.lane.b32.xlu0 %v943, 35
        %v3086 = vpop.permute.xlu0 %3085
        %3087 = vrot.lane.b32.xlu0 %v944, 35
        %v3088 = vpop.permute.xlu0 %3087
        %3089 = vrot.lane.b32.xlu0 %v945, 35
        %v3090 = vpop.permute.xlu0 %3089
        %3091 = vrot.lane.b32.xlu0 %v946, 35
        %v3092 = vpop.permute.xlu0 %3091
        %3093 = vrot.lane.b32.xlu0 %v947, 35
        %v3094 = vpop.permute.xlu0 %3093
        %3095 = vrot.lane.b32.xlu0 %v948, 35
        %v3096 = vpop.permute.xlu0 %3095
        %3097 = vrot.lane.b32.xlu0 %v795, 35
        %v3098 = vpop.permute.xlu0 %3097
        %3099 = vrot.lane.b32.xlu0 %v949, 35
        %v3100 = vpop.permute.xlu0 %3099
        %3101 = vrot.lane.b32.xlu0 %v950, 35
        %v3102 = vpop.permute.xlu0 %3101
        %3103 = vrot.lane.b32.xlu0 %v951, 35
        %v3104 = vpop.permute.xlu0 %3103
        %3105 = vrot.lane.b32.xlu0 %v952, 35
        %v3106 = vpop.permute.xlu0 %3105
        %3107 = vrot.lane.b32.xlu0 %v953, 35
        %v3108 = vpop.permute.xlu0 %3107
        %3109 = vrot.lane.b32.xlu0 %v954, 35
        %v3110 = vpop.permute.xlu0 %3109
        %3111 = vrot.lane.b32.xlu0 %v955, 35
        %v3112 = vpop.permute.xlu0 %3111
        %3113 = vrot.lane.b32.xlu0 %v956, 35
        %v3114 = vpop.permute.xlu0 %3113
        %3115 = vrot.lane.b32.xlu0 %v957, 35
        %v3116 = vpop.permute.xlu0 %3115
        %3117 = vrot.lane.b32.xlu0 %v958, 35
        %v3118 = vpop.permute.xlu0 %3117
        %3119 = vrot.lane.b32.xlu0 %v817, 35
        %v3120 = vpop.permute.xlu0 %3119
        %3121 = vrot.lane.b32.xlu0 %v959, 35
        %v3122 = vpop.permute.xlu0 %3121
        %3123 = vrot.lane.b32.xlu0 %v960, 35
        %v3124 = vpop.permute.xlu0 %3123
        %3125 = vrot.lane.b32.xlu0 %v961, 35
        %v3126 = vpop.permute.xlu0 %3125
        %3127 = vrot.lane.b32.xlu0 %v962, 35
        %v3128 = vpop.permute.xlu0 %3127
        %3129 = vrot.lane.b32.xlu0 %v963, 35
        %v3130 = vpop.permute.xlu0 %3129
        %3131 = vrot.lane.b32.xlu0 %v964, 35
        %v3132 = vpop.permute.xlu0 %3131
        %3133 = vrot.lane.b32.xlu0 %v965, 35
        %v3134 = vpop.permute.xlu0 %3133
        %3135 = vrot.lane.b32.xlu0 %v966, 35
        %v3136 = vpop.permute.xlu0 %3135
        %3137 = vrot.lane.b32.xlu0 %v967, 35
        %v3138 = vpop.permute.xlu0 %3137
        %3139 = vrot.lane.b32.xlu0 %v968, 35
        %v3140 = vpop.permute.xlu0 %3139
        %3141 = vrot.lane.b32.xlu0 %v839, 35
        %v3142 = vpop.permute.xlu0 %3141
        %3143 = vrot.lane.b32.xlu0 %v969, 35
        %v3144 = vpop.permute.xlu0 %3143
        %3145 = vrot.lane.b32.xlu0 %v970, 35
        %v3146 = vpop.permute.xlu0 %3145
        %3147 = vrot.lane.b32.xlu0 %v971, 35
        %v3148 = vpop.permute.xlu0 %3147
        %3149 = vrot.lane.b32.xlu0 %v972, 35
        %v3150 = vpop.permute.xlu0 %3149
        %3151 = vrot.lane.b32.xlu0 %v973, 35
        %v3152 = vpop.permute.xlu0 %3151
        %3153 = vrot.lane.b32.xlu0 %v974, 35
        %v3154 = vpop.permute.xlu0 %3153
        %3155 = vrot.lane.b32.xlu0 %v975, 35
        %v3156 = vpop.permute.xlu0 %3155
        %3157 = vrot.lane.b32.xlu0 %v976, 35
        %v3158 = vpop.permute.xlu0 %3157
        %3159 = vrot.lane.b32.xlu0 %v977, 35
        %v3160 = vpop.permute.xlu0 %3159
        %3161 = vrot.lane.b32.xlu0 %v978, 35
        %v3162 = vpop.permute.xlu0 %3161
        %3163 = vrot.lane.b32.xlu0 %v861, 35
        %v3164 = vpop.permute.xlu0 %3163
        %3165 = vrot.lane.b32.xlu0 %v979, 35
        %v3166 = vpop.permute.xlu0 %3165
        %3167 = vrot.lane.b32.xlu0 %v980, 35
        %v3168 = vpop.permute.xlu0 %3167
        %3169 = vrot.lane.b32.xlu0 %v981, 35
        %v3170 = vpop.permute.xlu0 %3169
        %3171 = vrot.lane.b32.xlu0 %v982, 35
        %v3172 = vpop.permute.xlu0 %3171
        %3173 = vrot.lane.b32.xlu0 %v983, 35
        %v3174 = vpop.permute.xlu0 %3173
        %3175 = vrot.lane.b32.xlu0 %v984, 35
        %v3176 = vpop.permute.xlu0 %3175
        %3177 = vrot.lane.b32.xlu0 %v985, 35
        %v3178 = vpop.permute.xlu0 %3177
        %3179 = vrot.lane.b32.xlu0 %v986, 35
        %v3180 = vpop.permute.xlu0 %3179
        %3181 = vrot.lane.b32.xlu0 %v987, 35
        %v3182 = vpop.permute.xlu0 %3181
        %3183 = vrot.lane.b32.xlu0 %v988, 35
        %v3184 = vpop.permute.xlu0 %3183
        %3185 = vrot.lane.b32.xlu0 %v883, 35
        %v3186 = vpop.permute.xlu0 %3185
        %3187 = vrot.lane.b32.xlu0 %v989, 35
        %v3188 = vpop.permute.xlu0 %3187
        %3189 = vrot.lane.b32.xlu0 %v990, 35
        %v3190 = vpop.permute.xlu0 %3189
        %3191 = vrot.lane.b32.xlu0 %v991, 35
        %v3192 = vpop.permute.xlu0 %3191
        %3193 = vrot.lane.b32.xlu0 %v992, 35
        %v3194 = vpop.permute.xlu0 %3193
        %3195 = vrot.lane.b32.xlu0 %v993, 35
        %v3196 = vpop.permute.xlu0 %3195
        %3197 = vrot.lane.b32.xlu0 %v994, 35
        %v3198 = vpop.permute.xlu0 %3197
        %3199 = vrot.lane.b32.xlu0 %v995, 35
        %v3200 = vpop.permute.xlu0 %3199
        %3201 = vrot.lane.b32.xlu0 %v996, 35
        %v3202 = vpop.permute.xlu0 %3201
        %3203 = vrot.lane.b32.xlu0 %v997, 35
        %v3204 = vpop.permute.xlu0 %3203
        %3205 = vrot.lane.b32.xlu0 %v998, 35
        %v3206 = vpop.permute.xlu0 %3205
        %3207 = vrot.lane.b32.xlu0 %v905, 35
        %v3208 = vpop.permute.xlu0 %3207
        %3209 = vrot.lane.b32.xlu0 %v999, 35
        %v3210 = vpop.permute.xlu0 %3209
        %3211 = vrot.lane.b32.xlu0 %v1000, 35
        %v3212 = vpop.permute.xlu0 %3211
        %3213 = vrot.lane.b32.xlu0 %v1001, 35
        %v3214 = vpop.permute.xlu0 %3213
        %3215 = vrot.lane.b32.xlu0 %v1002, 35
        %v3216 = vpop.permute.xlu0 %3215
        %3217 = vrot.lane.b32.xlu0 %v1003, 35
        %v3218 = vpop.permute.xlu0 %3217
        %3219 = vrot.lane.b32.xlu0 %v1004, 35
        %v3220 = vpop.permute.xlu0 %3219
        %3221 = vrot.lane.b32.xlu0 %v1005, 35
        %v3222 = vpop.permute.xlu0 %3221
        %3223 = vrot.lane.b32.xlu0 %v1006, 35
        %v3224 = vpop.permute.xlu0 %3223
        %3225 = vrot.lane.b32.xlu0 %v1007, 35
        %v3226 = vpop.permute.xlu0 %3225
        %3227 = vrot.lane.b32.xlu0 %v1008, 35
        %v3228 = vpop.permute.xlu0 %3227
        %3229 = vrot.lane.b32.xlu0 %v927, 35
        %v3230 = vpop.permute.xlu0 %3229
        %3231 = vrot.lane.b32.xlu0 %v1186, 35
        %v3232 = vpop.permute.xlu0 %3231
        %3233 = vrot.lane.b32.xlu0 %v1187, 35
        %v3234 = vpop.permute.xlu0 %3233
        %3235 = vrot.lane.b32.xlu0 %v1188, 35
        %v3236 = vpop.permute.xlu0 %3235
        %3237 = vrot.lane.b32.xlu0 %v1189, 35
        %v3238 = vpop.permute.xlu0 %3237
        %3239 = vrot.lane.b32.xlu0 %v1190, 35
        %v3240 = vpop.permute.xlu0 %3239
        %3241 = vrot.lane.b32.xlu0 %v1191, 35
        %v3242 = vpop.permute.xlu0 %3241
        %3243 = vrot.lane.b32.xlu0 %v1192, 35
        %v3244 = vpop.permute.xlu0 %3243
        %3245 = vrot.lane.b32.xlu0 %v1193, 35
        %v3246 = vpop.permute.xlu0 %3245
        %3247 = vrot.lane.b32.xlu0 %v1194, 35
        %v3248 = vpop.permute.xlu0 %3247
        %3249 = vrot.lane.b32.xlu0 %v1195, 35
        %v3250 = vpop.permute.xlu0 %3249
        %3251 = vrot.lane.b32.xlu0 %v1030, 35
        %v3252 = vpop.permute.xlu0 %3251
        %3253 = vrot.lane.b32.xlu0 %v1196, 35
        %v3254 = vpop.permute.xlu0 %3253
        %3255 = vrot.lane.b32.xlu0 %v1197, 35
        %v3256 = vpop.permute.xlu0 %3255
        %3257 = vrot.lane.b32.xlu0 %v1198, 35
        %v3258 = vpop.permute.xlu0 %3257
        %3259 = vrot.lane.b32.xlu0 %v1199, 35
        %v3260 = vpop.permute.xlu0 %3259
        %3261 = vrot.lane.b32.xlu0 %v1200, 35
        %v3262 = vpop.permute.xlu0 %3261
        %3263 = vrot.lane.b32.xlu0 %v1201, 35
        %v3264 = vpop.permute.xlu0 %3263
        %3265 = vrot.lane.b32.xlu0 %v1202, 35
        %v3266 = vpop.permute.xlu0 %3265
        %3267 = vrot.lane.b32.xlu0 %v1203, 35
        %v3268 = vpop.permute.xlu0 %3267
        %3269 = vrot.lane.b32.xlu0 %v1204, 35
        %v3270 = vpop.permute.xlu0 %3269
        %3271 = vrot.lane.b32.xlu0 %v1205, 35
        %v3272 = vpop.permute.xlu0 %3271
        %3273 = vrot.lane.b32.xlu0 %v1052, 35
        %v3274 = vpop.permute.xlu0 %3273
        %3275 = vrot.lane.b32.xlu0 %v1206, 35
        %v3276 = vpop.permute.xlu0 %3275
        %3277 = vrot.lane.b32.xlu0 %v1207, 35
        %v3278 = vpop.permute.xlu0 %3277
        %3279 = vrot.lane.b32.xlu0 %v1208, 35
        %v3280 = vpop.permute.xlu0 %3279
        %3281 = vrot.lane.b32.xlu0 %v1209, 35
        %v3282 = vpop.permute.xlu0 %3281
        %3283 = vrot.lane.b32.xlu0 %v1210, 35
        %v3284 = vpop.permute.xlu0 %3283
        %3285 = vrot.lane.b32.xlu0 %v1211, 35
        %v3286 = vpop.permute.xlu0 %3285
        %3287 = vrot.lane.b32.xlu0 %v1212, 35
        %v3288 = vpop.permute.xlu0 %3287
        %3289 = vrot.lane.b32.xlu0 %v1213, 35
        %v3290 = vpop.permute.xlu0 %3289
        %3291 = vrot.lane.b32.xlu0 %v1214, 35
        %v3292 = vpop.permute.xlu0 %3291
        %3293 = vrot.lane.b32.xlu0 %v1215, 35
        %v3294 = vpop.permute.xlu0 %3293
        %3295 = vrot.lane.b32.xlu0 %v1074, 35
        %v3296 = vpop.permute.xlu0 %3295
        %3297 = vrot.lane.b32.xlu0 %v1216, 35
        %v3298 = vpop.permute.xlu0 %3297
        %3299 = vrot.lane.b32.xlu0 %v1217, 35
        %v3300 = vpop.permute.xlu0 %3299
        %3301 = vrot.lane.b32.xlu0 %v1218, 35
        %v3302 = vpop.permute.xlu0 %3301
        %3303 = vrot.lane.b32.xlu0 %v1219, 35
        %v3304 = vpop.permute.xlu0 %3303
        %3305 = vrot.lane.b32.xlu0 %v1220, 35
        %v3306 = vpop.permute.xlu0 %3305
        %3307 = vrot.lane.b32.xlu0 %v1221, 35
        %v3308 = vpop.permute.xlu0 %3307
        %3309 = vrot.lane.b32.xlu0 %v1222, 35
        %v3310 = vpop.permute.xlu0 %3309
        %3311 = vrot.lane.b32.xlu0 %v1223, 35
        %v3312 = vpop.permute.xlu0 %3311
        %3313 = vrot.lane.b32.xlu0 %v1224, 35
        %v3314 = vpop.permute.xlu0 %3313
        %3315 = vrot.lane.b32.xlu0 %v1225, 35
        %v3316 = vpop.permute.xlu0 %3315
        %3317 = vrot.lane.b32.xlu0 %v1096, 35
        %v3318 = vpop.permute.xlu0 %3317
        %3319 = vrot.lane.b32.xlu0 %v1226, 35
        %v3320 = vpop.permute.xlu0 %3319
        %3321 = vrot.lane.b32.xlu0 %v1227, 35
        %v3322 = vpop.permute.xlu0 %3321
        %3323 = vrot.lane.b32.xlu0 %v1228, 35
        %v3324 = vpop.permute.xlu0 %3323
        %3325 = vrot.lane.b32.xlu0 %v1229, 35
        %v3326 = vpop.permute.xlu0 %3325
        %3327 = vrot.lane.b32.xlu0 %v1230, 35
        %v3328 = vpop.permute.xlu0 %3327
        %3329 = vrot.lane.b32.xlu0 %v1231, 35
        %v3330 = vpop.permute.xlu0 %3329
        %3331 = vrot.lane.b32.xlu0 %v1232, 35
        %v3332 = vpop.permute.xlu0 %3331
        %3333 = vrot.lane.b32.xlu0 %v1233, 35
        %v3334 = vpop.permute.xlu0 %3333
        %3335 = vrot.lane.b32.xlu0 %v1234, 35
        %v3336 = vpop.permute.xlu0 %3335
        %3337 = vrot.lane.b32.xlu0 %v1235, 35
        %v3338 = vpop.permute.xlu0 %3337
        %3339 = vrot.lane.b32.xlu0 %v1118, 35
        %v3340 = vpop.permute.xlu0 %3339
        %3341 = vrot.lane.b32.xlu0 %v1236, 35
        %v3342 = vpop.permute.xlu0 %3341
        %3343 = vrot.lane.b32.xlu0 %v1237, 35
        %v3344 = vpop.permute.xlu0 %3343
        %3345 = vrot.lane.b32.xlu0 %v1238, 35
        %v3346 = vpop.permute.xlu0 %3345
        %3347 = vrot.lane.b32.xlu0 %v1239, 35
        %v3348 = vpop.permute.xlu0 %3347
        %3349 = vrot.lane.b32.xlu0 %v1240, 35
        %v3350 = vpop.permute.xlu0 %3349
        %3351 = vrot.lane.b32.xlu0 %v1241, 35
        %v3352 = vpop.permute.xlu0 %3351
        %3353 = vrot.lane.b32.xlu0 %v1242, 35
        %v3354 = vpop.permute.xlu0 %3353
        %3355 = vrot.lane.b32.xlu0 %v1243, 35
        %v3356 = vpop.permute.xlu0 %3355
        %3357 = vrot.lane.b32.xlu0 %v1244, 35
        %v3358 = vpop.permute.xlu0 %3357
        %3359 = vrot.lane.b32.xlu0 %v1245, 35
        %v3360 = vpop.permute.xlu0 %3359
        %3361 = vrot.lane.b32.xlu0 %v1140, 35
        %v3362 = vpop.permute.xlu0 %3361
        %3363 = vrot.lane.b32.xlu0 %v1246, 35
        %v3364 = vpop.permute.xlu0 %3363
        %3365 = vrot.lane.b32.xlu0 %v1247, 35
        %v3366 = vpop.permute.xlu0 %3365
        %3367 = vrot.lane.b32.xlu0 %v1248, 35
        %v3368 = vpop.permute.xlu0 %3367
        %3369 = vrot.lane.b32.xlu0 %v1249, 35
        %v3370 = vpop.permute.xlu0 %3369
        %3371 = vrot.lane.b32.xlu0 %v1250, 35
        %v3372 = vpop.permute.xlu0 %3371
        %3373 = vrot.lane.b32.xlu0 %v1251, 35
        %v3374 = vpop.permute.xlu0 %3373
        %3375 = vrot.lane.b32.xlu0 %v1252, 35
        %v3376 = vpop.permute.xlu0 %3375
        %3377 = vrot.lane.b32.xlu0 %v1253, 35
        %v3378 = vpop.permute.xlu0 %3377
        %3379 = vrot.lane.b32.xlu0 %v1254, 35
        %v3380 = vpop.permute.xlu0 %3379
        %3381 = vrot.lane.b32.xlu0 %v1255, 35
        %v3382 = vpop.permute.xlu0 %3381
        %3383 = vrot.lane.b32.xlu0 %v1162, 35
        %v3384 = vpop.permute.xlu0 %3383
        %3385 = vrot.lane.b32.xlu0 %v1256, 35
        %v3386 = vpop.permute.xlu0 %3385
        %3387 = vrot.lane.b32.xlu0 %v1257, 35
        %v3388 = vpop.permute.xlu0 %3387
        %3389 = vrot.lane.b32.xlu0 %v1258, 35
        %v3390 = vpop.permute.xlu0 %3389
        %3391 = vrot.lane.b32.xlu0 %v1259, 35
        %v3392 = vpop.permute.xlu0 %3391
        %3393 = vrot.lane.b32.xlu0 %v1260, 35
        %v3394 = vpop.permute.xlu0 %3393
        %3395 = vrot.lane.b32.xlu0 %v1261, 35
        %v3396 = vpop.permute.xlu0 %3395
        %3397 = vrot.lane.b32.xlu0 %v1262, 35
        %v3398 = vpop.permute.xlu0 %3397
        %3399 = vrot.lane.b32.xlu0 %v1263, 35
        %v3400 = vpop.permute.xlu0 %3399
        %3401 = vrot.lane.b32.xlu0 %v1264, 35
        %v3402 = vpop.permute.xlu0 %3401
        %3403 = vrot.lane.b32.xlu0 %v1265, 35
        %v3404 = vpop.permute.xlu0 %3403
        %3405 = vrot.lane.b32.xlu0 %v1184, 35
        %v3406 = vpop.permute.xlu0 %3405
        %3407 = vrot.lane.b32.xlu0 %v1267, 35
        %v3408 = vpop.permute.xlu0 %3407
        %3409 = vrot.lane.b32.xlu0 %v1427, 35
        %v3410 = vpop.permute.xlu0 %3409
        %3411 = vrot.lane.b32.xlu0 %v1428, 35
        %v3412 = vpop.permute.xlu0 %3411
        %3413 = vrot.lane.b32.xlu0 %v1429, 35
        %v3414 = vpop.permute.xlu0 %3413
        %3415 = vrot.lane.b32.xlu0 %v1430, 35
        %v3416 = vpop.permute.xlu0 %3415
        %3417 = vrot.lane.b32.xlu0 %v1431, 35
        %v3418 = vpop.permute.xlu0 %3417
        %3419 = vrot.lane.b32.xlu0 %v1432, 35
        %v3420 = vpop.permute.xlu0 %3419
        %3421 = vrot.lane.b32.xlu0 %v1433, 35
        %v3422 = vpop.permute.xlu0 %3421
        %3423 = vrot.lane.b32.xlu0 %v1434, 35
        %v3424 = vpop.permute.xlu0 %3423
        %3425 = vrot.lane.b32.xlu0 %v1435, 35
        %v3426 = vpop.permute.xlu0 %3425
        %3427 = vrot.lane.b32.xlu0 %v1285, 35
        %v3428 = vpop.permute.xlu0 %3427
        %3429 = vrot.lane.b32.xlu0 %v1287, 35
        %v3430 = vpop.permute.xlu0 %3429
        %3431 = vrot.lane.b32.xlu0 %v1436, 35
        %v3432 = vpop.permute.xlu0 %3431
        %3433 = vrot.lane.b32.xlu0 %v1437, 35
        %v3434 = vpop.permute.xlu0 %3433
        %3435 = vrot.lane.b32.xlu0 %v1438, 35
        %v3436 = vpop.permute.xlu0 %3435
        %3437 = vrot.lane.b32.xlu0 %v1439, 35
        %v3438 = vpop.permute.xlu0 %3437
        %3439 = vrot.lane.b32.xlu0 %v1440, 35
        %v3440 = vpop.permute.xlu0 %3439
        %3441 = vrot.lane.b32.xlu0 %v1441, 35
        %v3442 = vpop.permute.xlu0 %3441
        %3443 = vrot.lane.b32.xlu0 %v1442, 35
        %v3444 = vpop.permute.xlu0 %3443
        %3445 = vrot.lane.b32.xlu0 %v1443, 35
        %v3446 = vpop.permute.xlu0 %3445
        %3447 = vrot.lane.b32.xlu0 %v1444, 35
        %v3448 = vpop.permute.xlu0 %3447
        %3449 = vrot.lane.b32.xlu0 %v1305, 35
        %v3450 = vpop.permute.xlu0 %3449
        %3451 = vrot.lane.b32.xlu0 %v1307, 35
        %v3452 = vpop.permute.xlu0 %3451
        %3453 = vrot.lane.b32.xlu0 %v1445, 35
        %v3454 = vpop.permute.xlu0 %3453
        %3455 = vrot.lane.b32.xlu0 %v1446, 35
        %v3456 = vpop.permute.xlu0 %3455
        %3457 = vrot.lane.b32.xlu0 %v1447, 35
        %v3458 = vpop.permute.xlu0 %3457
        %3459 = vrot.lane.b32.xlu0 %v1448, 35
        %v3460 = vpop.permute.xlu0 %3459
        %3461 = vrot.lane.b32.xlu0 %v1449, 35
        %v3462 = vpop.permute.xlu0 %3461
        %3463 = vrot.lane.b32.xlu0 %v1450, 35
        %v3464 = vpop.permute.xlu0 %3463
        %3465 = vrot.lane.b32.xlu0 %v1451, 35
        %v3466 = vpop.permute.xlu0 %3465
        %3467 = vrot.lane.b32.xlu0 %v1452, 35
        %v3468 = vpop.permute.xlu0 %3467
        %3469 = vrot.lane.b32.xlu0 %v1453, 35
        %v3470 = vpop.permute.xlu0 %3469
        %3471 = vrot.lane.b32.xlu0 %v1325, 35
        %v3472 = vpop.permute.xlu0 %3471
        %3473 = vrot.lane.b32.xlu0 %v1327, 35
        %v3474 = vpop.permute.xlu0 %3473
        %3475 = vrot.lane.b32.xlu0 %v1454, 35
        %v3476 = vpop.permute.xlu0 %3475
        %3477 = vrot.lane.b32.xlu0 %v1455, 35
        %v3478 = vpop.permute.xlu0 %3477
        %3479 = vrot.lane.b32.xlu0 %v1456, 35
        %v3480 = vpop.permute.xlu0 %3479
        %3481 = vrot.lane.b32.xlu0 %v1457, 35
        %v3482 = vpop.permute.xlu0 %3481
        %3483 = vrot.lane.b32.xlu0 %v1458, 35
        %v3484 = vpop.permute.xlu0 %3483
        %3485 = vrot.lane.b32.xlu0 %v1459, 35
        %v3486 = vpop.permute.xlu0 %3485
        %3487 = vrot.lane.b32.xlu0 %v1460, 35
        %v3488 = vpop.permute.xlu0 %3487
        %3489 = vrot.lane.b32.xlu0 %v1461, 35
        %v3490 = vpop.permute.xlu0 %3489
        %3491 = vrot.lane.b32.xlu0 %v1462, 35
        %v3492 = vpop.permute.xlu0 %3491
        %3493 = vrot.lane.b32.xlu0 %v1345, 35
        %v3494 = vpop.permute.xlu0 %3493
        %3495 = vrot.lane.b32.xlu0 %v1347, 35
        %v3496 = vpop.permute.xlu0 %3495
        %3497 = vrot.lane.b32.xlu0 %v1463, 35
        %v3498 = vpop.permute.xlu0 %3497
        %3499 = vrot.lane.b32.xlu0 %v1464, 35
        %v3500 = vpop.permute.xlu0 %3499
        %3501 = vrot.lane.b32.xlu0 %v1465, 35
        %v3502 = vpop.permute.xlu0 %3501
        %3503 = vrot.lane.b32.xlu0 %v1466, 35
        %v3504 = vpop.permute.xlu0 %3503
        %3505 = vrot.lane.b32.xlu0 %v1467, 35
        %v3506 = vpop.permute.xlu0 %3505
        %3507 = vrot.lane.b32.xlu0 %v1468, 35
        %v3508 = vpop.permute.xlu0 %3507
        %3509 = vrot.lane.b32.xlu0 %v1469, 35
        %v3510 = vpop.permute.xlu0 %3509
        %3511 = vrot.lane.b32.xlu0 %v1470, 35
        %v3512 = vpop.permute.xlu0 %3511
        %3513 = vrot.lane.b32.xlu0 %v1471, 35
        %v3514 = vpop.permute.xlu0 %3513
        %3515 = vrot.lane.b32.xlu0 %v1365, 35
        %v3516 = vpop.permute.xlu0 %3515
        %3517 = vrot.lane.b32.xlu0 %v1367, 35
        %v3518 = vpop.permute.xlu0 %3517
        %3519 = vrot.lane.b32.xlu0 %v1472, 35
        %v3520 = vpop.permute.xlu0 %3519
        %3521 = vrot.lane.b32.xlu0 %v1473, 35
        %v3522 = vpop.permute.xlu0 %3521
        %3523 = vrot.lane.b32.xlu0 %v1474, 35
        %v3524 = vpop.permute.xlu0 %3523
        %3525 = vrot.lane.b32.xlu0 %v1475, 35
        %v3526 = vpop.permute.xlu0 %3525
        %3527 = vrot.lane.b32.xlu0 %v1476, 35
        %v3528 = vpop.permute.xlu0 %3527
        %3529 = vrot.lane.b32.xlu0 %v1477, 35
        %v3530 = vpop.permute.xlu0 %3529
        %3531 = vrot.lane.b32.xlu0 %v1478, 35
        %v3532 = vpop.permute.xlu0 %3531
        %3533 = vrot.lane.b32.xlu0 %v1479, 35
        %v3534 = vpop.permute.xlu0 %3533
        %3535 = vrot.lane.b32.xlu0 %v1480, 35
        %v3536 = vpop.permute.xlu0 %3535
        %3537 = vrot.lane.b32.xlu0 %v1385, 35
        %v3538 = vpop.permute.xlu0 %3537
        %3539 = vrot.lane.b32.xlu0 %v1387, 35
        %v3540 = vpop.permute.xlu0 %3539
        %3541 = vrot.lane.b32.xlu0 %v1481, 35
        %v3542 = vpop.permute.xlu0 %3541
        %3543 = vrot.lane.b32.xlu0 %v1482, 35
        %v3544 = vpop.permute.xlu0 %3543
        %3545 = vrot.lane.b32.xlu0 %v1483, 35
        %v3546 = vpop.permute.xlu0 %3545
        %3547 = vrot.lane.b32.xlu0 %v1484, 35
        %v3548 = vpop.permute.xlu0 %3547
        %3549 = vrot.lane.b32.xlu0 %v1485, 35
        %v3550 = vpop.permute.xlu0 %3549
        %3551 = vrot.lane.b32.xlu0 %v1486, 35
        %v3552 = vpop.permute.xlu0 %3551
        %3553 = vrot.lane.b32.xlu0 %v1487, 35
        %v3554 = vpop.permute.xlu0 %3553
        %3555 = vrot.lane.b32.xlu0 %v1488, 35
        %v3556 = vpop.permute.xlu0 %3555
        %3557 = vrot.lane.b32.xlu0 %v1489, 35
        %v3558 = vpop.permute.xlu0 %3557
        %3559 = vrot.lane.b32.xlu0 %v1405, 35
        %v3560 = vpop.permute.xlu0 %3559
        %3561 = vrot.lane.b32.xlu0 %v1407, 35
        %v3562 = vpop.permute.xlu0 %3561
        %3563 = vrot.lane.b32.xlu0 %v1490, 35
        %v3564 = vpop.permute.xlu0 %3563
        %3565 = vrot.lane.b32.xlu0 %v1491, 35
        %v3566 = vpop.permute.xlu0 %3565
        %3567 = vrot.lane.b32.xlu0 %v1492, 35
        %v3568 = vpop.permute.xlu0 %3567
        %3569 = vrot.lane.b32.xlu0 %v1493, 35
        %v3570 = vpop.permute.xlu0 %3569
        %3571 = vrot.lane.b32.xlu0 %v1494, 35
        %v3572 = vpop.permute.xlu0 %3571
        %3573 = vrot.lane.b32.xlu0 %v1495, 35
        %v3574 = vpop.permute.xlu0 %3573
        %3575 = vrot.lane.b32.xlu0 %v1496, 35
        %v3576 = vpop.permute.xlu0 %3575
        %3577 = vrot.lane.b32.xlu0 %v1497, 35
        %v3578 = vpop.permute.xlu0 %3577
        %3579 = vrot.lane.b32.xlu0 %v1498, 35
        %v3580 = vpop.permute.xlu0 %3579
        %3581 = vrot.lane.b32.xlu0 %v1425, 35
        %v3582 = vpop.permute.xlu0 %3581
        %3583 = vrot.lane.b32.xlu0 %v1588, 35
        %v3584 = vpop.permute.xlu0 %3583
        %3585 = vrot.lane.b32.xlu0 %v1764, 35
        %v3586 = vpop.permute.xlu0 %3585
        %3587 = vrot.lane.b32.xlu0 %v1765, 35
        %v3588 = vpop.permute.xlu0 %3587
        %3589 = vrot.lane.b32.xlu0 %v1766, 35
        %v3590 = vpop.permute.xlu0 %3589
        %3591 = vrot.lane.b32.xlu0 %v1767, 35
        %v3592 = vpop.permute.xlu0 %3591
        %3593 = vrot.lane.b32.xlu0 %v1768, 35
        %v3594 = vpop.permute.xlu0 %3593
        %3595 = vrot.lane.b32.xlu0 %v1769, 35
        %v3596 = vpop.permute.xlu0 %3595
        %3597 = vrot.lane.b32.xlu0 %v1770, 35
        %v3598 = vpop.permute.xlu0 %3597
        %3599 = vrot.lane.b32.xlu0 %v1771, 35
        %v3600 = vpop.permute.xlu0 %3599
        %3601 = vrot.lane.b32.xlu0 %v1772, 35
        %v3602 = vpop.permute.xlu0 %3601
        %3603 = vrot.lane.b32.xlu0 %v1773, 35
        %v3604 = vpop.permute.xlu0 %3603
        %3605 = vrot.lane.b32.xlu0 %v1610, 35
        %v3606 = vpop.permute.xlu0 %3605
        %3607 = vrot.lane.b32.xlu0 %v1774, 35
        %v3608 = vpop.permute.xlu0 %3607
        %3609 = vrot.lane.b32.xlu0 %v1775, 35
        %v3610 = vpop.permute.xlu0 %3609
        %3611 = vrot.lane.b32.xlu0 %v1776, 35
        %v3612 = vpop.permute.xlu0 %3611
        %3613 = vrot.lane.b32.xlu0 %v1777, 35
        %v3614 = vpop.permute.xlu0 %3613
        %3615 = vrot.lane.b32.xlu0 %v1778, 35
        %v3616 = vpop.permute.xlu0 %3615
        %3617 = vrot.lane.b32.xlu0 %v1779, 35
        %v3618 = vpop.permute.xlu0 %3617
        %3619 = vrot.lane.b32.xlu0 %v1780, 35
        %v3620 = vpop.permute.xlu0 %3619
        %3621 = vrot.lane.b32.xlu0 %v1781, 35
        %v3622 = vpop.permute.xlu0 %3621
        %3623 = vrot.lane.b32.xlu0 %v1782, 35
        %v3624 = vpop.permute.xlu0 %3623
        %3625 = vrot.lane.b32.xlu0 %v1783, 35
        %v3626 = vpop.permute.xlu0 %3625
        %3627 = vrot.lane.b32.xlu0 %v1632, 35
        %v3628 = vpop.permute.xlu0 %3627
        %3629 = vrot.lane.b32.xlu0 %v1784, 35
        %v3630 = vpop.permute.xlu0 %3629
        %3631 = vrot.lane.b32.xlu0 %v1785, 35
        %v3632 = vpop.permute.xlu0 %3631
        %3633 = vrot.lane.b32.xlu0 %v1786, 35
        %v3634 = vpop.permute.xlu0 %3633
        %3635 = vrot.lane.b32.xlu0 %v1787, 35
        %v3636 = vpop.permute.xlu0 %3635
        %3637 = vrot.lane.b32.xlu0 %v1788, 35
        %v3638 = vpop.permute.xlu0 %3637
        %3639 = vrot.lane.b32.xlu0 %v1789, 35
        %v3640 = vpop.permute.xlu0 %3639
        %3641 = vrot.lane.b32.xlu0 %v1790, 35
        %v3642 = vpop.permute.xlu0 %3641
        %3643 = vrot.lane.b32.xlu0 %v1791, 35
        %v3644 = vpop.permute.xlu0 %3643
        %3645 = vrot.lane.b32.xlu0 %v1792, 35
        %v3646 = vpop.permute.xlu0 %3645
        %3647 = vrot.lane.b32.xlu0 %v1793, 35
        %v3648 = vpop.permute.xlu0 %3647
        %3649 = vrot.lane.b32.xlu0 %v1654, 35
        %v3650 = vpop.permute.xlu0 %3649
        %3651 = vrot.lane.b32.xlu0 %v1794, 35
        %v3652 = vpop.permute.xlu0 %3651
        %3653 = vrot.lane.b32.xlu0 %v1795, 35
        %v3654 = vpop.permute.xlu0 %3653
        %3655 = vrot.lane.b32.xlu0 %v1796, 35
        %v3656 = vpop.permute.xlu0 %3655
        %3657 = vrot.lane.b32.xlu0 %v1797, 35
        %v3658 = vpop.permute.xlu0 %3657
        %3659 = vrot.lane.b32.xlu0 %v1798, 35
        %v3660 = vpop.permute.xlu0 %3659
        %3661 = vrot.lane.b32.xlu0 %v1799, 35
        %v3662 = vpop.permute.xlu0 %3661
        %3663 = vrot.lane.b32.xlu0 %v1800, 35
        %v3664 = vpop.permute.xlu0 %3663
        %3665 = vrot.lane.b32.xlu0 %v1801, 35
        %v3666 = vpop.permute.xlu0 %3665
        %3667 = vrot.lane.b32.xlu0 %v1802, 35
        %v3668 = vpop.permute.xlu0 %3667
        %3669 = vrot.lane.b32.xlu0 %v1803, 35
        %v3670 = vpop.permute.xlu0 %3669
        %3671 = vrot.lane.b32.xlu0 %v1676, 35
        %v3672 = vpop.permute.xlu0 %3671
        %3673 = vrot.lane.b32.xlu0 %v1804, 35
        %v3674 = vpop.permute.xlu0 %3673
        %3675 = vrot.lane.b32.xlu0 %v1805, 35
        %v3676 = vpop.permute.xlu0 %3675
        %3677 = vrot.lane.b32.xlu0 %v1806, 35
        %v3678 = vpop.permute.xlu0 %3677
        %3679 = vrot.lane.b32.xlu0 %v1807, 35
        %v3680 = vpop.permute.xlu0 %3679
        %3681 = vrot.lane.b32.xlu0 %v1808, 35
        %v3682 = vpop.permute.xlu0 %3681
        %3683 = vrot.lane.b32.xlu0 %v1809, 35
        %v3684 = vpop.permute.xlu0 %3683
        %3685 = vrot.lane.b32.xlu0 %v1810, 35
        %v3686 = vpop.permute.xlu0 %3685
        %3687 = vrot.lane.b32.xlu0 %v1811, 35
        %v3688 = vpop.permute.xlu0 %3687
        %3689 = vrot.lane.b32.xlu0 %v1812, 35
        %v3690 = vpop.permute.xlu0 %3689
        %3691 = vrot.lane.b32.xlu0 %v1813, 35
        %v3692 = vpop.permute.xlu0 %3691
        %3693 = vrot.lane.b32.xlu0 %v1698, 35
        %v3694 = vpop.permute.xlu0 %3693
        %3695 = vrot.lane.b32.xlu0 %v1814, 35
        %v3696 = vpop.permute.xlu0 %3695
        %3697 = vrot.lane.b32.xlu0 %v1815, 35
        %v3698 = vpop.permute.xlu0 %3697
        %3699 = vrot.lane.b32.xlu0 %v1816, 35
        %v3700 = vpop.permute.xlu0 %3699
        %3701 = vrot.lane.b32.xlu0 %v1817, 35
        %v3702 = vpop.permute.xlu0 %3701
        %3703 = vrot.lane.b32.xlu0 %v1818, 35
        %v3704 = vpop.permute.xlu0 %3703
        %3705 = vrot.lane.b32.xlu0 %v1819, 35
        %v3706 = vpop.permute.xlu0 %3705
        %3707 = vrot.lane.b32.xlu0 %v1820, 35
        %v3708 = vpop.permute.xlu0 %3707
        %3709 = vrot.lane.b32.xlu0 %v1821, 35
        %v3710 = vpop.permute.xlu0 %3709
        %3711 = vrot.lane.b32.xlu0 %v1822, 35
        %v3712 = vpop.permute.xlu0 %3711
        %3713 = vrot.lane.b32.xlu0 %v1823, 35
        %v3714 = vpop.permute.xlu0 %3713
        %3715 = vrot.lane.b32.xlu0 %v1720, 35
        %v3716 = vpop.permute.xlu0 %3715
        %3717 = vrot.lane.b32.xlu0 %v1824, 35
        %v3718 = vpop.permute.xlu0 %3717
        %3719 = vrot.lane.b32.xlu0 %v1825, 35
        %v3720 = vpop.permute.xlu0 %3719
        %3721 = vrot.lane.b32.xlu0 %v1826, 35
        %v3722 = vpop.permute.xlu0 %3721
        %3723 = vrot.lane.b32.xlu0 %v1827, 35
        %v3724 = vpop.permute.xlu0 %3723
        %3725 = vrot.lane.b32.xlu0 %v1828, 35
        %v3726 = vpop.permute.xlu0 %3725
        %3727 = vrot.lane.b32.xlu0 %v1829, 35
        %v3728 = vpop.permute.xlu0 %3727
        %3729 = vrot.lane.b32.xlu0 %v1830, 35
        %v3730 = vpop.permute.xlu0 %3729
        %3731 = vrot.lane.b32.xlu0 %v1831, 35
        %v3732 = vpop.permute.xlu0 %3731
        %3733 = vrot.lane.b32.xlu0 %v1832, 35
        %v3734 = vpop.permute.xlu0 %3733
        %3735 = vrot.lane.b32.xlu0 %v1833, 35
        %v3736 = vpop.permute.xlu0 %3735
        %3737 = vrot.lane.b32.xlu0 %v1742, 35
        %v3738 = vpop.permute.xlu0 %3737
        %3739 = vrot.lane.b32.xlu0 %v1834, 35
        %v3740 = vpop.permute.xlu0 %3739
        %3741 = vrot.lane.b32.xlu0 %v1835, 35
        %v3742 = vpop.permute.xlu0 %3741
        %3743 = vrot.lane.b32.xlu0 %v1836, 35
        %v3744 = vpop.permute.xlu0 %3743
        %3745 = vrot.lane.b32.xlu0 %v1837, 35
        %v3746 = vpop.permute.xlu0 %3745
        %3747 = vrot.lane.b32.xlu0 %v1838, 35
        %v3748 = vpop.permute.xlu0 %3747
        %3749 = vrot.lane.b32.xlu0 %v1839, 35
        %v3750 = vpop.permute.xlu0 %3749
        %3751 = vrot.lane.b32.xlu0 %v1840, 35
        %v3752 = vpop.permute.xlu0 %3751
        %3753 = vrot.lane.b32.xlu0 %v1841, 35
        %v3754 = vpop.permute.xlu0 %3753
        %3755 = vrot.lane.b32.xlu0 %v1842, 35
        %v3756 = vpop.permute.xlu0 %3755
        %3757 = vrot.lane.b32.xlu0 %v1843, 35
        %v3758 = vpop.permute.xlu0 %3757
        %3759 = vrot.lane.b32.xlu0 %v1845, 35
        %v3760 = vpop.permute.xlu0 %3759
        %3761 = vrot.lane.b32.xlu0 %v2021, 35
        %v3762 = vpop.permute.xlu0 %3761
        %3763 = vrot.lane.b32.xlu0 %v2022, 35
        %v3764 = vpop.permute.xlu0 %3763
        %3765 = vrot.lane.b32.xlu0 %v2023, 35
        %v3766 = vpop.permute.xlu0 %3765
        %3767 = vrot.lane.b32.xlu0 %v2024, 35
        %v3768 = vpop.permute.xlu0 %3767
        %3769 = vrot.lane.b32.xlu0 %v2025, 35
        %v3770 = vpop.permute.xlu0 %3769
        %3771 = vrot.lane.b32.xlu0 %v2026, 35
        %v3772 = vpop.permute.xlu0 %3771
        %3773 = vrot.lane.b32.xlu0 %v2027, 35
        %v3774 = vpop.permute.xlu0 %3773
        %3775 = vrot.lane.b32.xlu0 %v2028, 35
        %v3776 = vpop.permute.xlu0 %3775
        %3777 = vrot.lane.b32.xlu0 %v2029, 35
        %v3778 = vpop.permute.xlu0 %3777
        %3779 = vrot.lane.b32.xlu0 %v2030, 35
        %v3780 = vpop.permute.xlu0 %3779
        %3781 = vrot.lane.b32.xlu0 %v1867, 35
        %v3782 = vpop.permute.xlu0 %3781
        %3783 = vrot.lane.b32.xlu0 %v2031, 35
        %v3784 = vpop.permute.xlu0 %3783
        %3785 = vrot.lane.b32.xlu0 %v2032, 35
        %v3786 = vpop.permute.xlu0 %3785
        %3787 = vrot.lane.b32.xlu0 %v2033, 35
        %v3788 = vpop.permute.xlu0 %3787
        %3789 = vrot.lane.b32.xlu0 %v2034, 35
        %v3790 = vpop.permute.xlu0 %3789
        %3791 = vrot.lane.b32.xlu0 %v2035, 35
        %v3792 = vpop.permute.xlu0 %3791
        %3793 = vrot.lane.b32.xlu0 %v2036, 35
        %v3794 = vpop.permute.xlu0 %3793
        %3795 = vrot.lane.b32.xlu0 %v2037, 35
        %v3796 = vpop.permute.xlu0 %3795
        %3797 = vrot.lane.b32.xlu0 %v2038, 35
        %v3798 = vpop.permute.xlu0 %3797
        %3799 = vrot.lane.b32.xlu0 %v2039, 35
        %v3800 = vpop.permute.xlu0 %3799
        %3801 = vrot.lane.b32.xlu0 %v2040, 35
        %v3802 = vpop.permute.xlu0 %3801
        %3803 = vrot.lane.b32.xlu0 %v1889, 35
        %v3804 = vpop.permute.xlu0 %3803
        %3805 = vrot.lane.b32.xlu0 %v2041, 35
        %v3806 = vpop.permute.xlu0 %3805
        %3807 = vrot.lane.b32.xlu0 %v2042, 35
        %v3808 = vpop.permute.xlu0 %3807
        %3809 = vrot.lane.b32.xlu0 %v2043, 35
        %v3810 = vpop.permute.xlu0 %3809
        %3811 = vrot.lane.b32.xlu0 %v2044, 35
        %v3812 = vpop.permute.xlu0 %3811
        %3813 = vrot.lane.b32.xlu0 %v2045, 35
        %v3814 = vpop.permute.xlu0 %3813
        %3815 = vrot.lane.b32.xlu0 %v2046, 35
        %v3816 = vpop.permute.xlu0 %3815
        %3817 = vrot.lane.b32.xlu0 %v2047, 35
        %v3818 = vpop.permute.xlu0 %3817
        %3819 = vrot.lane.b32.xlu0 %v2048, 35
        %v3820 = vpop.permute.xlu0 %3819
        %3821 = vrot.lane.b32.xlu0 %v2049, 35
        %v3822 = vpop.permute.xlu0 %3821
        %3823 = vrot.lane.b32.xlu0 %v2050, 35
        %v3824 = vpop.permute.xlu0 %3823
        %3825 = vrot.lane.b32.xlu0 %v1911, 35
        %v3826 = vpop.permute.xlu0 %3825
        %3827 = vrot.lane.b32.xlu0 %v2051, 35
        %v3828 = vpop.permute.xlu0 %3827
        %3829 = vrot.lane.b32.xlu0 %v2052, 35
        %v3830 = vpop.permute.xlu0 %3829
        %3831 = vrot.lane.b32.xlu0 %v2053, 35
        %v3832 = vpop.permute.xlu0 %3831
        %3833 = vrot.lane.b32.xlu0 %v2054, 35
        %v3834 = vpop.permute.xlu0 %3833
        %3835 = vrot.lane.b32.xlu0 %v2055, 35
        %v3836 = vpop.permute.xlu0 %3835
        %3837 = vrot.lane.b32.xlu0 %v2056, 35
        %v3838 = vpop.permute.xlu0 %3837
        %3839 = vrot.lane.b32.xlu0 %v2057, 35
        %v3840 = vpop.permute.xlu0 %3839
        %3841 = vrot.lane.b32.xlu0 %v2058, 35
        %v3842 = vpop.permute.xlu0 %3841
        %3843 = vrot.lane.b32.xlu0 %v2059, 35
        %v3844 = vpop.permute.xlu0 %3843
        %3845 = vrot.lane.b32.xlu0 %v2060, 35
        %v3846 = vpop.permute.xlu0 %3845
        %3847 = vrot.lane.b32.xlu0 %v1933, 35
        %v3848 = vpop.permute.xlu0 %3847
        %3849 = vrot.lane.b32.xlu0 %v2061, 35
        %v3850 = vpop.permute.xlu0 %3849
        %3851 = vrot.lane.b32.xlu0 %v2062, 35
        %v3852 = vpop.permute.xlu0 %3851
        %3853 = vrot.lane.b32.xlu0 %v2063, 35
        %v3854 = vpop.permute.xlu0 %3853
        %3855 = vrot.lane.b32.xlu0 %v2064, 35
        %v3856 = vpop.permute.xlu0 %3855
        %3857 = vrot.lane.b32.xlu0 %v2065, 35
        %v3858 = vpop.permute.xlu0 %3857
        %3859 = vrot.lane.b32.xlu0 %v2066, 35
        %v3860 = vpop.permute.xlu0 %3859
        %3861 = vrot.lane.b32.xlu0 %v2067, 35
        %v3862 = vpop.permute.xlu0 %3861
        %3863 = vrot.lane.b32.xlu0 %v2068, 35
        %v3864 = vpop.permute.xlu0 %3863
        %3865 = vrot.lane.b32.xlu0 %v2069, 35
        %v3866 = vpop.permute.xlu0 %3865
        %3867 = vrot.lane.b32.xlu0 %v2070, 35
        %v3868 = vpop.permute.xlu0 %3867
        %3869 = vrot.lane.b32.xlu0 %v1955, 35
        %v3870 = vpop.permute.xlu0 %3869
        %3871 = vrot.lane.b32.xlu0 %v2071, 35
        %v3872 = vpop.permute.xlu0 %3871
        %3873 = vrot.lane.b32.xlu0 %v2072, 35
        %v3874 = vpop.permute.xlu0 %3873
        %3875 = vrot.lane.b32.xlu0 %v2073, 35
        %v3876 = vpop.permute.xlu0 %3875
        %3877 = vrot.lane.b32.xlu0 %v2074, 35
        %v3878 = vpop.permute.xlu0 %3877
        %3879 = vrot.lane.b32.xlu0 %v2075, 35
        %v3880 = vpop.permute.xlu0 %3879
        %3881 = vrot.lane.b32.xlu0 %v2076, 35
        %v3882 = vpop.permute.xlu0 %3881
        %3883 = vrot.lane.b32.xlu0 %v2077, 35
        %v3884 = vpop.permute.xlu0 %3883
        %3885 = vrot.lane.b32.xlu0 %v2078, 35
        %v3886 = vpop.permute.xlu0 %3885
        %3887 = vrot.lane.b32.xlu0 %v2079, 35
        %v3888 = vpop.permute.xlu0 %3887
        %3889 = vrot.lane.b32.xlu0 %v2080, 35
        %v3890 = vpop.permute.xlu0 %3889
        %3891 = vrot.lane.b32.xlu0 %v1977, 35
        %v3892 = vpop.permute.xlu0 %3891
        %3893 = vrot.lane.b32.xlu0 %v2081, 35
        %v3894 = vpop.permute.xlu0 %3893
        %3895 = vrot.lane.b32.xlu0 %v2082, 35
        %v3896 = vpop.permute.xlu0 %3895
        %3897 = vrot.lane.b32.xlu0 %v2083, 35
        %v3898 = vpop.permute.xlu0 %3897
        %3899 = vrot.lane.b32.xlu0 %v2084, 35
        %v3900 = vpop.permute.xlu0 %3899
        %3901 = vrot.lane.b32.xlu0 %v2085, 35
        %v3902 = vpop.permute.xlu0 %3901
        %3903 = vrot.lane.b32.xlu0 %v2086, 35
        %v3904 = vpop.permute.xlu0 %3903
        %3905 = vrot.lane.b32.xlu0 %v2087, 35
        %v3906 = vpop.permute.xlu0 %3905
        %3907 = vrot.lane.b32.xlu0 %v2088, 35
        %v3908 = vpop.permute.xlu0 %3907
        %3909 = vrot.lane.b32.xlu0 %v2089, 35
        %v3910 = vpop.permute.xlu0 %3909
        %3911 = vrot.lane.b32.xlu0 %v2090, 35
        %v3912 = vpop.permute.xlu0 %3911
        %3913 = vrot.lane.b32.xlu0 %v1999, 35
        %v3914 = vpop.permute.xlu0 %3913
        %3915 = vrot.lane.b32.xlu0 %v2091, 35
        %v3916 = vpop.permute.xlu0 %3915
        %3917 = vrot.lane.b32.xlu0 %v2092, 35
        %v3918 = vpop.permute.xlu0 %3917
        %3919 = vrot.lane.b32.xlu0 %v2093, 35
        %v3920 = vpop.permute.xlu0 %3919
        %3921 = vrot.lane.b32.xlu0 %v2094, 35
        %v3922 = vpop.permute.xlu0 %3921
        %3923 = vrot.lane.b32.xlu0 %v2095, 35
        %v3924 = vpop.permute.xlu0 %3923
        %3925 = vrot.lane.b32.xlu0 %v2096, 35
        %v3926 = vpop.permute.xlu0 %3925
        %3927 = vrot.lane.b32.xlu0 %v2097, 35
        %v3928 = vpop.permute.xlu0 %3927
        %3929 = vrot.lane.b32.xlu0 %v2098, 35
        %v3930 = vpop.permute.xlu0 %3929
        %3931 = vrot.lane.b32.xlu0 %v2099, 35
        %v3932 = vpop.permute.xlu0 %3931
        %3933 = vrot.lane.b32.xlu0 %v2100, 35
        %v3934 = vpop.permute.xlu0 %3933
        %3935 = vrot.lane.b32.xlu0 %v2102, 35
        %v3936 = vpop.permute.xlu0 %3935
        %3937 = vrot.lane.b32.xlu0 %v2278, 35
        %v3938 = vpop.permute.xlu0 %3937
        %3939 = vrot.lane.b32.xlu0 %v2279, 35
        %v3940 = vpop.permute.xlu0 %3939
        %3941 = vrot.lane.b32.xlu0 %v2280, 35
        %v3942 = vpop.permute.xlu0 %3941
        %3943 = vrot.lane.b32.xlu0 %v2281, 35
        %v3944 = vpop.permute.xlu0 %3943
        %3945 = vrot.lane.b32.xlu0 %v2282, 35
        %v3946 = vpop.permute.xlu0 %3945
        %3947 = vrot.lane.b32.xlu0 %v2283, 35
        %v3948 = vpop.permute.xlu0 %3947
        %3949 = vrot.lane.b32.xlu0 %v2284, 35
        %v3950 = vpop.permute.xlu0 %3949
        %3951 = vrot.lane.b32.xlu0 %v2285, 35
        %v3952 = vpop.permute.xlu0 %3951
        %3953 = vrot.lane.b32.xlu0 %v2286, 35
        %v3954 = vpop.permute.xlu0 %3953
        %3955 = vrot.lane.b32.xlu0 %v2287, 35
        %v3956 = vpop.permute.xlu0 %3955
        %3957 = vrot.lane.b32.xlu0 %v2124, 35
        %v3958 = vpop.permute.xlu0 %3957
        %3959 = vrot.lane.b32.xlu0 %v2288, 35
        %v3960 = vpop.permute.xlu0 %3959
        %3961 = vrot.lane.b32.xlu0 %v2289, 35
        %v3962 = vpop.permute.xlu0 %3961
        %3963 = vrot.lane.b32.xlu0 %v2290, 35
        %v3964 = vpop.permute.xlu0 %3963
        %3965 = vrot.lane.b32.xlu0 %v2291, 35
        %v3966 = vpop.permute.xlu0 %3965
        %3967 = vrot.lane.b32.xlu0 %v2292, 35
        %v3968 = vpop.permute.xlu0 %3967
        %3969 = vrot.lane.b32.xlu0 %v2293, 35
        %v3970 = vpop.permute.xlu0 %3969
        %3971 = vrot.lane.b32.xlu0 %v2294, 35
        %v3972 = vpop.permute.xlu0 %3971
        %3973 = vrot.lane.b32.xlu0 %v2295, 35
        %v3974 = vpop.permute.xlu0 %3973
        %3975 = vrot.lane.b32.xlu0 %v2296, 35
        %v3976 = vpop.permute.xlu0 %3975
        %3977 = vrot.lane.b32.xlu0 %v2297, 35
        %v3978 = vpop.permute.xlu0 %3977
        %3979 = vrot.lane.b32.xlu0 %v2146, 35
        %v3980 = vpop.permute.xlu0 %3979
        %3981 = vrot.lane.b32.xlu0 %v2298, 35
        %v3982 = vpop.permute.xlu0 %3981
        %3983 = vrot.lane.b32.xlu0 %v2299, 35
        %v3984 = vpop.permute.xlu0 %3983
        %3985 = vrot.lane.b32.xlu0 %v2300, 35
        %v3986 = vpop.permute.xlu0 %3985
        %3987 = vrot.lane.b32.xlu0 %v2301, 35
        %v3988 = vpop.permute.xlu0 %3987
        %3989 = vrot.lane.b32.xlu0 %v2302, 35
        %v3990 = vpop.permute.xlu0 %3989
        %3991 = vrot.lane.b32.xlu0 %v2303, 35
        %v3992 = vpop.permute.xlu0 %3991
        %3993 = vrot.lane.b32.xlu0 %v2304, 35
        %v3994 = vpop.permute.xlu0 %3993
        %3995 = vrot.lane.b32.xlu0 %v2305, 35
        %v3996 = vpop.permute.xlu0 %3995
        %3997 = vrot.lane.b32.xlu0 %v2306, 35
        %v3998 = vpop.permute.xlu0 %3997
        %3999 = vrot.lane.b32.xlu0 %v2307, 35
        %v4000 = vpop.permute.xlu0 %3999
        %4001 = vrot.lane.b32.xlu0 %v2168, 35
        %v4002 = vpop.permute.xlu0 %4001
        %4003 = vrot.lane.b32.xlu0 %v2308, 35
        %v4004 = vpop.permute.xlu0 %4003
        %4005 = vrot.lane.b32.xlu0 %v2309, 35
        %v4006 = vpop.permute.xlu0 %4005
        %4007 = vrot.lane.b32.xlu0 %v2310, 35
        %v4008 = vpop.permute.xlu0 %4007
        %4009 = vrot.lane.b32.xlu0 %v2311, 35
        %v4010 = vpop.permute.xlu0 %4009
        %4011 = vrot.lane.b32.xlu0 %v2312, 35
        %v4012 = vpop.permute.xlu0 %4011
        %4013 = vrot.lane.b32.xlu0 %v2313, 35
        %v4014 = vpop.permute.xlu0 %4013
        %4015 = vrot.lane.b32.xlu0 %v2314, 35
        %v4016 = vpop.permute.xlu0 %4015
        %4017 = vrot.lane.b32.xlu0 %v2315, 35
        %v4018 = vpop.permute.xlu0 %4017
        %4019 = vrot.lane.b32.xlu0 %v2316, 35
        %v4020 = vpop.permute.xlu0 %4019
        %4021 = vrot.lane.b32.xlu0 %v2317, 35
        %v4022 = vpop.permute.xlu0 %4021
        %4023 = vrot.lane.b32.xlu0 %v2190, 35
        %v4024 = vpop.permute.xlu0 %4023
        %4025 = vrot.lane.b32.xlu0 %v2318, 35
        %v4026 = vpop.permute.xlu0 %4025
        %4027 = vrot.lane.b32.xlu0 %v2319, 35
        %v4028 = vpop.permute.xlu0 %4027
        %4029 = vrot.lane.b32.xlu0 %v2320, 35
        %v4030 = vpop.permute.xlu0 %4029
        %4031 = vrot.lane.b32.xlu0 %v2321, 35
        %v4032 = vpop.permute.xlu0 %4031
        %4033 = vrot.lane.b32.xlu0 %v2322, 35
        %v4034 = vpop.permute.xlu0 %4033
        %4035 = vrot.lane.b32.xlu0 %v2323, 35
        %v4036 = vpop.permute.xlu0 %4035
        %4037 = vrot.lane.b32.xlu0 %v2324, 35
        %v4038 = vpop.permute.xlu0 %4037
        %4039 = vrot.lane.b32.xlu0 %v2325, 35
        %v4040 = vpop.permute.xlu0 %4039
        %4041 = vrot.lane.b32.xlu0 %v2326, 35
        %v4042 = vpop.permute.xlu0 %4041
        %4043 = vrot.lane.b32.xlu0 %v2327, 35
        %v4044 = vpop.permute.xlu0 %4043
        %4045 = vrot.lane.b32.xlu0 %v2212, 35
        %v4046 = vpop.permute.xlu0 %4045
        %4047 = vrot.lane.b32.xlu0 %v2328, 35
        %v4048 = vpop.permute.xlu0 %4047
        %4049 = vrot.lane.b32.xlu0 %v2329, 35
        %v4050 = vpop.permute.xlu0 %4049
        %4051 = vrot.lane.b32.xlu0 %v2330, 35
        %v4052 = vpop.permute.xlu0 %4051
        %4053 = vrot.lane.b32.xlu0 %v2331, 35
        %v4054 = vpop.permute.xlu0 %4053
        %4055 = vrot.lane.b32.xlu0 %v2332, 35
        %v4056 = vpop.permute.xlu0 %4055
        %4057 = vrot.lane.b32.xlu0 %v2333, 35
        %v4058 = vpop.permute.xlu0 %4057
        %4059 = vrot.lane.b32.xlu0 %v2334, 35
        %v4060 = vpop.permute.xlu0 %4059
        %4061 = vrot.lane.b32.xlu0 %v2335, 35
        %v4062 = vpop.permute.xlu0 %4061
        %4063 = vrot.lane.b32.xlu0 %v2336, 35
        %v4064 = vpop.permute.xlu0 %4063
        %4065 = vrot.lane.b32.xlu0 %v2337, 35
        %v4066 = vpop.permute.xlu0 %4065
        %4067 = vrot.lane.b32.xlu0 %v2234, 35
        %v4068 = vpop.permute.xlu0 %4067
        %4069 = vrot.lane.b32.xlu0 %v2338, 35
        %v4070 = vpop.permute.xlu0 %4069
        %4071 = vrot.lane.b32.xlu0 %v2339, 35
        %v4072 = vpop.permute.xlu0 %4071
        %4073 = vrot.lane.b32.xlu0 %v2340, 35
        %v4074 = vpop.permute.xlu0 %4073
        %4075 = vrot.lane.b32.xlu0 %v2341, 35
        %v4076 = vpop.permute.xlu0 %4075
        %4077 = vrot.lane.b32.xlu0 %v2342, 35
        %v4078 = vpop.permute.xlu0 %4077
        %4079 = vrot.lane.b32.xlu0 %v2343, 35
        %v4080 = vpop.permute.xlu0 %4079
        %4081 = vrot.lane.b32.xlu0 %v2344, 35
        %v4082 = vpop.permute.xlu0 %4081
        %4083 = vrot.lane.b32.xlu0 %v2345, 35
        %v4084 = vpop.permute.xlu0 %4083
        %4085 = vrot.lane.b32.xlu0 %v2346, 35
        %v4086 = vpop.permute.xlu0 %4085
        %4087 = vrot.lane.b32.xlu0 %v2347, 35
        %v4088 = vpop.permute.xlu0 %4087
        %4089 = vrot.lane.b32.xlu0 %v2256, 35
        %v4090 = vpop.permute.xlu0 %4089
        %4091 = vrot.lane.b32.xlu0 %v2348, 35
        %v4092 = vpop.permute.xlu0 %4091
        %4093 = vrot.lane.b32.xlu0 %v2349, 35
        %v4094 = vpop.permute.xlu0 %4093
        %4095 = vrot.lane.b32.xlu0 %v2350, 35
        %v4096 = vpop.permute.xlu0 %4095
        %4097 = vrot.lane.b32.xlu0 %v2351, 35
        %v4098 = vpop.permute.xlu0 %4097
        %4099 = vrot.lane.b32.xlu0 %v2352, 35
        %v4100 = vpop.permute.xlu0 %4099
        %4101 = vrot.lane.b32.xlu0 %v2353, 35
        %v4102 = vpop.permute.xlu0 %4101
        %4103 = vrot.lane.b32.xlu0 %v2354, 35
        %v4104 = vpop.permute.xlu0 %4103
        %4105 = vrot.lane.b32.xlu0 %v2355, 35
        %v4106 = vpop.permute.xlu0 %4105
        %4107 = vrot.lane.b32.xlu0 %v2356, 35
        %v4108 = vpop.permute.xlu0 %4107
        %4109 = vrot.lane.b32.xlu0 %v2357, 35
        %v4110 = vpop.permute.xlu0 %4109
        %4111 = vrot.lane.b32.xlu0 %v2359, 35
        %v4112 = vpop.permute.xlu0 %4111
        %4113 = vrot.lane.b32.xlu0 %v2535, 35
        %v4114 = vpop.permute.xlu0 %4113
        %4115 = vrot.lane.b32.xlu0 %v2536, 35
        %v4116 = vpop.permute.xlu0 %4115
        %4117 = vrot.lane.b32.xlu0 %v2537, 35
        %v4118 = vpop.permute.xlu0 %4117
        %4119 = vrot.lane.b32.xlu0 %v2538, 35
        %v4120 = vpop.permute.xlu0 %4119
        %4121 = vrot.lane.b32.xlu0 %v2539, 35
        %v4122 = vpop.permute.xlu0 %4121
        %4123 = vrot.lane.b32.xlu0 %v2540, 35
        %v4124 = vpop.permute.xlu0 %4123
        %4125 = vrot.lane.b32.xlu0 %v2541, 35
        %v4126 = vpop.permute.xlu0 %4125
        %4127 = vrot.lane.b32.xlu0 %v2542, 35
        %v4128 = vpop.permute.xlu0 %4127
        %4129 = vrot.lane.b32.xlu0 %v2543, 35
        %v4130 = vpop.permute.xlu0 %4129
        %4131 = vrot.lane.b32.xlu0 %v2544, 35
        %v4132 = vpop.permute.xlu0 %4131
        %4133 = vrot.lane.b32.xlu0 %v2381, 35
        %v4134 = vpop.permute.xlu0 %4133
        %4135 = vrot.lane.b32.xlu0 %v2545, 35
        %v4136 = vpop.permute.xlu0 %4135
        %4137 = vrot.lane.b32.xlu0 %v2546, 35
        %v4138 = vpop.permute.xlu0 %4137
        %4139 = vrot.lane.b32.xlu0 %v2547, 35
        %v4140 = vpop.permute.xlu0 %4139
        %4141 = vrot.lane.b32.xlu0 %v2548, 35
        %v4142 = vpop.permute.xlu0 %4141
        %4143 = vrot.lane.b32.xlu0 %v2549, 35
        %v4144 = vpop.permute.xlu0 %4143
        %4145 = vrot.lane.b32.xlu0 %v2550, 35
        %v4146 = vpop.permute.xlu0 %4145
        %4147 = vrot.lane.b32.xlu0 %v2551, 35
        %v4148 = vpop.permute.xlu0 %4147
        %4149 = vrot.lane.b32.xlu0 %v2552, 35
        %v4150 = vpop.permute.xlu0 %4149
        %4151 = vrot.lane.b32.xlu0 %v2553, 35
        %v4152 = vpop.permute.xlu0 %4151
        %4153 = vrot.lane.b32.xlu0 %v2554, 35
        %v4154 = vpop.permute.xlu0 %4153
        %4155 = vrot.lane.b32.xlu0 %v2403, 35
        %v4156 = vpop.permute.xlu0 %4155
        %4157 = vrot.lane.b32.xlu0 %v2555, 35
        %v4158 = vpop.permute.xlu0 %4157
        %4159 = vrot.lane.b32.xlu0 %v2556, 35
        %v4160 = vpop.permute.xlu0 %4159
        %4161 = vrot.lane.b32.xlu0 %v2557, 35
        %v4162 = vpop.permute.xlu0 %4161
        %4163 = vrot.lane.b32.xlu0 %v2558, 35
        %v4164 = vpop.permute.xlu0 %4163
        %4165 = vrot.lane.b32.xlu0 %v2559, 35
        %v4166 = vpop.permute.xlu0 %4165
        %4167 = vrot.lane.b32.xlu0 %v2560, 35
        %v4168 = vpop.permute.xlu0 %4167
        %4169 = vrot.lane.b32.xlu0 %v2561, 35
        %v4170 = vpop.permute.xlu0 %4169
        %4171 = vrot.lane.b32.xlu0 %v2562, 35
        %v4172 = vpop.permute.xlu0 %4171
        %4173 = vrot.lane.b32.xlu0 %v2563, 35
        %v4174 = vpop.permute.xlu0 %4173
        %4175 = vrot.lane.b32.xlu0 %v2564, 35
        %v4176 = vpop.permute.xlu0 %4175
        %4177 = vrot.lane.b32.xlu0 %v2425, 35
        %v4178 = vpop.permute.xlu0 %4177
        %4179 = vrot.lane.b32.xlu0 %v2565, 35
        %v4180 = vpop.permute.xlu0 %4179
        %4181 = vrot.lane.b32.xlu0 %v2566, 35
        %v4182 = vpop.permute.xlu0 %4181
        %4183 = vrot.lane.b32.xlu0 %v2567, 35
        %v4184 = vpop.permute.xlu0 %4183
        %4185 = vrot.lane.b32.xlu0 %v2568, 35
        %v4186 = vpop.permute.xlu0 %4185
        %4187 = vrot.lane.b32.xlu0 %v2569, 35
        %v4188 = vpop.permute.xlu0 %4187
        %4189 = vrot.lane.b32.xlu0 %v2570, 35
        %v4190 = vpop.permute.xlu0 %4189
        %4191 = vrot.lane.b32.xlu0 %v2571, 35
        %v4192 = vpop.permute.xlu0 %4191
        %4193 = vrot.lane.b32.xlu0 %v2572, 35
        %v4194 = vpop.permute.xlu0 %4193
        %4195 = vrot.lane.b32.xlu0 %v2573, 35
        %v4196 = vpop.permute.xlu0 %4195
        %4197 = vrot.lane.b32.xlu0 %v2574, 35
        %v4198 = vpop.permute.xlu0 %4197
        %4199 = vrot.lane.b32.xlu0 %v2447, 35
        %v4200 = vpop.permute.xlu0 %4199
        %4201 = vrot.lane.b32.xlu0 %v2575, 35
        %v4202 = vpop.permute.xlu0 %4201
        %4203 = vrot.lane.b32.xlu0 %v2576, 35
        %v4204 = vpop.permute.xlu0 %4203
        %4205 = vrot.lane.b32.xlu0 %v2577, 35
        %v4206 = vpop.permute.xlu0 %4205
        %4207 = vrot.lane.b32.xlu0 %v2578, 35
        %v4208 = vpop.permute.xlu0 %4207
        %4209 = vrot.lane.b32.xlu0 %v2579, 35
        %v4210 = vpop.permute.xlu0 %4209
        %4211 = vrot.lane.b32.xlu0 %v2580, 35
        %v4212 = vpop.permute.xlu0 %4211
        %4213 = vrot.lane.b32.xlu0 %v2581, 35
        %v4214 = vpop.permute.xlu0 %4213
        %4215 = vrot.lane.b32.xlu0 %v2582, 35
        %v4216 = vpop.permute.xlu0 %4215
        %4217 = vrot.lane.b32.xlu0 %v2583, 35
        %v4218 = vpop.permute.xlu0 %4217
        %4219 = vrot.lane.b32.xlu0 %v2584, 35
        %v4220 = vpop.permute.xlu0 %4219
        %4221 = vrot.lane.b32.xlu0 %v2469, 35
        %v4222 = vpop.permute.xlu0 %4221
        %4223 = vrot.lane.b32.xlu0 %v2585, 35
        %v4224 = vpop.permute.xlu0 %4223
        %4225 = vrot.lane.b32.xlu0 %v2586, 35
        %v4226 = vpop.permute.xlu0 %4225
        %4227 = vrot.lane.b32.xlu0 %v2587, 35
        %v4228 = vpop.permute.xlu0 %4227
        %4229 = vrot.lane.b32.xlu0 %v2588, 35
        %v4230 = vpop.permute.xlu0 %4229
        %4231 = vrot.lane.b32.xlu0 %v2589, 35
        %v4232 = vpop.permute.xlu0 %4231
        %4233 = vrot.lane.b32.xlu0 %v2590, 35
        %v4234 = vpop.permute.xlu0 %4233
        %4235 = vrot.lane.b32.xlu0 %v2591, 35
        %v4236 = vpop.permute.xlu0 %4235
        %4237 = vrot.lane.b32.xlu0 %v2592, 35
        %v4238 = vpop.permute.xlu0 %4237
        %4239 = vrot.lane.b32.xlu0 %v2593, 35
        %v4240 = vpop.permute.xlu0 %4239
        %4241 = vrot.lane.b32.xlu0 %v2594, 35
        %v4242 = vpop.permute.xlu0 %4241
        %4243 = vrot.lane.b32.xlu0 %v2491, 35
        %v4244 = vpop.permute.xlu0 %4243
        %4245 = vrot.lane.b32.xlu0 %v2595, 35
        %v4246 = vpop.permute.xlu0 %4245
        %4247 = vrot.lane.b32.xlu0 %v2596, 35
        %v4248 = vpop.permute.xlu0 %4247
        %4249 = vrot.lane.b32.xlu0 %v2597, 35
        %v4250 = vpop.permute.xlu0 %4249
        %4251 = vrot.lane.b32.xlu0 %v2598, 35
        %v4252 = vpop.permute.xlu0 %4251
        %4253 = vrot.lane.b32.xlu0 %v2599, 35
        %v4254 = vpop.permute.xlu0 %4253
        %4255 = vrot.lane.b32.xlu0 %v2600, 35
        %v4256 = vpop.permute.xlu0 %4255
        %4257 = vrot.lane.b32.xlu0 %v2601, 35
        %v4258 = vpop.permute.xlu0 %4257
        %4259 = vrot.lane.b32.xlu0 %v2602, 35
        %v4260 = vpop.permute.xlu0 %4259
        %4261 = vrot.lane.b32.xlu0 %v2603, 35
        %v4262 = vpop.permute.xlu0 %4261
        %4263 = vrot.lane.b32.xlu0 %v2604, 35
        %v4264 = vpop.permute.xlu0 %4263
        %4265 = vrot.lane.b32.xlu0 %v2513, 35
        %v4266 = vpop.permute.xlu0 %4265
        %4267 = vrot.lane.b32.xlu0 %v2605, 35
        %v4268 = vpop.permute.xlu0 %4267
        %4269 = vrot.lane.b32.xlu0 %v2606, 35
        %v4270 = vpop.permute.xlu0 %4269
        %4271 = vrot.lane.b32.xlu0 %v2607, 35
        %v4272 = vpop.permute.xlu0 %4271
        %4273 = vrot.lane.b32.xlu0 %v2608, 35
        %v4274 = vpop.permute.xlu0 %4273
        %4275 = vrot.lane.b32.xlu0 %v2609, 35
        %v4276 = vpop.permute.xlu0 %4275
        %4277 = vrot.lane.b32.xlu0 %v2610, 35
        %v4278 = vpop.permute.xlu0 %4277
        %4279 = vrot.lane.b32.xlu0 %v2611, 35
        %v4280 = vpop.permute.xlu0 %4279
        %4281 = vrot.lane.b32.xlu0 %v2612, 35
        %v4282 = vpop.permute.xlu0 %4281
        %4283 = vrot.lane.b32.xlu0 %v2613, 35
        %v4284 = vpop.permute.xlu0 %4283
        %4285 = vrot.lane.b32.xlu0 %v2614, 35
        %v4286 = vpop.permute.xlu0 %4285
        %vm4287 = vcmask 285696
        %v4288 = vsel %vm4287, %v2704, %v2706
        %v4289 = vsel %vm4287, %v2706, %v2708
        %v4290 = vsel %vm4287, %v2708, %v2710
        %v4291 = vsel %vm4287, %v2710, %v2712
        %v4292 = vsel %vm4287, %v2712, %v2714
        %v4293 = vsel %vm4287, %v2714, %v2716
        %v4294 = vsel %vm4287, %v2716, %v2718
        %v4295 = vsel %vm4287, %v2718, %v2720
        %v4296 = vsel %vm4287, %v2720, %v2722
        %v4297 = vsel %vm4287, %v2722, %v2724
        %v4298 = vsel %vm4287, %v2726, %v2728
        %v4299 = vsel %vm4287, %v2728, %v2730
        %v4300 = vsel %vm4287, %v2730, %v2732
        %v4301 = vsel %vm4287, %v2732, %v2734
        %v4302 = vsel %vm4287, %v2734, %v2736
        %v4303 = vsel %vm4287, %v2736, %v2738
        %v4304 = vsel %vm4287, %v2738, %v2740
        %v4305 = vsel %vm4287, %v2740, %v2742
        %v4306 = vsel %vm4287, %v2742, %v2744
        %v4307 = vsel %vm4287, %v2744, %v2746
        %v4308 = vsel %vm4287, %v2748, %v2750
        %v4309 = vsel %vm4287, %v2750, %v2752
        %v4310 = vsel %vm4287, %v2752, %v2754
        %v4311 = vsel %vm4287, %v2754, %v2756
        %v4312 = vsel %vm4287, %v2756, %v2758
        %v4313 = vsel %vm4287, %v2758, %v2760
        %v4314 = vsel %vm4287, %v2760, %v2762
        %v4315 = vsel %vm4287, %v2762, %v2764
        %v4316 = vsel %vm4287, %v2764, %v2766
        %v4317 = vsel %vm4287, %v2766, %v2768
        %v4318 = vsel %vm4287, %v2770, %v2772
        %v4319 = vsel %vm4287, %v2772, %v2774
        %v4320 = vsel %vm4287, %v2774, %v2776
        %v4321 = vsel %vm4287, %v2776, %v2778
        %v4322 = vsel %vm4287, %v2778, %v2780
        %v4323 = vsel %vm4287, %v2780, %v2782
        %v4324 = vsel %vm4287, %v2782, %v2784
        %v4325 = vsel %vm4287, %v2784, %v2786
        %v4326 = vsel %vm4287, %v2786, %v2788
        %v4327 = vsel %vm4287, %v2788, %v2790
        %v4328 = vsel %vm4287, %v2792, %v2794
        %v4329 = vsel %vm4287, %v2794, %v2796
        %v4330 = vsel %vm4287, %v2796, %v2798
        %v4331 = vsel %vm4287, %v2798, %v2800
        %v4332 = vsel %vm4287, %v2800, %v2802
        %v4333 = vsel %vm4287, %v2802, %v2804
        %v4334 = vsel %vm4287, %v2804, %v2806
        %v4335 = vsel %vm4287, %v2806, %v2808
        %v4336 = vsel %vm4287, %v2808, %v2810
        %v4337 = vsel %vm4287, %v2810, %v2812
        %v4338 = vsel %vm4287, %v2814, %v2816
        %v4339 = vsel %vm4287, %v2816, %v2818
        %v4340 = vsel %vm4287, %v2818, %v2820
        %v4341 = vsel %vm4287, %v2820, %v2822
        %v4342 = vsel %vm4287, %v2822, %v2824
        %v4343 = vsel %vm4287, %v2824, %v2826
        %v4344 = vsel %vm4287, %v2826, %v2828
        %v4345 = vsel %vm4287, %v2828, %v2830
        %v4346 = vsel %vm4287, %v2830, %v2832
        %v4347 = vsel %vm4287, %v2832, %v2834
        %v4348 = vsel %vm4287, %v2836, %v2838
        %v4349 = vsel %vm4287, %v2838, %v2840
        %v4350 = vsel %vm4287, %v2840, %v2842
        %v4351 = vsel %vm4287, %v2842, %v2844
        %v4352 = vsel %vm4287, %v2844, %v2846
        %v4353 = vsel %vm4287, %v2846, %v2848
        %v4354 = vsel %vm4287, %v2848, %v2850
        %v4355 = vsel %vm4287, %v2850, %v2852
        %v4356 = vsel %vm4287, %v2852, %v2854
        %v4357 = vsel %vm4287, %v2854, %v2856
        %v4358 = vsel %vm4287, %v2858, %v2860
        %v4359 = vsel %vm4287, %v2860, %v2862
        %v4360 = vsel %vm4287, %v2862, %v2864
        %v4361 = vsel %vm4287, %v2864, %v2866
        %v4362 = vsel %vm4287, %v2866, %v2868
        %v4363 = vsel %vm4287, %v2868, %v2870
        %v4364 = vsel %vm4287, %v2870, %v2872
        %v4365 = vsel %vm4287, %v2872, %v2874
        %v4366 = vsel %vm4287, %v2874, %v2876
        %v4367 = vsel %vm4287, %v2876, %v2878
        %v4368 = vsel %vm4287, %v2880, %v2882
        %v4369 = vsel %vm4287, %v2882, %v2884
        %v4370 = vsel %vm4287, %v2884, %v2886
        %v4371 = vsel %vm4287, %v2886, %v2888
        %v4372 = vsel %vm4287, %v2888, %v2890
        %v4373 = vsel %vm4287, %v2890, %v2892
        %v4374 = vsel %vm4287, %v2892, %v2894
        %v4375 = vsel %vm4287, %v2894, %v2896
        %v4376 = vsel %vm4287, %v2896, %v2898
        %v4377 = vsel %vm4287, %v2898, %v2900
        %v4378 = vsel %vm4287, %v2902, %v2904
        %v4379 = vsel %vm4287, %v2904, %v2906
        %v4380 = vsel %vm4287, %v2906, %v2908
        %v4381 = vsel %vm4287, %v2908, %v2910
        %v4382 = vsel %vm4287, %v2910, %v2912
        %v4383 = vsel %vm4287, %v2912, %v2914
        %v4384 = vsel %vm4287, %v2914, %v2916
        %v4385 = vsel %vm4287, %v2916, %v2918
        %v4386 = vsel %vm4287, %v2918, %v2920
        %v4387 = vsel %vm4287, %v2920, %v2922
        %v4388 = vsel %vm4287, %v2924, %v2926
        %v4389 = vsel %vm4287, %v2926, %v2928
        %v4390 = vsel %vm4287, %v2928, %v2930
        %v4391 = vsel %vm4287, %v2930, %v2932
        %v4392 = vsel %vm4287, %v2932, %v2934
        %v4393 = vsel %vm4287, %v2934, %v2936
        %v4394 = vsel %vm4287, %v2936, %v2938
        %v4395 = vsel %vm4287, %v2938, %v2940
        %v4396 = vsel %vm4287, %v2940, %v2942
        %v4397 = vsel %vm4287, %v2942, %v2944
        %v4398 = vsel %vm4287, %v2946, %v2948
        %v4399 = vsel %vm4287, %v2948, %v2950
        %v4400 = vsel %vm4287, %v2950, %v2952
        %v4401 = vsel %vm4287, %v2952, %v2954
        %v4402 = vsel %vm4287, %v2954, %v2956
        %v4403 = vsel %vm4287, %v2956, %v2958
        %v4404 = vsel %vm4287, %v2958, %v2960
        %v4405 = vsel %vm4287, %v2960, %v2962
        %v4406 = vsel %vm4287, %v2962, %v2964
        %v4407 = vsel %vm4287, %v2964, %v2966
        %v4408 = vsel %vm4287, %v2968, %v2970
        %v4409 = vsel %vm4287, %v2970, %v2972
        %v4410 = vsel %vm4287, %v2972, %v2974
        %v4411 = vsel %vm4287, %v2974, %v2976
        %v4412 = vsel %vm4287, %v2976, %v2978
        %v4413 = vsel %vm4287, %v2978, %v2980
        %v4414 = vsel %vm4287, %v2980, %v2982
        %v4415 = vsel %vm4287, %v2982, %v2984
        %v4416 = vsel %vm4287, %v2984, %v2986
        %v4417 = vsel %vm4287, %v2986, %v2988
        %v4418 = vsel %vm4287, %v2990, %v2992
        %v4419 = vsel %vm4287, %v2992, %v2994
        %v4420 = vsel %vm4287, %v2994, %v2996
        %v4421 = vsel %vm4287, %v2996, %v2998
        %v4422 = vsel %vm4287, %v2998, %v3000
        %v4423 = vsel %vm4287, %v3000, %v3002
        %v4424 = vsel %vm4287, %v3002, %v3004
        %v4425 = vsel %vm4287, %v3004, %v3006
        %v4426 = vsel %vm4287, %v3006, %v3008
        %v4427 = vsel %vm4287, %v3008, %v3010
        %v4428 = vsel %vm4287, %v3012, %v3014
        %v4429 = vsel %vm4287, %v3014, %v3016
        %v4430 = vsel %vm4287, %v3016, %v3018
        %v4431 = vsel %vm4287, %v3018, %v3020
        %v4432 = vsel %vm4287, %v3020, %v3022
        %v4433 = vsel %vm4287, %v3022, %v3024
        %v4434 = vsel %vm4287, %v3024, %v3026
        %v4435 = vsel %vm4287, %v3026, %v3028
        %v4436 = vsel %vm4287, %v3028, %v3030
        %v4437 = vsel %vm4287, %v3030, %v3032
        %v4438 = vsel %vm4287, %v3034, %v3036
        %v4439 = vsel %vm4287, %v3036, %v3038
        %v4440 = vsel %vm4287, %v3038, %v3040
        %v4441 = vsel %vm4287, %v3040, %v3042
        %v4442 = vsel %vm4287, %v3042, %v3044
        %v4443 = vsel %vm4287, %v3044, %v3046
        %v4444 = vsel %vm4287, %v3046, %v3048
        %v4445 = vsel %vm4287, %v3048, %v3050
        %v4446 = vsel %vm4287, %v3050, %v3052
        %v4447 = vsel %vm4287, %v3052, %v3054
        %v4448 = vsel %vm4287, %v3056, %v3058
        %v4449 = vsel %vm4287, %v3058, %v3060
        %v4450 = vsel %vm4287, %v3060, %v3062
        %v4451 = vsel %vm4287, %v3062, %v3064
        %v4452 = vsel %vm4287, %v3064, %v3066
        %v4453 = vsel %vm4287, %v3066, %v3068
        %v4454 = vsel %vm4287, %v3068, %v3070
        %v4455 = vsel %vm4287, %v3070, %v3072
        %v4456 = vsel %vm4287, %v3072, %v3074
        %v4457 = vsel %vm4287, %v3074, %v3076
        %v4458 = vsel %vm4287, %v3078, %v3080
        %v4459 = vsel %vm4287, %v3080, %v3082
        %v4460 = vsel %vm4287, %v3082, %v3084
        %v4461 = vsel %vm4287, %v3084, %v3086
        %v4462 = vsel %vm4287, %v3086, %v3088
        %v4463 = vsel %vm4287, %v3088, %v3090
        %v4464 = vsel %vm4287, %v3090, %v3092
        %v4465 = vsel %vm4287, %v3092, %v3094
        %v4466 = vsel %vm4287, %v3094, %v3096
        %v4467 = vsel %vm4287, %v3096, %v3098
        %v4468 = vsel %vm4287, %v3100, %v3102
        %v4469 = vsel %vm4287, %v3102, %v3104
        %v4470 = vsel %vm4287, %v3104, %v3106
        %v4471 = vsel %vm4287, %v3106, %v3108
        %v4472 = vsel %vm4287, %v3108, %v3110
        %v4473 = vsel %vm4287, %v3110, %v3112
        %v4474 = vsel %vm4287, %v3112, %v3114
        %v4475 = vsel %vm4287, %v3114, %v3116
        %v4476 = vsel %vm4287, %v3116, %v3118
        %v4477 = vsel %vm4287, %v3118, %v3120
        %v4478 = vsel %vm4287, %v3122, %v3124
        %v4479 = vsel %vm4287, %v3124, %v3126
        %v4480 = vsel %vm4287, %v3126, %v3128
        %v4481 = vsel %vm4287, %v3128, %v3130
        %v4482 = vsel %vm4287, %v3130, %v3132
        %v4483 = vsel %vm4287, %v3132, %v3134
        %v4484 = vsel %vm4287, %v3134, %v3136
        %v4485 = vsel %vm4287, %v3136, %v3138
        %v4486 = vsel %vm4287, %v3138, %v3140
        %v4487 = vsel %vm4287, %v3140, %v3142
        %v4488 = vsel %vm4287, %v3144, %v3146
        %v4489 = vsel %vm4287, %v3146, %v3148
        %v4490 = vsel %vm4287, %v3148, %v3150
        %v4491 = vsel %vm4287, %v3150, %v3152
        %v4492 = vsel %vm4287, %v3152, %v3154
        %v4493 = vsel %vm4287, %v3154, %v3156
        %v4494 = vsel %vm4287, %v3156, %v3158
        %v4495 = vsel %vm4287, %v3158, %v3160
        %v4496 = vsel %vm4287, %v3160, %v3162
        %v4497 = vsel %vm4287, %v3162, %v3164
        %v4498 = vsel %vm4287, %v3166, %v3168
        %v4499 = vsel %vm4287, %v3168, %v3170
        %v4500 = vsel %vm4287, %v3170, %v3172
        %v4501 = vsel %vm4287, %v3172, %v3174
        %v4502 = vsel %vm4287, %v3174, %v3176
        %v4503 = vsel %vm4287, %v3176, %v3178
        %v4504 = vsel %vm4287, %v3178, %v3180
        %v4505 = vsel %vm4287, %v3180, %v3182
        %v4506 = vsel %vm4287, %v3182, %v3184
        %v4507 = vsel %vm4287, %v3184, %v3186
        %v4508 = vsel %vm4287, %v3188, %v3190
        %v4509 = vsel %vm4287, %v3190, %v3192
        %v4510 = vsel %vm4287, %v3192, %v3194
        %v4511 = vsel %vm4287, %v3194, %v3196
        %v4512 = vsel %vm4287, %v3196, %v3198
        %v4513 = vsel %vm4287, %v3198, %v3200
        %v4514 = vsel %vm4287, %v3200, %v3202
        %v4515 = vsel %vm4287, %v3202, %v3204
        %v4516 = vsel %vm4287, %v3204, %v3206
        %v4517 = vsel %vm4287, %v3206, %v3208
        %v4518 = vsel %vm4287, %v3210, %v3212
        %v4519 = vsel %vm4287, %v3212, %v3214
        %v4520 = vsel %vm4287, %v3214, %v3216
        %v4521 = vsel %vm4287, %v3216, %v3218
        %v4522 = vsel %vm4287, %v3218, %v3220
        %v4523 = vsel %vm4287, %v3220, %v3222
        %v4524 = vsel %vm4287, %v3222, %v3224
        %v4525 = vsel %vm4287, %v3224, %v3226
        %v4526 = vsel %vm4287, %v3226, %v3228
        %v4527 = vsel %vm4287, %v3228, %v3230
        %v4528 = vsel %vm4287, %v3232, %v3234
        %v4529 = vsel %vm4287, %v3234, %v3236
        %v4530 = vsel %vm4287, %v3236, %v3238
        %v4531 = vsel %vm4287, %v3238, %v3240
        %v4532 = vsel %vm4287, %v3240, %v3242
        %v4533 = vsel %vm4287, %v3242, %v3244
        %v4534 = vsel %vm4287, %v3244, %v3246
        %v4535 = vsel %vm4287, %v3246, %v3248
        %v4536 = vsel %vm4287, %v3248, %v3250
        %v4537 = vsel %vm4287, %v3250, %v3252
        %v4538 = vsel %vm4287, %v3254, %v3256
        %v4539 = vsel %vm4287, %v3256, %v3258
        %v4540 = vsel %vm4287, %v3258, %v3260
        %v4541 = vsel %vm4287, %v3260, %v3262
        %v4542 = vsel %vm4287, %v3262, %v3264
        %v4543 = vsel %vm4287, %v3264, %v3266
        %v4544 = vsel %vm4287, %v3266, %v3268
        %v4545 = vsel %vm4287, %v3268, %v3270
        %v4546 = vsel %vm4287, %v3270, %v3272
        %v4547 = vsel %vm4287, %v3272, %v3274
        %v4548 = vsel %vm4287, %v3276, %v3278
        %v4549 = vsel %vm4287, %v3278, %v3280
        %v4550 = vsel %vm4287, %v3280, %v3282
        %v4551 = vsel %vm4287, %v3282, %v3284
        %v4552 = vsel %vm4287, %v3284, %v3286
        %v4553 = vsel %vm4287, %v3286, %v3288
        %v4554 = vsel %vm4287, %v3288, %v3290
        %v4555 = vsel %vm4287, %v3290, %v3292
        %v4556 = vsel %vm4287, %v3292, %v3294
        %v4557 = vsel %vm4287, %v3294, %v3296
        %v4558 = vsel %vm4287, %v3298, %v3300
        %v4559 = vsel %vm4287, %v3300, %v3302
        %v4560 = vsel %vm4287, %v3302, %v3304
        %v4561 = vsel %vm4287, %v3304, %v3306
        %v4562 = vsel %vm4287, %v3306, %v3308
        %v4563 = vsel %vm4287, %v3308, %v3310
        %v4564 = vsel %vm4287, %v3310, %v3312
        %v4565 = vsel %vm4287, %v3312, %v3314
        %v4566 = vsel %vm4287, %v3314, %v3316
        %v4567 = vsel %vm4287, %v3316, %v3318
        %v4568 = vsel %vm4287, %v3320, %v3322
        %v4569 = vsel %vm4287, %v3322, %v3324
        %v4570 = vsel %vm4287, %v3324, %v3326
        %v4571 = vsel %vm4287, %v3326, %v3328
        %v4572 = vsel %vm4287, %v3328, %v3330
        %v4573 = vsel %vm4287, %v3330, %v3332
        %v4574 = vsel %vm4287, %v3332, %v3334
        %v4575 = vsel %vm4287, %v3334, %v3336
        %v4576 = vsel %vm4287, %v3336, %v3338
        %v4577 = vsel %vm4287, %v3338, %v3340
        %v4578 = vsel %vm4287, %v3342, %v3344
        %v4579 = vsel %vm4287, %v3344, %v3346
        %v4580 = vsel %vm4287, %v3346, %v3348
        %v4581 = vsel %vm4287, %v3348, %v3350
        %v4582 = vsel %vm4287, %v3350, %v3352
        %v4583 = vsel %vm4287, %v3352, %v3354
        %v4584 = vsel %vm4287, %v3354, %v3356
        %v4585 = vsel %vm4287, %v3356, %v3358
        %v4586 = vsel %vm4287, %v3358, %v3360
        %v4587 = vsel %vm4287, %v3360, %v3362
        %v4588 = vsel %vm4287, %v3364, %v3366
        %v4589 = vsel %vm4287, %v3366, %v3368
        %v4590 = vsel %vm4287, %v3368, %v3370
        %v4591 = vsel %vm4287, %v3370, %v3372
        %v4592 = vsel %vm4287, %v3372, %v3374
        %v4593 = vsel %vm4287, %v3374, %v3376
        %v4594 = vsel %vm4287, %v3376, %v3378
        %v4595 = vsel %vm4287, %v3378, %v3380
        %v4596 = vsel %vm4287, %v3380, %v3382
        %v4597 = vsel %vm4287, %v3382, %v3384
        %v4598 = vsel %vm4287, %v3386, %v3388
        %v4599 = vsel %vm4287, %v3388, %v3390
        %v4600 = vsel %vm4287, %v3390, %v3392
        %v4601 = vsel %vm4287, %v3392, %v3394
        %v4602 = vsel %vm4287, %v3394, %v3396
        %v4603 = vsel %vm4287, %v3396, %v3398
        %v4604 = vsel %vm4287, %v3398, %v3400
        %v4605 = vsel %vm4287, %v3400, %v3402
        %v4606 = vsel %vm4287, %v3402, %v3404
        %v4607 = vsel %vm4287, %v3404, %v3406
        %v4608 = vsel %vm4287, %v3408, %v3410
        %v4609 = vsel %vm4287, %v3410, %v3412
        %v4610 = vsel %vm4287, %v3412, %v3414
        %v4611 = vsel %vm4287, %v3414, %v3416
        %v4612 = vsel %vm4287, %v3416, %v3418
        %v4613 = vsel %vm4287, %v3418, %v3420
        %v4614 = vsel %vm4287, %v3420, %v3422
        %v4615 = vsel %vm4287, %v3422, %v3424
        %v4616 = vsel %vm4287, %v3424, %v3426
        %v4617 = vsel %vm4287, %v3426, %v3428
        %v4618 = vsel %vm4287, %v3430, %v3432
        %v4619 = vsel %vm4287, %v3432, %v3434
        %v4620 = vsel %vm4287, %v3434, %v3436
        %v4621 = vsel %vm4287, %v3436, %v3438
        %v4622 = vsel %vm4287, %v3438, %v3440
        %v4623 = vsel %vm4287, %v3440, %v3442
        %v4624 = vsel %vm4287, %v3442, %v3444
        %v4625 = vsel %vm4287, %v3444, %v3446
        %v4626 = vsel %vm4287, %v3446, %v3448
        %v4627 = vsel %vm4287, %v3448, %v3450
        %v4628 = vsel %vm4287, %v3452, %v3454
        %v4629 = vsel %vm4287, %v3454, %v3456
        %v4630 = vsel %vm4287, %v3456, %v3458
        %v4631 = vsel %vm4287, %v3458, %v3460
        %v4632 = vsel %vm4287, %v3460, %v3462
        %v4633 = vsel %vm4287, %v3462, %v3464
        %v4634 = vsel %vm4287, %v3464, %v3466
        %v4635 = vsel %vm4287, %v3466, %v3468
        %v4636 = vsel %vm4287, %v3468, %v3470
        %v4637 = vsel %vm4287, %v3470, %v3472
        %v4638 = vsel %vm4287, %v3474, %v3476
        %v4639 = vsel %vm4287, %v3476, %v3478
        %v4640 = vsel %vm4287, %v3478, %v3480
        %v4641 = vsel %vm4287, %v3480, %v3482
        %v4642 = vsel %vm4287, %v3482, %v3484
        %v4643 = vsel %vm4287, %v3484, %v3486
        %v4644 = vsel %vm4287, %v3486, %v3488
        %v4645 = vsel %vm4287, %v3488, %v3490
        %v4646 = vsel %vm4287, %v3490, %v3492
        %v4647 = vsel %vm4287, %v3492, %v3494
        %v4648 = vsel %vm4287, %v3496, %v3498
        %v4649 = vsel %vm4287, %v3498, %v3500
        %v4650 = vsel %vm4287, %v3500, %v3502
        %v4651 = vsel %vm4287, %v3502, %v3504
        %v4652 = vsel %vm4287, %v3504, %v3506
        %v4653 = vsel %vm4287, %v3506, %v3508
        %v4654 = vsel %vm4287, %v3508, %v3510
        %v4655 = vsel %vm4287, %v3510, %v3512
        %v4656 = vsel %vm4287, %v3512, %v3514
        %v4657 = vsel %vm4287, %v3514, %v3516
        %v4658 = vsel %vm4287, %v3518, %v3520
        %v4659 = vsel %vm4287, %v3520, %v3522
        %v4660 = vsel %vm4287, %v3522, %v3524
        %v4661 = vsel %vm4287, %v3524, %v3526
        %v4662 = vsel %vm4287, %v3526, %v3528
        %v4663 = vsel %vm4287, %v3528, %v3530
        %v4664 = vsel %vm4287, %v3530, %v3532
        %v4665 = vsel %vm4287, %v3532, %v3534
        %v4666 = vsel %vm4287, %v3534, %v3536
        %v4667 = vsel %vm4287, %v3536, %v3538
        %v4668 = vsel %vm4287, %v3540, %v3542
        %v4669 = vsel %vm4287, %v3542, %v3544
        %v4670 = vsel %vm4287, %v3544, %v3546
        %v4671 = vsel %vm4287, %v3546, %v3548
        %v4672 = vsel %vm4287, %v3548, %v3550
        %v4673 = vsel %vm4287, %v3550, %v3552
        %v4674 = vsel %vm4287, %v3552, %v3554
        %v4675 = vsel %vm4287, %v3554, %v3556
        %v4676 = vsel %vm4287, %v3556, %v3558
        %v4677 = vsel %vm4287, %v3558, %v3560
        %v4678 = vsel %vm4287, %v3562, %v3564
        %v4679 = vsel %vm4287, %v3564, %v3566
        %v4680 = vsel %vm4287, %v3566, %v3568
        %v4681 = vsel %vm4287, %v3568, %v3570
        %v4682 = vsel %vm4287, %v3570, %v3572
        %v4683 = vsel %vm4287, %v3572, %v3574
        %v4684 = vsel %vm4287, %v3574, %v3576
        %v4685 = vsel %vm4287, %v3576, %v3578
        %v4686 = vsel %vm4287, %v3578, %v3580
        %v4687 = vsel %vm4287, %v3580, %v3582
        %v4688 = vsel %vm4287, %v3584, %v3586
        %v4689 = vsel %vm4287, %v3586, %v3588
        %v4690 = vsel %vm4287, %v3588, %v3590
        %v4691 = vsel %vm4287, %v3590, %v3592
        %v4692 = vsel %vm4287, %v3592, %v3594
        %v4693 = vsel %vm4287, %v3594, %v3596
        %v4694 = vsel %vm4287, %v3596, %v3598
        %v4695 = vsel %vm4287, %v3598, %v3600
        %v4696 = vsel %vm4287, %v3600, %v3602
        %v4697 = vsel %vm4287, %v3602, %v3604
        %v4698 = vsel %vm4287, %v3606, %v3608
        %v4699 = vsel %vm4287, %v3608, %v3610
        %v4700 = vsel %vm4287, %v3610, %v3612
        %v4701 = vsel %vm4287, %v3612, %v3614
        %v4702 = vsel %vm4287, %v3614, %v3616
        %v4703 = vsel %vm4287, %v3616, %v3618
        %v4704 = vsel %vm4287, %v3618, %v3620
        %v4705 = vsel %vm4287, %v3620, %v3622
        %v4706 = vsel %vm4287, %v3622, %v3624
        %v4707 = vsel %vm4287, %v3624, %v3626
        %v4708 = vsel %vm4287, %v3628, %v3630
        %v4709 = vsel %vm4287, %v3630, %v3632
        %v4710 = vsel %vm4287, %v3632, %v3634
        %v4711 = vsel %vm4287, %v3634, %v3636
        %v4712 = vsel %vm4287, %v3636, %v3638
        %v4713 = vsel %vm4287, %v3638, %v3640
        %v4714 = vsel %vm4287, %v3640, %v3642
        %v4715 = vsel %vm4287, %v3642, %v3644
        %v4716 = vsel %vm4287, %v3644, %v3646
        %v4717 = vsel %vm4287, %v3646, %v3648
        %v4718 = vsel %vm4287, %v3650, %v3652
        %v4719 = vsel %vm4287, %v3652, %v3654
        %v4720 = vsel %vm4287, %v3654, %v3656
        %v4721 = vsel %vm4287, %v3656, %v3658
        %v4722 = vsel %vm4287, %v3658, %v3660
        %v4723 = vsel %vm4287, %v3660, %v3662
        %v4724 = vsel %vm4287, %v3662, %v3664
        %v4725 = vsel %vm4287, %v3664, %v3666
        %v4726 = vsel %vm4287, %v3666, %v3668
        %v4727 = vsel %vm4287, %v3668, %v3670
        %v4728 = vsel %vm4287, %v3672, %v3674
        %v4729 = vsel %vm4287, %v3674, %v3676
        %v4730 = vsel %vm4287, %v3676, %v3678
        %v4731 = vsel %vm4287, %v3678, %v3680
        %v4732 = vsel %vm4287, %v3680, %v3682
        %v4733 = vsel %vm4287, %v3682, %v3684
        %v4734 = vsel %vm4287, %v3684, %v3686
        %v4735 = vsel %vm4287, %v3686, %v3688
        %v4736 = vsel %vm4287, %v3688, %v3690
        %v4737 = vsel %vm4287, %v3690, %v3692
        %v4738 = vsel %vm4287, %v3694, %v3696
        %v4739 = vsel %vm4287, %v3696, %v3698
        %v4740 = vsel %vm4287, %v3698, %v3700
        %v4741 = vsel %vm4287, %v3700, %v3702
        %v4742 = vsel %vm4287, %v3702, %v3704
        %v4743 = vsel %vm4287, %v3704, %v3706
        %v4744 = vsel %vm4287, %v3706, %v3708
        %v4745 = vsel %vm4287, %v3708, %v3710
        %v4746 = vsel %vm4287, %v3710, %v3712
        %v4747 = vsel %vm4287, %v3712, %v3714
        %v4748 = vsel %vm4287, %v3716, %v3718
        %v4749 = vsel %vm4287, %v3718, %v3720
        %v4750 = vsel %vm4287, %v3720, %v3722
        %v4751 = vsel %vm4287, %v3722, %v3724
        %v4752 = vsel %vm4287, %v3724, %v3726
        %v4753 = vsel %vm4287, %v3726, %v3728
        %v4754 = vsel %vm4287, %v3728, %v3730
        %v4755 = vsel %vm4287, %v3730, %v3732
        %v4756 = vsel %vm4287, %v3732, %v3734
        %v4757 = vsel %vm4287, %v3734, %v3736
        %v4758 = vsel %vm4287, %v3738, %v3740
        %v4759 = vsel %vm4287, %v3740, %v3742
        %v4760 = vsel %vm4287, %v3742, %v3744
        %v4761 = vsel %vm4287, %v3744, %v3746
        %v4762 = vsel %vm4287, %v3746, %v3748
        %v4763 = vsel %vm4287, %v3748, %v3750
        %v4764 = vsel %vm4287, %v3750, %v3752
        %v4765 = vsel %vm4287, %v3752, %v3754
        %v4766 = vsel %vm4287, %v3754, %v3756
        %v4767 = vsel %vm4287, %v3756, %v3758
        %v4768 = vsel %vm4287, %v3760, %v3762
        %v4769 = vsel %vm4287, %v3762, %v3764
        %v4770 = vsel %vm4287, %v3764, %v3766
        %v4771 = vsel %vm4287, %v3766, %v3768
        %v4772 = vsel %vm4287, %v3768, %v3770
        %v4773 = vsel %vm4287, %v3770, %v3772
        %v4774 = vsel %vm4287, %v3772, %v3774
        %v4775 = vsel %vm4287, %v3774, %v3776
        %v4776 = vsel %vm4287, %v3776, %v3778
        %v4777 = vsel %vm4287, %v3778, %v3780
        %v4778 = vsel %vm4287, %v3782, %v3784
        %v4779 = vsel %vm4287, %v3784, %v3786
        %v4780 = vsel %vm4287, %v3786, %v3788
        %v4781 = vsel %vm4287, %v3788, %v3790
        %v4782 = vsel %vm4287, %v3790, %v3792
        %v4783 = vsel %vm4287, %v3792, %v3794
        %v4784 = vsel %vm4287, %v3794, %v3796
        %v4785 = vsel %vm4287, %v3796, %v3798
        %v4786 = vsel %vm4287, %v3798, %v3800
        %v4787 = vsel %vm4287, %v3800, %v3802
        %v4788 = vsel %vm4287, %v3804, %v3806
        %v4789 = vsel %vm4287, %v3806, %v3808
        %v4790 = vsel %vm4287, %v3808, %v3810
        %v4791 = vsel %vm4287, %v3810, %v3812
        %v4792 = vsel %vm4287, %v3812, %v3814
        %v4793 = vsel %vm4287, %v3814, %v3816
        %v4794 = vsel %vm4287, %v3816, %v3818
        %v4795 = vsel %vm4287, %v3818, %v3820
        %v4796 = vsel %vm4287, %v3820, %v3822
        %v4797 = vsel %vm4287, %v3822, %v3824
        %v4798 = vsel %vm4287, %v3826, %v3828
        %v4799 = vsel %vm4287, %v3828, %v3830
        %v4800 = vsel %vm4287, %v3830, %v3832
        %v4801 = vsel %vm4287, %v3832, %v3834
        %v4802 = vsel %vm4287, %v3834, %v3836
        %v4803 = vsel %vm4287, %v3836, %v3838
        %v4804 = vsel %vm4287, %v3838, %v3840
        %v4805 = vsel %vm4287, %v3840, %v3842
        %v4806 = vsel %vm4287, %v3842, %v3844
        %v4807 = vsel %vm4287, %v3844, %v3846
        %v4808 = vsel %vm4287, %v3848, %v3850
        %v4809 = vsel %vm4287, %v3850, %v3852
        %v4810 = vsel %vm4287, %v3852, %v3854
        %v4811 = vsel %vm4287, %v3854, %v3856
        %v4812 = vsel %vm4287, %v3856, %v3858
        %v4813 = vsel %vm4287, %v3858, %v3860
        %v4814 = vsel %vm4287, %v3860, %v3862
        %v4815 = vsel %vm4287, %v3862, %v3864
        %v4816 = vsel %vm4287, %v3864, %v3866
        %v4817 = vsel %vm4287, %v3866, %v3868
        %v4818 = vsel %vm4287, %v3870, %v3872
        %v4819 = vsel %vm4287, %v3872, %v3874
        %v4820 = vsel %vm4287, %v3874, %v3876
        %v4821 = vsel %vm4287, %v3876, %v3878
        %v4822 = vsel %vm4287, %v3878, %v3880
        %v4823 = vsel %vm4287, %v3880, %v3882
        %v4824 = vsel %vm4287, %v3882, %v3884
        %v4825 = vsel %vm4287, %v3884, %v3886
        %v4826 = vsel %vm4287, %v3886, %v3888
        %v4827 = vsel %vm4287, %v3888, %v3890
        %v4828 = vsel %vm4287, %v3892, %v3894
        %v4829 = vsel %vm4287, %v3894, %v3896
        %v4830 = vsel %vm4287, %v3896, %v3898
        %v4831 = vsel %vm4287, %v3898, %v3900
        %v4832 = vsel %vm4287, %v3900, %v3902
        %v4833 = vsel %vm4287, %v3902, %v3904
        %v4834 = vsel %vm4287, %v3904, %v3906
        %v4835 = vsel %vm4287, %v3906, %v3908
        %v4836 = vsel %vm4287, %v3908, %v3910
        %v4837 = vsel %vm4287, %v3910, %v3912
        %v4838 = vsel %vm4287, %v3914, %v3916
        %v4839 = vsel %vm4287, %v3916, %v3918
        %v4840 = vsel %vm4287, %v3918, %v3920
        %v4841 = vsel %vm4287, %v3920, %v3922
        %v4842 = vsel %vm4287, %v3922, %v3924
        %v4843 = vsel %vm4287, %v3924, %v3926
        %v4844 = vsel %vm4287, %v3926, %v3928
        %v4845 = vsel %vm4287, %v3928, %v3930
        %v4846 = vsel %vm4287, %v3930, %v3932
        %v4847 = vsel %vm4287, %v3932, %v3934
        %v4848 = vsel %vm4287, %v3936, %v3938
        %v4849 = vsel %vm4287, %v3938, %v3940
        %v4850 = vsel %vm4287, %v3940, %v3942
        %v4851 = vsel %vm4287, %v3942, %v3944
        %v4852 = vsel %vm4287, %v3944, %v3946
        %v4853 = vsel %vm4287, %v3946, %v3948
        %v4854 = vsel %vm4287, %v3948, %v3950
        %v4855 = vsel %vm4287, %v3950, %v3952
        %v4856 = vsel %vm4287, %v3952, %v3954
        %v4857 = vsel %vm4287, %v3954, %v3956
        %v4858 = vsel %vm4287, %v3958, %v3960
        %v4859 = vsel %vm4287, %v3960, %v3962
        %v4860 = vsel %vm4287, %v3962, %v3964
        %v4861 = vsel %vm4287, %v3964, %v3966
        %v4862 = vsel %vm4287, %v3966, %v3968
        %v4863 = vsel %vm4287, %v3968, %v3970
        %v4864 = vsel %vm4287, %v3970, %v3972
        %v4865 = vsel %vm4287, %v3972, %v3974
        %v4866 = vsel %vm4287, %v3974, %v3976
        %v4867 = vsel %vm4287, %v3976, %v3978
        %v4868 = vsel %vm4287, %v3980, %v3982
        %v4869 = vsel %vm4287, %v3982, %v3984
        %v4870 = vsel %vm4287, %v3984, %v3986
        %v4871 = vsel %vm4287, %v3986, %v3988
        %v4872 = vsel %vm4287, %v3988, %v3990
        %v4873 = vsel %vm4287, %v3990, %v3992
        %v4874 = vsel %vm4287, %v3992, %v3994
        %v4875 = vsel %vm4287, %v3994, %v3996
        %v4876 = vsel %vm4287, %v3996, %v3998
        %v4877 = vsel %vm4287, %v3998, %v4000
        %v4878 = vsel %vm4287, %v4002, %v4004
        %v4879 = vsel %vm4287, %v4004, %v4006
        %v4880 = vsel %vm4287, %v4006, %v4008
        %v4881 = vsel %vm4287, %v4008, %v4010
        %v4882 = vsel %vm4287, %v4010, %v4012
        %v4883 = vsel %vm4287, %v4012, %v4014
        %v4884 = vsel %vm4287, %v4014, %v4016
        %v4885 = vsel %vm4287, %v4016, %v4018
        %v4886 = vsel %vm4287, %v4018, %v4020
        %v4887 = vsel %vm4287, %v4020, %v4022
        %v4888 = vsel %vm4287, %v4024, %v4026
        %v4889 = vsel %vm4287, %v4026, %v4028
        %v4890 = vsel %vm4287, %v4028, %v4030
        %v4891 = vsel %vm4287, %v4030, %v4032
        %v4892 = vsel %vm4287, %v4032, %v4034
        %v4893 = vsel %vm4287, %v4034, %v4036
        %v4894 = vsel %vm4287, %v4036, %v4038
        %v4895 = vsel %vm4287, %v4038, %v4040
        %v4896 = vsel %vm4287, %v4040, %v4042
        %v4897 = vsel %vm4287, %v4042, %v4044
        %v4898 = vsel %vm4287, %v4046, %v4048
        %v4899 = vsel %vm4287, %v4048, %v4050
        %v4900 = vsel %vm4287, %v4050, %v4052
        %v4901 = vsel %vm4287, %v4052, %v4054
        %v4902 = vsel %vm4287, %v4054, %v4056
        %v4903 = vsel %vm4287, %v4056, %v4058
        %v4904 = vsel %vm4287, %v4058, %v4060
        %v4905 = vsel %vm4287, %v4060, %v4062
        %v4906 = vsel %vm4287, %v4062, %v4064
        %v4907 = vsel %vm4287, %v4064, %v4066
        %v4908 = vsel %vm4287, %v4068, %v4070
        %v4909 = vsel %vm4287, %v4070, %v4072
        %v4910 = vsel %vm4287, %v4072, %v4074
        %v4911 = vsel %vm4287, %v4074, %v4076
        %v4912 = vsel %vm4287, %v4076, %v4078
        %v4913 = vsel %vm4287, %v4078, %v4080
        %v4914 = vsel %vm4287, %v4080, %v4082
        %v4915 = vsel %vm4287, %v4082, %v4084
        %v4916 = vsel %vm4287, %v4084, %v4086
        %v4917 = vsel %vm4287, %v4086, %v4088
        %v4918 = vsel %vm4287, %v4090, %v4092
        %v4919 = vsel %vm4287, %v4092, %v4094
        %v4920 = vsel %vm4287, %v4094, %v4096
        %v4921 = vsel %vm4287, %v4096, %v4098
        %v4922 = vsel %vm4287, %v4098, %v4100
        %v4923 = vsel %vm4287, %v4100, %v4102
        %v4924 = vsel %vm4287, %v4102, %v4104
        %v4925 = vsel %vm4287, %v4104, %v4106
        %v4926 = vsel %vm4287, %v4106, %v4108
        %v4927 = vsel %vm4287, %v4108, %v4110
        %v4928 = vsel %vm4287, %v4112, %v4114
        %v4929 = vsel %vm4287, %v4114, %v4116
        %v4930 = vsel %vm4287, %v4116, %v4118
        %v4931 = vsel %vm4287, %v4118, %v4120
        %v4932 = vsel %vm4287, %v4120, %v4122
        %v4933 = vsel %vm4287, %v4122, %v4124
        %v4934 = vsel %vm4287, %v4124, %v4126
        %v4935 = vsel %vm4287, %v4126, %v4128
        %v4936 = vsel %vm4287, %v4128, %v4130
        %v4937 = vsel %vm4287, %v4130, %v4132
        %v4938 = vsel %vm4287, %v4134, %v4136
        %v4939 = vsel %vm4287, %v4136, %v4138
        %v4940 = vsel %vm4287, %v4138, %v4140
        %v4941 = vsel %vm4287, %v4140, %v4142
        %v4942 = vsel %vm4287, %v4142, %v4144
        %v4943 = vsel %vm4287, %v4144, %v4146
        %v4944 = vsel %vm4287, %v4146, %v4148
        %v4945 = vsel %vm4287, %v4148, %v4150
        %v4946 = vsel %vm4287, %v4150, %v4152
        %v4947 = vsel %vm4287, %v4152, %v4154
        %v4948 = vsel %vm4287, %v4156, %v4158
        %v4949 = vsel %vm4287, %v4158, %v4160
        %v4950 = vsel %vm4287, %v4160, %v4162
        %v4951 = vsel %vm4287, %v4162, %v4164
        %v4952 = vsel %vm4287, %v4164, %v4166
        %v4953 = vsel %vm4287, %v4166, %v4168
        %v4954 = vsel %vm4287, %v4168, %v4170
        %v4955 = vsel %vm4287, %v4170, %v4172
        %v4956 = vsel %vm4287, %v4172, %v4174
        %v4957 = vsel %vm4287, %v4174, %v4176
        %v4958 = vsel %vm4287, %v4178, %v4180
        %v4959 = vsel %vm4287, %v4180, %v4182
        %v4960 = vsel %vm4287, %v4182, %v4184
        %v4961 = vsel %vm4287, %v4184, %v4186
        %v4962 = vsel %vm4287, %v4186, %v4188
        %v4963 = vsel %vm4287, %v4188, %v4190
        %v4964 = vsel %vm4287, %v4190, %v4192
        %v4965 = vsel %vm4287, %v4192, %v4194
        %v4966 = vsel %vm4287, %v4194, %v4196
        %v4967 = vsel %vm4287, %v4196, %v4198
        %v4968 = vsel %vm4287, %v4200, %v4202
        %v4969 = vsel %vm4287, %v4202, %v4204
        %v4970 = vsel %vm4287, %v4204, %v4206
        %v4971 = vsel %vm4287, %v4206, %v4208
        %v4972 = vsel %vm4287, %v4208, %v4210
        %v4973 = vsel %vm4287, %v4210, %v4212
        %v4974 = vsel %vm4287, %v4212, %v4214
        %v4975 = vsel %vm4287, %v4214, %v4216
        %v4976 = vsel %vm4287, %v4216, %v4218
        %v4977 = vsel %vm4287, %v4218, %v4220
        %v4978 = vsel %vm4287, %v4222, %v4224
        %v4979 = vsel %vm4287, %v4224, %v4226
        %v4980 = vsel %vm4287, %v4226, %v4228
        %v4981 = vsel %vm4287, %v4228, %v4230
        %v4982 = vsel %vm4287, %v4230, %v4232
        %v4983 = vsel %vm4287, %v4232, %v4234
        %v4984 = vsel %vm4287, %v4234, %v4236
        %v4985 = vsel %vm4287, %v4236, %v4238
        %v4986 = vsel %vm4287, %v4238, %v4240
        %v4987 = vsel %vm4287, %v4240, %v4242
        %v4988 = vsel %vm4287, %v4244, %v4246
        %v4989 = vsel %vm4287, %v4246, %v4248
        %v4990 = vsel %vm4287, %v4248, %v4250
        %v4991 = vsel %vm4287, %v4250, %v4252
        %v4992 = vsel %vm4287, %v4252, %v4254
        %v4993 = vsel %vm4287, %v4254, %v4256
        %v4994 = vsel %vm4287, %v4256, %v4258
        %v4995 = vsel %vm4287, %v4258, %v4260
        %v4996 = vsel %vm4287, %v4260, %v4262
        %v4997 = vsel %vm4287, %v4262, %v4264
        %v4998 = vsel %vm4287, %v4266, %v4268
        %v4999 = vsel %vm4287, %v4268, %v4270
        %v5000 = vsel %vm4287, %v4270, %v4272
        %v5001 = vsel %vm4287, %v4272, %v4274
        %v5002 = vsel %vm4287, %v4274, %v4276
        %v5003 = vsel %vm4287, %v4276, %v4278
        %v5004 = vsel %vm4287, %v4278, %v4280
        %v5005 = vsel %vm4287, %v4280, %v4282
        %v5006 = vsel %vm4287, %v4282, %v4284
        %v5007 = vsel %vm4287, %v4284, %v4286
        %vm5728 = vcmask 523264
        %v5730 = vsel %vm5728, %v2619, 0
        %v5733 = vsel %vm5728, %v2624, 0
        %v5736 = vsel %vm5728, %v2629, 0
        %v5739 = vsel %vm5728, %v2634, 0
        %v5742 = vsel %vm5728, %v2639, 0
        %v5745 = vsel %vm5728, %v2644, 0
        %v5748 = vsel %vm5728, %v2649, 0
        %v5751 = vsel %vm5728, %v2654, 0
        %5753 = vmatprep.subr.mxu0 %v4439
        %5754 = vmatpush1.msra.mxu0 %v4438
        %5755 = vmatprep.subr.mxu0 %v4429
        %5756 = vmatpush1.msra.mxu0 %v4428
        %5757 = vmatprep.subr.mxu0 %v4419
        %5758 = vmatpush1.msra.mxu0 %v4418
        %5759 = vmatprep.subr.mxu0 %v4409
        %5760 = vmatpush1.msra.mxu0 %v4408
        %5761 = vmatprep.subr.mxu0 %v4399
        %5762 = vmatpush1.msra.mxu0 %v4398
        %5763 = vmatprep.subr.mxu0 %v4389
        %5764 = vmatpush1.msra.mxu0 %v4388
        %5765 = vmatprep.subr.mxu0 %v4379
        %5766 = vmatpush1.msra.mxu0 %v4378
        %5767 = vmatprep.subr.mxu0 %v4369
        %5768 = vmatpush1.msra.mxu0 %v4368
        %5769 = vmatprep.subr.mxu0 %v4359
        %5770 = vmatpush1.msra.mxu0 %v4358
        %5771 = vmatprep.subr.mxu0 %v4349
        %5772 = vmatpush1.msra.mxu0 %v4348
        %5773 = vmatprep.subr.mxu0 %v4339
        %5774 = vmatpush1.msra.mxu0 %v4338
        %5775 = vmatprep.subr.mxu0 %v4329
        %5776 = vmatpush1.msra.mxu0 %v4328
        %5777 = vmatprep.subr.mxu0 %v4319
        %5778 = vmatpush1.msra.mxu0 %v4318
        %5779 = vmatprep.subr.mxu0 %v4309
        %5780 = vmatpush1.msra.mxu0 %v4308
        %5781 = vmatprep.subr.mxu0 %v4299
        %5782 = vmatpush1.msra.mxu0 %v4298
        %5783 = vmatprep.subr.mxu0 %v4289
        %5784 = vmatpush1.msra.mxu0 %v4288
        %5785 = vmatprep.subr.mxu0 %v4599
        %5786 = vmatpush2.msra.mxu0 %v4598
        %5787 = vmatprep.subr.mxu0 %v4589
        %5788 = vmatpush2.msra.mxu0 %v4588
        %5789 = vmatprep.subr.mxu0 %v4579
        %5790 = vmatpush2.msra.mxu0 %v4578
        %5791 = vmatprep.subr.mxu0 %v4569
        %5792 = vmatpush2.msra.mxu0 %v4568
        %5793 = vmatprep.subr.mxu0 %v4559
        %5794 = vmatpush2.msra.mxu0 %v4558
        %5795 = vmatprep.subr.mxu0 %v4549
        %5796 = vmatpush2.msra.mxu0 %v4548
        %5797 = vmatprep.subr.mxu0 %v4539
        %5798 = vmatpush2.msra.mxu0 %v4538
        %5799 = vmatprep.subr.mxu0 %v4529
        %5800 = vmatpush2.msra.mxu0 %v4528
        %5801 = vmatprep.subr.mxu0 %v4519
        %5802 = vmatpush2.msra.mxu0 %v4518
        %5803 = vmatprep.subr.mxu0 %v4509
        %5804 = vmatpush2.msra.mxu0 %v4508
        %5805 = vmatprep.subr.mxu0 %v4499
        %5806 = vmatpush2.msra.mxu0 %v4498
        %5807 = vmatprep.subr.mxu0 %v4489
        %5808 = vmatpush2.msra.mxu0 %v4488
        %5809 = vmatprep.subr.mxu0 %v4479
        %5810 = vmatpush2.msra.mxu0 %v4478
        %5811 = vmatprep.subr.mxu0 %v4469
        %5812 = vmatpush2.msra.mxu0 %v4468
        %5813 = vmatprep.subr.mxu0 %v4459
        %5814 = vmatpush2.msra.mxu0 %v4458
        %5815 = vmatprep.subr.mxu0 %v4449
        %5816 = vmatpush2.msra.mxu0 %v4448
        %5817 = vmatprep.mubr.f32.mxu0 %v2616
        %5818 = vmatmul.mubr.f32.gmra.mxu0 %v2615
        %v5819 = vpop.f32.mrf.mxu0
        %v5820 = vadd.f32 %v2666, %v5819
        %v5821 = vpop.f32.mrf.mxu0
        %v5822 = vadd.f32 %v2666, %v5821
        %5823 = vmatprep.mubr.f32.mxu0 %v2621
        %5824 = vmatmul.mubr.f32.gmra.mxu0 %v2620
        %v5825 = vpop.f32.mrf.mxu0
        %v5826 = vadd.f32 %v2671, %v5825
        %v5827 = vpop.f32.mrf.mxu0
        %v5828 = vadd.f32 %v2671, %v5827
        %5829 = vmatprep.mubr.f32.mxu0 %v2626
        %5830 = vmatmul.mubr.f32.gmra.mxu0 %v2625
        %v5831 = vpop.f32.mrf.mxu0
        %v5832 = vadd.f32 %v2676, %v5831
        %v5833 = vpop.f32.mrf.mxu0
        %v5834 = vadd.f32 %v2676, %v5833
        %5835 = vmatprep.mubr.f32.mxu0 %v2631
        %5836 = vmatmul.mubr.f32.gmra.mxu0 %v2630
        %v5837 = vpop.f32.mrf.mxu0
        %v5838 = vadd.f32 %v2681, %v5837
        %v5839 = vpop.f32.mrf.mxu0
        %v5840 = vadd.f32 %v2681, %v5839
        %5841 = vmatprep.mubr.f32.mxu0 %v2636
        %5842 = vmatmul.mubr.f32.gmra.mxu0 %v2635
        %v5843 = vpop.f32.mrf.mxu0
        %v5844 = vadd.f32 %v2686, %v5843
        %v5845 = vpop.f32.mrf.mxu0
        %v5846 = vadd.f32 %v2686, %v5845
        %5847 = vmatprep.mubr.f32.mxu0 %v2641
        %5848 = vmatmul.mubr.f32.gmra.mxu0 %v2640
        %v5849 = vpop.f32.mrf.mxu0
        %v5850 = vadd.f32 %v2691, %v5849
        %v5851 = vpop.f32.mrf.mxu0
        %v5852 = vadd.f32 %v2691, %v5851
        %5853 = vmatprep.mubr.f32.mxu0 %v2646
        %5854 = vmatmul.mubr.f32.gmra.mxu0 %v2645
        %v5855 = vpop.f32.mrf.mxu0
        %v5856 = vadd.f32 %v2696, %v5855
        %v5857 = vpop.f32.mrf.mxu0
        %v5858 = vadd.f32 %v2696, %v5857
        %5859 = vmatprep.mubr.f32.mxu0 %v2651
        %5860 = vmatmul.mubr.f32.gmra.mxu0 %v2650
        %v5861 = vpop.f32.mrf.mxu0
        %v5862 = vadd.f32 %v2701, %v5861
        %v5863 = vpop.f32.mrf.mxu0
        %v5864 = vadd.f32 %v2701, %v5863
        %5865 = vdwg.mxu0
        %5866 = vmatprep.subr.mxu0 %v4759
        %5867 = vmatpush1.msra.mxu0 %v4758
        %5868 = vmatprep.subr.mxu0 %v4749
        %5869 = vmatpush1.msra.mxu0 %v4748
        %5870 = vmatprep.subr.mxu0 %v4739
        %5871 = vmatpush1.msra.mxu0 %v4738
        %5872 = vmatprep.subr.mxu0 %v4729
        %5873 = vmatpush1.msra.mxu0 %v4728
        %5874 = vmatprep.subr.mxu0 %v4719
        %5875 = vmatpush1.msra.mxu0 %v4718
        %5876 = vmatprep.subr.mxu0 %v4709
        %5877 = vmatpush1.msra.mxu0 %v4708
        %5878 = vmatprep.subr.mxu0 %v4699
        %5879 = vmatpush1.msra.mxu0 %v4698
        %5880 = vmatprep.subr.mxu0 %v4689
        %5881 = vmatpush1.msra.mxu0 %v4688
        %5882 = vmatprep.subr.mxu0 %v4679
        %5883 = vmatpush1.msra.mxu0 %v4678
        %5884 = vmatprep.subr.mxu0 %v4669
        %5885 = vmatpush1.msra.mxu0 %v4668
        %5886 = vmatprep.subr.mxu0 %v4659
        %5887 = vmatpush1.msra.mxu0 %v4658
        %5888 = vmatprep.subr.mxu0 %v4649
        %5889 = vmatpush1.msra.mxu0 %v4648
        %5890 = vmatprep.subr.mxu0 %v4639
        %5891 = vmatpush1.msra.mxu0 %v4638
        %5892 = vmatprep.subr.mxu0 %v4629
        %5893 = vmatpush1.msra.mxu0 %v4628
        %5894 = vmatprep.subr.mxu0 %v4619
        %5895 = vmatpush1.msra.mxu0 %v4618
        %5896 = vmatprep.subr.mxu0 %v4609
        %5897 = vmatpush1.msra.mxu0 %v4608
        %5898 = vmatprep.subr.mxu0 %v4919
        %5899 = vmatpush2.msra.mxu0 %v4918
        %5900 = vmatprep.subr.mxu0 %v4909
        %5901 = vmatpush2.msra.mxu0 %v4908
        %5902 = vmatprep.subr.mxu0 %v4899
        %5903 = vmatpush2.msra.mxu0 %v4898
        %5904 = vmatprep.subr.mxu0 %v4889
        %5905 = vmatpush2.msra.mxu0 %v4888
        %5906 = vmatprep.subr.mxu0 %v4879
        %5907 = vmatpush2.msra.mxu0 %v4878
        %5908 = vmatprep.subr.mxu0 %v4869
        %5909 = vmatpush2.msra.mxu0 %v4868
        %5910 = vmatprep.subr.mxu0 %v4859
        %5911 = vmatpush2.msra.mxu0 %v4858
        %5912 = vmatprep.subr.mxu0 %v4849
        %5913 = vmatpush2.msra.mxu0 %v4848
        %5914 = vmatprep.subr.mxu0 %v4839
        %5915 = vmatpush2.msra.mxu0 %v4838
        %5916 = vmatprep.subr.mxu0 %v4829
        %5917 = vmatpush2.msra.mxu0 %v4828
        %5918 = vmatprep.subr.mxu0 %v4819
        %5919 = vmatpush2.msra.mxu0 %v4818
        %5920 = vmatprep.subr.mxu0 %v4809
        %5921 = vmatpush2.msra.mxu0 %v4808
        %5922 = vmatprep.subr.mxu0 %v4799
        %5923 = vmatpush2.msra.mxu0 %v4798
        %5924 = vmatprep.subr.mxu0 %v4789
        %5925 = vmatpush2.msra.mxu0 %v4788
        %5926 = vmatprep.subr.mxu0 %v4779
        %5927 = vmatpush2.msra.mxu0 %v4778
        %5928 = vmatprep.subr.mxu0 %v4769
        %5929 = vmatpush2.msra.mxu0 %v4768
        %5930 = vmatprep.mubr.f32.mxu0 %v2618
        %5931 = vmatmul.mubr.f32.gmra.mxu0 %v2617
        %v5932 = vpop.f32.mrf.mxu0
        %v5933 = vadd.f32 %v5820, %v5932
        %v5934 = vpop.f32.mrf.mxu0
        %v5935 = vadd.f32 %v5822, %v5934
        %5936 = vmatprep.mubr.f32.mxu0 %v2623
        %5937 = vmatmul.mubr.f32.gmra.mxu0 %v2622
        %v5938 = vpop.f32.mrf.mxu0
        %v5939 = vadd.f32 %v5826, %v5938
        %v5940 = vpop.f32.mrf.mxu0
        %v5941 = vadd.f32 %v5828, %v5940
        %5942 = vmatprep.mubr.f32.mxu0 %v2628
        %5943 = vmatmul.mubr.f32.gmra.mxu0 %v2627
        %v5944 = vpop.f32.mrf.mxu0
        %v5945 = vadd.f32 %v5832, %v5944
        %v5946 = vpop.f32.mrf.mxu0
        %v5947 = vadd.f32 %v5834, %v5946
        %5948 = vmatprep.mubr.f32.mxu0 %v2633
        %5949 = vmatmul.mubr.f32.gmra.mxu0 %v2632
        %v5950 = vpop.f32.mrf.mxu0
        %v5951 = vadd.f32 %v5838, %v5950
        %v5952 = vpop.f32.mrf.mxu0
        %v5953 = vadd.f32 %v5840, %v5952
        %5954 = vmatprep.mubr.f32.mxu0 %v2638
        %5955 = vmatmul.mubr.f32.gmra.mxu0 %v2637
        %v5956 = vpop.f32.mrf.mxu0
        %v5957 = vadd.f32 %v5844, %v5956
        %v5958 = vpop.f32.mrf.mxu0
        %v5959 = vadd.f32 %v5846, %v5958
        %5960 = vmatprep.mubr.f32.mxu0 %v2643
        %5961 = vmatmul.mubr.f32.gmra.mxu0 %v2642
        %v5962 = vpop.f32.mrf.mxu0
        %v5963 = vadd.f32 %v5850, %v5962
        %v5964 = vpop.f32.mrf.mxu0
        %v5965 = vadd.f32 %v5852, %v5964
        %5966 = vmatprep.mubr.f32.mxu0 %v2648
        %5967 = vmatmul.mubr.f32.gmra.mxu0 %v2647
        %v5968 = vpop.f32.mrf.mxu0
        %v5969 = vadd.f32 %v5856, %v5968
        %v5970 = vpop.f32.mrf.mxu0
        %v5971 = vadd.f32 %v5858, %v5970
        %5972 = vmatprep.mubr.f32.mxu0 %v2653
        %5973 = vmatmul.mubr.f32.gmra.mxu0 %v2652
        %v5974 = vpop.f32.mrf.mxu0
        %v5975 = vadd.f32 %v5862, %v5974
        %v5976 = vpop.f32.mrf.mxu0
        %v5977 = vadd.f32 %v5864, %v5976
        %5978 = vdwg.mxu0
        %5979 = vmatprep.subr.mxu0 0.0
        %5980 = vmatpush1.msra.mxu0 0.0
        %5981 = vmatprep.subr.mxu0 0.0
        %5982 = vmatpush1.msra.mxu0 0.0
        %5983 = vmatprep.subr.mxu0 0.0
        %5984 = vmatpush1.msra.mxu0 0.0
        %5985 = vmatprep.subr.mxu0 0.0
        %5986 = vmatpush1.msra.mxu0 0.0
        %5987 = vmatprep.subr.mxu0 0.0
        %5988 = vmatpush1.msra.mxu0 0.0
        %5989 = vmatprep.subr.mxu0 0.0
        %5990 = vmatpush1.msra.mxu0 0.0
        %5991 = vmatprep.subr.mxu0 0.0
        %5992 = vmatpush1.msra.mxu0 0.0
        %5993 = vmatprep.subr.mxu0 0.0
        %5994 = vmatpush1.msra.mxu0 0.0
        %5995 = vmatprep.subr.mxu0 %v4999
        %5996 = vmatpush1.msra.mxu0 %v4998
        %5997 = vmatprep.subr.mxu0 %v4989
        %5998 = vmatpush1.msra.mxu0 %v4988
        %5999 = vmatprep.subr.mxu0 %v4979
        %6000 = vmatpush1.msra.mxu0 %v4978
        %6001 = vmatprep.subr.mxu0 %v4969
        %6002 = vmatpush1.msra.mxu0 %v4968
        %6003 = vmatprep.subr.mxu0 %v4959
        %6004 = vmatpush1.msra.mxu0 %v4958
        %6005 = vmatprep.subr.mxu0 %v4949
        %6006 = vmatpush1.msra.mxu0 %v4948
        %6007 = vmatprep.subr.mxu0 %v4939
        %6008 = vmatpush1.msra.mxu0 %v4938
        %6009 = vmatprep.subr.mxu0 %v4929
        %6010 = vmatpush1.msra.mxu0 %v4928
        %6011 = vmatprep.subr.mxu0 0.0
        %6012 = vmatpush2.msra.mxu0 0.0
        %6013 = vmatprep.subr.mxu0 0.0
        %6014 = vmatpush2.msra.mxu0 0.0
        %6015 = vmatprep.subr.mxu0 0.0
        %6016 = vmatpush2.msra.mxu0 0.0
        %6017 = vmatprep.subr.mxu0 0.0
        %6018 = vmatpush2.msra.mxu0 0.0
        %6019 = vmatprep.subr.mxu0 0.0
        %6020 = vmatpush2.msra.mxu0 0.0
        %6021 = vmatprep.subr.mxu0 0.0
        %6022 = vmatpush2.msra.mxu0 0.0
        %6023 = vmatprep.subr.mxu0 0.0
        %6024 = vmatpush2.msra.mxu0 0.0
        %6025 = vmatprep.subr.mxu0 0.0
        %6026 = vmatpush2.msra.mxu0 0.0
        %6027 = vmatprep.subr.mxu0 0.0
        %6028 = vmatpush2.msra.mxu0 0.0
        %6029 = vmatprep.subr.mxu0 0.0
        %6030 = vmatpush2.msra.mxu0 0.0
        %6031 = vmatprep.subr.mxu0 0.0
        %6032 = vmatpush2.msra.mxu0 0.0
        %6033 = vmatprep.subr.mxu0 0.0
        %6034 = vmatpush2.msra.mxu0 0.0
        %6035 = vmatprep.subr.mxu0 0.0
        %6036 = vmatpush2.msra.mxu0 0.0
        %6037 = vmatprep.subr.mxu0 0.0
        %6038 = vmatpush2.msra.mxu0 0.0
        %6039 = vmatprep.subr.mxu0 0.0
        %6040 = vmatpush2.msra.mxu0 0.0
        %6041 = vmatprep.subr.mxu0 0.0
        %6042 = vmatpush2.msra.mxu0 0.0
        %6043 = vmatprep.mubr.f32.mxu0 0.0
        %6044 = vmatmul.mubr.f32.gmra.mxu0 %v5730
        %v6045 = vpop.f32.mrf.mxu0
        %v6046 = vadd.f32 %v5933, %v6045
        %v6047 = vpop.f32.mrf.mxu0
        %v6048 = vadd.f32 %v5935, %v6047
        %6049 = vmatprep.mubr.f32.mxu0 0.0
        %6050 = vmatmul.mubr.f32.gmra.mxu0 %v5733
        %v6051 = vpop.f32.mrf.mxu0
        %v6052 = vadd.f32 %v5939, %v6051
        %v6053 = vpop.f32.mrf.mxu0
        %v6054 = vadd.f32 %v5941, %v6053
        %6055 = vmatprep.mubr.f32.mxu0 0.0
        %6056 = vmatmul.mubr.f32.gmra.mxu0 %v5736
        %v6057 = vpop.f32.mrf.mxu0
        %v6058 = vadd.f32 %v5945, %v6057
        %v6059 = vpop.f32.mrf.mxu0
        %v6060 = vadd.f32 %v5947, %v6059
        %6061 = vmatprep.mubr.f32.mxu0 0.0
        %6062 = vmatmul.mubr.f32.gmra.mxu0 %v5739
        %v6063 = vpop.f32.mrf.mxu0
        %v6064 = vadd.f32 %v5951, %v6063
        %v6065 = vpop.f32.mrf.mxu0
        %v6066 = vadd.f32 %v5953, %v6065
        %6067 = vmatprep.mubr.f32.mxu0 0.0
        %6068 = vmatmul.mubr.f32.gmra.mxu0 %v5742
        %v6069 = vpop.f32.mrf.mxu0
        %v6070 = vadd.f32 %v5957, %v6069
        %v6071 = vpop.f32.mrf.mxu0
        %v6072 = vadd.f32 %v5959, %v6071
        %6073 = vmatprep.mubr.f32.mxu0 0.0
        %6074 = vmatmul.mubr.f32.gmra.mxu0 %v5745
        %v6075 = vpop.f32.mrf.mxu0
        %v6076 = vadd.f32 %v5963, %v6075
        %v6077 = vpop.f32.mrf.mxu0
        %v6078 = vadd.f32 %v5965, %v6077
        %6079 = vmatprep.mubr.f32.mxu0 0.0
        %6080 = vmatmul.mubr.f32.gmra.mxu0 %v5748
        %v6081 = vpop.f32.mrf.mxu0
        %v6082 = vadd.f32 %v5969, %v6081
        %v6083 = vpop.f32.mrf.mxu0
        %v6084 = vadd.f32 %v5971, %v6083
        %6085 = vmatprep.mubr.f32.mxu0 0.0
        %6086 = vmatmul.mubr.f32.gmra.mxu0 %v5751
        %v6087 = vpop.f32.mrf.mxu0
        %v6088 = vadd.f32 %v5975, %v6087
        %v6089 = vpop.f32.mrf.mxu0
        %v6090 = vadd.f32 %v5977, %v6089
        %6091 = vdwg.mxu0
        %6092 = vmatprep.subr.mxu0 %v4441
        %6093 = vmatpush1.msra.mxu0 %v4440
        %6094 = vmatprep.subr.mxu0 %v4431
        %6095 = vmatpush1.msra.mxu0 %v4430
        %6096 = vmatprep.subr.mxu0 %v4421
        %6097 = vmatpush1.msra.mxu0 %v4420
        %6098 = vmatprep.subr.mxu0 %v4411
        %6099 = vmatpush1.msra.mxu0 %v4410
        %6100 = vmatprep.subr.mxu0 %v4401
        %6101 = vmatpush1.msra.mxu0 %v4400
        %6102 = vmatprep.subr.mxu0 %v4391
        %6103 = vmatpush1.msra.mxu0 %v4390
        %6104 = vmatprep.subr.mxu0 %v4381
        %6105 = vmatpush1.msra.mxu0 %v4380
        %6106 = vmatprep.subr.mxu0 %v4371
        %6107 = vmatpush1.msra.mxu0 %v4370
        %6108 = vmatprep.subr.mxu0 %v4361
        %6109 = vmatpush1.msra.mxu0 %v4360
        %6110 = vmatprep.subr.mxu0 %v4351
        %6111 = vmatpush1.msra.mxu0 %v4350
        %6112 = vmatprep.subr.mxu0 %v4341
        %6113 = vmatpush1.msra.mxu0 %v4340
        %6114 = vmatprep.subr.mxu0 %v4331
        %6115 = vmatpush1.msra.mxu0 %v4330
        %6116 = vmatprep.subr.mxu0 %v4321
        %6117 = vmatpush1.msra.mxu0 %v4320
        %6118 = vmatprep.subr.mxu0 %v4311
        %6119 = vmatpush1.msra.mxu0 %v4310
        %6120 = vmatprep.subr.mxu0 %v4301
        %6121 = vmatpush1.msra.mxu0 %v4300
        %6122 = vmatprep.subr.mxu0 %v4291
        %6123 = vmatpush1.msra.mxu0 %v4290
        %6124 = vmatprep.subr.mxu0 %v4601
        %6125 = vmatpush2.msra.mxu0 %v4600
        %6126 = vmatprep.subr.mxu0 %v4591
        %6127 = vmatpush2.msra.mxu0 %v4590
        %6128 = vmatprep.subr.mxu0 %v4581
        %6129 = vmatpush2.msra.mxu0 %v4580
        %6130 = vmatprep.subr.mxu0 %v4571
        %6131 = vmatpush2.msra.mxu0 %v4570
        %6132 = vmatprep.subr.mxu0 %v4561
        %6133 = vmatpush2.msra.mxu0 %v4560
        %6134 = vmatprep.subr.mxu0 %v4551
        %6135 = vmatpush2.msra.mxu0 %v4550
        %6136 = vmatprep.subr.mxu0 %v4541
        %6137 = vmatpush2.msra.mxu0 %v4540
        %6138 = vmatprep.subr.mxu0 %v4531
        %6139 = vmatpush2.msra.mxu0 %v4530
        %6140 = vmatprep.subr.mxu0 %v4521
        %6141 = vmatpush2.msra.mxu0 %v4520
        %6142 = vmatprep.subr.mxu0 %v4511
        %6143 = vmatpush2.msra.mxu0 %v4510
        %6144 = vmatprep.subr.mxu0 %v4501
        %6145 = vmatpush2.msra.mxu0 %v4500
        %6146 = vmatprep.subr.mxu0 %v4491
        %6147 = vmatpush2.msra.mxu0 %v4490
        %6148 = vmatprep.subr.mxu0 %v4481
        %6149 = vmatpush2.msra.mxu0 %v4480
        %6150 = vmatprep.subr.mxu0 %v4471
        %6151 = vmatpush2.msra.mxu0 %v4470
        %6152 = vmatprep.subr.mxu0 %v4461
        %6153 = vmatpush2.msra.mxu0 %v4460
        %6154 = vmatprep.subr.mxu0 %v4451
        %6155 = vmatpush2.msra.mxu0 %v4450
        %6156 = vmatprep.mubr.f32.mxu0 %v2616
        %6157 = vmatmul.mubr.f32.gmra.mxu0 %v2615
        %v6158 = vpop.f32.mrf.mxu0
        %v6159 = vadd.f32 %v2666, %v6158
        %v6160 = vpop.f32.mrf.mxu0
        %v6161 = vadd.f32 %v2666, %v6160
        %6162 = vmatprep.mubr.f32.mxu0 %v2621
        %6163 = vmatmul.mubr.f32.gmra.mxu0 %v2620
        %v6164 = vpop.f32.mrf.mxu0
        %v6165 = vadd.f32 %v2671, %v6164
        %v6166 = vpop.f32.mrf.mxu0
        %v6167 = vadd.f32 %v2671, %v6166
        %6168 = vmatprep.mubr.f32.mxu0 %v2626
        %6169 = vmatmul.mubr.f32.gmra.mxu0 %v2625
        %v6170 = vpop.f32.mrf.mxu0
        %v6171 = vadd.f32 %v2676, %v6170
        %v6172 = vpop.f32.mrf.mxu0
        %v6173 = vadd.f32 %v2676, %v6172
        %6174 = vmatprep.mubr.f32.mxu0 %v2631
        %6175 = vmatmul.mubr.f32.gmra.mxu0 %v2630
        %v6176 = vpop.f32.mrf.mxu0
        %v6177 = vadd.f32 %v2681, %v6176
        %v6178 = vpop.f32.mrf.mxu0
        %v6179 = vadd.f32 %v2681, %v6178
        %6180 = vmatprep.mubr.f32.mxu0 %v2636
        %6181 = vmatmul.mubr.f32.gmra.mxu0 %v2635
        %v6182 = vpop.f32.mrf.mxu0
        %v6183 = vadd.f32 %v2686, %v6182
        %v6184 = vpop.f32.mrf.mxu0
        %v6185 = vadd.f32 %v2686, %v6184
        %6186 = vmatprep.mubr.f32.mxu0 %v2641
        %6187 = vmatmul.mubr.f32.gmra.mxu0 %v2640
        %v6188 = vpop.f32.mrf.mxu0
        %v6189 = vadd.f32 %v2691, %v6188
        %v6190 = vpop.f32.mrf.mxu0
        %v6191 = vadd.f32 %v2691, %v6190
        %6192 = vmatprep.mubr.f32.mxu0 %v2646
        %6193 = vmatmul.mubr.f32.gmra.mxu0 %v2645
        %v6194 = vpop.f32.mrf.mxu0
        %v6195 = vadd.f32 %v2696, %v6194
        %v6196 = vpop.f32.mrf.mxu0
        %v6197 = vadd.f32 %v2696, %v6196
        %6198 = vmatprep.mubr.f32.mxu0 %v2651
        %6199 = vmatmul.mubr.f32.gmra.mxu0 %v2650
        %v6200 = vpop.f32.mrf.mxu0
        %v6201 = vadd.f32 %v2701, %v6200
        %v6202 = vpop.f32.mrf.mxu0
        %v6203 = vadd.f32 %v2701, %v6202
        %6204 = vdwg.mxu0
        %6205 = vmatprep.subr.mxu0 %v4761
        %6206 = vmatpush1.msra.mxu0 %v4760
        %6207 = vmatprep.subr.mxu0 %v4751
        %6208 = vmatpush1.msra.mxu0 %v4750
        %6209 = vmatprep.subr.mxu0 %v4741
        %6210 = vmatpush1.msra.mxu0 %v4740
        %6211 = vmatprep.subr.mxu0 %v4731
        %6212 = vmatpush1.msra.mxu0 %v4730
        %6213 = vmatprep.subr.mxu0 %v4721
        %6214 = vmatpush1.msra.mxu0 %v4720
        %6215 = vmatprep.subr.mxu0 %v4711
        %6216 = vmatpush1.msra.mxu0 %v4710
        %6217 = vmatprep.subr.mxu0 %v4701
        %6218 = vmatpush1.msra.mxu0 %v4700
        %6219 = vmatprep.subr.mxu0 %v4691
        %6220 = vmatpush1.msra.mxu0 %v4690
        %6221 = vmatprep.subr.mxu0 %v4681
        %6222 = vmatpush1.msra.mxu0 %v4680
        %6223 = vmatprep.subr.mxu0 %v4671
        %6224 = vmatpush1.msra.mxu0 %v4670
        %6225 = vmatprep.subr.mxu0 %v4661
        %6226 = vmatpush1.msra.mxu0 %v4660
        %6227 = vmatprep.subr.mxu0 %v4651
        %6228 = vmatpush1.msra.mxu0 %v4650
        %6229 = vmatprep.subr.mxu0 %v4641
        %6230 = vmatpush1.msra.mxu0 %v4640
        %6231 = vmatprep.subr.mxu0 %v4631
        %6232 = vmatpush1.msra.mxu0 %v4630
        %6233 = vmatprep.subr.mxu0 %v4621
        %6234 = vmatpush1.msra.mxu0 %v4620
        %6235 = vmatprep.subr.mxu0 %v4611
        %6236 = vmatpush1.msra.mxu0 %v4610
        %6237 = vmatprep.subr.mxu0 %v4921
        %6238 = vmatpush2.msra.mxu0 %v4920
        %6239 = vmatprep.subr.mxu0 %v4911
        %6240 = vmatpush2.msra.mxu0 %v4910
        %6241 = vmatprep.subr.mxu0 %v4901
        %6242 = vmatpush2.msra.mxu0 %v4900
        %6243 = vmatprep.subr.mxu0 %v4891
        %6244 = vmatpush2.msra.mxu0 %v4890
        %6245 = vmatprep.subr.mxu0 %v4881
        %6246 = vmatpush2.msra.mxu0 %v4880
        %6247 = vmatprep.subr.mxu0 %v4871
        %6248 = vmatpush2.msra.mxu0 %v4870
        %6249 = vmatprep.subr.mxu0 %v4861
        %6250 = vmatpush2.msra.mxu0 %v4860
        %6251 = vmatprep.subr.mxu0 %v4851
        %6252 = vmatpush2.msra.mxu0 %v4850
        %6253 = vmatprep.subr.mxu0 %v4841
        %6254 = vmatpush2.msra.mxu0 %v4840
        %6255 = vmatprep.subr.mxu0 %v4831
        %6256 = vmatpush2.msra.mxu0 %v4830
        %6257 = vmatprep.subr.mxu0 %v4821
        %6258 = vmatpush2.msra.mxu0 %v4820
        %6259 = vmatprep.subr.mxu0 %v4811
        %6260 = vmatpush2.msra.mxu0 %v4810
        %6261 = vmatprep.subr.mxu0 %v4801
        %6262 = vmatpush2.msra.mxu0 %v4800
        %6263 = vmatprep.subr.mxu0 %v4791
        %6264 = vmatpush2.msra.mxu0 %v4790
        %6265 = vmatprep.subr.mxu0 %v4781
        %6266 = vmatpush2.msra.mxu0 %v4780
        %6267 = vmatprep.subr.mxu0 %v4771
        %6268 = vmatpush2.msra.mxu0 %v4770
        %6269 = vmatprep.mubr.f32.mxu0 %v2618
        %6270 = vmatmul.mubr.f32.gmra.mxu0 %v2617
        %v6271 = vpop.f32.mrf.mxu0
        %v6272 = vadd.f32 %v6159, %v6271
        %v6273 = vpop.f32.mrf.mxu0
        %v6274 = vadd.f32 %v6161, %v6273
        %6275 = vmatprep.mubr.f32.mxu0 %v2623
        %6276 = vmatmul.mubr.f32.gmra.mxu0 %v2622
        %v6277 = vpop.f32.mrf.mxu0
        %v6278 = vadd.f32 %v6165, %v6277
        %v6279 = vpop.f32.mrf.mxu0
        %v6280 = vadd.f32 %v6167, %v6279
        %6281 = vmatprep.mubr.f32.mxu0 %v2628
        %6282 = vmatmul.mubr.f32.gmra.mxu0 %v2627
        %v6283 = vpop.f32.mrf.mxu0
        %v6284 = vadd.f32 %v6171, %v6283
        %v6285 = vpop.f32.mrf.mxu0
        %v6286 = vadd.f32 %v6173, %v6285
        %6287 = vmatprep.mubr.f32.mxu0 %v2633
        %6288 = vmatmul.mubr.f32.gmra.mxu0 %v2632
        %v6289 = vpop.f32.mrf.mxu0
        %v6290 = vadd.f32 %v6177, %v6289
        %v6291 = vpop.f32.mrf.mxu0
        %v6292 = vadd.f32 %v6179, %v6291
        %6293 = vmatprep.mubr.f32.mxu0 %v2638
        %6294 = vmatmul.mubr.f32.gmra.mxu0 %v2637
        %v6295 = vpop.f32.mrf.mxu0
        %v6296 = vadd.f32 %v6183, %v6295
        %v6297 = vpop.f32.mrf.mxu0
        %v6298 = vadd.f32 %v6185, %v6297
        %6299 = vmatprep.mubr.f32.mxu0 %v2643
        %6300 = vmatmul.mubr.f32.gmra.mxu0 %v2642
        %v6301 = vpop.f32.mrf.mxu0
        %v6302 = vadd.f32 %v6189, %v6301
        %v6303 = vpop.f32.mrf.mxu0
        %v6304 = vadd.f32 %v6191, %v6303
        %6305 = vmatprep.mubr.f32.mxu0 %v2648
        %6306 = vmatmul.mubr.f32.gmra.mxu0 %v2647
        %v6307 = vpop.f32.mrf.mxu0
        %v6308 = vadd.f32 %v6195, %v6307
        %v6309 = vpop.f32.mrf.mxu0
        %v6310 = vadd.f32 %v6197, %v6309
        %6311 = vmatprep.mubr.f32.mxu0 %v2653
        %6312 = vmatmul.mubr.f32.gmra.mxu0 %v2652
        %v6313 = vpop.f32.mrf.mxu0
        %v6314 = vadd.f32 %v6201, %v6313
        %v6315 = vpop.f32.mrf.mxu0
        %v6316 = vadd.f32 %v6203, %v6315
        %6317 = vdwg.mxu0
        %6318 = vmatprep.subr.mxu0 0.0
        %6319 = vmatpush1.msra.mxu0 0.0
        %6320 = vmatprep.subr.mxu0 0.0
        %6321 = vmatpush1.msra.mxu0 0.0
        %6322 = vmatprep.subr.mxu0 0.0
        %6323 = vmatpush1.msra.mxu0 0.0
        %6324 = vmatprep.subr.mxu0 0.0
        %6325 = vmatpush1.msra.mxu0 0.0
        %6326 = vmatprep.subr.mxu0 0.0
        %6327 = vmatpush1.msra.mxu0 0.0
        %6328 = vmatprep.subr.mxu0 0.0
        %6329 = vmatpush1.msra.mxu0 0.0
        %6330 = vmatprep.subr.mxu0 0.0
        %6331 = vmatpush1.msra.mxu0 0.0
        %6332 = vmatprep.subr.mxu0 0.0
        %6333 = vmatpush1.msra.mxu0 0.0
        %6334 = vmatprep.subr.mxu0 %v5001
        %6335 = vmatpush1.msra.mxu0 %v5000
        %6336 = vmatprep.subr.mxu0 %v4991
        %6337 = vmatpush1.msra.mxu0 %v4990
        %6338 = vmatprep.subr.mxu0 %v4981
        %6339 = vmatpush1.msra.mxu0 %v4980
        %6340 = vmatprep.subr.mxu0 %v4971
        %6341 = vmatpush1.msra.mxu0 %v4970
        %6342 = vmatprep.subr.mxu0 %v4961
        %6343 = vmatpush1.msra.mxu0 %v4960
        %6344 = vmatprep.subr.mxu0 %v4951
        %6345 = vmatpush1.msra.mxu0 %v4950
        %6346 = vmatprep.subr.mxu0 %v4941
        %6347 = vmatpush1.msra.mxu0 %v4940
        %6348 = vmatprep.subr.mxu0 %v4931
        %6349 = vmatpush1.msra.mxu0 %v4930
        %6350 = vmatprep.subr.mxu0 0.0
        %6351 = vmatpush2.msra.mxu0 0.0
        %6352 = vmatprep.subr.mxu0 0.0
        %6353 = vmatpush2.msra.mxu0 0.0
        %6354 = vmatprep.subr.mxu0 0.0
        %6355 = vmatpush2.msra.mxu0 0.0
        %6356 = vmatprep.subr.mxu0 0.0
        %6357 = vmatpush2.msra.mxu0 0.0
        %6358 = vmatprep.subr.mxu0 0.0
        %6359 = vmatpush2.msra.mxu0 0.0
        %6360 = vmatprep.subr.mxu0 0.0
        %6361 = vmatpush2.msra.mxu0 0.0
        %6362 = vmatprep.subr.mxu0 0.0
        %6363 = vmatpush2.msra.mxu0 0.0
        %6364 = vmatprep.subr.mxu0 0.0
        %6365 = vmatpush2.msra.mxu0 0.0
        %6366 = vmatprep.subr.mxu0 0.0
        %6367 = vmatpush2.msra.mxu0 0.0
        %6368 = vmatprep.subr.mxu0 0.0
        %6369 = vmatpush2.msra.mxu0 0.0
        %6370 = vmatprep.subr.mxu0 0.0
        %6371 = vmatpush2.msra.mxu0 0.0
        %6372 = vmatprep.subr.mxu0 0.0
        %6373 = vmatpush2.msra.mxu0 0.0
        %6374 = vmatprep.subr.mxu0 0.0
        %6375 = vmatpush2.msra.mxu0 0.0
        %6376 = vmatprep.subr.mxu0 0.0
        %6377 = vmatpush2.msra.mxu0 0.0
        %6378 = vmatprep.subr.mxu0 0.0
        %6379 = vmatpush2.msra.mxu0 0.0
        %6380 = vmatprep.subr.mxu0 0.0
        %6381 = vmatpush2.msra.mxu0 0.0
        %6382 = vmatprep.mubr.f32.mxu0 0.0
        %6383 = vmatmul.mubr.f32.gmra.mxu0 %v5730
        %v6384 = vpop.f32.mrf.mxu0
        %v6385 = vadd.f32 %v6272, %v6384
        %v6386 = vpop.f32.mrf.mxu0
        %v6387 = vadd.f32 %v6274, %v6386
        %6388 = vmatprep.mubr.f32.mxu0 0.0
        %6389 = vmatmul.mubr.f32.gmra.mxu0 %v5733
        %v6390 = vpop.f32.mrf.mxu0
        %v6391 = vadd.f32 %v6278, %v6390
        %v6392 = vpop.f32.mrf.mxu0
        %v6393 = vadd.f32 %v6280, %v6392
        %6394 = vmatprep.mubr.f32.mxu0 0.0
        %6395 = vmatmul.mubr.f32.gmra.mxu0 %v5736
        %v6396 = vpop.f32.mrf.mxu0
        %v6397 = vadd.f32 %v6284, %v6396
        %v6398 = vpop.f32.mrf.mxu0
        %v6399 = vadd.f32 %v6286, %v6398
        %6400 = vmatprep.mubr.f32.mxu0 0.0
        %6401 = vmatmul.mubr.f32.gmra.mxu0 %v5739
        %v6402 = vpop.f32.mrf.mxu0
        %v6403 = vadd.f32 %v6290, %v6402
        %v6404 = vpop.f32.mrf.mxu0
        %v6405 = vadd.f32 %v6292, %v6404
        %6406 = vmatprep.mubr.f32.mxu0 0.0
        %6407 = vmatmul.mubr.f32.gmra.mxu0 %v5742
        %v6408 = vpop.f32.mrf.mxu0
        %v6409 = vadd.f32 %v6296, %v6408
        %v6410 = vpop.f32.mrf.mxu0
        %v6411 = vadd.f32 %v6298, %v6410
        %6412 = vmatprep.mubr.f32.mxu0 0.0
        %6413 = vmatmul.mubr.f32.gmra.mxu0 %v5745
        %v6414 = vpop.f32.mrf.mxu0
        %v6415 = vadd.f32 %v6302, %v6414
        %v6416 = vpop.f32.mrf.mxu0
        %v6417 = vadd.f32 %v6304, %v6416
        %6418 = vmatprep.mubr.f32.mxu0 0.0
        %6419 = vmatmul.mubr.f32.gmra.mxu0 %v5748
        %v6420 = vpop.f32.mrf.mxu0
        %v6421 = vadd.f32 %v6308, %v6420
        %v6422 = vpop.f32.mrf.mxu0
        %v6423 = vadd.f32 %v6310, %v6422
        %6424 = vmatprep.mubr.f32.mxu0 0.0
        %6425 = vmatmul.mubr.f32.gmra.mxu0 %v5751
        %v6426 = vpop.f32.mrf.mxu0
        %v6427 = vadd.f32 %v6314, %v6426
        %v6428 = vpop.f32.mrf.mxu0
        %v6429 = vadd.f32 %v6316, %v6428
        %6430 = vdwg.mxu0
        %6431 = vmatprep.subr.mxu0 %v4443
        %6432 = vmatpush1.msra.mxu0 %v4442
        %6433 = vmatprep.subr.mxu0 %v4433
        %6434 = vmatpush1.msra.mxu0 %v4432
        %6435 = vmatprep.subr.mxu0 %v4423
        %6436 = vmatpush1.msra.mxu0 %v4422
        %6437 = vmatprep.subr.mxu0 %v4413
        %6438 = vmatpush1.msra.mxu0 %v4412
        %6439 = vmatprep.subr.mxu0 %v4403
        %6440 = vmatpush1.msra.mxu0 %v4402
        %6441 = vmatprep.subr.mxu0 %v4393
        %6442 = vmatpush1.msra.mxu0 %v4392
        %6443 = vmatprep.subr.mxu0 %v4383
        %6444 = vmatpush1.msra.mxu0 %v4382
        %6445 = vmatprep.subr.mxu0 %v4373
        %6446 = vmatpush1.msra.mxu0 %v4372
        %6447 = vmatprep.subr.mxu0 %v4363
        %6448 = vmatpush1.msra.mxu0 %v4362
        %6449 = vmatprep.subr.mxu0 %v4353
        %6450 = vmatpush1.msra.mxu0 %v4352
        %6451 = vmatprep.subr.mxu0 %v4343
        %6452 = vmatpush1.msra.mxu0 %v4342
        %6453 = vmatprep.subr.mxu0 %v4333
        %6454 = vmatpush1.msra.mxu0 %v4332
        %6455 = vmatprep.subr.mxu0 %v4323
        %6456 = vmatpush1.msra.mxu0 %v4322
        %6457 = vmatprep.subr.mxu0 %v4313
        %6458 = vmatpush1.msra.mxu0 %v4312
        %6459 = vmatprep.subr.mxu0 %v4303
        %6460 = vmatpush1.msra.mxu0 %v4302
        %6461 = vmatprep.subr.mxu0 %v4293
        %6462 = vmatpush1.msra.mxu0 %v4292
        %6463 = vmatprep.subr.mxu0 %v4603
        %6464 = vmatpush2.msra.mxu0 %v4602
        %6465 = vmatprep.subr.mxu0 %v4593
        %6466 = vmatpush2.msra.mxu0 %v4592
        %6467 = vmatprep.subr.mxu0 %v4583
        %6468 = vmatpush2.msra.mxu0 %v4582
        %6469 = vmatprep.subr.mxu0 %v4573
        %6470 = vmatpush2.msra.mxu0 %v4572
        %6471 = vmatprep.subr.mxu0 %v4563
        %6472 = vmatpush2.msra.mxu0 %v4562
        %6473 = vmatprep.subr.mxu0 %v4553
        %6474 = vmatpush2.msra.mxu0 %v4552
        %6475 = vmatprep.subr.mxu0 %v4543
        %6476 = vmatpush2.msra.mxu0 %v4542
        %6477 = vmatprep.subr.mxu0 %v4533
        %6478 = vmatpush2.msra.mxu0 %v4532
        %6479 = vmatprep.subr.mxu0 %v4523
        %6480 = vmatpush2.msra.mxu0 %v4522
        %6481 = vmatprep.subr.mxu0 %v4513
        %6482 = vmatpush2.msra.mxu0 %v4512
        %6483 = vmatprep.subr.mxu0 %v4503
        %6484 = vmatpush2.msra.mxu0 %v4502
        %6485 = vmatprep.subr.mxu0 %v4493
        %6486 = vmatpush2.msra.mxu0 %v4492
        %6487 = vmatprep.subr.mxu0 %v4483
        %6488 = vmatpush2.msra.mxu0 %v4482
        %6489 = vmatprep.subr.mxu0 %v4473
        %6490 = vmatpush2.msra.mxu0 %v4472
        %6491 = vmatprep.subr.mxu0 %v4463
        %6492 = vmatpush2.msra.mxu0 %v4462
        %6493 = vmatprep.subr.mxu0 %v4453
        %6494 = vmatpush2.msra.mxu0 %v4452
        %6495 = vmatprep.mubr.f32.mxu0 %v2616
        %6496 = vmatmul.mubr.f32.gmra.mxu0 %v2615
        %v6497 = vpop.f32.mrf.mxu0
        %v6498 = vadd.f32 %v2666, %v6497
        %v6499 = vpop.f32.mrf.mxu0
        %v6500 = vadd.f32 %v2666, %v6499
        %6501 = vmatprep.mubr.f32.mxu0 %v2621
        %6502 = vmatmul.mubr.f32.gmra.mxu0 %v2620
        %v6503 = vpop.f32.mrf.mxu0
        %v6504 = vadd.f32 %v2671, %v6503
        %v6505 = vpop.f32.mrf.mxu0
        %v6506 = vadd.f32 %v2671, %v6505
        %6507 = vmatprep.mubr.f32.mxu0 %v2626
        %6508 = vmatmul.mubr.f32.gmra.mxu0 %v2625
        %v6509 = vpop.f32.mrf.mxu0
        %v6510 = vadd.f32 %v2676, %v6509
        %v6511 = vpop.f32.mrf.mxu0
        %v6512 = vadd.f32 %v2676, %v6511
        %6513 = vmatprep.mubr.f32.mxu0 %v2631
        %6514 = vmatmul.mubr.f32.gmra.mxu0 %v2630
        %v6515 = vpop.f32.mrf.mxu0
        %v6516 = vadd.f32 %v2681, %v6515
        %v6517 = vpop.f32.mrf.mxu0
        %v6518 = vadd.f32 %v2681, %v6517
        %6519 = vmatprep.mubr.f32.mxu0 %v2636
        %6520 = vmatmul.mubr.f32.gmra.mxu0 %v2635
        %v6521 = vpop.f32.mrf.mxu0
        %v6522 = vadd.f32 %v2686, %v6521
        %v6523 = vpop.f32.mrf.mxu0
        %v6524 = vadd.f32 %v2686, %v6523
        %6525 = vmatprep.mubr.f32.mxu0 %v2641
        %6526 = vmatmul.mubr.f32.gmra.mxu0 %v2640
        %v6527 = vpop.f32.mrf.mxu0
        %v6528 = vadd.f32 %v2691, %v6527
        %v6529 = vpop.f32.mrf.mxu0
        %v6530 = vadd.f32 %v2691, %v6529
        %6531 = vmatprep.mubr.f32.mxu0 %v2646
        %6532 = vmatmul.mubr.f32.gmra.mxu0 %v2645
        %v6533 = vpop.f32.mrf.mxu0
        %v6534 = vadd.f32 %v2696, %v6533
        %v6535 = vpop.f32.mrf.mxu0
        %v6536 = vadd.f32 %v2696, %v6535
        %6537 = vmatprep.mubr.f32.mxu0 %v2651
        %6538 = vmatmul.mubr.f32.gmra.mxu0 %v2650
        %v6539 = vpop.f32.mrf.mxu0
        %v6540 = vadd.f32 %v2701, %v6539
        %v6541 = vpop.f32.mrf.mxu0
        %v6542 = vadd.f32 %v2701, %v6541
        %6543 = vdwg.mxu0
        %6544 = vmatprep.subr.mxu0 %v4763
        %6545 = vmatpush1.msra.mxu0 %v4762
        %6546 = vmatprep.subr.mxu0 %v4753
        %6547 = vmatpush1.msra.mxu0 %v4752
        %6548 = vmatprep.subr.mxu0 %v4743
        %6549 = vmatpush1.msra.mxu0 %v4742
        %6550 = vmatprep.subr.mxu0 %v4733
        %6551 = vmatpush1.msra.mxu0 %v4732
        %6552 = vmatprep.subr.mxu0 %v4723
        %6553 = vmatpush1.msra.mxu0 %v4722
        %6554 = vmatprep.subr.mxu0 %v4713
        %6555 = vmatpush1.msra.mxu0 %v4712
        %6556 = vmatprep.subr.mxu0 %v4703
        %6557 = vmatpush1.msra.mxu0 %v4702
        %6558 = vmatprep.subr.mxu0 %v4693
        %6559 = vmatpush1.msra.mxu0 %v4692
        %6560 = vmatprep.subr.mxu0 %v4683
        %6561 = vmatpush1.msra.mxu0 %v4682
        %6562 = vmatprep.subr.mxu0 %v4673
        %6563 = vmatpush1.msra.mxu0 %v4672
        %6564 = vmatprep.subr.mxu0 %v4663
        %6565 = vmatpush1.msra.mxu0 %v4662
        %6566 = vmatprep.subr.mxu0 %v4653
        %6567 = vmatpush1.msra.mxu0 %v4652
        %6568 = vmatprep.subr.mxu0 %v4643
        %6569 = vmatpush1.msra.mxu0 %v4642
        %6570 = vmatprep.subr.mxu0 %v4633
        %6571 = vmatpush1.msra.mxu0 %v4632
        %6572 = vmatprep.subr.mxu0 %v4623
        %6573 = vmatpush1.msra.mxu0 %v4622
        %6574 = vmatprep.subr.mxu0 %v4613
        %6575 = vmatpush1.msra.mxu0 %v4612
        %6576 = vmatprep.subr.mxu0 %v4923
        %6577 = vmatpush2.msra.mxu0 %v4922
        %6578 = vmatprep.subr.mxu0 %v4913
        %6579 = vmatpush2.msra.mxu0 %v4912
        %6580 = vmatprep.subr.mxu0 %v4903
        %6581 = vmatpush2.msra.mxu0 %v4902
        %6582 = vmatprep.subr.mxu0 %v4893
        %6583 = vmatpush2.msra.mxu0 %v4892
        %6584 = vmatprep.subr.mxu0 %v4883
        %6585 = vmatpush2.msra.mxu0 %v4882
        %6586 = vmatprep.subr.mxu0 %v4873
        %6587 = vmatpush2.msra.mxu0 %v4872
        %6588 = vmatprep.subr.mxu0 %v4863
        %6589 = vmatpush2.msra.mxu0 %v4862
        %6590 = vmatprep.subr.mxu0 %v4853
        %6591 = vmatpush2.msra.mxu0 %v4852
        %6592 = vmatprep.subr.mxu0 %v4843
        %6593 = vmatpush2.msra.mxu0 %v4842
        %6594 = vmatprep.subr.mxu0 %v4833
        %6595 = vmatpush2.msra.mxu0 %v4832
        %6596 = vmatprep.subr.mxu0 %v4823
        %6597 = vmatpush2.msra.mxu0 %v4822
        %6598 = vmatprep.subr.mxu0 %v4813
        %6599 = vmatpush2.msra.mxu0 %v4812
        %6600 = vmatprep.subr.mxu0 %v4803
        %6601 = vmatpush2.msra.mxu0 %v4802
        %6602 = vmatprep.subr.mxu0 %v4793
        %6603 = vmatpush2.msra.mxu0 %v4792
        %6604 = vmatprep.subr.mxu0 %v4783
        %6605 = vmatpush2.msra.mxu0 %v4782
        %6606 = vmatprep.subr.mxu0 %v4773
        %6607 = vmatpush2.msra.mxu0 %v4772
        %6608 = vmatprep.mubr.f32.mxu0 %v2618
        %6609 = vmatmul.mubr.f32.gmra.mxu0 %v2617
        %v6610 = vpop.f32.mrf.mxu0
        %v6611 = vadd.f32 %v6498, %v6610
        %v6612 = vpop.f32.mrf.mxu0
        %v6613 = vadd.f32 %v6500, %v6612
        %6614 = vmatprep.mubr.f32.mxu0 %v2623
        %6615 = vmatmul.mubr.f32.gmra.mxu0 %v2622
        %v6616 = vpop.f32.mrf.mxu0
        %v6617 = vadd.f32 %v6504, %v6616
        %v6618 = vpop.f32.mrf.mxu0
        %v6619 = vadd.f32 %v6506, %v6618
        %6620 = vmatprep.mubr.f32.mxu0 %v2628
        %6621 = vmatmul.mubr.f32.gmra.mxu0 %v2627
        %v6622 = vpop.f32.mrf.mxu0
        %v6623 = vadd.f32 %v6510, %v6622
        %v6624 = vpop.f32.mrf.mxu0
        %v6625 = vadd.f32 %v6512, %v6624
        %6626 = vmatprep.mubr.f32.mxu0 %v2633
        %6627 = vmatmul.mubr.f32.gmra.mxu0 %v2632
        %v6628 = vpop.f32.mrf.mxu0
        %v6629 = vadd.f32 %v6516, %v6628
        %v6630 = vpop.f32.mrf.mxu0
        %v6631 = vadd.f32 %v6518, %v6630
        %6632 = vmatprep.mubr.f32.mxu0 %v2638
        %6633 = vmatmul.mubr.f32.gmra.mxu0 %v2637
        %v6634 = vpop.f32.mrf.mxu0
        %v6635 = vadd.f32 %v6522, %v6634
        %v6636 = vpop.f32.mrf.mxu0
        %v6637 = vadd.f32 %v6524, %v6636
        %6638 = vmatprep.mubr.f32.mxu0 %v2643
        %6639 = vmatmul.mubr.f32.gmra.mxu0 %v2642
        %v6640 = vpop.f32.mrf.mxu0
        %v6641 = vadd.f32 %v6528, %v6640
        %v6642 = vpop.f32.mrf.mxu0
        %v6643 = vadd.f32 %v6530, %v6642
        %6644 = vmatprep.mubr.f32.mxu0 %v2648
        %6645 = vmatmul.mubr.f32.gmra.mxu0 %v2647
        %v6646 = vpop.f32.mrf.mxu0
        %v6647 = vadd.f32 %v6534, %v6646
        %v6648 = vpop.f32.mrf.mxu0
        %v6649 = vadd.f32 %v6536, %v6648
        %6650 = vmatprep.mubr.f32.mxu0 %v2653
        %6651 = vmatmul.mubr.f32.gmra.mxu0 %v2652
        %v6652 = vpop.f32.mrf.mxu0
        %v6653 = vadd.f32 %v6540, %v6652
        %v6654 = vpop.f32.mrf.mxu0
        %v6655 = vadd.f32 %v6542, %v6654
        %6656 = vdwg.mxu0
        %6657 = vmatprep.subr.mxu0 0.0
        %6658 = vmatpush1.msra.mxu0 0.0
        %6659 = vmatprep.subr.mxu0 0.0
        %6660 = vmatpush1.msra.mxu0 0.0
        %6661 = vmatprep.subr.mxu0 0.0
        %6662 = vmatpush1.msra.mxu0 0.0
        %6663 = vmatprep.subr.mxu0 0.0
        %6664 = vmatpush1.msra.mxu0 0.0
        %6665 = vmatprep.subr.mxu0 0.0
        %6666 = vmatpush1.msra.mxu0 0.0
        %6667 = vmatprep.subr.mxu0 0.0
        %6668 = vmatpush1.msra.mxu0 0.0
        %6669 = vmatprep.subr.mxu0 0.0
        %6670 = vmatpush1.msra.mxu0 0.0
        %6671 = vmatprep.subr.mxu0 0.0
        %6672 = vmatpush1.msra.mxu0 0.0
        %6673 = vmatprep.subr.mxu0 %v5003
        %6674 = vmatpush1.msra.mxu0 %v5002
        %6675 = vmatprep.subr.mxu0 %v4993
        %6676 = vmatpush1.msra.mxu0 %v4992
        %6677 = vmatprep.subr.mxu0 %v4983
        %6678 = vmatpush1.msra.mxu0 %v4982
        %6679 = vmatprep.subr.mxu0 %v4973
        %6680 = vmatpush1.msra.mxu0 %v4972
        %6681 = vmatprep.subr.mxu0 %v4963
        %6682 = vmatpush1.msra.mxu0 %v4962
        %6683 = vmatprep.subr.mxu0 %v4953
        %6684 = vmatpush1.msra.mxu0 %v4952
        %6685 = vmatprep.subr.mxu0 %v4943
        %6686 = vmatpush1.msra.mxu0 %v4942
        %6687 = vmatprep.subr.mxu0 %v4933
        %6688 = vmatpush1.msra.mxu0 %v4932
        %6689 = vmatprep.subr.mxu0 0.0
        %6690 = vmatpush2.msra.mxu0 0.0
        %6691 = vmatprep.subr.mxu0 0.0
        %6692 = vmatpush2.msra.mxu0 0.0
        %6693 = vmatprep.subr.mxu0 0.0
        %6694 = vmatpush2.msra.mxu0 0.0
        %6695 = vmatprep.subr.mxu0 0.0
        %6696 = vmatpush2.msra.mxu0 0.0
        %6697 = vmatprep.subr.mxu0 0.0
        %6698 = vmatpush2.msra.mxu0 0.0
        %6699 = vmatprep.subr.mxu0 0.0
        %6700 = vmatpush2.msra.mxu0 0.0
        %6701 = vmatprep.subr.mxu0 0.0
        %6702 = vmatpush2.msra.mxu0 0.0
        %6703 = vmatprep.subr.mxu0 0.0
        %6704 = vmatpush2.msra.mxu0 0.0
        %6705 = vmatprep.subr.mxu0 0.0
        %6706 = vmatpush2.msra.mxu0 0.0
        %6707 = vmatprep.subr.mxu0 0.0
        %6708 = vmatpush2.msra.mxu0 0.0
        %6709 = vmatprep.subr.mxu0 0.0
        %6710 = vmatpush2.msra.mxu0 0.0
        %6711 = vmatprep.subr.mxu0 0.0
        %6712 = vmatpush2.msra.mxu0 0.0
        %6713 = vmatprep.subr.mxu0 0.0
        %6714 = vmatpush2.msra.mxu0 0.0
        %6715 = vmatprep.subr.mxu0 0.0
        %6716 = vmatpush2.msra.mxu0 0.0
        %6717 = vmatprep.subr.mxu0 0.0
        %6718 = vmatpush2.msra.mxu0 0.0
        %6719 = vmatprep.subr.mxu0 0.0
        %6720 = vmatpush2.msra.mxu0 0.0
        %6721 = vmatprep.mubr.f32.mxu0 0.0
        %6722 = vmatmul.mubr.f32.gmra.mxu0 %v5730
        %v6723 = vpop.f32.mrf.mxu0
        %v6724 = vadd.f32 %v6611, %v6723
        %v6725 = vpop.f32.mrf.mxu0
        %v6726 = vadd.f32 %v6613, %v6725
        %6727 = vmatprep.mubr.f32.mxu0 0.0
        %6728 = vmatmul.mubr.f32.gmra.mxu0 %v5733
        %v6729 = vpop.f32.mrf.mxu0
        %v6730 = vadd.f32 %v6617, %v6729
        %v6731 = vpop.f32.mrf.mxu0
        %v6732 = vadd.f32 %v6619, %v6731
        %6733 = vmatprep.mubr.f32.mxu0 0.0
        %6734 = vmatmul.mubr.f32.gmra.mxu0 %v5736
        %v6735 = vpop.f32.mrf.mxu0
        %v6736 = vadd.f32 %v6623, %v6735
        %v6737 = vpop.f32.mrf.mxu0
        %v6738 = vadd.f32 %v6625, %v6737
        %6739 = vmatprep.mubr.f32.mxu0 0.0
        %6740 = vmatmul.mubr.f32.gmra.mxu0 %v5739
        %v6741 = vpop.f32.mrf.mxu0
        %v6742 = vadd.f32 %v6629, %v6741
        %v6743 = vpop.f32.mrf.mxu0
        %v6744 = vadd.f32 %v6631, %v6743
        %6745 = vmatprep.mubr.f32.mxu0 0.0
        %6746 = vmatmul.mubr.f32.gmra.mxu0 %v5742
        %v6747 = vpop.f32.mrf.mxu0
        %v6748 = vadd.f32 %v6635, %v6747
        %v6749 = vpop.f32.mrf.mxu0
        %v6750 = vadd.f32 %v6637, %v6749
        %6751 = vmatprep.mubr.f32.mxu0 0.0
        %6752 = vmatmul.mubr.f32.gmra.mxu0 %v5745
        %v6753 = vpop.f32.mrf.mxu0
        %v6754 = vadd.f32 %v6641, %v6753
        %v6755 = vpop.f32.mrf.mxu0
        %v6756 = vadd.f32 %v6643, %v6755
        %6757 = vmatprep.mubr.f32.mxu0 0.0
        %6758 = vmatmul.mubr.f32.gmra.mxu0 %v5748
        %v6759 = vpop.f32.mrf.mxu0
        %v6760 = vadd.f32 %v6647, %v6759
        %v6761 = vpop.f32.mrf.mxu0
        %v6762 = vadd.f32 %v6649, %v6761
        %6763 = vmatprep.mubr.f32.mxu0 0.0
        %6764 = vmatmul.mubr.f32.gmra.mxu0 %v5751
        %v6765 = vpop.f32.mrf.mxu0
        %v6766 = vadd.f32 %v6653, %v6765
        %v6767 = vpop.f32.mrf.mxu0
        %v6768 = vadd.f32 %v6655, %v6767
        %6769 = vdwg.mxu0
        %6770 = vmatprep.subr.mxu0 %v4445
        %6771 = vmatpush1.msra.mxu0 %v4444
        %6772 = vmatprep.subr.mxu0 %v4435
        %6773 = vmatpush1.msra.mxu0 %v4434
        %6774 = vmatprep.subr.mxu0 %v4425
        %6775 = vmatpush1.msra.mxu0 %v4424
        %6776 = vmatprep.subr.mxu0 %v4415
        %6777 = vmatpush1.msra.mxu0 %v4414
        %6778 = vmatprep.subr.mxu0 %v4405
        %6779 = vmatpush1.msra.mxu0 %v4404
        %6780 = vmatprep.subr.mxu0 %v4395
        %6781 = vmatpush1.msra.mxu0 %v4394
        %6782 = vmatprep.subr.mxu0 %v4385
        %6783 = vmatpush1.msra.mxu0 %v4384
        %6784 = vmatprep.subr.mxu0 %v4375
        %6785 = vmatpush1.msra.mxu0 %v4374
        %6786 = vmatprep.subr.mxu0 %v4365
        %6787 = vmatpush1.msra.mxu0 %v4364
        %6788 = vmatprep.subr.mxu0 %v4355
        %6789 = vmatpush1.msra.mxu0 %v4354
        %6790 = vmatprep.subr.mxu0 %v4345
        %6791 = vmatpush1.msra.mxu0 %v4344
        %6792 = vmatprep.subr.mxu0 %v4335
        %6793 = vmatpush1.msra.mxu0 %v4334
        %6794 = vmatprep.subr.mxu0 %v4325
        %6795 = vmatpush1.msra.mxu0 %v4324
        %6796 = vmatprep.subr.mxu0 %v4315
        %6797 = vmatpush1.msra.mxu0 %v4314
        %6798 = vmatprep.subr.mxu0 %v4305
        %6799 = vmatpush1.msra.mxu0 %v4304
        %6800 = vmatprep.subr.mxu0 %v4295
        %6801 = vmatpush1.msra.mxu0 %v4294
        %6802 = vmatprep.subr.mxu0 %v4605
        %6803 = vmatpush2.msra.mxu0 %v4604
        %6804 = vmatprep.subr.mxu0 %v4595
        %6805 = vmatpush2.msra.mxu0 %v4594
        %6806 = vmatprep.subr.mxu0 %v4585
        %6807 = vmatpush2.msra.mxu0 %v4584
        %6808 = vmatprep.subr.mxu0 %v4575
        %6809 = vmatpush2.msra.mxu0 %v4574
        %6810 = vmatprep.subr.mxu0 %v4565
        %6811 = vmatpush2.msra.mxu0 %v4564
        %6812 = vmatprep.subr.mxu0 %v4555
        %6813 = vmatpush2.msra.mxu0 %v4554
        %6814 = vmatprep.subr.mxu0 %v4545
        %6815 = vmatpush2.msra.mxu0 %v4544
        %6816 = vmatprep.subr.mxu0 %v4535
        %6817 = vmatpush2.msra.mxu0 %v4534
        %6818 = vmatprep.subr.mxu0 %v4525
        %6819 = vmatpush2.msra.mxu0 %v4524
        %6820 = vmatprep.subr.mxu0 %v4515
        %6821 = vmatpush2.msra.mxu0 %v4514
        %6822 = vmatprep.subr.mxu0 %v4505
        %6823 = vmatpush2.msra.mxu0 %v4504
        %6824 = vmatprep.subr.mxu0 %v4495
        %6825 = vmatpush2.msra.mxu0 %v4494
        %6826 = vmatprep.subr.mxu0 %v4485
        %6827 = vmatpush2.msra.mxu0 %v4484
        %6828 = vmatprep.subr.mxu0 %v4475
        %6829 = vmatpush2.msra.mxu0 %v4474
        %6830 = vmatprep.subr.mxu0 %v4465
        %6831 = vmatpush2.msra.mxu0 %v4464
        %6832 = vmatprep.subr.mxu0 %v4455
        %6833 = vmatpush2.msra.mxu0 %v4454
        %6834 = vmatprep.mubr.f32.mxu0 %v2616
        %6835 = vmatmul.mubr.f32.gmra.mxu0 %v2615
        %v6836 = vpop.f32.mrf.mxu0
        %v6837 = vadd.f32 %v2666, %v6836
        %v6838 = vpop.f32.mrf.mxu0
        %v6839 = vadd.f32 %v2666, %v6838
        %6840 = vmatprep.mubr.f32.mxu0 %v2621
        %6841 = vmatmul.mubr.f32.gmra.mxu0 %v2620
        %v6842 = vpop.f32.mrf.mxu0
        %v6843 = vadd.f32 %v2671, %v6842
        %v6844 = vpop.f32.mrf.mxu0
        %v6845 = vadd.f32 %v2671, %v6844
        %6846 = vmatprep.mubr.f32.mxu0 %v2626
        %6847 = vmatmul.mubr.f32.gmra.mxu0 %v2625
        %v6848 = vpop.f32.mrf.mxu0
        %v6849 = vadd.f32 %v2676, %v6848
        %v6850 = vpop.f32.mrf.mxu0
        %v6851 = vadd.f32 %v2676, %v6850
        %6852 = vmatprep.mubr.f32.mxu0 %v2631
        %6853 = vmatmul.mubr.f32.gmra.mxu0 %v2630
        %v6854 = vpop.f32.mrf.mxu0
        %v6855 = vadd.f32 %v2681, %v6854
        %v6856 = vpop.f32.mrf.mxu0
        %v6857 = vadd.f32 %v2681, %v6856
        %6858 = vmatprep.mubr.f32.mxu0 %v2636
        %6859 = vmatmul.mubr.f32.gmra.mxu0 %v2635
        %v6860 = vpop.f32.mrf.mxu0
        %v6861 = vadd.f32 %v2686, %v6860
        %v6862 = vpop.f32.mrf.mxu0
        %v6863 = vadd.f32 %v2686, %v6862
        %6864 = vmatprep.mubr.f32.mxu0 %v2641
        %6865 = vmatmul.mubr.f32.gmra.mxu0 %v2640
        %v6866 = vpop.f32.mrf.mxu0
        %v6867 = vadd.f32 %v2691, %v6866
        %v6868 = vpop.f32.mrf.mxu0
        %v6869 = vadd.f32 %v2691, %v6868
        %6870 = vmatprep.mubr.f32.mxu0 %v2646
        %6871 = vmatmul.mubr.f32.gmra.mxu0 %v2645
        %v6872 = vpop.f32.mrf.mxu0
        %v6873 = vadd.f32 %v2696, %v6872
        %v6874 = vpop.f32.mrf.mxu0
        %v6875 = vadd.f32 %v2696, %v6874
        %6876 = vmatprep.mubr.f32.mxu0 %v2651
        %6877 = vmatmul.mubr.f32.gmra.mxu0 %v2650
        %v6878 = vpop.f32.mrf.mxu0
        %v6879 = vadd.f32 %v2701, %v6878
        %v6880 = vpop.f32.mrf.mxu0
        %v6881 = vadd.f32 %v2701, %v6880
        %6882 = vdwg.mxu0
        %6883 = vmatprep.subr.mxu0 %v4765
        %6884 = vmatpush1.msra.mxu0 %v4764
        %6885 = vmatprep.subr.mxu0 %v4755
        %6886 = vmatpush1.msra.mxu0 %v4754
        %6887 = vmatprep.subr.mxu0 %v4745
        %6888 = vmatpush1.msra.mxu0 %v4744
        %6889 = vmatprep.subr.mxu0 %v4735
        %6890 = vmatpush1.msra.mxu0 %v4734
        %6891 = vmatprep.subr.mxu0 %v4725
        %6892 = vmatpush1.msra.mxu0 %v4724
        %6893 = vmatprep.subr.mxu0 %v4715
        %6894 = vmatpush1.msra.mxu0 %v4714
        %6895 = vmatprep.subr.mxu0 %v4705
        %6896 = vmatpush1.msra.mxu0 %v4704
        %6897 = vmatprep.subr.mxu0 %v4695
        %6898 = vmatpush1.msra.mxu0 %v4694
        %6899 = vmatprep.subr.mxu0 %v4685
        %6900 = vmatpush1.msra.mxu0 %v4684
        %6901 = vmatprep.subr.mxu0 %v4675
        %6902 = vmatpush1.msra.mxu0 %v4674
        %6903 = vmatprep.subr.mxu0 %v4665
        %6904 = vmatpush1.msra.mxu0 %v4664
        %6905 = vmatprep.subr.mxu0 %v4655
        %6906 = vmatpush1.msra.mxu0 %v4654
        %6907 = vmatprep.subr.mxu0 %v4645
        %6908 = vmatpush1.msra.mxu0 %v4644
        %6909 = vmatprep.subr.mxu0 %v4635
        %6910 = vmatpush1.msra.mxu0 %v4634
        %6911 = vmatprep.subr.mxu0 %v4625
        %6912 = vmatpush1.msra.mxu0 %v4624
        %6913 = vmatprep.subr.mxu0 %v4615
        %6914 = vmatpush1.msra.mxu0 %v4614
        %6915 = vmatprep.subr.mxu0 %v4925
        %6916 = vmatpush2.msra.mxu0 %v4924
        %6917 = vmatprep.subr.mxu0 %v4915
        %6918 = vmatpush2.msra.mxu0 %v4914
        %6919 = vmatprep.subr.mxu0 %v4905
        %6920 = vmatpush2.msra.mxu0 %v4904
        %6921 = vmatprep.subr.mxu0 %v4895
        %6922 = vmatpush2.msra.mxu0 %v4894
        %6923 = vmatprep.subr.mxu0 %v4885
        %6924 = vmatpush2.msra.mxu0 %v4884
        %6925 = vmatprep.subr.mxu0 %v4875
        %6926 = vmatpush2.msra.mxu0 %v4874
        %6927 = vmatprep.subr.mxu0 %v4865
        %6928 = vmatpush2.msra.mxu0 %v4864
        %6929 = vmatprep.subr.mxu0 %v4855
        %6930 = vmatpush2.msra.mxu0 %v4854
        %6931 = vmatprep.subr.mxu0 %v4845
        %6932 = vmatpush2.msra.mxu0 %v4844
        %6933 = vmatprep.subr.mxu0 %v4835
        %6934 = vmatpush2.msra.mxu0 %v4834
        %6935 = vmatprep.subr.mxu0 %v4825
        %6936 = vmatpush2.msra.mxu0 %v4824
        %6937 = vmatprep.subr.mxu0 %v4815
        %6938 = vmatpush2.msra.mxu0 %v4814
        %6939 = vmatprep.subr.mxu0 %v4805
        %6940 = vmatpush2.msra.mxu0 %v4804
        %6941 = vmatprep.subr.mxu0 %v4795
        %6942 = vmatpush2.msra.mxu0 %v4794
        %6943 = vmatprep.subr.mxu0 %v4785
        %6944 = vmatpush2.msra.mxu0 %v4784
        %6945 = vmatprep.subr.mxu0 %v4775
        %6946 = vmatpush2.msra.mxu0 %v4774
        %6947 = vmatprep.mubr.f32.mxu0 %v2618
        %6948 = vmatmul.mubr.f32.gmra.mxu0 %v2617
        %v6949 = vpop.f32.mrf.mxu0
        %v6950 = vadd.f32 %v6837, %v6949
        %v6951 = vpop.f32.mrf.mxu0
        %v6952 = vadd.f32 %v6839, %v6951
        %6953 = vmatprep.mubr.f32.mxu0 %v2623
        %6954 = vmatmul.mubr.f32.gmra.mxu0 %v2622
        %v6955 = vpop.f32.mrf.mxu0
        %v6956 = vadd.f32 %v6843, %v6955
        %v6957 = vpop.f32.mrf.mxu0
        %v6958 = vadd.f32 %v6845, %v6957
        %6959 = vmatprep.mubr.f32.mxu0 %v2628
        %6960 = vmatmul.mubr.f32.gmra.mxu0 %v2627
        %v6961 = vpop.f32.mrf.mxu0
        %v6962 = vadd.f32 %v6849, %v6961
        %v6963 = vpop.f32.mrf.mxu0
        %v6964 = vadd.f32 %v6851, %v6963
        %6965 = vmatprep.mubr.f32.mxu0 %v2633
        %6966 = vmatmul.mubr.f32.gmra.mxu0 %v2632
        %v6967 = vpop.f32.mrf.mxu0
        %v6968 = vadd.f32 %v6855, %v6967
        %v6969 = vpop.f32.mrf.mxu0
        %v6970 = vadd.f32 %v6857, %v6969
        %6971 = vmatprep.mubr.f32.mxu0 %v2638
        %6972 = vmatmul.mubr.f32.gmra.mxu0 %v2637
        %v6973 = vpop.f32.mrf.mxu0
        %v6974 = vadd.f32 %v6861, %v6973
        %v6975 = vpop.f32.mrf.mxu0
        %v6976 = vadd.f32 %v6863, %v6975
        %6977 = vmatprep.mubr.f32.mxu0 %v2643
        %6978 = vmatmul.mubr.f32.gmra.mxu0 %v2642
        %v6979 = vpop.f32.mrf.mxu0
        %v6980 = vadd.f32 %v6867, %v6979
        %v6981 = vpop.f32.mrf.mxu0
        %v6982 = vadd.f32 %v6869, %v6981
        %6983 = vmatprep.mubr.f32.mxu0 %v2648
        %6984 = vmatmul.mubr.f32.gmra.mxu0 %v2647
        %v6985 = vpop.f32.mrf.mxu0
        %v6986 = vadd.f32 %v6873, %v6985
        %v6987 = vpop.f32.mrf.mxu0
        %v6988 = vadd.f32 %v6875, %v6987
        %6989 = vmatprep.mubr.f32.mxu0 %v2653
        %6990 = vmatmul.mubr.f32.gmra.mxu0 %v2652
        %v6991 = vpop.f32.mrf.mxu0
        %v6992 = vadd.f32 %v6879, %v6991
        %v6993 = vpop.f32.mrf.mxu0
        %v6994 = vadd.f32 %v6881, %v6993
        %6995 = vdwg.mxu0
        %6996 = vmatprep.subr.mxu0 0.0
        %6997 = vmatpush1.msra.mxu0 0.0
        %6998 = vmatprep.subr.mxu0 0.0
        %6999 = vmatpush1.msra.mxu0 0.0
        %7000 = vmatprep.subr.mxu0 0.0
        %7001 = vmatpush1.msra.mxu0 0.0
        %7002 = vmatprep.subr.mxu0 0.0
        %7003 = vmatpush1.msra.mxu0 0.0
        %7004 = vmatprep.subr.mxu0 0.0
        %7005 = vmatpush1.msra.mxu0 0.0
        %7006 = vmatprep.subr.mxu0 0.0
        %7007 = vmatpush1.msra.mxu0 0.0
        %7008 = vmatprep.subr.mxu0 0.0
        %7009 = vmatpush1.msra.mxu0 0.0
        %7010 = vmatprep.subr.mxu0 0.0
        %7011 = vmatpush1.msra.mxu0 0.0
        %7012 = vmatprep.subr.mxu0 %v5005
        %7013 = vmatpush1.msra.mxu0 %v5004
        %7014 = vmatprep.subr.mxu0 %v4995
        %7015 = vmatpush1.msra.mxu0 %v4994
        %7016 = vmatprep.subr.mxu0 %v4985
        %7017 = vmatpush1.msra.mxu0 %v4984
        %7018 = vmatprep.subr.mxu0 %v4975
        %7019 = vmatpush1.msra.mxu0 %v4974
        %7020 = vmatprep.subr.mxu0 %v4965
        %7021 = vmatpush1.msra.mxu0 %v4964
        %7022 = vmatprep.subr.mxu0 %v4955
        %7023 = vmatpush1.msra.mxu0 %v4954
        %7024 = vmatprep.subr.mxu0 %v4945
        %7025 = vmatpush1.msra.mxu0 %v4944
        %7026 = vmatprep.subr.mxu0 %v4935
        %7027 = vmatpush1.msra.mxu0 %v4934
        %7028 = vmatprep.subr.mxu0 0.0
        %7029 = vmatpush2.msra.mxu0 0.0
        %7030 = vmatprep.subr.mxu0 0.0
        %7031 = vmatpush2.msra.mxu0 0.0
        %7032 = vmatprep.subr.mxu0 0.0
        %7033 = vmatpush2.msra.mxu0 0.0
        %7034 = vmatprep.subr.mxu0 0.0
        %7035 = vmatpush2.msra.mxu0 0.0
        %7036 = vmatprep.subr.mxu0 0.0
        %7037 = vmatpush2.msra.mxu0 0.0
        %7038 = vmatprep.subr.mxu0 0.0
        %7039 = vmatpush2.msra.mxu0 0.0
        %7040 = vmatprep.subr.mxu0 0.0
        %7041 = vmatpush2.msra.mxu0 0.0
        %7042 = vmatprep.subr.mxu0 0.0
        %7043 = vmatpush2.msra.mxu0 0.0
        %7044 = vmatprep.subr.mxu0 0.0
        %7045 = vmatpush2.msra.mxu0 0.0
        %7046 = vmatprep.subr.mxu0 0.0
        %7047 = vmatpush2.msra.mxu0 0.0
        %7048 = vmatprep.subr.mxu0 0.0
        %7049 = vmatpush2.msra.mxu0 0.0
        %7050 = vmatprep.subr.mxu0 0.0
        %7051 = vmatpush2.msra.mxu0 0.0
        %7052 = vmatprep.subr.mxu0 0.0
        %7053 = vmatpush2.msra.mxu0 0.0
        %7054 = vmatprep.subr.mxu0 0.0
        %7055 = vmatpush2.msra.mxu0 0.0
        %7056 = vmatprep.subr.mxu0 0.0
        %7057 = vmatpush2.msra.mxu0 0.0
        %7058 = vmatprep.subr.mxu0 0.0
        %7059 = vmatpush2.msra.mxu0 0.0
        %7060 = vmatprep.mubr.f32.mxu0 0.0
        %7061 = vmatmul.mubr.f32.gmra.mxu0 %v5730
        %v7062 = vpop.f32.mrf.mxu0
        %v7063 = vadd.f32 %v6950, %v7062
        %v7064 = vpop.f32.mrf.mxu0
        %v7065 = vadd.f32 %v6952, %v7064
        %7066 = vmatprep.mubr.f32.mxu0 0.0
        %7067 = vmatmul.mubr.f32.gmra.mxu0 %v5733
        %v7068 = vpop.f32.mrf.mxu0
        %v7069 = vadd.f32 %v6956, %v7068
        %v7070 = vpop.f32.mrf.mxu0
        %v7071 = vadd.f32 %v6958, %v7070
        %7072 = vmatprep.mubr.f32.mxu0 0.0
        %7073 = vmatmul.mubr.f32.gmra.mxu0 %v5736
        %v7074 = vpop.f32.mrf.mxu0
        %v7075 = vadd.f32 %v6962, %v7074
        %v7076 = vpop.f32.mrf.mxu0
        %v7077 = vadd.f32 %v6964, %v7076
        %7078 = vmatprep.mubr.f32.mxu0 0.0
        %7079 = vmatmul.mubr.f32.gmra.mxu0 %v5739
        %v7080 = vpop.f32.mrf.mxu0
        %v7081 = vadd.f32 %v6968, %v7080
        %v7082 = vpop.f32.mrf.mxu0
        %v7083 = vadd.f32 %v6970, %v7082
        %7084 = vmatprep.mubr.f32.mxu0 0.0
        %7085 = vmatmul.mubr.f32.gmra.mxu0 %v5742
        %v7086 = vpop.f32.mrf.mxu0
        %v7087 = vadd.f32 %v6974, %v7086
        %v7088 = vpop.f32.mrf.mxu0
        %v7089 = vadd.f32 %v6976, %v7088
        %7090 = vmatprep.mubr.f32.mxu0 0.0
        %7091 = vmatmul.mubr.f32.gmra.mxu0 %v5745
        %v7092 = vpop.f32.mrf.mxu0
        %v7093 = vadd.f32 %v6980, %v7092
        %v7094 = vpop.f32.mrf.mxu0
        %v7095 = vadd.f32 %v6982, %v7094
        %7096 = vmatprep.mubr.f32.mxu0 0.0
        %7097 = vmatmul.mubr.f32.gmra.mxu0 %v5748
        %v7098 = vpop.f32.mrf.mxu0
        %v7099 = vadd.f32 %v6986, %v7098
        %v7100 = vpop.f32.mrf.mxu0
        %v7101 = vadd.f32 %v6988, %v7100
        %7102 = vmatprep.mubr.f32.mxu0 0.0
        %7103 = vmatmul.mubr.f32.gmra.mxu0 %v5751
        %v7104 = vpop.f32.mrf.mxu0
        %v7105 = vadd.f32 %v6992, %v7104
        %v7106 = vpop.f32.mrf.mxu0
        %v7107 = vadd.f32 %v6994, %v7106
        %7108 = vdwg.mxu0
        %7109 = vmatprep.subr.mxu0 %v4447
        %7110 = vmatpush1.msra.mxu0 %v4446
        %7111 = vmatprep.subr.mxu0 %v4437
        %7112 = vmatpush1.msra.mxu0 %v4436
        %7113 = vmatprep.subr.mxu0 %v4427
        %7114 = vmatpush1.msra.mxu0 %v4426
        %7115 = vmatprep.subr.mxu0 %v4417
        %7116 = vmatpush1.msra.mxu0 %v4416
        %7117 = vmatprep.subr.mxu0 %v4407
        %7118 = vmatpush1.msra.mxu0 %v4406
        %7119 = vmatprep.subr.mxu0 %v4397
        %7120 = vmatpush1.msra.mxu0 %v4396
        %7121 = vmatprep.subr.mxu0 %v4387
        %7122 = vmatpush1.msra.mxu0 %v4386
        %7123 = vmatprep.subr.mxu0 %v4377
        %7124 = vmatpush1.msra.mxu0 %v4376
        %7125 = vmatprep.subr.mxu0 %v4367
        %7126 = vmatpush1.msra.mxu0 %v4366
        %7127 = vmatprep.subr.mxu0 %v4357
        %7128 = vmatpush1.msra.mxu0 %v4356
        %7129 = vmatprep.subr.mxu0 %v4347
        %7130 = vmatpush1.msra.mxu0 %v4346
        %7131 = vmatprep.subr.mxu0 %v4337
        %7132 = vmatpush1.msra.mxu0 %v4336
        %7133 = vmatprep.subr.mxu0 %v4327
        %7134 = vmatpush1.msra.mxu0 %v4326
        %7135 = vmatprep.subr.mxu0 %v4317
        %7136 = vmatpush1.msra.mxu0 %v4316
        %7137 = vmatprep.subr.mxu0 %v4307
        %7138 = vmatpush1.msra.mxu0 %v4306
        %7139 = vmatprep.subr.mxu0 %v4297
        %7140 = vmatpush1.msra.mxu0 %v4296
        %7141 = vmatprep.subr.mxu0 %v4607
        %7142 = vmatpush2.msra.mxu0 %v4606
        %7143 = vmatprep.subr.mxu0 %v4597
        %7144 = vmatpush2.msra.mxu0 %v4596
        %7145 = vmatprep.subr.mxu0 %v4587
        %7146 = vmatpush2.msra.mxu0 %v4586
        %7147 = vmatprep.subr.mxu0 %v4577
        %7148 = vmatpush2.msra.mxu0 %v4576
        %7149 = vmatprep.subr.mxu0 %v4567
        %7150 = vmatpush2.msra.mxu0 %v4566
        %7151 = vmatprep.subr.mxu0 %v4557
        %7152 = vmatpush2.msra.mxu0 %v4556
        %7153 = vmatprep.subr.mxu0 %v4547
        %7154 = vmatpush2.msra.mxu0 %v4546
        %7155 = vmatprep.subr.mxu0 %v4537
        %7156 = vmatpush2.msra.mxu0 %v4536
        %7157 = vmatprep.subr.mxu0 %v4527
        %7158 = vmatpush2.msra.mxu0 %v4526
        %7159 = vmatprep.subr.mxu0 %v4517
        %7160 = vmatpush2.msra.mxu0 %v4516
        %7161 = vmatprep.subr.mxu0 %v4507
        %7162 = vmatpush2.msra.mxu0 %v4506
        %7163 = vmatprep.subr.mxu0 %v4497
        %7164 = vmatpush2.msra.mxu0 %v4496
        %7165 = vmatprep.subr.mxu0 %v4487
        %7166 = vmatpush2.msra.mxu0 %v4486
        %7167 = vmatprep.subr.mxu0 %v4477
        %7168 = vmatpush2.msra.mxu0 %v4476
        %7169 = vmatprep.subr.mxu0 %v4467
        %7170 = vmatpush2.msra.mxu0 %v4466
        %7171 = vmatprep.subr.mxu0 %v4457
        %7172 = vmatpush2.msra.mxu0 %v4456
        %7173 = vmatprep.mubr.f32.mxu0 %v2616
        %7174 = vmatmul.mubr.f32.gmra.mxu0 %v2615
        %v7175 = vpop.f32.mrf.mxu0
        %v7176 = vadd.f32 %v2666, %v7175
        %v7177 = vpop.f32.mrf.mxu0
        %v7178 = vadd.f32 %v2666, %v7177
        %7179 = vmatprep.mubr.f32.mxu0 %v2621
        %7180 = vmatmul.mubr.f32.gmra.mxu0 %v2620
        %v7181 = vpop.f32.mrf.mxu0
        %v7182 = vadd.f32 %v2671, %v7181
        %v7183 = vpop.f32.mrf.mxu0
        %v7184 = vadd.f32 %v2671, %v7183
        %7185 = vmatprep.mubr.f32.mxu0 %v2626
        %7186 = vmatmul.mubr.f32.gmra.mxu0 %v2625
        %v7187 = vpop.f32.mrf.mxu0
        %v7188 = vadd.f32 %v2676, %v7187
        %v7189 = vpop.f32.mrf.mxu0
        %v7190 = vadd.f32 %v2676, %v7189
        %7191 = vmatprep.mubr.f32.mxu0 %v2631
        %7192 = vmatmul.mubr.f32.gmra.mxu0 %v2630
        %v7193 = vpop.f32.mrf.mxu0
        %v7194 = vadd.f32 %v2681, %v7193
        %v7195 = vpop.f32.mrf.mxu0
        %v7196 = vadd.f32 %v2681, %v7195
        %7197 = vmatprep.mubr.f32.mxu0 %v2636
        %7198 = vmatmul.mubr.f32.gmra.mxu0 %v2635
        %v7199 = vpop.f32.mrf.mxu0
        %v7200 = vadd.f32 %v2686, %v7199
        %v7201 = vpop.f32.mrf.mxu0
        %v7202 = vadd.f32 %v2686, %v7201
        %7203 = vmatprep.mubr.f32.mxu0 %v2641
        %7204 = vmatmul.mubr.f32.gmra.mxu0 %v2640
        %v7205 = vpop.f32.mrf.mxu0
        %v7206 = vadd.f32 %v2691, %v7205
        %v7207 = vpop.f32.mrf.mxu0
        %v7208 = vadd.f32 %v2691, %v7207
        %7209 = vmatprep.mubr.f32.mxu0 %v2646
        %7210 = vmatmul.mubr.f32.gmra.mxu0 %v2645
        %v7211 = vpop.f32.mrf.mxu0
        %v7212 = vadd.f32 %v2696, %v7211
        %v7213 = vpop.f32.mrf.mxu0
        %v7214 = vadd.f32 %v2696, %v7213
        %7215 = vmatprep.mubr.f32.mxu0 %v2651
        %7216 = vmatmul.mubr.f32.gmra.mxu0 %v2650
        %v7217 = vpop.f32.mrf.mxu0
        %v7218 = vadd.f32 %v2701, %v7217
        %v7219 = vpop.f32.mrf.mxu0
        %v7220 = vadd.f32 %v2701, %v7219
        %7221 = vdwg.mxu0
        %7222 = vmatprep.subr.mxu0 %v4767
        %7223 = vmatpush1.msra.mxu0 %v4766
        %7224 = vmatprep.subr.mxu0 %v4757
        %7225 = vmatpush1.msra.mxu0 %v4756
        %7226 = vmatprep.subr.mxu0 %v4747
        %7227 = vmatpush1.msra.mxu0 %v4746
        %7228 = vmatprep.subr.mxu0 %v4737
        %7229 = vmatpush1.msra.mxu0 %v4736
        %7230 = vmatprep.subr.mxu0 %v4727
        %7231 = vmatpush1.msra.mxu0 %v4726
        %7232 = vmatprep.subr.mxu0 %v4717
        %7233 = vmatpush1.msra.mxu0 %v4716
        %7234 = vmatprep.subr.mxu0 %v4707
        %7235 = vmatpush1.msra.mxu0 %v4706
        %7236 = vmatprep.subr.mxu0 %v4697
        %7237 = vmatpush1.msra.mxu0 %v4696
        %7238 = vmatprep.subr.mxu0 %v4687
        %7239 = vmatpush1.msra.mxu0 %v4686
        %7240 = vmatprep.subr.mxu0 %v4677
        %7241 = vmatpush1.msra.mxu0 %v4676
        %7242 = vmatprep.subr.mxu0 %v4667
        %7243 = vmatpush1.msra.mxu0 %v4666
        %7244 = vmatprep.subr.mxu0 %v4657
        %7245 = vmatpush1.msra.mxu0 %v4656
        %7246 = vmatprep.subr.mxu0 %v4647
        %7247 = vmatpush1.msra.mxu0 %v4646
        %7248 = vmatprep.subr.mxu0 %v4637
        %7249 = vmatpush1.msra.mxu0 %v4636
        %7250 = vmatprep.subr.mxu0 %v4627
        %7251 = vmatpush1.msra.mxu0 %v4626
        %7252 = vmatprep.subr.mxu0 %v4617
        %7253 = vmatpush1.msra.mxu0 %v4616
        %7254 = vmatprep.subr.mxu0 %v4927
        %7255 = vmatpush2.msra.mxu0 %v4926
        %7256 = vmatprep.subr.mxu0 %v4917
        %7257 = vmatpush2.msra.mxu0 %v4916
        %7258 = vmatprep.subr.mxu0 %v4907
        %7259 = vmatpush2.msra.mxu0 %v4906
        %7260 = vmatprep.subr.mxu0 %v4897
        %7261 = vmatpush2.msra.mxu0 %v4896
        %7262 = vmatprep.subr.mxu0 %v4887
        %7263 = vmatpush2.msra.mxu0 %v4886
        %7264 = vmatprep.subr.mxu0 %v4877
        %7265 = vmatpush2.msra.mxu0 %v4876
        %7266 = vmatprep.subr.mxu0 %v4867
        %7267 = vmatpush2.msra.mxu0 %v4866
        %7268 = vmatprep.subr.mxu0 %v4857
        %7269 = vmatpush2.msra.mxu0 %v4856
        %7270 = vmatprep.subr.mxu0 %v4847
        %7271 = vmatpush2.msra.mxu0 %v4846
        %7272 = vmatprep.subr.mxu0 %v4837
        %7273 = vmatpush2.msra.mxu0 %v4836
        %7274 = vmatprep.subr.mxu0 %v4827
        %7275 = vmatpush2.msra.mxu0 %v4826
        %7276 = vmatprep.subr.mxu0 %v4817
        %7277 = vmatpush2.msra.mxu0 %v4816
        %7278 = vmatprep.subr.mxu0 %v4807
        %7279 = vmatpush2.msra.mxu0 %v4806
        %7280 = vmatprep.subr.mxu0 %v4797
        %7281 = vmatpush2.msra.mxu0 %v4796
        %7282 = vmatprep.subr.mxu0 %v4787
        %7283 = vmatpush2.msra.mxu0 %v4786
        %7284 = vmatprep.subr.mxu0 %v4777
        %7285 = vmatpush2.msra.mxu0 %v4776
        %7286 = vmatprep.mubr.f32.mxu0 %v2618
        %7287 = vmatmul.mubr.f32.gmra.mxu0 %v2617
        %v7288 = vpop.f32.mrf.mxu0
        %v7289 = vadd.f32 %v7176, %v7288
        %v7290 = vpop.f32.mrf.mxu0
        %v7291 = vadd.f32 %v7178, %v7290
        %7292 = vmatprep.mubr.f32.mxu0 %v2623
        %7293 = vmatmul.mubr.f32.gmra.mxu0 %v2622
        %v7294 = vpop.f32.mrf.mxu0
        %v7295 = vadd.f32 %v7182, %v7294
        %v7296 = vpop.f32.mrf.mxu0
        %v7297 = vadd.f32 %v7184, %v7296
        %7298 = vmatprep.mubr.f32.mxu0 %v2628
        %7299 = vmatmul.mubr.f32.gmra.mxu0 %v2627
        %v7300 = vpop.f32.mrf.mxu0
        %v7301 = vadd.f32 %v7188, %v7300
        %v7302 = vpop.f32.mrf.mxu0
        %v7303 = vadd.f32 %v7190, %v7302
        %7304 = vmatprep.mubr.f32.mxu0 %v2633
        %7305 = vmatmul.mubr.f32.gmra.mxu0 %v2632
        %v7306 = vpop.f32.mrf.mxu0
        %v7307 = vadd.f32 %v7194, %v7306
        %v7308 = vpop.f32.mrf.mxu0
        %v7309 = vadd.f32 %v7196, %v7308
        %7310 = vmatprep.mubr.f32.mxu0 %v2638
        %7311 = vmatmul.mubr.f32.gmra.mxu0 %v2637
        %v7312 = vpop.f32.mrf.mxu0
        %v7313 = vadd.f32 %v7200, %v7312
        %v7314 = vpop.f32.mrf.mxu0
        %v7315 = vadd.f32 %v7202, %v7314
        %7316 = vmatprep.mubr.f32.mxu0 %v2643
        %7317 = vmatmul.mubr.f32.gmra.mxu0 %v2642
        %v7318 = vpop.f32.mrf.mxu0
        %v7319 = vadd.f32 %v7206, %v7318
        %v7320 = vpop.f32.mrf.mxu0
        %v7321 = vadd.f32 %v7208, %v7320
        %7322 = vmatprep.mubr.f32.mxu0 %v2648
        %7323 = vmatmul.mubr.f32.gmra.mxu0 %v2647
        %v7324 = vpop.f32.mrf.mxu0
        %v7325 = vadd.f32 %v7212, %v7324
        %v7326 = vpop.f32.mrf.mxu0
        %v7327 = vadd.f32 %v7214, %v7326
        %7328 = vmatprep.mubr.f32.mxu0 %v2653
        %7329 = vmatmul.mubr.f32.gmra.mxu0 %v2652
        %v7330 = vpop.f32.mrf.mxu0
        %v7331 = vadd.f32 %v7218, %v7330
        %v7332 = vpop.f32.mrf.mxu0
        %v7333 = vadd.f32 %v7220, %v7332
        %7334 = vdwg.mxu0
        %7335 = vmatprep.subr.mxu0 0.0
        %7336 = vmatpush1.msra.mxu0 0.0
        %7337 = vmatprep.subr.mxu0 0.0
        %7338 = vmatpush1.msra.mxu0 0.0
        %7339 = vmatprep.subr.mxu0 0.0
        %7340 = vmatpush1.msra.mxu0 0.0
        %7341 = vmatprep.subr.mxu0 0.0
        %7342 = vmatpush1.msra.mxu0 0.0
        %7343 = vmatprep.subr.mxu0 0.0
        %7344 = vmatpush1.msra.mxu0 0.0
        %7345 = vmatprep.subr.mxu0 0.0
        %7346 = vmatpush1.msra.mxu0 0.0
        %7347 = vmatprep.subr.mxu0 0.0
        %7348 = vmatpush1.msra.mxu0 0.0
        %7349 = vmatprep.subr.mxu0 0.0
        %7350 = vmatpush1.msra.mxu0 0.0
        %7351 = vmatprep.subr.mxu0 %v5007
        %7352 = vmatpush1.msra.mxu0 %v5006
        %7353 = vmatprep.subr.mxu0 %v4997
        %7354 = vmatpush1.msra.mxu0 %v4996
        %7355 = vmatprep.subr.mxu0 %v4987
        %7356 = vmatpush1.msra.mxu0 %v4986
        %7357 = vmatprep.subr.mxu0 %v4977
        %7358 = vmatpush1.msra.mxu0 %v4976
        %7359 = vmatprep.subr.mxu0 %v4967
        %7360 = vmatpush1.msra.mxu0 %v4966
        %7361 = vmatprep.subr.mxu0 %v4957
        %7362 = vmatpush1.msra.mxu0 %v4956
        %7363 = vmatprep.subr.mxu0 %v4947
        %7364 = vmatpush1.msra.mxu0 %v4946
        %7365 = vmatprep.subr.mxu0 %v4937
        %7366 = vmatpush1.msra.mxu0 %v4936
        %7367 = vmatprep.subr.mxu0 0.0
        %7368 = vmatpush2.msra.mxu0 0.0
        %7369 = vmatprep.subr.mxu0 0.0
        %7370 = vmatpush2.msra.mxu0 0.0
        %7371 = vmatprep.subr.mxu0 0.0
        %7372 = vmatpush2.msra.mxu0 0.0
        %7373 = vmatprep.subr.mxu0 0.0
        %7374 = vmatpush2.msra.mxu0 0.0
        %7375 = vmatprep.subr.mxu0 0.0
        %7376 = vmatpush2.msra.mxu0 0.0
        %7377 = vmatprep.subr.mxu0 0.0
        %7378 = vmatpush2.msra.mxu0 0.0
        %7379 = vmatprep.subr.mxu0 0.0
        %7380 = vmatpush2.msra.mxu0 0.0
        %7381 = vmatprep.subr.mxu0 0.0
        %7382 = vmatpush2.msra.mxu0 0.0
        %7383 = vmatprep.subr.mxu0 0.0
        %7384 = vmatpush2.msra.mxu0 0.0
        %7385 = vmatprep.subr.mxu0 0.0
        %7386 = vmatpush2.msra.mxu0 0.0
        %7387 = vmatprep.subr.mxu0 0.0
        %7388 = vmatpush2.msra.mxu0 0.0
        %7389 = vmatprep.subr.mxu0 0.0
        %7390 = vmatpush2.msra.mxu0 0.0
        %7391 = vmatprep.subr.mxu0 0.0
        %7392 = vmatpush2.msra.mxu0 0.0
        %7393 = vmatprep.subr.mxu0 0.0
        %7394 = vmatpush2.msra.mxu0 0.0
        %7395 = vmatprep.subr.mxu0 0.0
        %7396 = vmatpush2.msra.mxu0 0.0
        %7397 = vmatprep.subr.mxu0 0.0
        %7398 = vmatpush2.msra.mxu0 0.0
        %7399 = vmatprep.mubr.f32.mxu0 0.0
        %7400 = vmatmul.mubr.f32.gmra.mxu0 %v5730
        %v7401 = vpop.f32.mrf.mxu0
        %v7402 = vadd.f32 %v7289, %v7401
        %v7403 = vpop.f32.mrf.mxu0
        %v7404 = vadd.f32 %v7291, %v7403
        %7405 = vmatprep.mubr.f32.mxu0 0.0
        %7406 = vmatmul.mubr.f32.gmra.mxu0 %v5733
        %v7407 = vpop.f32.mrf.mxu0
        %v7408 = vadd.f32 %v7295, %v7407
        %v7409 = vpop.f32.mrf.mxu0
        %v7410 = vadd.f32 %v7297, %v7409
        %7411 = vmatprep.mubr.f32.mxu0 0.0
        %7412 = vmatmul.mubr.f32.gmra.mxu0 %v5736
        %v7413 = vpop.f32.mrf.mxu0
        %v7414 = vadd.f32 %v7301, %v7413
        %v7415 = vpop.f32.mrf.mxu0
        %v7416 = vadd.f32 %v7303, %v7415
        %7417 = vmatprep.mubr.f32.mxu0 0.0
        %7418 = vmatmul.mubr.f32.gmra.mxu0 %v5739
        %v7419 = vpop.f32.mrf.mxu0
        %v7420 = vadd.f32 %v7307, %v7419
        %v7421 = vpop.f32.mrf.mxu0
        %v7422 = vadd.f32 %v7309, %v7421
        %7423 = vmatprep.mubr.f32.mxu0 0.0
        %7424 = vmatmul.mubr.f32.gmra.mxu0 %v5742
        %v7425 = vpop.f32.mrf.mxu0
        %v7426 = vadd.f32 %v7313, %v7425
        %v7427 = vpop.f32.mrf.mxu0
        %v7428 = vadd.f32 %v7315, %v7427
        %7429 = vmatprep.mubr.f32.mxu0 0.0
        %7430 = vmatmul.mubr.f32.gmra.mxu0 %v5745
        %v7431 = vpop.f32.mrf.mxu0
        %v7432 = vadd.f32 %v7319, %v7431
        %v7433 = vpop.f32.mrf.mxu0
        %v7434 = vadd.f32 %v7321, %v7433
        %7435 = vmatprep.mubr.f32.mxu0 0.0
        %7436 = vmatmul.mubr.f32.gmra.mxu0 %v5748
        %v7437 = vpop.f32.mrf.mxu0
        %v7438 = vadd.f32 %v7325, %v7437
        %v7439 = vpop.f32.mrf.mxu0
        %v7440 = vadd.f32 %v7327, %v7439
        %7441 = vmatprep.mubr.f32.mxu0 0.0
        %7442 = vmatmul.mubr.f32.gmra.mxu0 %v5751
        %v7443 = vpop.f32.mrf.mxu0
        %v7444 = vadd.f32 %v7331, %v7443
        %v7445 = vpop.f32.mrf.mxu0
        %v7446 = vadd.f32 %v7333, %v7445
        %7447 = vdwg.mxu0
        %v7448 = vmax.f32 %v6046, 0.0
        %v7449 = vmax.f32 %v6048, 0.0
        %v7450 = vmax.f32 %v6385, 0.0
        %v7451 = vmax.f32 %v6387, 0.0
        %v7452 = vmax.f32 %v6724, 0.0
        %v7453 = vmax.f32 %v6726, 0.0
        %v7454 = vmax.f32 %v7063, 0.0
        %v7455 = vmax.f32 %v7065, 0.0
        %v7456 = vmax.f32 %v7402, 0.0
        %v7457 = vmax.f32 %v7404, 0.0
        %v7458 = vmax.f32 %v6052, 0.0
        %v7459 = vmax.f32 %v6054, 0.0
        %v7460 = vmax.f32 %v6391, 0.0
        %v7461 = vmax.f32 %v6393, 0.0
        %v7462 = vmax.f32 %v6730, 0.0
        %v7463 = vmax.f32 %v6732, 0.0
        %v7464 = vmax.f32 %v7069, 0.0
        %v7465 = vmax.f32 %v7071, 0.0
        %v7466 = vmax.f32 %v7408, 0.0
        %v7467 = vmax.f32 %v7410, 0.0
        %v7468 = vmax.f32 %v6058, 0.0
        %v7469 = vmax.f32 %v6060, 0.0
        %v7470 = vmax.f32 %v6397, 0.0
        %v7471 = vmax.f32 %v6399, 0.0
        %v7472 = vmax.f32 %v6736, 0.0
        %v7473 = vmax.f32 %v6738, 0.0
        %v7474 = vmax.f32 %v7075, 0.0
        %v7475 = vmax.f32 %v7077, 0.0
        %v7476 = vmax.f32 %v7414, 0.0
        %v7477 = vmax.f32 %v7416, 0.0
        %v7478 = vmax.f32 %v6064, 0.0
        %v7479 = vmax.f32 %v6066, 0.0
        %v7480 = vmax.f32 %v6403, 0.0
        %v7481 = vmax.f32 %v6405, 0.0
        %v7482 = vmax.f32 %v6742, 0.0
        %v7483 = vmax.f32 %v6744, 0.0
        %v7484 = vmax.f32 %v7081, 0.0
        %v7485 = vmax.f32 %v7083, 0.0
        %v7486 = vmax.f32 %v7420, 0.0
        %v7487 = vmax.f32 %v7422, 0.0
        %v7488 = vmax.f32 %v6070, 0.0
        %v7489 = vmax.f32 %v6072, 0.0
        %v7490 = vmax.f32 %v6409, 0.0
        %v7491 = vmax.f32 %v6411, 0.0
        %v7492 = vmax.f32 %v6748, 0.0
        %v7493 = vmax.f32 %v6750, 0.0
        %v7494 = vmax.f32 %v7087, 0.0
        %v7495 = vmax.f32 %v7089, 0.0
        %v7496 = vmax.f32 %v7426, 0.0
        %v7497 = vmax.f32 %v7428, 0.0
        %v7498 = vmax.f32 %v6076, 0.0
        %v7499 = vmax.f32 %v6078, 0.0
        %v7500 = vmax.f32 %v6415, 0.0
        %v7501 = vmax.f32 %v6417, 0.0
        %v7502 = vmax.f32 %v6754, 0.0
        %v7503 = vmax.f32 %v6756, 0.0
        %v7504 = vmax.f32 %v7093, 0.0
        %v7505 = vmax.f32 %v7095, 0.0
        %v7506 = vmax.f32 %v7432, 0.0
        %v7507 = vmax.f32 %v7434, 0.0
        %v7508 = vmax.f32 %v6082, 0.0
        %v7509 = vmax.f32 %v6084, 0.0
        %v7510 = vmax.f32 %v6421, 0.0
        %v7511 = vmax.f32 %v6423, 0.0
        %v7512 = vmax.f32 %v6760, 0.0
        %v7513 = vmax.f32 %v6762, 0.0
        %v7514 = vmax.f32 %v7099, 0.0
        %v7515 = vmax.f32 %v7101, 0.0
        %v7516 = vmax.f32 %v7438, 0.0
        %v7517 = vmax.f32 %v7440, 0.0
        %v7518 = vmax.f32 %v6088, 0.0
        %v7519 = vmax.f32 %v6090, 0.0
        %v7520 = vmax.f32 %v6427, 0.0
        %v7521 = vmax.f32 %v6429, 0.0
        %v7522 = vmax.f32 %v6766, 0.0
        %v7523 = vmax.f32 %v6768, 0.0
        %v7524 = vmax.f32 %v7105, 0.0
        %v7525 = vmax.f32 %v7107, 0.0
        %v7526 = vmax.f32 %v7444, 0.0
        %v7527 = vmax.f32 %v7446, 0.0
        %v7528 = vld [vmem:[%s3] sm:$0xff]
        %v7529 = vld [vmem:[%s3 + $0x8] sm:$0x3]
        %v7532 = vlaneseq
        %v7533 = vshrl.u32 %v7532, 7
        %v7534 = vsub.s32 0, %v7533
        %v7535 = vrot.slane %v7528, %v7534
        %v7536 = vlaneseq
        %v7537 = vshrl.u32 %v7536, 7
        %v7538 = vsub.s32 1, %v7537
        %v7539 = vrot.slane %v7528, %v7538
        %v7540 = vlaneseq
        %v7541 = vshrl.u32 %v7540, 7
        %v7542 = vsub.s32 2, %v7541
        %v7543 = vrot.slane %v7528, %v7542
        %v7544 = vlaneseq
        %v7545 = vshrl.u32 %v7544, 7
        %v7546 = vsub.s32 3, %v7545
        %v7547 = vrot.slane %v7528, %v7546
        %v7548 = vlaneseq
        %v7549 = vshrl.u32 %v7548, 7
        %v7550 = vsub.s32 4, %v7549
        %v7551 = vrot.slane %v7528, %v7550
        %v7552 = vlaneseq
        %v7553 = vshrl.u32 %v7552, 7
        %v7554 = vsub.s32 5, %v7553
        %v7555 = vrot.slane %v7528, %v7554
        %v7556 = vlaneseq
        %v7557 = vshrl.u32 %v7556, 7
        %v7558 = vsub.s32 6, %v7557
        %v7559 = vrot.slane %v7528, %v7558
        %v7560 = vlaneseq
        %v7561 = vshrl.u32 %v7560, 7
        %v7562 = vsub.s32 7, %v7561
        %v7563 = vrot.slane %v7528, %v7562
        %v7564 = vlaneseq
        %v7565 = vshrl.u32 %v7564, 7
        %v7566 = vsub.s32 0, %v7565
        %v7567 = vrot.slane %v7529, %v7566
        %v7568 = vlaneseq
        %v7569 = vshrl.u32 %v7568, 7
        %v7570 = vsub.s32 1, %v7569
        %v7571 = vrot.slane %v7529, %v7570
        %v7582 = vmul.f32 %v7448, %v7535
        %v7583 = vmul.f32 %v7449, %v7539
        %v7584 = vmul.f32 %v7450, %v7543
        %v7585 = vmul.f32 %v7451, %v7547
        %v7586 = vmul.f32 %v7452, %v7551
        %v7587 = vmul.f32 %v7453, %v7555
        %v7588 = vmul.f32 %v7454, %v7559
        %v7589 = vmul.f32 %v7455, %v7563
        %v7590 = vmul.f32 %v7456, %v7567
        %v7591 = vmul.f32 %v7457, %v7571
        %v7592 = vmul.f32 %v7458, %v7535
        %v7593 = vmul.f32 %v7459, %v7539
        %v7594 = vmul.f32 %v7460, %v7543
        %v7595 = vmul.f32 %v7461, %v7547
        %v7596 = vmul.f32 %v7462, %v7551
        %v7597 = vmul.f32 %v7463, %v7555
        %v7598 = vmul.f32 %v7464, %v7559
        %v7599 = vmul.f32 %v7465, %v7563
        %v7600 = vmul.f32 %v7466, %v7567
        %v7601 = vmul.f32 %v7467, %v7571
        %v7602 = vmul.f32 %v7468, %v7535
        %v7603 = vmul.f32 %v7469, %v7539
        %v7604 = vmul.f32 %v7470, %v7543
        %v7605 = vmul.f32 %v7471, %v7547
        %v7606 = vmul.f32 %v7472, %v7551
        %v7607 = vmul.f32 %v7473, %v7555
        %v7608 = vmul.f32 %v7474, %v7559
        %v7609 = vmul.f32 %v7475, %v7563
        %v7610 = vmul.f32 %v7476, %v7567
        %v7611 = vmul.f32 %v7477, %v7571
        %v7612 = vmul.f32 %v7478, %v7535
        %v7613 = vmul.f32 %v7479, %v7539
        %v7614 = vmul.f32 %v7480, %v7543
        %v7615 = vmul.f32 %v7481, %v7547
        %v7616 = vmul.f32 %v7482, %v7551
        %v7617 = vmul.f32 %v7483, %v7555
        %v7618 = vmul.f32 %v7484, %v7559
        %v7619 = vmul.f32 %v7485, %v7563
        %v7620 = vmul.f32 %v7486, %v7567
        %v7621 = vmul.f32 %v7487, %v7571
        %v7622 = vmul.f32 %v7488, %v7535
        %v7623 = vmul.f32 %v7489, %v7539
        %v7624 = vmul.f32 %v7490, %v7543
        %v7625 = vmul.f32 %v7491, %v7547
        %v7626 = vmul.f32 %v7492, %v7551
        %v7627 = vmul.f32 %v7493, %v7555
        %v7628 = vmul.f32 %v7494, %v7559
        %v7629 = vmul.f32 %v7495, %v7563
        %v7630 = vmul.f32 %v7496, %v7567
        %v7631 = vmul.f32 %v7497, %v7571
        %v7632 = vmul.f32 %v7498, %v7535
        %v7633 = vmul.f32 %v7499, %v7539
        %v7634 = vmul.f32 %v7500, %v7543
        %v7635 = vmul.f32 %v7501, %v7547
        %v7636 = vmul.f32 %v7502, %v7551
        %v7637 = vmul.f32 %v7503, %v7555
        %v7638 = vmul.f32 %v7504, %v7559
        %v7639 = vmul.f32 %v7505, %v7563
        %v7640 = vmul.f32 %v7506, %v7567
        %v7641 = vmul.f32 %v7507, %v7571
        %v7642 = vmul.f32 %v7508, %v7535
        %v7643 = vmul.f32 %v7509, %v7539
        %v7644 = vmul.f32 %v7510, %v7543
        %v7645 = vmul.f32 %v7511, %v7547
        %v7646 = vmul.f32 %v7512, %v7551
        %v7647 = vmul.f32 %v7513, %v7555
        %v7648 = vmul.f32 %v7514, %v7559
        %v7649 = vmul.f32 %v7515, %v7563
        %v7650 = vmul.f32 %v7516, %v7567
        %v7651 = vmul.f32 %v7517, %v7571
        %v7652 = vmul.f32 %v7518, %v7535
        %v7653 = vmul.f32 %v7519, %v7539
        %v7654 = vmul.f32 %v7520, %v7543
        %v7655 = vmul.f32 %v7521, %v7547
        %v7656 = vmul.f32 %v7522, %v7551
        %v7657 = vmul.f32 %v7523, %v7555
        %v7658 = vmul.f32 %v7524, %v7559
        %v7659 = vmul.f32 %v7525, %v7563
        %v7660 = vmul.f32 %v7526, %v7567
        %v7661 = vmul.f32 %v7527, %v7571
        %7662 = vst [vmem:[%s230] sm:$0xff] 0.0
        %7663 = vst [vmem:[%s230 + $0x8] sm:$0xff] %v7582
        %7664 = vst [vmem:[%s230 + $0x10] sm:$0xff] %v7583
        %7665 = vst [vmem:[%s230 + $0x18] sm:$0xff] %v7584
        %7666 = vst [vmem:[%s230 + $0x20] sm:$0xff] %v7585
        %7667 = vst [vmem:[%s230 + $0x28] sm:$0xff] %v7586
        %7668 = vst [vmem:[%s230 + $0x30] sm:$0xff] %v7587
        %7669 = vst [vmem:[%s230 + $0x38] sm:$0xff] %v7588
        %7670 = vst [vmem:[%s230 + $0x40] sm:$0xff] %v7589
        %7671 = vst [vmem:[%s230 + $0x48] sm:$0xff] %v7590
        %7672 = vst [vmem:[%s230 + $0x50] sm:$0xff] %v7591
        %7673 = vst [vmem:[%s230 + $0x58] sm:$0xff] 0.0
        %7674 = vst [vmem:[%s230 + $0x60] sm:$0xff] 0.0
        %7675 = vst [vmem:[%s230 + $0x68] sm:$0xff] %v7592
        %7676 = vst [vmem:[%s230 + $0x70] sm:$0xff] %v7593
        %7677 = vst [vmem:[%s230 + $0x78] sm:$0xff] %v7594
        %7678 = vst [vmem:[%s230 + $0x80] sm:$0xff] %v7595
        %7679 = vst [vmem:[%s230 + $0x88] sm:$0xff] %v7596
        %7680 = vst [vmem:[%s230 + $0x90] sm:$0xff] %v7597
        %7681 = vst [vmem:[%s230 + $0x98] sm:$0xff] %v7598
        %7682 = vst [vmem:[%s230 + $0xa0] sm:$0xff] %v7599
        %7683 = vst [vmem:[%s230 + $0xa8] sm:$0xff] %v7600
        %7684 = vst [vmem:[%s230 + $0xb0] sm:$0xff] %v7601
        %7685 = vst [vmem:[%s230 + $0xb8] sm:$0xff] 0.0
        %7686 = vst [vmem:[%s230 + $0xc0] sm:$0xff] 0.0
        %7687 = vst [vmem:[%s230 + $0xc8] sm:$0xff] %v7602
        %7688 = vst [vmem:[%s230 + $0xd0] sm:$0xff] %v7603
        %7689 = vst [vmem:[%s230 + $0xd8] sm:$0xff] %v7604
        %7690 = vst [vmem:[%s230 + $0xe0] sm:$0xff] %v7605
        %7691 = vst [vmem:[%s230 + $0xe8] sm:$0xff] %v7606
        %7692 = vst [vmem:[%s230 + $0xf0] sm:$0xff] %v7607
        %7693 = vst [vmem:[%s230 + $0xf8] sm:$0xff] %v7608
        %7694 = vst [vmem:[%s230 + $0x100] sm:$0xff] %v7609
        %7695 = vst [vmem:[%s230 + $0x108] sm:$0xff] %v7610
        %7696 = vst [vmem:[%s230 + $0x110] sm:$0xff] %v7611
        %7697 = vst [vmem:[%s230 + $0x118] sm:$0xff] 0.0
        %7698 = vst [vmem:[%s230 + $0x120] sm:$0xff] 0.0
        %7699 = vst [vmem:[%s230 + $0x128] sm:$0xff] %v7612
        %7700 = vst [vmem:[%s230 + $0x130] sm:$0xff] %v7613
        %7701 = vst [vmem:[%s230 + $0x138] sm:$0xff] %v7614
        %7702 = vst [vmem:[%s230 + $0x140] sm:$0xff] %v7615
        %7703 = vst [vmem:[%s230 + $0x148] sm:$0xff] %v7616
        %7704 = vst [vmem:[%s230 + $0x150] sm:$0xff] %v7617
        %7705 = vst [vmem:[%s230 + $0x158] sm:$0xff] %v7618
        %7706 = vst [vmem:[%s230 + $0x160] sm:$0xff] %v7619
        %7707 = vst [vmem:[%s230 + $0x168] sm:$0xff] %v7620
        %7708 = vst [vmem:[%s230 + $0x170] sm:$0xff] %v7621
        %7709 = vst [vmem:[%s230 + $0x178] sm:$0xff] 0.0
        %7710 = vst [vmem:[%s230 + $0x180] sm:$0xff] 0.0
        %7711 = vst [vmem:[%s230 + $0x188] sm:$0xff] %v7622
        %7712 = vst [vmem:[%s230 + $0x190] sm:$0xff] %v7623
        %7713 = vst [vmem:[%s230 + $0x198] sm:$0xff] %v7624
        %7714 = vst [vmem:[%s230 + $0x1a0] sm:$0xff] %v7625
        %7715 = vst [vmem:[%s230 + $0x1a8] sm:$0xff] %v7626
        %7716 = vst [vmem:[%s230 + $0x1b0] sm:$0xff] %v7627
        %7717 = vst [vmem:[%s230 + $0x1b8] sm:$0xff] %v7628
        %7718 = vst [vmem:[%s230 + $0x1c0] sm:$0xff] %v7629
        %7719 = vst [vmem:[%s230 + $0x1c8] sm:$0xff] %v7630
        %7720 = vst [vmem:[%s230 + $0x1d0] sm:$0xff] %v7631
        %7721 = vst [vmem:[%s230 + $0x1d8] sm:$0xff] 0.0
        %7722 = vst [vmem:[%s230 + $0x1e0] sm:$0xff] 0.0
        %7723 = vst [vmem:[%s230 + $0x1e8] sm:$0xff] %v7632
        %7724 = vst [vmem:[%s230 + $0x1f0] sm:$0xff] %v7633
        %7725 = vst [vmem:[%s230 + $0x1f8] sm:$0xff] %v7634
        %7726 = vst [vmem:[%s230 + $0x200] sm:$0xff] %v7635
        %7727 = vst [vmem:[%s230 + $0x208] sm:$0xff] %v7636
        %7728 = vst [vmem:[%s230 + $0x210] sm:$0xff] %v7637
        %7729 = vst [vmem:[%s230 + $0x218] sm:$0xff] %v7638
        %7730 = vst [vmem:[%s230 + $0x220] sm:$0xff] %v7639
        %7731 = vst [vmem:[%s230 + $0x228] sm:$0xff] %v7640
        %7732 = vst [vmem:[%s230 + $0x230] sm:$0xff] %v7641
        %7733 = vst [vmem:[%s230 + $0x238] sm:$0xff] 0.0
        %7734 = vst [vmem:[%s230 + $0x240] sm:$0xff] 0.0
        %7735 = vst [vmem:[%s230 + $0x248] sm:$0xff] %v7642
        %7736 = vst [vmem:[%s230 + $0x250] sm:$0xff] %v7643
        %7737 = vst [vmem:[%s230 + $0x258] sm:$0xff] %v7644
        %7738 = vst [vmem:[%s230 + $0x260] sm:$0xff] %v7645
        %7739 = vst [vmem:[%s230 + $0x268] sm:$0xff] %v7646
        %7740 = vst [vmem:[%s230 + $0x270] sm:$0xff] %v7647
        %7741 = vst [vmem:[%s230 + $0x278] sm:$0xff] %v7648
        %7742 = vst [vmem:[%s230 + $0x280] sm:$0xff] %v7649
        %7743 = vst [vmem:[%s230 + $0x288] sm:$0xff] %v7650
        %7744 = vst [vmem:[%s230 + $0x290] sm:$0xff] %v7651
        %7745 = vst [vmem:[%s230 + $0x298] sm:$0xff] 0.0
        %7746 = vst [vmem:[%s230 + $0x2a0] sm:$0xff] 0.0
        %7747 = vst [vmem:[%s230 + $0x2a8] sm:$0xff] %v7652
        %7748 = vst [vmem:[%s230 + $0x2b0] sm:$0xff] %v7653
        %7749 = vst [vmem:[%s230 + $0x2b8] sm:$0xff] %v7654
        %7750 = vst [vmem:[%s230 + $0x2c0] sm:$0xff] %v7655
        %7751 = vst [vmem:[%s230 + $0x2c8] sm:$0xff] %v7656
        %7752 = vst [vmem:[%s230 + $0x2d0] sm:$0xff] %v7657
        %7753 = vst [vmem:[%s230 + $0x2d8] sm:$0xff] %v7658
        %7754 = vst [vmem:[%s230 + $0x2e0] sm:$0xff] %v7659
        %7755 = vst [vmem:[%s230 + $0x2e8] sm:$0xff] %v7660
        %7756 = vst [vmem:[%s230 + $0x2f0] sm:$0xff] %v7661
        %7757 = vst [vmem:[%s230 + $0x2f8] sm:$0xff] 0.0
        %s7758 = sand.u32 %s119, 1
        %s7759 = scalar_lea.sflag [#allocation4], %s7758
        %s7760 = sand.u32 %s119, 1
        %s7761 = smul.addr %s7760, 768
        %s7762 = scalar_lea.vmem [#allocation7], %s7761
        // Predicated region
        $region45: #{tpu_custom_call.1} parent=35 // pred_check
          %p7763 = pneg %p129
        $region46: #{tpu_custom_call.1} parent=35 // pred_check_branch
          %7765 = sbr.rel (%p7763) target = $region48
        $region47: #{tpu_custom_call.1} parent=35 // pred_region
          %s7767 = ssub.s32 12288, 12288
          %7768 = vsyncadd %s7759, %s7767
          %s7769 = smul.addr %s22, 96
          %s7770 = smul.addr %s7769, 128
          %s7771 = scalar_lea.hbm %s4, %s7770
          %s7772 = sshll.u32 %s7762, 4
          %s7773 = int_to_ptr.vmem [resolvable:$true] %s7772
          %7778 = dma.vmem_to_hbm [thread:$0]  %s7773, 12288, %s7771, %s7759, 1536, 1536, 96
        $region48: #{tpu_custom_call.1} parent=35 // pred_fallthru
          _
      $region36: #{tpu_custom_call.1} parent=5 // pred_fallthru
        _
      %p7779 = scmp.le.s32.totalorder 2, %s17
      // Predicated region
      $region49: #{tpu_custom_call.1} parent=5 // pred_check
        %p7780 = pneg %p7779
      $region50: #{tpu_custom_call.1} parent=5 // pred_check_branch
        %7782 = sbr.rel (%p7780) target = $region52
      $region51: #{tpu_custom_call.1} parent=5 // pred_region
        %s7783 = ssub.s32 %s17, 2
        // Predicated region
        $region53: #{tpu_custom_call.1} parent=51 // pred_check
          %p7784 = pneg %p135
        $region54: #{tpu_custom_call.1} parent=51 // pred_check_branch
          %7786 = sbr.rel (%p7784) target = $region56
        $region55: #{tpu_custom_call.1} parent=51 // pred_region
          %s7787 = sand.u32 %s120, 1
          %s7788 = scalar_lea.sflag [#allocation4], %s7787
          %s7789 = sand.u32 %s120, 1
          %s7790 = smul.addr %s7789, 768
          %s7791 = scalar_lea.vmem [#allocation7], %s7790
          %7792 = dma.done %s7788, 12288
        $region56: #{tpu_custom_call.1} parent=51 // pred_fallthru
          _
      $region52: #{tpu_custom_call.1} parent=5 // pred_fallthru
        _
    $region6: #{tpu_custom_call.1} parent=1 // loop_footer
      %s21 = sadd.s32 1, %s17
    $region7: #{tpu_custom_call.1} parent=1 // loop_footer_branch
      %16 = sbr.rel target = $region3
    $region8: #{tpu_custom_call.1} parent=1 // loop_exit
      _
    %7793 = vsyncpa [#allocation3], 1
    %s7794 = scalar_lea.sflag [#allocation3], 1
    %7795 = vsyncpa %s7794, 1
    %7796 = vsyncpa [#allocation6], 1
    %7797 = vsyncpa [#allocation4], 1
    %s7798 = scalar_lea.sflag [#allocation4], 1
    %7799 = vsyncpa %s7798, 1

</llo_original>
